<compile_context>
chip_gen: v6e
topology: v6e:2x2x1
jax: 0.10.0
libtpu: 0.0.40
codegen_flags: <defaults>
</compile_context>

<pallas_src>
import functools

import jax
import jax.numpy as jnp
from jax.experimental import pallas as pl
from jax.experimental.pallas import tpu as pltpu

BN_EPS = 1e-5  # nn.BatchNorm2d default eps
_LANE = 128


def _round_up(n, m):
    return (n + m - 1) // m * m


def _fold_bn(w, gamma, beta, mean, var, *, eps):
    """Fold eval-mode BatchNorm into a 1x1 conv weight (C_out, C_in) + bias."""
    scale = gamma * jax.lax.rsqrt(var + eps)
    return w * scale[:, None], beta - mean * scale


def _pick_c3_tile(c3p, hw, itemsize):
    """Largest multiple-of-128 divisor of c3p whose pooled VMEM working set
    (~7 live (H, W, tc) maps) stays under ~12 MiB."""
    budget = 12 * 1024 * 1024
    d = c3p // _LANE
    best = _LANE
    for k in range(1, d + 1):
        if d % k == 0 and 7 * hw * (_LANE * k) * itemsize <= budget:
            best = _LANE * k
    return best


# ---------------------------------------------------------------------------
# Fused kernel: cv1 (1x1 conv + folded BN + SiLU) -> 3 chained max pools ->
# cv5 (1x1 conv over the 4-branch concat, expressed as 4 accumulated matmuls).
# One grid step = one batch element x one C3 tile (full spatial extent).
# ---------------------------------------------------------------------------
def _sppelan_kernel(x_ref, w1_ref, b1_ref, w5_ref, b5_ref, o_ref,
                    padw_ref, padh_ref, *acc_scratch,
                    H, W, r, n_ct, x_channels_major):
    c = pl.program_id(1)
    cdt = w1_ref.dtype
    tc = w1_ref.shape[1]
    HW = H * W

    # ---- cv1: 1x1 conv (+ folded BN) + SiLU for this C3 tile ----------------
    xb = x_ref[...].astype(cdt)
    if x_channels_major:
        # x_ref: (C1, HW) native NCHW slice -> contract dim 0 of both operands,
        # result (HW, tc) is lane-dense on channels, no relayout of x needed.
        z1 = jax.lax.dot_general(
            xb, w1_ref[...], (((0,), (0,)), ((), ())),
            preferred_element_type=jnp.float32)
    else:
        # x_ref: (HW, C1) channels-last staging layout -> standard matmul.
        z1 = jnp.dot(xb, w1_ref[...], preferred_element_type=jnp.float32)
    z1 = z1 + b1_ref[...]                                   # (HW, tc) + (1, tc)
    y1_flat = (z1 * jax.nn.sigmoid(z1)).astype(cdt)         # SiLU, cast once

    # ---- three chained k x k / stride-1 / same-pad max pools ----------------
    # Separable (W pass then H pass) through -inf padded scratch buffers:
    # one store + (2r+1) shifted loads per axis; channels stay on lanes.
    ninf_w = jnp.full((H, r, tc), -jnp.inf, cdt)
    padw_ref[:, :r, :] = ninf_w
    padw_ref[:, W + r:, :] = ninf_w
    ninf_h = jnp.full((r, W, tc), -jnp.inf, cdt)
    padh_ref[:r, :, :] = ninf_h
    padh_ref[H + r:, :, :] = ninf_h

    def pool(a):  # (H, W, tc) -> (H, W, tc), window (2r+1)^2, same padding
        padw_ref[:, r:r + W, :] = a
        m = padw_ref[:, 0:W, :]
        for d in range(1, 2 * r + 1):
            m = jnp.maximum(m, padw_ref[:, d:d + W, :])
        padh_ref[r:r + H, :, :] = m
        out = padh_ref[0:H, :, :]
        for d in range(1, 2 * r + 1):
            out = jnp.maximum(out, padh_ref[d:d + H, :, :])
        return out

    y1 = y1_flat.reshape(H, W, tc)
    y2 = pool(y1)
    y3 = pool(y2)
    y4 = pool(y3)

    # ---- cv5: concat-free 4-branch matmul, accumulated over C3 tiles --------
    part = jnp.dot(y1_flat, w5_ref[0], preferred_element_type=jnp.float32)
    for i, yi in enumerate((y2, y3, y4), start=1):
        part = part + jnp.dot(yi.reshape(HW, tc), w5_ref[i],
                              preferred_element_type=jnp.float32)

    def epilogue(z_acc):
        z = z_acc + b5_ref[...]
        o_ref[...] = (z * jax.nn.sigmoid(z)).astype(o_ref.dtype)

    if n_ct == 1:
        epilogue(part)
    else:
        acc_ref = acc_scratch[0]

        @pl.when(c == 0)
        def _():
            acc_ref[...] = part

        @pl.when(c != 0)
        def _():
            acc_ref[...] = acc_ref[...] + part

        @pl.when(c == n_ct - 1)
        def _():
            epilogue(acc_ref[...])


# ---------------------------------------------------------------------------
# Wrapper
# ---------------------------------------------------------------------------
def sppelan(x, w1, bn1, w5, bn5, *, k=5, eps=BN_EPS,
            compute_dtype=jnp.bfloat16):
    """SPPELAN forward (eval-mode BatchNorm folded into the 1x1 convs).

    x:   (B, C1, H, W) NCHW (PyTorch layout)
    w1:  (C3, C1)      1x1 conv weight of cv1
    bn1: (gamma, beta, running_mean, running_var), each (C3,)
    w5:  (C2, 4*C3)    1x1 conv weight of cv5
    bn5: (gamma, beta, running_mean, running_var), each (C2,)
    Returns (B, C2, H, W) with x.dtype.
    """
    B, C1, H, W = x.shape
    C3 = w1.shape[0]
    C2 = w5.shape[0]
    HW = H * W
    r = k // 2
    cdt = compute_dtype

    # Fold eval-mode BN into the convs (no separate normalization pass).
    w1f, b1f = _fold_bn(w1, *bn1, eps=eps)              # (C3, C1), (C3,)
    w5f, b5f = _fold_bn(w5, *bn5, eps=eps)              # (C2, 4*C3), (C2,)

    # Zero-pad channels to the lane width so matmul outputs / pooled maps are
    # lane-dense (unmasked stores).  Padded channels stay exactly zero through
    # SiLU(0)=0, the max pools and the zero cv5 rows/cols, then are sliced off.
    C3p = _round_up(C3, _LANE)
    C2p = _round_up(C2, _LANE)

    w1t = jnp.zeros((C1, C3p), cdt).at[:, :C3].set(
        jnp.transpose(w1f).astype(cdt))
    b1v = jnp.zeros((1, C3p), jnp.float32).at[:, :C3].set(
        b1f.astype(jnp.float32).reshape(1, C3))

    w5r = jnp.transpose(w5f.reshape(C2, 4, C3), (1, 2, 0))        # (4, C3, C2)
    w5s = jnp.zeros((4, C3p, C2p), cdt).at[:, :C3, :C2].set(w5r.astype(cdt))
    b5v = jnp.zeros((1, C2p), jnp.float32).at[:, :C2].set(
        b5f.astype(jnp.float32).reshape(1, C2))

    tc = _pick_c3_tile(C3p, HW, jnp.dtype(cdt).itemsize)
    n_ct = C3p // tc

    scratch = [pltpu.VMEM((H, W + 2 * r, tc), cdt),     # W-pass pad buffer
               pltpu.VMEM((H + 2 * r, W, tc), cdt)]     # H-pass pad buffer
    if n_ct > 1:
        scratch.append(pltpu.VMEM((HW, C2p), jnp.float32))  # cv5 accumulator

    def _call(x_kernel, x_spec, x_channels_major):
        kernel = functools.partial(
            _sppelan_kernel, H=H, W=W, r=r, n_ct=n_ct,
            x_channels_major=x_channels_major)
        return pl.pallas_call(
            kernel,
            out_shape=jax.ShapeDtypeStruct((B, HW, C2p), cdt),
            grid=(B, n_ct),
            in_specs=[
                x_spec,                                               # x
                pl.BlockSpec((C1, tc), lambda b, c: (0, c)),          # w1 tile
                pl.BlockSpec((1, tc), lambda b, c: (0, c)),           # b1 tile
                pl.BlockSpec((4, tc, C2p), lambda b, c: (0, c, 0)),   # w5 tile
                pl.BlockSpec((1, C2p), lambda b, c: (0, 0)),          # b5
            ],
            out_specs=pl.BlockSpec((None, HW, C2p), lambda b, c: (b, 0, 0)),
            scratch_shapes=scratch,
            compiler_params=pltpu.CompilerParams(
                dimension_semantics=("parallel", "arbitrary"),
                vmem_limit_bytes=64 * 1024 * 1024),
        )(x_kernel, w1t, b1v, w5s, b5v)

    try:
        # Preferred: read x in its native NCHW (C1, HW) layout — no HBM
        # round trip just to change the input layout.
        out = _call(x.reshape(B, C1, HW),
                    pl.BlockSpec((None, C1, HW), lambda b, c: (b, 0, 0)),
                    True)
    except Exception:
        # Fallback: stage x through one XLA transpose to channels-last if the
        # transposed-LHS matmul form is not supported by this backend build.
        x_nhwc = jnp.transpose(x, (0, 2, 3, 1)).reshape(B, HW, C1).astype(cdt)
        out = _call(x_nhwc,
                    pl.BlockSpec((None, HW, C1), lambda b, c: (b, 0, 0)),
                    False)

    out = out.reshape(B, H, W, C2p)[:, :, :, :C2]
    return jnp.transpose(out, (0, 3, 1, 2)).astype(x.dtype)


# ---------------------------------------------------------------------------
# Pure-JAX reference of the PyTorch forward (eval-mode BN, explicit, unfolded)
# ---------------------------------------------------------------------------
def _reference(x, w1, bn1, w5, bn5, *, k, eps):
    def conv_bn_silu(t, w, bn):
        gamma, beta, mean, var = bn
        y = jnp.einsum('oc,bchw->bohw', w, t)
        scale = gamma * jax.lax.rsqrt(var + eps)
        y = y * scale[None, :, None, None] + (beta - mean * scale)[None, :, None, None]
        return jax.nn.silu(y)

    r = k // 2
    y1 = conv_bn_silu(x, w1, bn1)

    def pool(t):  # MaxPool2d(k, stride=1, padding=k//2) pads with -inf
        return jax.lax.reduce_window(
            t, -jnp.inf, jax.lax.max,
            (1, 1, k, k), (1, 1, 1, 1),
            padding=((0, 0), (0, 0), (r, r), (r, r)))

    y2 = pool(y1)
    y3 = pool(y2)
    y4 = pool(y3)
    cat = jnp.concatenate([y1, y2, y3, y4], axis=1)
    return conv_bn_silu(cat, w5, bn5)


if __name__ == "__main__":
    B, C1, C3, C2, H, W, K = 2, 64, 32, 64, 16, 16, 5

    key = jax.random.PRNGKey(0)
    ks = jax.random.split(key, 11)
    x = jax.random.normal(ks[0], (B, C1, H, W), jnp.float32)
    w1 = jax.random.normal(ks[1], (C3, C1), jnp.float32) / jnp.sqrt(float(C1))
    w5 = jax.random.normal(ks[2], (C2, 4 * C3), jnp.float32) / jnp.sqrt(4.0 * C3)

    g1 = 1.0 + 0.1 * jax.random.normal(ks[3], (C3,), jnp.float32)
    b1 = 0.1 * jax.random.normal(ks[4], (C3,), jnp.float32)
    m1 = 0.1 * jax.random.normal(ks[5], (C3,), jnp.float32)
    v1 = jax.random.uniform(ks[6], (C3,), jnp.float32, 0.5, 1.5)
    g5 = 1.0 + 0.1 * jax.random.normal(ks[7], (C2,), jnp.float32)
    b5 = 0.1 * jax.random.normal(ks[8], (C2,), jnp.float32)
    m5 = 0.1 * jax.random.normal(ks[9], (C2,), jnp.float32)
    v5 = jax.random.uniform(ks[10], (C2,), jnp.float32, 0.5, 1.5)

    bn1 = (g1, b1, m1, v1)
    bn5 = (g5, b5, m5, v5)

    ref = _reference(x, w1, bn1, w5, bn5, k=K, eps=BN_EPS)

    # f32 compute path: tight correctness check against the unfused reference.
    out_f32 = jax.block_until_ready(
        sppelan(x, w1, bn1, w5, bn5, k=K, compute_dtype=jnp.float32))
    assert out_f32.shape == (B, C2, H, W)
    err32 = jnp.max(jnp.abs(out_f32 - ref))
    assert jnp.allclose(out_f32, ref, atol=5e-3, rtol=5e-3), f"f32 max err {err32}"

    # Default bf16 compute path (half the intermediate HBM traffic): loose
    # sanity check — precision loss, not a logic difference.
    out_bf16 = jax.block_until_ready(sppelan(x, w1, bn1, w5, bn5, k=K))
    assert out_bf16.shape == (B, C2, H, W)
    err16 = jnp.max(jnp.abs(out_bf16 - ref))
    assert jnp.allclose(out_bf16, ref, atol=0.2, rtol=0.05), f"bf16 max err {err16}"

    print("KERNEL_OK")
</pallas_src>

<mosaic_0001>
module attributes {stable_mosaic.version = 11 : i64} {
  func.func @_sppelan_kernel(%arg0: i32, %arg1: i32, %arg2: memref<1x64x256xf32, #tpu.memory_space<vmem>>, %arg3: memref<64x128xf32, #tpu.memory_space<vmem>>, %arg4: memref<1x128xf32, #tpu.memory_space<vmem>>, %arg5: memref<4x128x128xf32, #tpu.memory_space<vmem>>, %arg6: memref<1x128xf32, #tpu.memory_space<vmem>>, %arg7: memref<1x256x128xf32, #tpu.memory_space<vmem>>, %arg8: memref<16x20x128xf32, #tpu.memory_space<vmem>>, %arg9: memref<20x16x128xf32, #tpu.memory_space<vmem>>) attributes {dimension_semantics = [#tpu.dimension_semantics<parallel>, #tpu.dimension_semantics<arbitrary>], iteration_bounds = array<i64: 2, 1>, scalar_prefetch = 0 : i64, scratch_operands = 2 : i64, tpu.core_type = #tpu.core_type<tc>, window_params = [{transform_indices = @transform_0, window_bounds = array<i64: 1, 64, 256>}, {transform_indices = @transform_1, window_bounds = array<i64: 64, 128>}, {transform_indices = @transform_2, window_bounds = array<i64: 1, 128>}, {transform_indices = @transform_3, window_bounds = array<i64: 4, 128, 128>}, {pipeline_mode = #tpu.pipeline_mode<synchronous>, transform_indices = @transform_4, window_bounds = array<i64: 1, 128>}, {transform_indices = @transform_5, window_bounds = array<i64: 1, 256, 128>}]} {
    %c0 = arith.constant 0 : index
    %c0_0 = arith.constant 0 : index
    %c0_1 = arith.constant 0 : index
    %0 = vector.load %arg2[%c0, %c0_0, %c0_1] : memref<1x64x256xf32, #tpu.memory_space<vmem>>, vector<1x64x256xf32>
    %1 = vector.shape_cast %0 : vector<1x64x256xf32> to vector<64x256xf32>
    %c0_2 = arith.constant 0 : index
    %c0_3 = arith.constant 0 : index
    %2 = vector.load %arg3[%c0_2, %c0_3] : memref<64x128xf32, #tpu.memory_space<vmem>>, vector<64x128xf32>
    %cst = arith.constant dense<0.000000e+00> : vector<256x128xf32>
    %3 = tpu.matmul %1, %2, %cst {dimension_numbers = #tpu.dot_dimension_numbers<[0], [0], [1], [1], [0, 1, 1, 1], [], []>} : vector<64x256xf32>, vector<64x128xf32>, vector<256x128xf32> -> vector<256x128xf32>
    %c0_4 = arith.constant 0 : index
    %c0_5 = arith.constant 0 : index
    %4 = vector.load %arg4[%c0_4, %c0_5] : memref<1x128xf32, #tpu.memory_space<vmem>>, vector<1x128xf32>
    %5 = vector.broadcast %4 : vector<1x128xf32> to vector<256x128xf32>
    %6 = arith.addf %3, %5 : vector<256x128xf32>
    %7 = arith.negf %6 : vector<256x128xf32>
    %8 = math.exp %7 : vector<256x128xf32>
    %cst_6 = arith.constant 1.000000e+00 : f32
    %9 = vector.broadcast %cst_6 : f32 to vector<256x128xf32>
    %10 = arith.addf %9, %8 : vector<256x128xf32>
    %11 = arith.divf %9, %10 : vector<256x128xf32>
    %12 = arith.mulf %6, %11 : vector<256x128xf32>
    %cst_7 = arith.constant 0xFF800000 : f32
    %13 = vector.broadcast %cst_7 : f32 to vector<16x2x128xf32>
    %c0_8 = arith.constant 0 : index
    %c0_9 = arith.constant 0 : index
    %c0_10 = arith.constant 0 : index
    %14 = vector.load %arg8[%c0_8, %c0_9, %c0_10] : memref<16x20x128xf32, #tpu.memory_space<vmem>>, vector<16x2x128xf32>
    tpu.vector_store %arg8[%c0_8, %c0_9, %c0_10], %13 {strides = array<i32>} : memref<16x20x128xf32, #tpu.memory_space<vmem>>, vector<16x2x128xf32>,
    %c0_11 = arith.constant 0 : index
    %c18 = arith.constant 18 : index
    %c0_12 = arith.constant 0 : index
    %15 = vector.load %arg8[%c0_11, %c18, %c0_12] : memref<16x20x128xf32, #tpu.memory_space<vmem>>, vector<16x2x128xf32>
    tpu.vector_store %arg8[%c0_11, %c18, %c0_12], %13 {strides = array<i32>} : memref<16x20x128xf32, #tpu.memory_space<vmem>>, vector<16x2x128xf32>,
    %cst_13 = arith.constant 0xFF800000 : f32
    %16 = vector.broadcast %cst_13 : f32 to vector<2x16x128xf32>
    %c0_14 = arith.constant 0 : index
    %c0_15 = arith.constant 0 : index
    %c0_16 = arith.constant 0 : index
    %17 = vector.load %arg9[%c0_14, %c0_15, %c0_16] : memref<20x16x128xf32, #tpu.memory_space<vmem>>, vector<2x16x128xf32>
    tpu.vector_store %arg9[%c0_14, %c0_15, %c0_16], %16 {strides = array<i32>} : memref<20x16x128xf32, #tpu.memory_space<vmem>>, vector<2x16x128xf32>,
    %c18_17 = arith.constant 18 : index
    %c0_18 = arith.constant 0 : index
    %c0_19 = arith.constant 0 : index
    %18 = vector.load %arg9[%c18_17, %c0_18, %c0_19] : memref<20x16x128xf32, #tpu.memory_space<vmem>>, vector<2x16x128xf32>
    tpu.vector_store %arg9[%c18_17, %c0_18, %c0_19], %16 {strides = array<i32>} : memref<20x16x128xf32, #tpu.memory_space<vmem>>, vector<2x16x128xf32>,
    %19 = vector.shape_cast %12 : vector<256x128xf32> to vector<16x16x128xf32>
    %c0_20 = arith.constant 0 : index
    %c2 = arith.constant 2 : index
    %c0_21 = arith.constant 0 : index
    %20 = vector.load %arg8[%c0_20, %c2, %c0_21] : memref<16x20x128xf32, #tpu.memory_space<vmem>>, vector<16x16x128xf32>
    tpu.vector_store %arg8[%c0_20, %c2, %c0_21], %19 {strides = array<i32>} : memref<16x20x128xf32, #tpu.memory_space<vmem>>, vector<16x16x128xf32>,
    %c0_22 = arith.constant 0 : index
    %c0_23 = arith.constant 0 : index
    %c0_24 = arith.constant 0 : index
    %21 = vector.load %arg8[%c0_22, %c0_23, %c0_24] : memref<16x20x128xf32, #tpu.memory_space<vmem>>, vector<16x16x128xf32>
    %c0_25 = arith.constant 0 : index
    %c1 = arith.constant 1 : index
    %c0_26 = arith.constant 0 : index
    %22 = vector.load %arg8[%c0_25, %c1, %c0_26] : memref<16x20x128xf32, #tpu.memory_space<vmem>>, vector<16x16x128xf32>
    %23 = arith.maximumf %21, %22 : vector<16x16x128xf32>
    %c0_27 = arith.constant 0 : index
    %c2_28 = arith.constant 2 : index
    %c0_29 = arith.constant 0 : index
    %24 = vector.load %arg8[%c0_27, %c2_28, %c0_29] : memref<16x20x128xf32, #tpu.memory_space<vmem>>, vector<16x16x128xf32>
    %25 = arith.maximumf %23, %24 : vector<16x16x128xf32>
    %c0_30 = arith.constant 0 : index
    %c3 = arith.constant 3 : index
    %c0_31 = arith.constant 0 : index
    %26 = vector.load %arg8[%c0_30, %c3, %c0_31] : memref<16x20x128xf32, #tpu.memory_space<vmem>>, vector<16x16x128xf32>
    %27 = arith.maximumf %25, %26 : vector<16x16x128xf32>
    %c0_32 = arith.constant 0 : index
    %c4 = arith.constant 4 : index
    %c0_33 = arith.constant 0 : index
    %28 = vector.load %arg8[%c0_32, %c4, %c0_33] : memref<16x20x128xf32, #tpu.memory_space<vmem>>, vector<16x16x128xf32>
    %29 = arith.maximumf %27, %28 : vector<16x16x128xf32>
    %c2_34 = arith.constant 2 : index
    %c0_35 = arith.constant 0 : index
    %c0_36 = arith.constant 0 : index
    %30 = vector.load %arg9[%c2_34, %c0_35, %c0_36] : memref<20x16x128xf32, #tpu.memory_space<vmem>>, vector<16x16x128xf32>
    tpu.vector_store %arg9[%c2_34, %c0_35, %c0_36], %29 {strides = array<i32>} : memref<20x16x128xf32, #tpu.memory_space<vmem>>, vector<16x16x128xf32>,
    %c0_37 = arith.constant 0 : index
    %c0_38 = arith.constant 0 : index
    %c0_39 = arith.constant 0 : index
    %31 = vector.load %arg9[%c0_37, %c0_38, %c0_39] : memref<20x16x128xf32, #tpu.memory_space<vmem>>, vector<16x16x128xf32>
    %c1_40 = arith.constant 1 : index
    %c0_41 = arith.constant 0 : index
    %c0_42 = arith.constant 0 : index
    %32 = vector.load %arg9[%c1_40, %c0_41, %c0_42] : memref<20x16x128xf32, #tpu.memory_space<vmem>>, vector<16x16x128xf32>
    %33 = arith.maximumf %31, %32 : vector<16x16x128xf32>
    %c2_43 = arith.constant 2 : index
    %c0_44 = arith.constant 0 : index
    %c0_45 = arith.constant 0 : index
    %34 = vector.load %arg9[%c2_43, %c0_44, %c0_45] : memref<20x16x128xf32, #tpu.memory_space<vmem>>, vector<16x16x128xf32>
    %35 = arith.maximumf %33, %34 : vector<16x16x128xf32>
    %c3_46 = arith.constant 3 : index
    %c0_47 = arith.constant 0 : index
    %c0_48 = arith.constant 0 : index
    %36 = vector.load %arg9[%c3_46, %c0_47, %c0_48] : memref<20x16x128xf32, #tpu.memory_space<vmem>>, vector<16x16x128xf32>
    %37 = arith.maximumf %35, %36 : vector<16x16x128xf32>
    %c4_49 = arith.constant 4 : index
    %c0_50 = arith.constant 0 : index
    %c0_51 = arith.constant 0 : index
    %38 = vector.load %arg9[%c4_49, %c0_50, %c0_51] : memref<20x16x128xf32, #tpu.memory_space<vmem>>, vector<16x16x128xf32>
    %39 = arith.maximumf %37, %38 : vector<16x16x128xf32>
    %c0_52 = arith.constant 0 : index
    %c2_53 = arith.constant 2 : index
    %c0_54 = arith.constant 0 : index
    %40 = vector.load %arg8[%c0_52, %c2_53, %c0_54] : memref<16x20x128xf32, #tpu.memory_space<vmem>>, vector<16x16x128xf32>
    tpu.vector_store %arg8[%c0_52, %c2_53, %c0_54], %39 {strides = array<i32>} : memref<16x20x128xf32, #tpu.memory_space<vmem>>, vector<16x16x128xf32>,
    %c0_55 = arith.constant 0 : index
    %c0_56 = arith.constant 0 : index
    %c0_57 = arith.constant 0 : index
    %41 = vector.load %arg8[%c0_55, %c0_56, %c0_57] : memref<16x20x128xf32, #tpu.memory_space<vmem>>, vector<16x16x128xf32>
    %c0_58 = arith.constant 0 : index
    %c1_59 = arith.constant 1 : index
    %c0_60 = arith.constant 0 : index
    %42 = vector.load %arg8[%c0_58, %c1_59, %c0_60] : memref<16x20x128xf32, #tpu.memory_space<vmem>>, vector<16x16x128xf32>
    %43 = arith.maximumf %41, %42 : vector<16x16x128xf32>
    %c0_61 = arith.constant 0 : index
    %c2_62 = arith.constant 2 : index
    %c0_63 = arith.constant 0 : index
    %44 = vector.load %arg8[%c0_61, %c2_62, %c0_63] : memref<16x20x128xf32, #tpu.memory_space<vmem>>, vector<16x16x128xf32>
    %45 = arith.maximumf %43, %44 : vector<16x16x128xf32>
    %c0_64 = arith.constant 0 : index
    %c3_65 = arith.constant 3 : index
    %c0_66 = arith.constant 0 : index
    %46 = vector.load %arg8[%c0_64, %c3_65, %c0_66] : memref<16x20x128xf32, #tpu.memory_space<vmem>>, vector<16x16x128xf32>
    %47 = arith.maximumf %45, %46 : vector<16x16x128xf32>
    %c0_67 = arith.constant 0 : index
    %c4_68 = arith.constant 4 : index
    %c0_69 = arith.constant 0 : index
    %48 = vector.load %arg8[%c0_67, %c4_68, %c0_69] : memref<16x20x128xf32, #tpu.memory_space<vmem>>, vector<16x16x128xf32>
    %49 = arith.maximumf %47, %48 : vector<16x16x128xf32>
    %c2_70 = arith.constant 2 : index
    %c0_71 = arith.constant 0 : index
    %c0_72 = arith.constant 0 : index
    %50 = vector.load %arg9[%c2_70, %c0_71, %c0_72] : memref<20x16x128xf32, #tpu.memory_space<vmem>>, vector<16x16x128xf32>
    tpu.vector_store %arg9[%c2_70, %c0_71, %c0_72], %49 {strides = array<i32>} : memref<20x16x128xf32, #tpu.memory_space<vmem>>, vector<16x16x128xf32>,
    %c0_73 = arith.constant 0 : index
    %c0_74 = arith.constant 0 : index
    %c0_75 = arith.constant 0 : index
    %51 = vector.load %arg9[%c0_73, %c0_74, %c0_75] : memref<20x16x128xf32, #tpu.memory_space<vmem>>, vector<16x16x128xf32>
    %c1_76 = arith.constant 1 : index
    %c0_77 = arith.constant 0 : index
    %c0_78 = arith.constant 0 : index
    %52 = vector.load %arg9[%c1_76, %c0_77, %c0_78] : memref<20x16x128xf32, #tpu.memory_space<vmem>>, vector<16x16x128xf32>
    %53 = arith.maximumf %51, %52 : vector<16x16x128xf32>
    %c2_79 = arith.constant 2 : index
    %c0_80 = arith.constant 0 : index
    %c0_81 = arith.constant 0 : index
    %54 = vector.load %arg9[%c2_79, %c0_80, %c0_81] : memref<20x16x128xf32, #tpu.memory_space<vmem>>, vector<16x16x128xf32>
    %55 = arith.maximumf %53, %54 : vector<16x16x128xf32>
    %c3_82 = arith.constant 3 : index
    %c0_83 = arith.constant 0 : index
    %c0_84 = arith.constant 0 : index
    %56 = vector.load %arg9[%c3_82, %c0_83, %c0_84] : memref<20x16x128xf32, #tpu.memory_space<vmem>>, vector<16x16x128xf32>
    %57 = arith.maximumf %55, %56 : vector<16x16x128xf32>
    %c4_85 = arith.constant 4 : index
    %c0_86 = arith.constant 0 : index
    %c0_87 = arith.constant 0 : index
    %58 = vector.load %arg9[%c4_85, %c0_86, %c0_87] : memref<20x16x128xf32, #tpu.memory_space<vmem>>, vector<16x16x128xf32>
    %59 = arith.maximumf %57, %58 : vector<16x16x128xf32>
    %c0_88 = arith.constant 0 : index
    %c2_89 = arith.constant 2 : index
    %c0_90 = arith.constant 0 : index
    %60 = vector.load %arg8[%c0_88, %c2_89, %c0_90] : memref<16x20x128xf32, #tpu.memory_space<vmem>>, vector<16x16x128xf32>
    tpu.vector_store %arg8[%c0_88, %c2_89, %c0_90], %59 {strides = array<i32>} : memref<16x20x128xf32, #tpu.memory_space<vmem>>, vector<16x16x128xf32>,
    %c0_91 = arith.constant 0 : index
    %c0_92 = arith.constant 0 : index
    %c0_93 = arith.constant 0 : index
    %61 = vector.load %arg8[%c0_91, %c0_92, %c0_93] : memref<16x20x128xf32, #tpu.memory_space<vmem>>, vector<16x16x128xf32>
    %c0_94 = arith.constant 0 : index
    %c1_95 = arith.constant 1 : index
    %c0_96 = arith.constant 0 : index
    %62 = vector.load %arg8[%c0_94, %c1_95, %c0_96] : memref<16x20x128xf32, #tpu.memory_space<vmem>>, vector<16x16x128xf32>
    %63 = arith.maximumf %61, %62 : vector<16x16x128xf32>
    %c0_97 = arith.constant 0 : index
    %c2_98 = arith.constant 2 : index
    %c0_99 = arith.constant 0 : index
    %64 = vector.load %arg8[%c0_97, %c2_98, %c0_99] : memref<16x20x128xf32, #tpu.memory_space<vmem>>, vector<16x16x128xf32>
    %65 = arith.maximumf %63, %64 : vector<16x16x128xf32>
    %c0_100 = arith.constant 0 : index
    %c3_101 = arith.constant 3 : index
    %c0_102 = arith.constant 0 : index
    %66 = vector.load %arg8[%c0_100, %c3_101, %c0_102] : memref<16x20x128xf32, #tpu.memory_space<vmem>>, vector<16x16x128xf32>
    %67 = arith.maximumf %65, %66 : vector<16x16x128xf32>
    %c0_103 = arith.constant 0 : index
    %c4_104 = arith.constant 4 : index
    %c0_105 = arith.constant 0 : index
    %68 = vector.load %arg8[%c0_103, %c4_104, %c0_105] : memref<16x20x128xf32, #tpu.memory_space<vmem>>, vector<16x16x128xf32>
    %69 = arith.maximumf %67, %68 : vector<16x16x128xf32>
    %c2_106 = arith.constant 2 : index
    %c0_107 = arith.constant 0 : index
    %c0_108 = arith.constant 0 : index
    %70 = vector.load %arg9[%c2_106, %c0_107, %c0_108] : memref<20x16x128xf32, #tpu.memory_space<vmem>>, vector<16x16x128xf32>
    tpu.vector_store %arg9[%c2_106, %c0_107, %c0_108], %69 {strides = array<i32>} : memref<20x16x128xf32, #tpu.memory_space<vmem>>, vector<16x16x128xf32>,
    %c0_109 = arith.constant 0 : index
    %c0_110 = arith.constant 0 : index
    %c0_111 = arith.constant 0 : index
    %71 = vector.load %arg9[%c0_109, %c0_110, %c0_111] : memref<20x16x128xf32, #tpu.memory_space<vmem>>, vector<16x16x128xf32>
    %c1_112 = arith.constant 1 : index
    %c0_113 = arith.constant 0 : index
    %c0_114 = arith.constant 0 : index
    %72 = vector.load %arg9[%c1_112, %c0_113, %c0_114] : memref<20x16x128xf32, #tpu.memory_space<vmem>>, vector<16x16x128xf32>
    %73 = arith.maximumf %71, %72 : vector<16x16x128xf32>
    %c2_115 = arith.constant 2 : index
    %c0_116 = arith.constant 0 : index
    %c0_117 = arith.constant 0 : index
    %74 = vector.load %arg9[%c2_115, %c0_116, %c0_117] : memref<20x16x128xf32, #tpu.memory_space<vmem>>, vector<16x16x128xf32>
    %75 = arith.maximumf %73, %74 : vector<16x16x128xf32>
    %c3_118 = arith.constant 3 : index
    %c0_119 = arith.constant 0 : index
    %c0_120 = arith.constant 0 : index
    %76 = vector.load %arg9[%c3_118, %c0_119, %c0_120] : memref<20x16x128xf32, #tpu.memory_space<vmem>>, vector<16x16x128xf32>
    %77 = arith.maximumf %75, %76 : vector<16x16x128xf32>
    %c4_121 = arith.constant 4 : index
    %c0_122 = arith.constant 0 : index
    %c0_123 = arith.constant 0 : index
    %78 = vector.load %arg9[%c4_121, %c0_122, %c0_123] : memref<20x16x128xf32, #tpu.memory_space<vmem>>, vector<16x16x128xf32>
    %79 = arith.maximumf %77, %78 : vector<16x16x128xf32>
    %c0_124 = arith.constant 0 : index
    %c0_125 = arith.constant 0 : index
    %c0_126 = arith.constant 0 : index
    %80 = vector.load %arg5[%c0_124, %c0_125, %c0_126] : memref<4x128x128xf32, #tpu.memory_space<vmem>>, vector<1x128x128xf32>
    %81 = vector.shape_cast %80 : vector<1x128x128xf32> to vector<128x128xf32>
    %cst_127 = arith.constant dense<0.000000e+00> : vector<256x128xf32>
    %82 = tpu.matmul %12, %81, %cst_127 {dimension_numbers = #tpu.dot_dimension_numbers<[1], [0], [0], [1], [0, 0, 1, 1], [], []>} : vector<256x128xf32>, vector<128x128xf32>, vector<256x128xf32> -> vector<256x128xf32>
    %83 = vector.shape_cast %39 : vector<16x16x128xf32> to vector<256x128xf32>
    %c1_128 = arith.constant 1 : index
    %c0_129 = arith.constant 0 : index
    %c0_130 = arith.constant 0 : index
    %84 = vector.load %arg5[%c1_128, %c0_129, %c0_130] : memref<4x128x128xf32, #tpu.memory_space<vmem>>, vector<1x128x128xf32>
    %85 = vector.shape_cast %84 : vector<1x128x128xf32> to vector<128x128xf32>
    %cst_131 = arith.constant dense<0.000000e+00> : vector<256x128xf32>
    %86 = tpu.matmul %83, %85, %cst_131 {dimension_numbers = #tpu.dot_dimension_numbers<[1], [0], [0], [1], [0, 0, 1, 1], [], []>} : vector<256x128xf32>, vector<128x128xf32>, vector<256x128xf32> -> vector<256x128xf32>
    %87 = arith.addf %82, %86 : vector<256x128xf32>
    %88 = vector.shape_cast %59 : vector<16x16x128xf32> to vector<256x128xf32>
    %c2_132 = arith.constant 2 : index
    %c0_133 = arith.constant 0 : index
    %c0_134 = arith.constant 0 : index
    %89 = vector.load %arg5[%c2_132, %c0_133, %c0_134] : memref<4x128x128xf32, #tpu.memory_space<vmem>>, vector<1x128x128xf32>
    %90 = vector.shape_cast %89 : vector<1x128x128xf32> to vector<128x128xf32>
    %cst_135 = arith.constant dense<0.000000e+00> : vector<256x128xf32>
    %91 = tpu.matmul %88, %90, %cst_135 {dimension_numbers = #tpu.dot_dimension_numbers<[1], [0], [0], [1], [0, 0, 1, 1], [], []>} : vector<256x128xf32>, vector<128x128xf32>, vector<256x128xf32> -> vector<256x128xf32>
    %92 = arith.addf %87, %91 : vector<256x128xf32>
    %93 = vector.shape_cast %79 : vector<16x16x128xf32> to vector<256x128xf32>
    %c3_136 = arith.constant 3 : index
    %c0_137 = arith.constant 0 : index
    %c0_138 = arith.constant 0 : index
    %94 = vector.load %arg5[%c3_136, %c0_137, %c0_138] : memref<4x128x128xf32, #tpu.memory_space<vmem>>, vector<1x128x128xf32>
    %95 = vector.shape_cast %94 : vector<1x128x128xf32> to vector<128x128xf32>
    %cst_139 = arith.constant dense<0.000000e+00> : vector<256x128xf32>
    %96 = tpu.matmul %93, %95, %cst_139 {dimension_numbers = #tpu.dot_dimension_numbers<[1], [0], [0], [1], [0, 0, 1, 1], [], []>} : vector<256x128xf32>, vector<128x128xf32>, vector<256x128xf32> -> vector<256x128xf32>
    %97 = arith.addf %92, %96 : vector<256x128xf32>
    %c0_140 = arith.constant 0 : index
    %c0_141 = arith.constant 0 : index
    %98 = vector.load %arg6[%c0_140, %c0_141] : memref<1x128xf32, #tpu.memory_space<vmem>>, vector<1x128xf32>
    %99 = vector.broadcast %98 : vector<1x128xf32> to vector<256x128xf32>
    %100 = arith.addf %97, %99 : vector<256x128xf32>
    %101 = arith.negf %100 : vector<256x128xf32>
    %102 = math.exp %101 : vector<256x128xf32>
    %cst_142 = arith.constant 1.000000e+00 : f32
    %103 = vector.broadcast %cst_142 : f32 to vector<256x128xf32>
    %104 = arith.addf %103, %102 : vector<256x128xf32>
    %105 = arith.divf %103, %104 : vector<256x128xf32>
    %106 = arith.mulf %100, %105 : vector<256x128xf32>
    %c0_143 = arith.constant 0 : index
    %c0_144 = arith.constant 0 : index
    %c0_145 = arith.constant 0 : index
    %107 = vector.load %arg7[%c0_143, %c0_144, %c0_145] : memref<1x256x128xf32, #tpu.memory_space<vmem>>, vector<1x256x128xf32>
    %108 = vector.shape_cast %107 : vector<1x256x128xf32> to vector<256x128xf32>
    %109 = vector.shape_cast %106 : vector<256x128xf32> to vector<1x256x128xf32>
    tpu.vector_store %arg7[%c0_143, %c0_144, %c0_145], %109 {strides = array<i32>} : memref<1x256x128xf32, #tpu.memory_space<vmem>>, vector<1x256x128xf32>,
    return
  }
  func.func @transform_0(%arg0: i32, %arg1: i32) -> (i32, i32, i32) {
    %c0_i32 = arith.constant 0 : i32
    %c0_i32_0 = arith.constant 0 : i32
    %c0_i32_1 = arith.constant 0 : i32
    return %arg0, %c0_i32, %c0_i32_0 : i32, i32, i32
  }
  func.func @transform_1(%arg0: i32, %arg1: i32) -> (i32, i32) {
    %c0_i32 = arith.constant 0 : i32
    %c0_i32_0 = arith.constant 0 : i32
    return %c0_i32, %arg1 : i32, i32
  }
  func.func @transform_2(%arg0: i32, %arg1: i32) -> (i32, i32) {
    %c0_i32 = arith.constant 0 : i32
    %c0_i32_0 = arith.constant 0 : i32
    return %c0_i32, %arg1 : i32, i32
  }
  func.func @transform_3(%arg0: i32, %arg1: i32) -> (i32, i32, i32) {
    %c0_i32 = arith.constant 0 : i32
    %c0_i32_0 = arith.constant 0 : i32
    %c0_i32_1 = arith.constant 0 : i32
    return %c0_i32, %arg1, %c0_i32_0 : i32, i32, i32
  }
  func.func @transform_4(%arg0: i32, %arg1: i32) -> (i32, i32) {
    %c0_i32 = arith.constant 0 : i32
    %c0_i32_0 = arith.constant 0 : i32
    %c0_i32_1 = arith.constant 0 : i32
    return %c0_i32, %c0_i32_0 : i32, i32
  }
  func.func @transform_5(%arg0: i32, %arg1: i32) -> (i32, i32, i32) {
    %c0_i32 = arith.constant 0 : i32
    %c0_i32_0 = arith.constant 0 : i32
    %c0_i32_1 = arith.constant 0 : i32
    return %arg0, %c0_i32, %c0_i32_0 : i32, i32, i32
  }
}

module attributes {stable_mosaic.version = 11 : i64} {
  func.func @_sppelan_kernel(%arg0: i32, %arg1: i32, %arg2: memref<1x256x64xf32, #tpu.memory_space<vmem>>, %arg3: memref<64x128xf32, #tpu.memory_space<vmem>>, %arg4: memref<1x128xf32, #tpu.memory_space<vmem>>, %arg5: memref<4x128x128xf32, #tpu.memory_space<vmem>>, %arg6: memref<1x128xf32, #tpu.memory_space<vmem>>, %arg7: memref<1x256x128xf32, #tpu.memory_space<vmem>>, %arg8: memref<16x20x128xf32, #tpu.memory_space<vmem>>, %arg9: memref<20x16x128xf32, #tpu.memory_space<vmem>>) attributes {dimension_semantics = [#tpu.dimension_semantics<parallel>, #tpu.dimension_semantics<arbitrary>], iteration_bounds = array<i64: 2, 1>, scalar_prefetch = 0 : i64, scratch_operands = 2 : i64, tpu.core_type = #tpu.core_type<tc>, window_params = [{transform_indices = @transform_0, window_bounds = array<i64: 1, 256, 64>}, {transform_indices = @transform_1, window_bounds = array<i64: 64, 128>}, {transform_indices = @transform_2, window_bounds = array<i64: 1, 128>}, {transform_indices = @transform_3, window_bounds = array<i64: 4, 128, 128>}, {pipeline_mode = #tpu.pipeline_mode<synchronous>, transform_indices = @transform_4, window_bounds = array<i64: 1, 128>}, {transform_indices = @transform_5, window_bounds = array<i64: 1, 256, 128>}]} {
    %c0 = arith.constant 0 : index
    %c0_0 = arith.constant 0 : index
    %c0_1 = arith.constant 0 : index
    %0 = vector.load %arg2[%c0, %c0_0, %c0_1] : memref<1x256x64xf32, #tpu.memory_space<vmem>>, vector<1x256x64xf32>
    %1 = vector.shape_cast %0 : vector<1x256x64xf32> to vector<256x64xf32>
    %c0_2 = arith.constant 0 : index
    %c0_3 = arith.constant 0 : index
    %2 = vector.load %arg3[%c0_2, %c0_3] : memref<64x128xf32, #tpu.memory_space<vmem>>, vector<64x128xf32>
    %cst = arith.constant dense<0.000000e+00> : vector<256x128xf32>
    %3 = tpu.matmul %1, %2, %cst {dimension_numbers = #tpu.dot_dimension_numbers<[1], [0], [0], [1], [0, 0, 1, 1], [], []>} : vector<256x64xf32>, vector<64x128xf32>, vector<256x128xf32> -> vector<256x128xf32>
    %c0_4 = arith.constant 0 : index
    %c0_5 = arith.constant 0 : index
    %4 = vector.load %arg4[%c0_4, %c0_5] : memref<1x128xf32, #tpu.memory_space<vmem>>, vector<1x128xf32>
    %5 = vector.broadcast %4 : vector<1x128xf32> to vector<256x128xf32>
    %6 = arith.addf %3, %5 : vector<256x128xf32>
    %7 = arith.negf %6 : vector<256x128xf32>
    %8 = math.exp %7 : vector<256x128xf32>
    %cst_6 = arith.constant 1.000000e+00 : f32
    %9 = vector.broadcast %cst_6 : f32 to vector<256x128xf32>
    %10 = arith.addf %9, %8 : vector<256x128xf32>
    %11 = arith.divf %9, %10 : vector<256x128xf32>
    %12 = arith.mulf %6, %11 : vector<256x128xf32>
    %cst_7 = arith.constant 0xFF800000 : f32
    %13 = vector.broadcast %cst_7 : f32 to vector<16x2x128xf32>
    %c0_8 = arith.constant 0 : index
    %c0_9 = arith.constant 0 : index
    %c0_10 = arith.constant 0 : index
    %14 = vector.load %arg8[%c0_8, %c0_9, %c0_10] : memref<16x20x128xf32, #tpu.memory_space<vmem>>, vector<16x2x128xf32>
    tpu.vector_store %arg8[%c0_8, %c0_9, %c0_10], %13 {strides = array<i32>} : memref<16x20x128xf32, #tpu.memory_space<vmem>>, vector<16x2x128xf32>,
    %c0_11 = arith.constant 0 : index
    %c18 = arith.constant 18 : index
    %c0_12 = arith.constant 0 : index
    %15 = vector.load %arg8[%c0_11, %c18, %c0_12] : memref<16x20x128xf32, #tpu.memory_space<vmem>>, vector<16x2x128xf32>
    tpu.vector_store %arg8[%c0_11, %c18, %c0_12], %13 {strides = array<i32>} : memref<16x20x128xf32, #tpu.memory_space<vmem>>, vector<16x2x128xf32>,
    %cst_13 = arith.constant 0xFF800000 : f32
    %16 = vector.broadcast %cst_13 : f32 to vector<2x16x128xf32>
    %c0_14 = arith.constant 0 : index
    %c0_15 = arith.constant 0 : index
    %c0_16 = arith.constant 0 : index
    %17 = vector.load %arg9[%c0_14, %c0_15, %c0_16] : memref<20x16x128xf32, #tpu.memory_space<vmem>>, vector<2x16x128xf32>
    tpu.vector_store %arg9[%c0_14, %c0_15, %c0_16], %16 {strides = array<i32>} : memref<20x16x128xf32, #tpu.memory_space<vmem>>, vector<2x16x128xf32>,
    %c18_17 = arith.constant 18 : index
    %c0_18 = arith.constant 0 : index
    %c0_19 = arith.constant 0 : index
    %18 = vector.load %arg9[%c18_17, %c0_18, %c0_19] : memref<20x16x128xf32, #tpu.memory_space<vmem>>, vector<2x16x128xf32>
    tpu.vector_store %arg9[%c18_17, %c0_18, %c0_19], %16 {strides = array<i32>} : memref<20x16x128xf32, #tpu.memory_space<vmem>>, vector<2x16x128xf32>,
    %19 = vector.shape_cast %12 : vector<256x128xf32> to vector<16x16x128xf32>
    %c0_20 = arith.constant 0 : index
    %c2 = arith.constant 2 : index
    %c0_21 = arith.constant 0 : index
    %20 = vector.load %arg8[%c0_20, %c2, %c0_21] : memref<16x20x128xf32, #tpu.memory_space<vmem>>, vector<16x16x128xf32>
    tpu.vector_store %arg8[%c0_20, %c2, %c0_21], %19 {strides = array<i32>} : memref<16x20x128xf32, #tpu.memory_space<vmem>>, vector<16x16x128xf32>,
    %c0_22 = arith.constant 0 : index
    %c0_23 = arith.constant 0 : index
    %c0_24 = arith.constant 0 : index
    %21 = vector.load %arg8[%c0_22, %c0_23, %c0_24] : memref<16x20x128xf32, #tpu.memory_space<vmem>>, vector<16x16x128xf32>
    %c0_25 = arith.constant 0 : index
    %c1 = arith.constant 1 : index
    %c0_26 = arith.constant 0 : index
    %22 = vector.load %arg8[%c0_25, %c1, %c0_26] : memref<16x20x128xf32, #tpu.memory_space<vmem>>, vector<16x16x128xf32>
    %23 = arith.maximumf %21, %22 : vector<16x16x128xf32>
    %c0_27 = arith.constant 0 : index
    %c2_28 = arith.constant 2 : index
    %c0_29 = arith.constant 0 : index
    %24 = vector.load %arg8[%c0_27, %c2_28, %c0_29] : memref<16x20x128xf32, #tpu.memory_space<vmem>>, vector<16x16x128xf32>
    %25 = arith.maximumf %23, %24 : vector<16x16x128xf32>
    %c0_30 = arith.constant 0 : index
    %c3 = arith.constant 3 : index
    %c0_31 = arith.constant 0 : index
    %26 = vector.load %arg8[%c0_30, %c3, %c0_31] : memref<16x20x128xf32, #tpu.memory_space<vmem>>, vector<16x16x128xf32>
    %27 = arith.maximumf %25, %26 : vector<16x16x128xf32>
    %c0_32 = arith.constant 0 : index
    %c4 = arith.constant 4 : index
    %c0_33 = arith.constant 0 : index
    %28 = vector.load %arg8[%c0_32, %c4, %c0_33] : memref<16x20x128xf32, #tpu.memory_space<vmem>>, vector<16x16x128xf32>
    %29 = arith.maximumf %27, %28 : vector<16x16x128xf32>
    %c2_34 = arith.constant 2 : index
    %c0_35 = arith.constant 0 : index
    %c0_36 = arith.constant 0 : index
    %30 = vector.load %arg9[%c2_34, %c0_35, %c0_36] : memref<20x16x128xf32, #tpu.memory_space<vmem>>, vector<16x16x128xf32>
    tpu.vector_store %arg9[%c2_34, %c0_35, %c0_36], %29 {strides = array<i32>} : memref<20x16x128xf32, #tpu.memory_space<vmem>>, vector<16x16x128xf32>,
    %c0_37 = arith.constant 0 : index
    %c0_38 = arith.constant 0 : index
    %c0_39 = arith.constant 0 : index
    %31 = vector.load %arg9[%c0_37, %c0_38, %c0_39] : memref<20x16x128xf32, #tpu.memory_space<vmem>>, vector<16x16x128xf32>
    %c1_40 = arith.constant 1 : index
    %c0_41 = arith.constant 0 : index
    %c0_42 = arith.constant 0 : index
    %32 = vector.load %arg9[%c1_40, %c0_41, %c0_42] : memref<20x16x128xf32, #tpu.memory_space<vmem>>, vector<16x16x128xf32>
    %33 = arith.maximumf %31, %32 : vector<16x16x128xf32>
    %c2_43 = arith.constant 2 : index
    %c0_44 = arith.constant 0 : index
    %c0_45 = arith.constant 0 : index
    %34 = vector.load %arg9[%c2_43, %c0_44, %c0_45] : memref<20x16x128xf32, #tpu.memory_space<vmem>>, vector<16x16x128xf32>
    %35 = arith.maximumf %33, %34 : vector<16x16x128xf32>
    %c3_46 = arith.constant 3 : index
    %c0_47 = arith.constant 0 : index
    %c0_48 = arith.constant 0 : index
    %36 = vector.load %arg9[%c3_46, %c0_47, %c0_48] : memref<20x16x128xf32, #tpu.memory_space<vmem>>, vector<16x16x128xf32>
    %37 = arith.maximumf %35, %36 : vector<16x16x128xf32>
    %c4_49 = arith.constant 4 : index
    %c0_50 = arith.constant 0 : index
    %c0_51 = arith.constant 0 : index
    %38 = vector.load %arg9[%c4_49, %c0_50, %c0_51] : memref<20x16x128xf32, #tpu.memory_space<vmem>>, vector<16x16x128xf32>
    %39 = arith.maximumf %37, %38 : vector<16x16x128xf32>
    %c0_52 = arith.constant 0 : index
    %c2_53 = arith.constant 2 : index
    %c0_54 = arith.constant 0 : index
    %40 = vector.load %arg8[%c0_52, %c2_53, %c0_54] : memref<16x20x128xf32, #tpu.memory_space<vmem>>, vector<16x16x128xf32>
    tpu.vector_store %arg8[%c0_52, %c2_53, %c0_54], %39 {strides = array<i32>} : memref<16x20x128xf32, #tpu.memory_space<vmem>>, vector<16x16x128xf32>,
    %c0_55 = arith.constant 0 : index
    %c0_56 = arith.constant 0 : index
    %c0_57 = arith.constant 0 : index
    %41 = vector.load %arg8[%c0_55, %c0_56, %c0_57] : memref<16x20x128xf32, #tpu.memory_space<vmem>>, vector<16x16x128xf32>
    %c0_58 = arith.constant 0 : index
    %c1_59 = arith.constant 1 : index
    %c0_60 = arith.constant 0 : index
    %42 = vector.load %arg8[%c0_58, %c1_59, %c0_60] : memref<16x20x128xf32, #tpu.memory_space<vmem>>, vector<16x16x128xf32>
    %43 = arith.maximumf %41, %42 : vector<16x16x128xf32>
    %c0_61 = arith.constant 0 : index
    %c2_62 = arith.constant 2 : index
    %c0_63 = arith.constant 0 : index
    %44 = vector.load %arg8[%c0_61, %c2_62, %c0_63] : memref<16x20x128xf32, #tpu.memory_space<vmem>>, vector<16x16x128xf32>
    %45 = arith.maximumf %43, %44 : vector<16x16x128xf32>
    %c0_64 = arith.constant 0 : index
    %c3_65 = arith.constant 3 : index
    %c0_66 = arith.constant 0 : index
    %46 = vector.load %arg8[%c0_64, %c3_65, %c0_66] : memref<16x20x128xf32, #tpu.memory_space<vmem>>, vector<16x16x128xf32>
    %47 = arith.maximumf %45, %46 : vector<16x16x128xf32>
    %c0_67 = arith.constant 0 : index
    %c4_68 = arith.constant 4 : index
    %c0_69 = arith.constant 0 : index
    %48 = vector.load %arg8[%c0_67, %c4_68, %c0_69] : memref<16x20x128xf32, #tpu.memory_space<vmem>>, vector<16x16x128xf32>
    %49 = arith.maximumf %47, %48 : vector<16x16x128xf32>
    %c2_70 = arith.constant 2 : index
    %c0_71 = arith.constant 0 : index
    %c0_72 = arith.constant 0 : index
    %50 = vector.load %arg9[%c2_70, %c0_71, %c0_72] : memref<20x16x128xf32, #tpu.memory_space<vmem>>, vector<16x16x128xf32>
    tpu.vector_store %arg9[%c2_70, %c0_71, %c0_72], %49 {strides = array<i32>} : memref<20x16x128xf32, #tpu.memory_space<vmem>>, vector<16x16x128xf32>,
    %c0_73 = arith.constant 0 : index
    %c0_74 = arith.constant 0 : index
    %c0_75 = arith.constant 0 : index
    %51 = vector.load %arg9[%c0_73, %c0_74, %c0_75] : memref<20x16x128xf32, #tpu.memory_space<vmem>>, vector<16x16x128xf32>
    %c1_76 = arith.constant 1 : index
    %c0_77 = arith.constant 0 : index
    %c0_78 = arith.constant 0 : index
    %52 = vector.load %arg9[%c1_76, %c0_77, %c0_78] : memref<20x16x128xf32, #tpu.memory_space<vmem>>, vector<16x16x128xf32>
    %53 = arith.maximumf %51, %52 : vector<16x16x128xf32>
    %c2_79 = arith.constant 2 : index
    %c0_80 = arith.constant 0 : index
    %c0_81 = arith.constant 0 : index
    %54 = vector.load %arg9[%c2_79, %c0_80, %c0_81] : memref<20x16x128xf32, #tpu.memory_space<vmem>>, vector<16x16x128xf32>
    %55 = arith.maximumf %53, %54 : vector<16x16x128xf32>
    %c3_82 = arith.constant 3 : index
    %c0_83 = arith.constant 0 : index
    %c0_84 = arith.constant 0 : index
    %56 = vector.load %arg9[%c3_82, %c0_83, %c0_84] : memref<20x16x128xf32, #tpu.memory_space<vmem>>, vector<16x16x128xf32>
    %57 = arith.maximumf %55, %56 : vector<16x16x128xf32>
    %c4_85 = arith.constant 4 : index
    %c0_86 = arith.constant 0 : index
    %c0_87 = arith.constant 0 : index
    %58 = vector.load %arg9[%c4_85, %c0_86, %c0_87] : memref<20x16x128xf32, #tpu.memory_space<vmem>>, vector<16x16x128xf32>
    %59 = arith.maximumf %57, %58 : vector<16x16x128xf32>
    %c0_88 = arith.constant 0 : index
    %c2_89 = arith.constant 2 : index
    %c0_90 = arith.constant 0 : index
    %60 = vector.load %arg8[%c0_88, %c2_89, %c0_90] : memref<16x20x128xf32, #tpu.memory_space<vmem>>, vector<16x16x128xf32>
    tpu.vector_store %arg8[%c0_88, %c2_89, %c0_90], %59 {strides = array<i32>} : memref<16x20x128xf32, #tpu.memory_space<vmem>>, vector<16x16x128xf32>,
    %c0_91 = arith.constant 0 : index
    %c0_92 = arith.constant 0 : index
    %c0_93 = arith.constant 0 : index
    %61 = vector.load %arg8[%c0_91, %c0_92, %c0_93] : memref<16x20x128xf32, #tpu.memory_space<vmem>>, vector<16x16x128xf32>
    %c0_94 = arith.constant 0 : index
    %c1_95 = arith.constant 1 : index
    %c0_96 = arith.constant 0 : index
    %62 = vector.load %arg8[%c0_94, %c1_95, %c0_96] : memref<16x20x128xf32, #tpu.memory_space<vmem>>, vector<16x16x128xf32>
    %63 = arith.maximumf %61, %62 : vector<16x16x128xf32>
    %c0_97 = arith.constant 0 : index
    %c2_98 = arith.constant 2 : index
    %c0_99 = arith.constant 0 : index
    %64 = vector.load %arg8[%c0_97, %c2_98, %c0_99] : memref<16x20x128xf32, #tpu.memory_space<vmem>>, vector<16x16x128xf32>
    %65 = arith.maximumf %63, %64 : vector<16x16x128xf32>
    %c0_100 = arith.constant 0 : index
    %c3_101 = arith.constant 3 : index
    %c0_102 = arith.constant 0 : index
    %66 = vector.load %arg8[%c0_100, %c3_101, %c0_102] : memref<16x20x128xf32, #tpu.memory_space<vmem>>, vector<16x16x128xf32>
    %67 = arith.maximumf %65, %66 : vector<16x16x128xf32>
    %c0_103 = arith.constant 0 : index
    %c4_104 = arith.constant 4 : index
    %c0_105 = arith.constant 0 : index
    %68 = vector.load %arg8[%c0_103, %c4_104, %c0_105] : memref<16x20x128xf32, #tpu.memory_space<vmem>>, vector<16x16x128xf32>
    %69 = arith.maximumf %67, %68 : vector<16x16x128xf32>
    %c2_106 = arith.constant 2 : index
    %c0_107 = arith.constant 0 : index
    %c0_108 = arith.constant 0 : index
    %70 = vector.load %arg9[%c2_106, %c0_107, %c0_108] : memref<20x16x128xf32, #tpu.memory_space<vmem>>, vector<16x16x128xf32>
    tpu.vector_store %arg9[%c2_106, %c0_107, %c0_108], %69 {strides = array<i32>} : memref<20x16x128xf32, #tpu.memory_space<vmem>>, vector<16x16x128xf32>,
    %c0_109 = arith.constant 0 : index
    %c0_110 = arith.constant 0 : index
    %c0_111 = arith.constant 0 : index
    %71 = vector.load %arg9[%c0_109, %c0_110, %c0_111] : memref<20x16x128xf32, #tpu.memory_space<vmem>>, vector<16x16x128xf32>
    %c1_112 = arith.constant 1 : index
    %c0_113 = arith.constant 0 : index
    %c0_114 = arith.constant 0 : index
    %72 = vector.load %arg9[%c1_112, %c0_113, %c0_114] : memref<20x16x128xf32, #tpu.memory_space<vmem>>, vector<16x16x128xf32>
    %73 = arith.maximumf %71, %72 : vector<16x16x128xf32>
    %c2_115 = arith.constant 2 : index
    %c0_116 = arith.constant 0 : index
    %c0_117 = arith.constant 0 : index
    %74 = vector.load %arg9[%c2_115, %c0_116, %c0_117] : memref<20x16x128xf32, #tpu.memory_space<vmem>>, vector<16x16x128xf32>
    %75 = arith.maximumf %73, %74 : vector<16x16x128xf32>
    %c3_118 = arith.constant 3 : index
    %c0_119 = arith.constant 0 : index
    %c0_120 = arith.constant 0 : index
    %76 = vector.load %arg9[%c3_118, %c0_119, %c0_120] : memref<20x16x128xf32, #tpu.memory_space<vmem>>, vector<16x16x128xf32>
    %77 = arith.maximumf %75, %76 : vector<16x16x128xf32>
    %c4_121 = arith.constant 4 : index
    %c0_122 = arith.constant 0 : index
    %c0_123 = arith.constant 0 : index
    %78 = vector.load %arg9[%c4_121, %c0_122, %c0_123] : memref<20x16x128xf32, #tpu.memory_space<vmem>>, vector<16x16x128xf32>
    %79 = arith.maximumf %77, %78 : vector<16x16x128xf32>
    %c0_124 = arith.constant 0 : index
    %c0_125 = arith.constant 0 : index
    %c0_126 = arith.constant 0 : index
    %80 = vector.load %arg5[%c0_124, %c0_125, %c0_126] : memref<4x128x128xf32, #tpu.memory_space<vmem>>, vector<1x128x128xf32>
    %81 = vector.shape_cast %80 : vector<1x128x128xf32> to vector<128x128xf32>
    %cst_127 = arith.constant dense<0.000000e+00> : vector<256x128xf32>
    %82 = tpu.matmul %12, %81, %cst_127 {dimension_numbers = #tpu.dot_dimension_numbers<[1], [0], [0], [1], [0, 0, 1, 1], [], []>} : vector<256x128xf32>, vector<128x128xf32>, vector<256x128xf32> -> vector<256x128xf32>
    %83 = vector.shape_cast %39 : vector<16x16x128xf32> to vector<256x128xf32>
    %c1_128 = arith.constant 1 : index
    %c0_129 = arith.constant 0 : index
    %c0_130 = arith.constant 0 : index
    %84 = vector.load %arg5[%c1_128, %c0_129, %c0_130] : memref<4x128x128xf32, #tpu.memory_space<vmem>>, vector<1x128x128xf32>
    %85 = vector.shape_cast %84 : vector<1x128x128xf32> to vector<128x128xf32>
    %cst_131 = arith.constant dense<0.000000e+00> : vector<256x128xf32>
    %86 = tpu.matmul %83, %85, %cst_131 {dimension_numbers = #tpu.dot_dimension_numbers<[1], [0], [0], [1], [0, 0, 1, 1], [], []>} : vector<256x128xf32>, vector<128x128xf32>, vector<256x128xf32> -> vector<256x128xf32>
    %87 = arith.addf %82, %86 : vector<256x128xf32>
    %88 = vector.shape_cast %59 : vector<16x16x128xf32> to vector<256x128xf32>
    %c2_132 = arith.constant 2 : index
    %c0_133 = arith.constant 0 : index
    %c0_134 = arith.constant 0 : index
    %89 = vector.load %arg5[%c2_132, %c0_133, %c0_134] : memref<4x128x128xf32, #tpu.memory_space<vmem>>, vector<1x128x128xf32>
    %90 = vector.shape_cast %89 : vector<1x128x128xf32> to vector<128x128xf32>
    %cst_135 = arith.constant dense<0.000000e+00> : vector<256x128xf32>
    %91 = tpu.matmul %88, %90, %cst_135 {dimension_numbers = #tpu.dot_dimension_numbers<[1], [0], [0], [1], [0, 0, 1, 1], [], []>} : vector<256x128xf32>, vector<128x128xf32>, vector<256x128xf32> -> vector<256x128xf32>
    %92 = arith.addf %87, %91 : vector<256x128xf32>
    %93 = vector.shape_cast %79 : vector<16x16x128xf32> to vector<256x128xf32>
    %c3_136 = arith.constant 3 : index
    %c0_137 = arith.constant 0 : index
    %c0_138 = arith.constant 0 : index
    %94 = vector.load %arg5[%c3_136, %c0_137, %c0_138] : memref<4x128x128xf32, #tpu.memory_space<vmem>>, vector<1x128x128xf32>
    %95 = vector.shape_cast %94 : vector<1x128x128xf32> to vector<128x128xf32>
    %cst_139 = arith.constant dense<0.000000e+00> : vector<256x128xf32>
    %96 = tpu.matmul %93, %95, %cst_139 {dimension_numbers = #tpu.dot_dimension_numbers<[1], [0], [0], [1], [0, 0, 1, 1], [], []>} : vector<256x128xf32>, vector<128x128xf32>, vector<256x128xf32> -> vector<256x128xf32>
    %97 = arith.addf %92, %96 : vector<256x128xf32>
    %c0_140 = arith.constant 0 : index
    %c0_141 = arith.constant 0 : index
    %98 = vector.load %arg6[%c0_140, %c0_141] : memref<1x128xf32, #tpu.memory_space<vmem>>, vector<1x128xf32>
    %99 = vector.broadcast %98 : vector<1x128xf32> to vector<256x128xf32>
    %100 = arith.addf %97, %99 : vector<256x128xf32>
    %101 = arith.negf %100 : vector<256x128xf32>
    %102 = math.exp %101 : vector<256x128xf32>
    %cst_142 = arith.constant 1.000000e+00 : f32
    %103 = vector.broadcast %cst_142 : f32 to vector<256x128xf32>
    %104 = arith.addf %103, %102 : vector<256x128xf32>
    %105 = arith.divf %103, %104 : vector<256x128xf32>
    %106 = arith.mulf %100, %105 : vector<256x128xf32>
    %c0_143 = arith.constant 0 : index
    %c0_144 = arith.constant 0 : index
    %c0_145 = arith.constant 0 : index
    %107 = vector.load %arg7[%c0_143, %c0_144, %c0_145] : memref<1x256x128xf32, #tpu.memory_space<vmem>>, vector<1x256x128xf32>
    %108 = vector.shape_cast %107 : vector<1x256x128xf32> to vector<256x128xf32>
    %109 = vector.shape_cast %106 : vector<256x128xf32> to vector<1x256x128xf32>
    tpu.vector_store %arg7[%c0_143, %c0_144, %c0_145], %109 {strides = array<i32>} : memref<1x256x128xf32, #tpu.memory_space<vmem>>, vector<1x256x128xf32>,
    return
  }
  func.func @transform_0(%arg0: i32, %arg1: i32) -> (i32, i32, i32) {
    %c0_i32 = arith.constant 0 : i32
    %c0_i32_0 = arith.constant 0 : i32
    %c0_i32_1 = arith.constant 0 : i32
    return %arg0, %c0_i32, %c0_i32_0 : i32, i32, i32
  }
  func.func @transform_1(%arg0: i32, %arg1: i32) -> (i32, i32) {
    %c0_i32 = arith.constant 0 : i32
    %c0_i32_0 = arith.constant 0 : i32
    return %c0_i32, %arg1 : i32, i32
  }
  func.func @transform_2(%arg0: i32, %arg1: i32) -> (i32, i32) {
    %c0_i32 = arith.constant 0 : i32
    %c0_i32_0 = arith.constant 0 : i32
    return %c0_i32, %arg1 : i32, i32
  }
  func.func @transform_3(%arg0: i32, %arg1: i32) -> (i32, i32, i32) {
    %c0_i32 = arith.constant 0 : i32
    %c0_i32_0 = arith.constant 0 : i32
    %c0_i32_1 = arith.constant 0 : i32
    return %c0_i32, %arg1, %c0_i32_0 : i32, i32, i32
  }
  func.func @transform_4(%arg0: i32, %arg1: i32) -> (i32, i32) {
    %c0_i32 = arith.constant 0 : i32
    %c0_i32_0 = arith.constant 0 : i32
    %c0_i32_1 = arith.constant 0 : i32
    return %c0_i32, %c0_i32_0 : i32, i32
  }
  func.func @transform_5(%arg0: i32, %arg1: i32) -> (i32, i32, i32) {
    %c0_i32 = arith.constant 0 : i32
    %c0_i32_0 = arith.constant 0 : i32
    %c0_i32_1 = arith.constant 0 : i32
    return %arg0, %c0_i32, %c0_i32_0 : i32, i32, i32
  }
}

</mosaic_0001>

<llo_original>
// kernel: tpu_custom_call.1
$region0: #{tpu_custom_call.1}
  #allocation0 [shape = 'u32[]', space=smem, size = 0x4, offset = 0x4, fixed_abs, tag = 'smem constant byte address 0x4 - core index']
  #allocation1 [shape = 'u32[144,128]{1,0:T(1,128)}', space=vmem, size = 0x12000, scoped, tag = 'internal scratch']
  #allocation2 [shape = 'f32[16,20,128]{2,1,0:T(8,128)}', space=vmem, size = 0x30000, scoped, tag = 'scratch operand']
  #allocation3 [shape = 'f32[20,16,128]{2,1,0:T(8,128)}', space=vmem, size = 0x28000, scoped, tag = 'scratch operand']
  %s0 = inlined_call_operand.hbm [shape: f32[2,64,256], index: 0, kind: input, shape index: {}]
  %s1 = inlined_call_operand.hbm [shape: f32[64,128], index: 1, kind: input, shape index: {}]
  %s2 = inlined_call_operand.vmem [shape: f32[1,128], index: 2, kind: input, shape index: {}]
  %s3 = inlined_call_operand.hbm [shape: f32[4,128,128], index: 3, kind: input, shape index: {}]
  %s4 = inlined_call_operand.vmem [shape: f32[1,128], index: 4, kind: input, shape index: {}]
  %s5 = inlined_call_operand.hbm [shape: f32[2,256,128], index: 5, kind: output, shape index: {}]
  %s6 = sld [smem:[#allocation0]]
  $region65: #{tpu_custom_call.1} parent=0
    _
  %s8 = ssub.s32 1, %s6
  %s9 = scalar_select 0, %s8, %s6
  $region1: #{tpu_custom_call.1} parent=0
    #allocation4 [shape = 'u8[131072]{0}', space=vmem, size = 0x20000, scoped, tag = 'input window, operand 0']
    #allocation5 [shape = 's32[2]{0}', space=sflag, size = 0x8, scoped, tag = 'scoped memory for tpu_custom_call.1']
    #allocation6 [shape = 's32[2]{0}', space=sflag, size = 0x8, scoped, tag = 'scoped memory for tpu_custom_call.1']
    #allocation7 [shape = 'u8[32768]{0}', space=vmem, size = 0x8000, scoped, tag = 'input window, operand 1, single buffered']
    #allocation8 [shape = 's32[1]{0}', space=sflag, size = 0x4, scoped, tag = 'scoped memory for tpu_custom_call.1']
    #allocation9 [shape = 'u8[262144]{0}', space=vmem, size = 0x40000, scoped, tag = 'input window, operand 3, single buffered']
    #allocation10 [shape = 'u8[262144]{0}', space=vmem, size = 0x40000, scoped, tag = 'output window, operand 0']
    %10 = vsyncpa [#allocation5], 0
    %s11 = scalar_lea.sflag [#allocation5], 1
    %12 = vsyncpa %s11, 0
    %13 = vsyncpa [#allocation8], 0
    %14 = vsyncpa [#allocation6], 0
    %s15 = scalar_lea.sflag [#allocation6], 1
    %16 = vsyncpa %s15, 0
    loop: start=0, step=1, limit=4
    $region2: #{tpu_custom_call.1} parent=1 // loop_pre_header
      _
    $region3: #{tpu_custom_call.1} parent=1 // loop_header
      %s18 = sphi 0, %s22
      %p19 = scmp.ge.s32.totalorder %s18, 4
      %s25 = sphi 0, %s37
      %s26 = sphi 0, %s33
      %s27 = sphi 0, %s25
      %s28 = sphi 0, %s26
      %s29 = sphi 0, %s27
      %s30 = sphi 0, %s28
      %s40 = sphi 0, %s42
      %s43 = sphi 0, %s40
      %s44 = sphi 0, %s43
      %s60 = sphi 0, %s44
      %s66 = sphi 0, %s68
      %s69 = sphi 0, %s66
      %s70 = sphi 0, %s69
      %s86 = sphi 0, %s70
      %s92 = sphi 0, %s94
      %s95 = sphi 0, %s92
      %s96 = sphi 0, %s95
      %s112 = sphi 0, %s96
      %s118 = sphi 0, %s120
      %s121 = sphi 0, %s118
      %s122 = sphi 0, %s121
      %s138 = sphi 0, %s122
      %s142 = sphi 0, %s142
      %s144 = sphi 0, %s142
      %s145 = sphi 0, %s144
      %s159 = sphi 0, %s145
      %s165 = sphi 0, %s167
      %s168 = sphi 0, %s165
      %s169 = sphi 0, %s168
      %s185 = sphi 0, %s169
    $region4: #{tpu_custom_call.1} parent=1 // loop_header_branch
      %21 = sbr.rel (%p19) target = $region8
    $region5: #{tpu_custom_call.1} parent=1 // loop_body
      %s23 = ssub.s32 %s18, 1
      %s24 = ssub.s32 %s18, 2
      %s31 = sadd.s32 1, %s26
      %p32 = scmp.ge.s32.totalorder %s31, 1
      %s33 = scalar_select %p32, 0, %s31
      %s34 = sadd.s32 1, %s25
      %s35 = scalar_select %p32, %s34, %s25
      %p36 = scmp.ge.s32.totalorder %s35, 2
      %s37 = scalar_select %p36, 0, %s35
      %s38 = ssub.s32 %s25, %s37
      %p39 = scmp.eq.s32.totalorder %s38, 0
      %s41 = sadd.s32 %s40, 1
      %s42 = scalar_select %p39, %s40, %s41
      %p45 = pneg %p39
      %p46 = scmp.eq.s32.totalorder %s18, 1
      %p47 = por %p45, %p46
      %p48 = scmp.ne.s32.totalorder %s40, %s43
      %p49 = scmp.eq.s32.totalorder %s18, 0
      %p50 = por %p48, %p49
      %p51 = scmp.ne.s32.totalorder %s40, %s43
      %p52 = scmp.eq.s32.totalorder %s23, 1
      %p53 = por %p51, %p52
      %p54 = scmp.ne.s32.totalorder %s43, %s44
      %p55 = scmp.eq.s32.totalorder %s23, 0
      %p56 = por %p54, %p55
      %p57 = scmp.ne.s32.totalorder %s43, %s44
      %p58 = scmp.eq.s32.totalorder %s24, 1
      %p59 = por %p57, %p58
      %p61 = scmp.ne.s32.totalorder %s44, %s60
      %p62 = scmp.eq.s32.totalorder %s24, 0
      %p63 = por %p61, %p62
      %s64 = ssub.s32 %s26, %s33
      %p65 = scmp.eq.s32.totalorder %s64, 0
      %s67 = sadd.s32 %s66, 1
      %s68 = scalar_select %p65, %s66, %s67
      %p71 = pneg %p65
      %p72 = scmp.eq.s32.totalorder %s18, 1
      %p73 = por %p71, %p72
      %p74 = scmp.ne.s32.totalorder %s66, %s69
      %p75 = scmp.eq.s32.totalorder %s18, 0
      %p76 = por %p74, %p75
      %p77 = scmp.ne.s32.totalorder %s66, %s69
      %p78 = scmp.eq.s32.totalorder %s23, 1
      %p79 = por %p77, %p78
      %p80 = scmp.ne.s32.totalorder %s69, %s70
      %p81 = scmp.eq.s32.totalorder %s23, 0
      %p82 = por %p80, %p81
      %p83 = scmp.ne.s32.totalorder %s69, %s70
      %p84 = scmp.eq.s32.totalorder %s24, 1
      %p85 = por %p83, %p84
      %p87 = scmp.ne.s32.totalorder %s70, %s86
      %p88 = scmp.eq.s32.totalorder %s24, 0
      %p89 = por %p87, %p88
      %s90 = ssub.s32 %s26, %s33
      %p91 = scmp.eq.s32.totalorder %s90, 0
      %s93 = sadd.s32 %s92, 1
      %s94 = scalar_select %p91, %s92, %s93
      %p97 = pneg %p91
      %p98 = scmp.eq.s32.totalorder %s18, 1
      %p99 = por %p97, %p98
      %p100 = scmp.ne.s32.totalorder %s92, %s95
      %p101 = scmp.eq.s32.totalorder %s18, 0
      %p102 = por %p100, %p101
      %p103 = scmp.ne.s32.totalorder %s92, %s95
      %p104 = scmp.eq.s32.totalorder %s23, 1
      %p105 = por %p103, %p104
      %p106 = scmp.ne.s32.totalorder %s95, %s96
      %p107 = scmp.eq.s32.totalorder %s23, 0
      %p108 = por %p106, %p107
      %p109 = scmp.ne.s32.totalorder %s95, %s96
      %p110 = scmp.eq.s32.totalorder %s24, 1
      %p111 = por %p109, %p110
      %p113 = scmp.ne.s32.totalorder %s96, %s112
      %p114 = scmp.eq.s32.totalorder %s24, 0
      %p115 = por %p113, %p114
      %s116 = ssub.s32 %s26, %s33
      %p117 = scmp.eq.s32.totalorder %s116, 0
      %s119 = sadd.s32 %s118, 1
      %s120 = scalar_select %p117, %s118, %s119
      %p123 = pneg %p117
      %p124 = scmp.eq.s32.totalorder %s18, 1
      %p125 = por %p123, %p124
      %p126 = scmp.ne.s32.totalorder %s118, %s121
      %p127 = scmp.eq.s32.totalorder %s18, 0
      %p128 = por %p126, %p127
      %p129 = scmp.ne.s32.totalorder %s118, %s121
      %p130 = scmp.eq.s32.totalorder %s23, 1
      %p131 = por %p129, %p130
      %p132 = scmp.ne.s32.totalorder %s121, %s122
      %p133 = scmp.eq.s32.totalorder %s23, 0
      %p134 = por %p132, %p133
      %p135 = scmp.ne.s32.totalorder %s121, %s122
      %p136 = scmp.eq.s32.totalorder %s24, 1
      %p137 = por %p135, %p136
      %p139 = scmp.ne.s32.totalorder %s122, %s138
      %p140 = scmp.eq.s32.totalorder %s24, 0
      %p141 = por %p139, %p140
      %s143 = sadd.s32 %s142, 1
      %p146 = scmp.eq.s32.totalorder %s18, 1
      %p147 = scmp.ne.s32.totalorder %s142, %s144
      %p148 = scmp.eq.s32.totalorder %s18, 0
      %p149 = por %p147, %p148
      %p150 = scmp.ne.s32.totalorder %s142, %s144
      %p151 = scmp.eq.s32.totalorder %s23, 1
      %p152 = por %p150, %p151
      %p153 = scmp.ne.s32.totalorder %s144, %s145
      %p154 = scmp.eq.s32.totalorder %s23, 0
      %p155 = por %p153, %p154
      %p156 = scmp.ne.s32.totalorder %s144, %s145
      %p157 = scmp.eq.s32.totalorder %s24, 1
      %p158 = por %p156, %p157
      %p160 = scmp.ne.s32.totalorder %s145, %s159
      %p161 = scmp.eq.s32.totalorder %s24, 0
      %p162 = por %p160, %p161
      %s163 = ssub.s32 %s25, %s37
      %p164 = scmp.eq.s32.totalorder %s163, 0
      %s166 = sadd.s32 %s165, 1
      %s167 = scalar_select %p164, %s165, %s166
      %p170 = pneg %p164
      %p171 = scmp.eq.s32.totalorder %s18, 1
      %p172 = por %p170, %p171
      %p173 = scmp.ne.s32.totalorder %s165, %s168
      %p174 = scmp.eq.s32.totalorder %s18, 0
      %p175 = por %p173, %p174
      %p176 = scmp.ne.s32.totalorder %s165, %s168
      %p177 = scmp.eq.s32.totalorder %s23, 1
      %p178 = por %p176, %p177
      %p179 = scmp.ne.s32.totalorder %s168, %s169
      %p180 = scmp.eq.s32.totalorder %s23, 0
      %p181 = por %p179, %p180
      %p182 = scmp.ne.s32.totalorder %s168, %s169
      %p183 = scmp.eq.s32.totalorder %s24, 1
      %p184 = por %p182, %p183
      %p186 = scmp.ne.s32.totalorder %s169, %s185
      %p187 = scmp.eq.s32.totalorder %s24, 0
      %p188 = por %p186, %p187
      %p189 = scmp.le.s32.totalorder 1, %s18
      %p190 = scmp.lt.s32.totalorder %s18, 3
      %p191 = pnand %p189, %p190
      %p192 = pneg %p191
      // Predicated region
      $region9: #{tpu_custom_call.1} parent=5 // pred_check
        _
      $region10: #{tpu_custom_call.1} parent=5 // pred_check_branch
        %194 = sbr.rel (%p191) target = $region12
      $region11: #{tpu_custom_call.1} parent=5 // pred_region
        %s195 = ssub.s32 %s18, 1
        // Predicated region
        $region13: #{tpu_custom_call.1} parent=11 // pred_check
          %p196 = pneg %p82
        $region14: #{tpu_custom_call.1} parent=11 // pred_check_branch
          %198 = sbr.rel (%p196) target = $region16
        $region15: #{tpu_custom_call.1} parent=11 // pred_region
          %s200 = ssub.s32 1024, 1024
          %201 = vsyncadd [#allocation8], %s200
          %s202 = smul.addr %s28, 128
          %s203 = scalar_lea.hbm %s1, %s202
          %s204 = sshll.u32 [#allocation7], 4
          %s205 = int_to_ptr.vmem [resolvable:$true] %s204
          %210 = dma.hbm_to_vmem [thread:$0]  %s203, 1024, %s205, [#allocation8], 128, 128, 8
        $region16: #{tpu_custom_call.1} parent=11 // pred_fallthru
          _
        // Predicated region
        $region17: #{tpu_custom_call.1} parent=11 // pred_check
          %p211 = pneg %p108
        $region18: #{tpu_custom_call.1} parent=11 // pred_check_branch
          %213 = sbr.rel (%p211) target = $region20
        $region19: #{tpu_custom_call.1} parent=11 // pred_region
          %p214 = scmp.lt.s32.totalorder %s28, 0
          %s215 = scalar_select %p214, %s28, 0
          %s216 = scalar_lea.vmem %s2, %s215
        $region20: #{tpu_custom_call.1} parent=11 // pred_fallthru
          _
        // Predicated region
        $region21: #{tpu_custom_call.1} parent=11 // pred_check
          %p217 = pneg %p134
        $region22: #{tpu_custom_call.1} parent=11 // pred_check_branch
          %219 = sbr.rel (%p217) target = $region24
        $region23: #{tpu_custom_call.1} parent=11 // pred_region
          %s220 = smul.u32 16, %s28
          %s222 = ssub.s32 8192, 8192
          %223 = vsyncadd [#allocation8], %s222
          %s224 = smul.addr %s220, 128
          %s225 = scalar_lea.hbm %s3, %s224
          %s226 = sshll.u32 [#allocation9], 4
          %s227 = int_to_ptr.vmem [resolvable:$true] %s226
          %232 = dma.hbm_to_vmem [thread:$0]  %s225, 8192, %s227, [#allocation8], 128, 128, 8
        $region24: #{tpu_custom_call.1} parent=11 // pred_fallthru
          _
        // Predicated region
        $region25: #{tpu_custom_call.1} parent=11 // pred_check
          %p233 = pneg %p155
        $region26: #{tpu_custom_call.1} parent=11 // pred_check_branch
          %235 = sbr.rel (%p233) target = $region28
        $region27: #{tpu_custom_call.1} parent=11 // pred_region
          _
        $region28: #{tpu_custom_call.1} parent=11 // pred_fallthru
          _
      $region12: #{tpu_custom_call.1} parent=5 // pred_fallthru
        _
      %p236 = scmp.lt.s32.totalorder %s18, 2
      // Predicated region
      $region29: #{tpu_custom_call.1} parent=5 // pred_check
        %p237 = pneg %p236
      $region30: #{tpu_custom_call.1} parent=5 // pred_check_branch
        %239 = sbr.rel (%p237) target = $region32
      $region31: #{tpu_custom_call.1} parent=5 // pred_region
        // Predicated region
        $region33: #{tpu_custom_call.1} parent=31 // pred_check
          %p240 = pneg %p50
        $region34: #{tpu_custom_call.1} parent=31 // pred_check_branch
          %242 = sbr.rel (%p240) target = $region36
        $region35: #{tpu_custom_call.1} parent=31 // pred_region
          %s243 = sand.u32 %s40, 1
          %s244 = scalar_lea.sflag [#allocation5], %s243
          %s245 = sand.u32 %s40, 1
          %s246 = smul.addr %s245, 128
          %s247 = scalar_lea.vmem [#allocation4], %s246
          %s249 = ssub.s32 2048, 2048
          %250 = vsyncadd %s244, %s249
          %s251 = smul.addr %s25, 16
          %s252 = smul.addr %s251, 128
          %s253 = scalar_lea.hbm %s0, %s252
          %s254 = sshll.u32 %s247, 4
          %s255 = int_to_ptr.vmem [resolvable:$true] %s254
          %260 = dma.hbm_to_vmem [thread:$0]  %s253, 2048, %s255, %s244, 256, 256, 16
        $region36: #{tpu_custom_call.1} parent=31 // pred_fallthru
          _
      $region32: #{tpu_custom_call.1} parent=5 // pred_fallthru
        _
      %p261 = scmp.le.s32.totalorder 1, %s18
      %p262 = scmp.lt.s32.totalorder %s18, 3
      %p263 = pnand %p261, %p262
      %p264 = pneg %p263
      // Predicated region
      $region37: #{tpu_custom_call.1} parent=5 // pred_check
        _
      $region38: #{tpu_custom_call.1} parent=5 // pred_check_branch
        %266 = sbr.rel (%p263) target = $region40
      $region39: #{tpu_custom_call.1} parent=5 // pred_region
        %s267 = ssub.s32 %s18, 1
        %s268 = sand.u32 %s43, 1
        %s269 = scalar_lea.sflag [#allocation5], %s268
        %s270 = sand.u32 %s43, 1
        %s271 = smul.addr %s270, 128
        %s272 = scalar_lea.vmem [#allocation4], %s271
        // Predicated region
        $region41: #{tpu_custom_call.1} parent=39 // pred_check
          %p273 = pneg %p56
        $region42: #{tpu_custom_call.1} parent=39 // pred_check_branch
          %275 = sbr.rel (%p273) target = $region44
        $region43: #{tpu_custom_call.1} parent=39 // pred_region
          %276 = dma.done %s269, 2048
        $region44: #{tpu_custom_call.1} parent=39 // pred_fallthru
          _
        // Predicated region
        $region45: #{tpu_custom_call.1} parent=39 // pred_check
          %p277 = pneg %p82
        $region46: #{tpu_custom_call.1} parent=39 // pred_check_branch
          %279 = sbr.rel (%p277) target = $region48
        $region47: #{tpu_custom_call.1} parent=39 // pred_region
          %280 = dma.done [#allocation8], 1024
        $region48: #{tpu_custom_call.1} parent=39 // pred_fallthru
          _
        // Predicated region
        $region49: #{tpu_custom_call.1} parent=39 // pred_check
          %p281 = pneg %p134
        $region50: #{tpu_custom_call.1} parent=39 // pred_check_branch
          %283 = sbr.rel (%p281) target = $region52
        $region51: #{tpu_custom_call.1} parent=39 // pred_region
          %284 = dma.done [#allocation8], 8192
        $region52: #{tpu_custom_call.1} parent=39 // pred_fallthru
          _
        %s285 = sand.u32 %s43, 1
        %s286 = scalar_lea.sflag [#allocation5], %s285
        %s287 = sand.u32 %s43, 1
        %s288 = smul.addr %s287, 128
        %s289 = scalar_lea.vmem [#allocation4], %s288
        %p290 = pneg %p56
        %p291 = pneg %p53
        %p292 = pneg %p82
        %p293 = pneg %p79
        %p294 = scmp.lt.s32.totalorder %s28, 0
        %s295 = scalar_select %p294, %s28, 0
        %s296 = scalar_lea.vmem %s2, %s295
        %p297 = pneg %p108
        %p298 = pneg %p105
        %p299 = pneg %p134
        %p300 = pneg %p131
        %p301 = pneg %p155
        %p302 = pneg %p152
        %p303 = pneg %p181
        %p304 = pneg %p178
        %s305 = sand.u32 %s168, 1
        %s306 = scalar_lea.sflag [#allocation6], %s305
        %s307 = sand.u32 %s168, 1
        %s308 = smul.addr %s307, 256
        %s309 = scalar_lea.vmem [#allocation10], %s308
        %p310 = scmp.lt.s32.totalorder %s28, 0
        %s311 = scalar_select %p310, %s28, 0
        %s312 = scalar_lea.vmem %s2, %s311
        %s313 = smul.u32 16, %s28
        %v314 = vld [vmem:[%s272] sm:$0xff]
        %v315 = vld [vmem:[%s272 + $0x8] sm:$0xff]
        %v316 = vld [vmem:[%s272 + $0x10] sm:$0xff]
        %v317 = vld [vmem:[%s272 + $0x18] sm:$0xff]
        %v318 = vld [vmem:[%s272 + $0x20] sm:$0xff]
        %v319 = vld [vmem:[%s272 + $0x28] sm:$0xff]
        %v320 = vld [vmem:[%s272 + $0x30] sm:$0xff]
        %v321 = vld [vmem:[%s272 + $0x38] sm:$0xff]
        %v322 = vld [vmem:[%s272 + $0x40] sm:$0xff]
        %v323 = vld [vmem:[%s272 + $0x48] sm:$0xff]
        %v324 = vld [vmem:[%s272 + $0x50] sm:$0xff]
        %v325 = vld [vmem:[%s272 + $0x58] sm:$0xff]
        %v326 = vld [vmem:[%s272 + $0x60] sm:$0xff]
        %v327 = vld [vmem:[%s272 + $0x68] sm:$0xff]
        %v328 = vld [vmem:[%s272 + $0x70] sm:$0xff]
        %v329 = vld [vmem:[%s272 + $0x78] sm:$0xff]
        %v330 = vld [vmem:[#allocation7] sm:$0xff]
        %v331 = vld [vmem:[#allocation7 + $0x8] sm:$0xff]
        %v332 = vld [vmem:[#allocation7 + $0x10] sm:$0xff]
        %v333 = vld [vmem:[#allocation7 + $0x18] sm:$0xff]
        %v334 = vld [vmem:[#allocation7 + $0x20] sm:$0xff]
        %v335 = vld [vmem:[#allocation7 + $0x28] sm:$0xff]
        %v336 = vld [vmem:[#allocation7 + $0x30] sm:$0xff]
        %v337 = vld [vmem:[#allocation7 + $0x38] sm:$0xff]
        %v338 = vld [vmem:[%s312] sm:$0x1]
        %v340 = vlaneseq
        %v341 = vshrl.u32 %v340, 7
        %v342 = vsub.s32 0, %v341
        %v343 = vrot.slane %v338, %v342
        %345 = vxpose.xlu0.b32.start [1/16] %v314, 128
        %346 = vxpose.xlu0.b32.cont [2/16] %v316, 128
        %347 = vxpose.xlu0.b32.cont [3/16] %v318, 128
        %348 = vxpose.xlu0.b32.cont [4/16] %v320, 128
        %349 = vxpose.xlu0.b32.cont [5/16] %v322, 128
        %350 = vxpose.xlu0.b32.cont [6/16] %v324, 128
        %351 = vxpose.xlu0.b32.cont [7/16] %v326, 128
        %352 = vxpose.xlu0.b32.cont [8/16] %v328, 128
        %353 = vxpose.xlu0.b32.cont [9/16] 0.0, 128
        %354 = vxpose.xlu0.b32.cont [10/16] 0.0, 128
        %355 = vxpose.xlu0.b32.cont [11/16] 0.0, 128
        %356 = vxpose.xlu0.b32.cont [12/16] 0.0, 128
        %357 = vxpose.xlu0.b32.cont [13/16] 0.0, 128
        %358 = vxpose.xlu0.b32.cont [14/16] 0.0, 128
        %359 = vxpose.xlu0.b32.cont [15/16] 0.0, 128
        %360 = vxpose.xlu0.b32.end [16/16] 0.0, 128
        %v361 = vpop.trf.xlu0
        %v362 = vpop.trf.xlu0
        %v363 = vpop.trf.xlu0
        %v364 = vpop.trf.xlu0
        %v365 = vpop.trf.xlu0
        %v366 = vpop.trf.xlu0
        %v367 = vpop.trf.xlu0
        %v368 = vpop.trf.xlu0
        %v369 = vpop.trf.xlu0
        %v370 = vpop.trf.xlu0
        %v371 = vpop.trf.xlu0
        %v372 = vpop.trf.xlu0
        %v373 = vpop.trf.xlu0
        %v374 = vpop.trf.xlu0
        %v375 = vpop.trf.xlu0
        %v376 = vpop.trf.xlu0
        %377 = vxpose.xlu0.b32.start [1/16] %v315, 128
        %378 = vxpose.xlu0.b32.cont [2/16] %v317, 128
        %379 = vxpose.xlu0.b32.cont [3/16] %v319, 128
        %380 = vxpose.xlu0.b32.cont [4/16] %v321, 128
        %381 = vxpose.xlu0.b32.cont [5/16] %v323, 128
        %382 = vxpose.xlu0.b32.cont [6/16] %v325, 128
        %383 = vxpose.xlu0.b32.cont [7/16] %v327, 128
        %384 = vxpose.xlu0.b32.cont [8/16] %v329, 128
        %385 = vxpose.xlu0.b32.cont [9/16] 0.0, 128
        %386 = vxpose.xlu0.b32.cont [10/16] 0.0, 128
        %387 = vxpose.xlu0.b32.cont [11/16] 0.0, 128
        %388 = vxpose.xlu0.b32.cont [12/16] 0.0, 128
        %389 = vxpose.xlu0.b32.cont [13/16] 0.0, 128
        %390 = vxpose.xlu0.b32.cont [14/16] 0.0, 128
        %391 = vxpose.xlu0.b32.cont [15/16] 0.0, 128
        %392 = vxpose.xlu0.b32.end [16/16] 0.0, 128
        %v393 = vpop.trf.xlu0
        %v394 = vpop.trf.xlu0
        %v395 = vpop.trf.xlu0
        %v396 = vpop.trf.xlu0
        %v397 = vpop.trf.xlu0
        %v398 = vpop.trf.xlu0
        %v399 = vpop.trf.xlu0
        %v400 = vpop.trf.xlu0
        %v401 = vpop.trf.xlu0
        %v402 = vpop.trf.xlu0
        %v403 = vpop.trf.xlu0
        %v404 = vpop.trf.xlu0
        %v405 = vpop.trf.xlu0
        %v406 = vpop.trf.xlu0
        %v407 = vpop.trf.xlu0
        %v408 = vpop.trf.xlu0
        %vm409 = vcmask 523264
        %v411 = vsel %vm409, %v361, 0
        %v414 = vsel %vm409, %v362, 0
        %v417 = vsel %vm409, %v363, 0
        %v420 = vsel %vm409, %v364, 0
        %v423 = vsel %vm409, %v365, 0
        %v426 = vsel %vm409, %v366, 0
        %v429 = vsel %vm409, %v367, 0
        %v432 = vsel %vm409, %v368, 0
        %v435 = vsel %vm409, %v369, 0
        %v438 = vsel %vm409, %v370, 0
        %v441 = vsel %vm409, %v371, 0
        %v444 = vsel %vm409, %v372, 0
        %v447 = vsel %vm409, %v373, 0
        %v450 = vsel %vm409, %v374, 0
        %v453 = vsel %vm409, %v375, 0
        %v456 = vsel %vm409, %v376, 0
        %v459 = vsel %vm409, %v393, 0
        %v462 = vsel %vm409, %v394, 0
        %v465 = vsel %vm409, %v395, 0
        %v468 = vsel %vm409, %v396, 0
        %v471 = vsel %vm409, %v397, 0
        %v474 = vsel %vm409, %v398, 0
        %v477 = vsel %vm409, %v399, 0
        %v480 = vsel %vm409, %v400, 0
        %v483 = vsel %vm409, %v401, 0
        %v486 = vsel %vm409, %v402, 0
        %v489 = vsel %vm409, %v403, 0
        %v492 = vsel %vm409, %v404, 0
        %v495 = vsel %vm409, %v405, 0
        %v498 = vsel %vm409, %v406, 0
        %v501 = vsel %vm409, %v407, 0
        %v504 = vsel %vm409, %v408, 0
        %506 = vmatprep.subr.mxu0 0.0
        %507 = vmatpush1.msra.mxu0 0.0
        %508 = vmatprep.subr.mxu0 0.0
        %509 = vmatpush1.msra.mxu0 0.0
        %510 = vmatprep.subr.mxu0 0.0
        %511 = vmatpush1.msra.mxu0 0.0
        %512 = vmatprep.subr.mxu0 0.0
        %513 = vmatpush1.msra.mxu0 0.0
        %514 = vmatprep.subr.mxu0 0.0
        %515 = vmatpush1.msra.mxu0 0.0
        %516 = vmatprep.subr.mxu0 0.0
        %517 = vmatpush1.msra.mxu0 0.0
        %518 = vmatprep.subr.mxu0 0.0
        %519 = vmatpush1.msra.mxu0 0.0
        %520 = vmatprep.subr.mxu0 0.0
        %521 = vmatpush1.msra.mxu0 0.0
        %522 = vmatprep.subr.mxu0 0.0
        %523 = vmatpush1.msra.mxu0 %v337
        %524 = vmatprep.subr.mxu0 0.0
        %525 = vmatpush1.msra.mxu0 %v336
        %526 = vmatprep.subr.mxu0 0.0
        %527 = vmatpush1.msra.mxu0 %v335
        %528 = vmatprep.subr.mxu0 0.0
        %529 = vmatpush1.msra.mxu0 %v334
        %530 = vmatprep.subr.mxu0 0.0
        %531 = vmatpush1.msra.mxu0 %v333
        %532 = vmatprep.subr.mxu0 0.0
        %533 = vmatpush1.msra.mxu0 %v332
        %534 = vmatprep.subr.mxu0 0.0
        %535 = vmatpush1.msra.mxu0 %v331
        %536 = vmatprep.subr.mxu0 0.0
        %537 = vmatpush1.msra.mxu0 %v330
        %538 = vmatprep.subr.mxu0 0.0
        %539 = vmatpush2.msra.mxu0 0.0
        %540 = vmatprep.subr.mxu0 0.0
        %541 = vmatpush2.msra.mxu0 0.0
        %542 = vmatprep.subr.mxu0 0.0
        %543 = vmatpush2.msra.mxu0 0.0
        %544 = vmatprep.subr.mxu0 0.0
        %545 = vmatpush2.msra.mxu0 0.0
        %546 = vmatprep.subr.mxu0 0.0
        %547 = vmatpush2.msra.mxu0 0.0
        %548 = vmatprep.subr.mxu0 0.0
        %549 = vmatpush2.msra.mxu0 0.0
        %550 = vmatprep.subr.mxu0 0.0
        %551 = vmatpush2.msra.mxu0 0.0
        %552 = vmatprep.subr.mxu0 0.0
        %553 = vmatpush2.msra.mxu0 0.0
        %554 = vmatprep.subr.mxu0 0.0
        %555 = vmatpush2.msra.mxu0 0.0
        %556 = vmatprep.subr.mxu0 0.0
        %557 = vmatpush2.msra.mxu0 0.0
        %558 = vmatprep.subr.mxu0 0.0
        %559 = vmatpush2.msra.mxu0 0.0
        %560 = vmatprep.subr.mxu0 0.0
        %561 = vmatpush2.msra.mxu0 0.0
        %562 = vmatprep.subr.mxu0 0.0
        %563 = vmatpush2.msra.mxu0 0.0
        %564 = vmatprep.subr.mxu0 0.0
        %565 = vmatpush2.msra.mxu0 0.0
        %566 = vmatprep.subr.mxu0 0.0
        %567 = vmatpush2.msra.mxu0 0.0
        %568 = vmatprep.subr.mxu0 0.0
        %569 = vmatpush2.msra.mxu0 0.0
        %570 = vmatprep.mubr.f32.mxu0 0.0
        %571 = vmatmul.mubr.f32.gmra.mxu0 %v411
        %v572 = vpop.f32.mrf.mxu0
        %v573 = vadd.f32 %v343, %v572
        %v574 = vpop.f32.mrf.mxu0
        %575 = vmatprep.mubr.f32.mxu0 0.0
        %576 = vmatmul.mubr.f32.gmra.mxu0 %v414
        %v577 = vpop.f32.mrf.mxu0
        %v578 = vadd.f32 %v343, %v577
        %v579 = vpop.f32.mrf.mxu0
        %580 = vmatprep.mubr.f32.mxu0 0.0
        %581 = vmatmul.mubr.f32.gmra.mxu0 %v417
        %v582 = vpop.f32.mrf.mxu0
        %v583 = vadd.f32 %v343, %v582
        %v584 = vpop.f32.mrf.mxu0
        %585 = vmatprep.mubr.f32.mxu0 0.0
        %586 = vmatmul.mubr.f32.gmra.mxu0 %v420
        %v587 = vpop.f32.mrf.mxu0
        %v588 = vadd.f32 %v343, %v587
        %v589 = vpop.f32.mrf.mxu0
        %590 = vmatprep.mubr.f32.mxu0 0.0
        %591 = vmatmul.mubr.f32.gmra.mxu0 %v423
        %v592 = vpop.f32.mrf.mxu0
        %v593 = vadd.f32 %v343, %v592
        %v594 = vpop.f32.mrf.mxu0
        %595 = vmatprep.mubr.f32.mxu0 0.0
        %596 = vmatmul.mubr.f32.gmra.mxu0 %v426
        %v597 = vpop.f32.mrf.mxu0
        %v598 = vadd.f32 %v343, %v597
        %v599 = vpop.f32.mrf.mxu0
        %600 = vmatprep.mubr.f32.mxu0 0.0
        %601 = vmatmul.mubr.f32.gmra.mxu0 %v429
        %v602 = vpop.f32.mrf.mxu0
        %v603 = vadd.f32 %v343, %v602
        %v604 = vpop.f32.mrf.mxu0
        %605 = vmatprep.mubr.f32.mxu0 0.0
        %606 = vmatmul.mubr.f32.gmra.mxu0 %v432
        %v607 = vpop.f32.mrf.mxu0
        %v608 = vadd.f32 %v343, %v607
        %v609 = vpop.f32.mrf.mxu0
        %610 = vmatprep.mubr.f32.mxu0 0.0
        %611 = vmatmul.mubr.f32.gmra.mxu0 %v435
        %v612 = vpop.f32.mrf.mxu0
        %v613 = vadd.f32 %v343, %v612
        %v614 = vpop.f32.mrf.mxu0
        %615 = vmatprep.mubr.f32.mxu0 0.0
        %616 = vmatmul.mubr.f32.gmra.mxu0 %v438
        %v617 = vpop.f32.mrf.mxu0
        %v618 = vadd.f32 %v343, %v617
        %v619 = vpop.f32.mrf.mxu0
        %620 = vmatprep.mubr.f32.mxu0 0.0
        %621 = vmatmul.mubr.f32.gmra.mxu0 %v441
        %v622 = vpop.f32.mrf.mxu0
        %v623 = vadd.f32 %v343, %v622
        %v624 = vpop.f32.mrf.mxu0
        %625 = vmatprep.mubr.f32.mxu0 0.0
        %626 = vmatmul.mubr.f32.gmra.mxu0 %v444
        %v627 = vpop.f32.mrf.mxu0
        %v628 = vadd.f32 %v343, %v627
        %v629 = vpop.f32.mrf.mxu0
        %630 = vmatprep.mubr.f32.mxu0 0.0
        %631 = vmatmul.mubr.f32.gmra.mxu0 %v447
        %v632 = vpop.f32.mrf.mxu0
        %v633 = vadd.f32 %v343, %v632
        %v634 = vpop.f32.mrf.mxu0
        %635 = vmatprep.mubr.f32.mxu0 0.0
        %636 = vmatmul.mubr.f32.gmra.mxu0 %v450
        %v637 = vpop.f32.mrf.mxu0
        %v638 = vadd.f32 %v343, %v637
        %v639 = vpop.f32.mrf.mxu0
        %640 = vmatprep.mubr.f32.mxu0 0.0
        %641 = vmatmul.mubr.f32.gmra.mxu0 %v453
        %v642 = vpop.f32.mrf.mxu0
        %v643 = vadd.f32 %v343, %v642
        %v644 = vpop.f32.mrf.mxu0
        %645 = vmatprep.mubr.f32.mxu0 0.0
        %646 = vmatmul.mubr.f32.gmra.mxu0 %v456
        %v647 = vpop.f32.mrf.mxu0
        %v648 = vadd.f32 %v343, %v647
        %v649 = vpop.f32.mrf.mxu0
        %650 = vmatprep.mubr.f32.mxu0 0.0
        %651 = vmatmul.mubr.f32.gmra.mxu0 %v459
        %v652 = vpop.f32.mrf.mxu0
        %v653 = vadd.f32 %v343, %v652
        %v654 = vpop.f32.mrf.mxu0
        %655 = vmatprep.mubr.f32.mxu0 0.0
        %656 = vmatmul.mubr.f32.gmra.mxu0 %v462
        %v657 = vpop.f32.mrf.mxu0
        %v658 = vadd.f32 %v343, %v657
        %v659 = vpop.f32.mrf.mxu0
        %660 = vmatprep.mubr.f32.mxu0 0.0
        %661 = vmatmul.mubr.f32.gmra.mxu0 %v465
        %v662 = vpop.f32.mrf.mxu0
        %v663 = vadd.f32 %v343, %v662
        %v664 = vpop.f32.mrf.mxu0
        %665 = vmatprep.mubr.f32.mxu0 0.0
        %666 = vmatmul.mubr.f32.gmra.mxu0 %v468
        %v667 = vpop.f32.mrf.mxu0
        %v668 = vadd.f32 %v343, %v667
        %v669 = vpop.f32.mrf.mxu0
        %670 = vmatprep.mubr.f32.mxu0 0.0
        %671 = vmatmul.mubr.f32.gmra.mxu0 %v471
        %v672 = vpop.f32.mrf.mxu0
        %v673 = vadd.f32 %v343, %v672
        %v674 = vpop.f32.mrf.mxu0
        %675 = vmatprep.mubr.f32.mxu0 0.0
        %676 = vmatmul.mubr.f32.gmra.mxu0 %v474
        %v677 = vpop.f32.mrf.mxu0
        %v678 = vadd.f32 %v343, %v677
        %v679 = vpop.f32.mrf.mxu0
        %680 = vmatprep.mubr.f32.mxu0 0.0
        %681 = vmatmul.mubr.f32.gmra.mxu0 %v477
        %v682 = vpop.f32.mrf.mxu0
        %v683 = vadd.f32 %v343, %v682
        %v684 = vpop.f32.mrf.mxu0
        %685 = vmatprep.mubr.f32.mxu0 0.0
        %686 = vmatmul.mubr.f32.gmra.mxu0 %v480
        %v687 = vpop.f32.mrf.mxu0
        %v688 = vadd.f32 %v343, %v687
        %v689 = vpop.f32.mrf.mxu0
        %690 = vmatprep.mubr.f32.mxu0 0.0
        %691 = vmatmul.mubr.f32.gmra.mxu0 %v483
        %v692 = vpop.f32.mrf.mxu0
        %v693 = vadd.f32 %v343, %v692
        %v694 = vpop.f32.mrf.mxu0
        %695 = vmatprep.mubr.f32.mxu0 0.0
        %696 = vmatmul.mubr.f32.gmra.mxu0 %v486
        %v697 = vpop.f32.mrf.mxu0
        %v698 = vadd.f32 %v343, %v697
        %v699 = vpop.f32.mrf.mxu0
        %700 = vmatprep.mubr.f32.mxu0 0.0
        %701 = vmatmul.mubr.f32.gmra.mxu0 %v489
        %v702 = vpop.f32.mrf.mxu0
        %v703 = vadd.f32 %v343, %v702
        %v704 = vpop.f32.mrf.mxu0
        %705 = vmatprep.mubr.f32.mxu0 0.0
        %706 = vmatmul.mubr.f32.gmra.mxu0 %v492
        %v707 = vpop.f32.mrf.mxu0
        %v708 = vadd.f32 %v343, %v707
        %v709 = vpop.f32.mrf.mxu0
        %710 = vmatprep.mubr.f32.mxu0 0.0
        %711 = vmatmul.mubr.f32.gmra.mxu0 %v495
        %v712 = vpop.f32.mrf.mxu0
        %v713 = vadd.f32 %v343, %v712
        %v714 = vpop.f32.mrf.mxu0
        %715 = vmatprep.mubr.f32.mxu0 0.0
        %716 = vmatmul.mubr.f32.gmra.mxu0 %v498
        %v717 = vpop.f32.mrf.mxu0
        %v718 = vadd.f32 %v343, %v717
        %v719 = vpop.f32.mrf.mxu0
        %720 = vmatprep.mubr.f32.mxu0 0.0
        %721 = vmatmul.mubr.f32.gmra.mxu0 %v501
        %v722 = vpop.f32.mrf.mxu0
        %v723 = vadd.f32 %v343, %v722
        %v724 = vpop.f32.mrf.mxu0
        %725 = vmatprep.mubr.f32.mxu0 0.0
        %726 = vmatmul.mubr.f32.gmra.mxu0 %v504
        %v727 = vpop.f32.mrf.mxu0
        %v728 = vadd.f32 %v343, %v727
        %v729 = vpop.f32.mrf.mxu0
        %730 = vdwg.mxu0
        %v731 = vxor.u32 %v573, 2147483648
        %v732 = vxor.u32 %v578, 2147483648
        %v733 = vxor.u32 %v583, 2147483648
        %v734 = vxor.u32 %v588, 2147483648
        %v735 = vxor.u32 %v593, 2147483648
        %v736 = vxor.u32 %v598, 2147483648
        %v737 = vxor.u32 %v603, 2147483648
        %v738 = vxor.u32 %v608, 2147483648
        %v739 = vxor.u32 %v613, 2147483648
        %v740 = vxor.u32 %v618, 2147483648
        %v741 = vxor.u32 %v623, 2147483648
        %v742 = vxor.u32 %v628, 2147483648
        %v743 = vxor.u32 %v633, 2147483648
        %v744 = vxor.u32 %v638, 2147483648
        %v745 = vxor.u32 %v643, 2147483648
        %v746 = vxor.u32 %v648, 2147483648
        %v747 = vxor.u32 %v653, 2147483648
        %v748 = vxor.u32 %v658, 2147483648
        %v749 = vxor.u32 %v663, 2147483648
        %v750 = vxor.u32 %v668, 2147483648
        %v751 = vxor.u32 %v673, 2147483648
        %v752 = vxor.u32 %v678, 2147483648
        %v753 = vxor.u32 %v683, 2147483648
        %v754 = vxor.u32 %v688, 2147483648
        %v755 = vxor.u32 %v693, 2147483648
        %v756 = vxor.u32 %v698, 2147483648
        %v757 = vxor.u32 %v703, 2147483648
        %v758 = vxor.u32 %v708, 2147483648
        %v759 = vxor.u32 %v713, 2147483648
        %v760 = vxor.u32 %v718, 2147483648
        %v761 = vxor.u32 %v723, 2147483648
        %v762 = vxor.u32 %v728, 2147483648
        %v763 = vmul.f32 %v731, 1.442695
        %v764 = vpow.pop %v763
        %v765 = vmul.f32 %v732, 1.442695
        %v766 = vpow.pop %v765
        %v767 = vmul.f32 %v733, 1.442695
        %v768 = vpow.pop %v767
        %v769 = vmul.f32 %v734, 1.442695
        %v770 = vpow.pop %v769
        %v771 = vmul.f32 %v735, 1.442695
        %v772 = vpow.pop %v771
        %v773 = vmul.f32 %v736, 1.442695
        %v774 = vpow.pop %v773
        %v775 = vmul.f32 %v737, 1.442695
        %v776 = vpow.pop %v775
        %v777 = vmul.f32 %v738, 1.442695
        %v778 = vpow.pop %v777
        %v779 = vmul.f32 %v739, 1.442695
        %v780 = vpow.pop %v779
        %v781 = vmul.f32 %v740, 1.442695
        %v782 = vpow.pop %v781
        %v783 = vmul.f32 %v741, 1.442695
        %v784 = vpow.pop %v783
        %v785 = vmul.f32 %v742, 1.442695
        %v786 = vpow.pop %v785
        %v787 = vmul.f32 %v743, 1.442695
        %v788 = vpow.pop %v787
        %v789 = vmul.f32 %v744, 1.442695
        %v790 = vpow.pop %v789
        %v791 = vmul.f32 %v745, 1.442695
        %v792 = vpow.pop %v791
        %v793 = vmul.f32 %v746, 1.442695
        %v794 = vpow.pop %v793
        %v795 = vmul.f32 %v747, 1.442695
        %v796 = vpow.pop %v795
        %v797 = vmul.f32 %v748, 1.442695
        %v798 = vpow.pop %v797
        %v799 = vmul.f32 %v749, 1.442695
        %v800 = vpow.pop %v799
        %v801 = vmul.f32 %v750, 1.442695
        %v802 = vpow.pop %v801
        %v803 = vmul.f32 %v751, 1.442695
        %v804 = vpow.pop %v803
        %v805 = vmul.f32 %v752, 1.442695
        %v806 = vpow.pop %v805
        %v807 = vmul.f32 %v753, 1.442695
        %v808 = vpow.pop %v807
        %v809 = vmul.f32 %v754, 1.442695
        %v810 = vpow.pop %v809
        %v811 = vmul.f32 %v755, 1.442695
        %v812 = vpow.pop %v811
        %v813 = vmul.f32 %v756, 1.442695
        %v814 = vpow.pop %v813
        %v815 = vmul.f32 %v757, 1.442695
        %v816 = vpow.pop %v815
        %v817 = vmul.f32 %v758, 1.442695
        %v818 = vpow.pop %v817
        %v819 = vmul.f32 %v759, 1.442695
        %v820 = vpow.pop %v819
        %v821 = vmul.f32 %v760, 1.442695
        %v822 = vpow.pop %v821
        %v823 = vmul.f32 %v761, 1.442695
        %v824 = vpow.pop %v823
        %v825 = vmul.f32 %v762, 1.442695
        %v826 = vpow.pop %v825
        %v827 = vadd.f32 %v764, 1.0
        %v828 = vadd.f32 %v766, 1.0
        %v829 = vadd.f32 %v768, 1.0
        %v830 = vadd.f32 %v770, 1.0
        %v831 = vadd.f32 %v772, 1.0
        %v832 = vadd.f32 %v774, 1.0
        %v833 = vadd.f32 %v776, 1.0
        %v834 = vadd.f32 %v778, 1.0
        %v835 = vadd.f32 %v780, 1.0
        %v836 = vadd.f32 %v782, 1.0
        %v837 = vadd.f32 %v784, 1.0
        %v838 = vadd.f32 %v786, 1.0
        %v839 = vadd.f32 %v788, 1.0
        %v840 = vadd.f32 %v790, 1.0
        %v841 = vadd.f32 %v792, 1.0
        %v842 = vadd.f32 %v794, 1.0
        %v843 = vadd.f32 %v796, 1.0
        %v844 = vadd.f32 %v798, 1.0
        %v845 = vadd.f32 %v800, 1.0
        %v846 = vadd.f32 %v802, 1.0
        %v847 = vadd.f32 %v804, 1.0
        %v848 = vadd.f32 %v806, 1.0
        %v849 = vadd.f32 %v808, 1.0
        %v850 = vadd.f32 %v810, 1.0
        %v851 = vadd.f32 %v812, 1.0
        %v852 = vadd.f32 %v814, 1.0
        %v853 = vadd.f32 %v816, 1.0
        %v854 = vadd.f32 %v818, 1.0
        %v855 = vadd.f32 %v820, 1.0
        %v856 = vadd.f32 %v822, 1.0
        %v857 = vadd.f32 %v824, 1.0
        %v858 = vadd.f32 %v826, 1.0
        %v859 = vrcp.pop %v827
        %v860 = vmul.f32 1.0, %v859
        %v861 = vrcp.pop %v828
        %v862 = vmul.f32 1.0, %v861
        %v863 = vrcp.pop %v829
        %v864 = vmul.f32 1.0, %v863
        %v865 = vrcp.pop %v830
        %v866 = vmul.f32 1.0, %v865
        %v867 = vrcp.pop %v831
        %v868 = vmul.f32 1.0, %v867
        %v869 = vrcp.pop %v832
        %v870 = vmul.f32 1.0, %v869
        %v871 = vrcp.pop %v833
        %v872 = vmul.f32 1.0, %v871
        %v873 = vrcp.pop %v834
        %v874 = vmul.f32 1.0, %v873
        %v875 = vrcp.pop %v835
        %v876 = vmul.f32 1.0, %v875
        %v877 = vrcp.pop %v836
        %v878 = vmul.f32 1.0, %v877
        %v879 = vrcp.pop %v837
        %v880 = vmul.f32 1.0, %v879
        %v881 = vrcp.pop %v838
        %v882 = vmul.f32 1.0, %v881
        %v883 = vrcp.pop %v839
        %v884 = vmul.f32 1.0, %v883
        %v885 = vrcp.pop %v840
        %v886 = vmul.f32 1.0, %v885
        %v887 = vrcp.pop %v841
        %v888 = vmul.f32 1.0, %v887
        %v889 = vrcp.pop %v842
        %v890 = vmul.f32 1.0, %v889
        %v891 = vrcp.pop %v843
        %v892 = vmul.f32 1.0, %v891
        %v893 = vrcp.pop %v844
        %v894 = vmul.f32 1.0, %v893
        %v895 = vrcp.pop %v845
        %v896 = vmul.f32 1.0, %v895
        %v897 = vrcp.pop %v846
        %v898 = vmul.f32 1.0, %v897
        %v899 = vrcp.pop %v847
        %v900 = vmul.f32 1.0, %v899
        %v901 = vrcp.pop %v848
        %v902 = vmul.f32 1.0, %v901
        %v903 = vrcp.pop %v849
        %v904 = vmul.f32 1.0, %v903
        %v905 = vrcp.pop %v850
        %v906 = vmul.f32 1.0, %v905
        %v907 = vrcp.pop %v851
        %v908 = vmul.f32 1.0, %v907
        %v909 = vrcp.pop %v852
        %v910 = vmul.f32 1.0, %v909
        %v911 = vrcp.pop %v853
        %v912 = vmul.f32 1.0, %v911
        %v913 = vrcp.pop %v854
        %v914 = vmul.f32 1.0, %v913
        %v915 = vrcp.pop %v855
        %v916 = vmul.f32 1.0, %v915
        %v917 = vrcp.pop %v856
        %v918 = vmul.f32 1.0, %v917
        %v919 = vrcp.pop %v857
        %v920 = vmul.f32 1.0, %v919
        %v921 = vrcp.pop %v858
        %v922 = vmul.f32 1.0, %v921
        %v923 = vmul.f32 %v573, %v860
        %v924 = vmul.f32 %v578, %v862
        %v925 = vmul.f32 %v583, %v864
        %v926 = vmul.f32 %v588, %v866
        %v927 = vmul.f32 %v593, %v868
        %v928 = vmul.f32 %v598, %v870
        %v929 = vmul.f32 %v603, %v872
        %v930 = vmul.f32 %v608, %v874
        %v931 = vmul.f32 %v613, %v876
        %v932 = vmul.f32 %v618, %v878
        %v933 = vmul.f32 %v623, %v880
        %v934 = vmul.f32 %v628, %v882
        %v935 = vmul.f32 %v633, %v884
        %v936 = vmul.f32 %v638, %v886
        %v937 = vmul.f32 %v643, %v888
        %v938 = vmul.f32 %v648, %v890
        %v939 = vmul.f32 %v653, %v892
        %v940 = vmul.f32 %v658, %v894
        %v941 = vmul.f32 %v663, %v896
        %v942 = vmul.f32 %v668, %v898
        %v943 = vmul.f32 %v673, %v900
        %v944 = vmul.f32 %v678, %v902
        %v945 = vmul.f32 %v683, %v904
        %v946 = vmul.f32 %v688, %v906
        %v947 = vmul.f32 %v693, %v908
        %v948 = vmul.f32 %v698, %v910
        %v949 = vmul.f32 %v703, %v912
        %v950 = vmul.f32 %v708, %v914
        %v951 = vmul.f32 %v713, %v916
        %v952 = vmul.f32 %v718, %v918
        %v953 = vmul.f32 %v723, %v920
        %v954 = vmul.f32 %v728, %v922
        %955 = vst [vmem:[#allocation2] sm:$0x3] -inf
        %956 = vst [vmem:[#allocation2 + $0x18] sm:$0x3] -inf
        %957 = vst [vmem:[#allocation2 + $0x30] sm:$0x3] -inf
        %958 = vst [vmem:[#allocation2 + $0x48] sm:$0x3] -inf
        %959 = vst [vmem:[#allocation2 + $0x60] sm:$0x3] -inf
        %960 = vst [vmem:[#allocation2 + $0x78] sm:$0x3] -inf
        %961 = vst [vmem:[#allocation2 + $0x90] sm:$0x3] -inf
        %962 = vst [vmem:[#allocation2 + $0xa8] sm:$0x3] -inf
        %963 = vst [vmem:[#allocation2 + $0xc0] sm:$0x3] -inf
        %964 = vst [vmem:[#allocation2 + $0xd8] sm:$0x3] -inf
        %965 = vst [vmem:[#allocation2 + $0xf0] sm:$0x3] -inf
        %966 = vst [vmem:[#allocation2 + $0x108] sm:$0x3] -inf
        %967 = vst [vmem:[#allocation2 + $0x120] sm:$0x3] -inf
        %968 = vst [vmem:[#allocation2 + $0x138] sm:$0x3] -inf
        %969 = vst [vmem:[#allocation2 + $0x150] sm:$0x3] -inf
        %970 = vst [vmem:[#allocation2 + $0x168] sm:$0x3] -inf
        %971 = vst [vmem:[#allocation2 + $0x12] sm:$0x3] -inf
        %972 = vst [vmem:[#allocation2 + $0x2a] sm:$0x3] -inf
        %973 = vst [vmem:[#allocation2 + $0x42] sm:$0x3] -inf
        %974 = vst [vmem:[#allocation2 + $0x5a] sm:$0x3] -inf
        %975 = vst [vmem:[#allocation2 + $0x72] sm:$0x3] -inf
        %976 = vst [vmem:[#allocation2 + $0x8a] sm:$0x3] -inf
        %977 = vst [vmem:[#allocation2 + $0xa2] sm:$0x3] -inf
        %978 = vst [vmem:[#allocation2 + $0xba] sm:$0x3] -inf
        %979 = vst [vmem:[#allocation2 + $0xd2] sm:$0x3] -inf
        %980 = vst [vmem:[#allocation2 + $0xea] sm:$0x3] -inf
        %981 = vst [vmem:[#allocation2 + $0x102] sm:$0x3] -inf
        %982 = vst [vmem:[#allocation2 + $0x11a] sm:$0x3] -inf
        %983 = vst [vmem:[#allocation2 + $0x132] sm:$0x3] -inf
        %984 = vst [vmem:[#allocation2 + $0x14a] sm:$0x3] -inf
        %985 = vst [vmem:[#allocation2 + $0x162] sm:$0x3] -inf
        %986 = vst [vmem:[#allocation2 + $0x17a] sm:$0x3] -inf
        %987 = vst [vmem:[#allocation3] sm:$0xff] -inf
        %988 = vst [vmem:[#allocation3 + $0x8] sm:$0xff] -inf
        %989 = vst [vmem:[#allocation3 + $0x10] sm:$0xff] -inf
        %990 = vst [vmem:[#allocation3 + $0x18] sm:$0xff] -inf
        %s991 = scalar_lea.vmem [#allocation3], 288
        %992 = vst [vmem:[%s991] sm:$0xff] -inf
        %993 = vst [vmem:[%s991 + $0x8] sm:$0xff] -inf
        %994 = vst [vmem:[%s991 + $0x10] sm:$0xff] -inf
        %995 = vst [vmem:[%s991 + $0x18] sm:$0xff] -inf
        %996 = vst [vmem:[#allocation2 + $0x2] sm:$0xff] %v923
        %997 = vst [vmem:[#allocation2 + $0xa] sm:$0xff] %v924
        %998 = vst [vmem:[#allocation2 + $0x1a] sm:$0xff] %v925
        %999 = vst [vmem:[#allocation2 + $0x22] sm:$0xff] %v926
        %1000 = vst [vmem:[#allocation2 + $0x32] sm:$0xff] %v927
        %1001 = vst [vmem:[#allocation2 + $0x3a] sm:$0xff] %v928
        %1002 = vst [vmem:[#allocation2 + $0x4a] sm:$0xff] %v929
        %1003 = vst [vmem:[#allocation2 + $0x52] sm:$0xff] %v930
        %1004 = vst [vmem:[#allocation2 + $0x62] sm:$0xff] %v931
        %1005 = vst [vmem:[#allocation2 + $0x6a] sm:$0xff] %v932
        %1006 = vst [vmem:[#allocation2 + $0x7a] sm:$0xff] %v933
        %1007 = vst [vmem:[#allocation2 + $0x82] sm:$0xff] %v934
        %1008 = vst [vmem:[#allocation2 + $0x92] sm:$0xff] %v935
        %1009 = vst [vmem:[#allocation2 + $0x9a] sm:$0xff] %v936
        %1010 = vst [vmem:[#allocation2 + $0xaa] sm:$0xff] %v937
        %1011 = vst [vmem:[#allocation2 + $0xb2] sm:$0xff] %v938
        %1012 = vst [vmem:[#allocation2 + $0xc2] sm:$0xff] %v939
        %1013 = vst [vmem:[#allocation2 + $0xca] sm:$0xff] %v940
        %1014 = vst [vmem:[#allocation2 + $0xda] sm:$0xff] %v941
        %1015 = vst [vmem:[#allocation2 + $0xe2] sm:$0xff] %v942
        %1016 = vst [vmem:[#allocation2 + $0xf2] sm:$0xff] %v943
        %1017 = vst [vmem:[#allocation2 + $0xfa] sm:$0xff] %v944
        %1018 = vst [vmem:[#allocation2 + $0x10a] sm:$0xff] %v945
        %1019 = vst [vmem:[#allocation2 + $0x112] sm:$0xff] %v946
        %1020 = vst [vmem:[#allocation2 + $0x122] sm:$0xff] %v947
        %1021 = vst [vmem:[#allocation2 + $0x12a] sm:$0xff] %v948
        %1022 = vst [vmem:[#allocation2 + $0x13a] sm:$0xff] %v949
        %1023 = vst [vmem:[#allocation2 + $0x142] sm:$0xff] %v950
        %1024 = vst [vmem:[#allocation2 + $0x152] sm:$0xff] %v951
        %1025 = vst [vmem:[#allocation2 + $0x15a] sm:$0xff] %v952
        %1026 = vst [vmem:[#allocation2 + $0x16a] sm:$0xff] %v953
        %1027 = vst [vmem:[#allocation2 + $0x172] sm:$0xff] %v954
        %v1028 = vld [vmem:[#allocation2] sm:$0xff]
        %v1029 = vld [vmem:[#allocation2 + $0x8] sm:$0xff]
        %v1030 = vld [vmem:[#allocation2 + $0x18] sm:$0xff]
        %v1031 = vld [vmem:[#allocation2 + $0x20] sm:$0xff]
        %v1032 = vld [vmem:[#allocation2 + $0x30] sm:$0xff]
        %v1033 = vld [vmem:[#allocation2 + $0x38] sm:$0xff]
        %v1034 = vld [vmem:[#allocation2 + $0x48] sm:$0xff]
        %v1035 = vld [vmem:[#allocation2 + $0x50] sm:$0xff]
        %v1036 = vld [vmem:[#allocation2 + $0x60] sm:$0xff]
        %v1037 = vld [vmem:[#allocation2 + $0x68] sm:$0xff]
        %v1038 = vld [vmem:[#allocation2 + $0x78] sm:$0xff]
        %v1039 = vld [vmem:[#allocation2 + $0x80] sm:$0xff]
        %v1040 = vld [vmem:[#allocation2 + $0x90] sm:$0xff]
        %v1041 = vld [vmem:[#allocation2 + $0x98] sm:$0xff]
        %v1042 = vld [vmem:[#allocation2 + $0xa8] sm:$0xff]
        %v1043 = vld [vmem:[#allocation2 + $0xb0] sm:$0xff]
        %v1044 = vld [vmem:[#allocation2 + $0xc0] sm:$0xff]
        %v1045 = vld [vmem:[#allocation2 + $0xc8] sm:$0xff]
        %v1046 = vld [vmem:[#allocation2 + $0xd8] sm:$0xff]
        %v1047 = vld [vmem:[#allocation2 + $0xe0] sm:$0xff]
        %v1048 = vld [vmem:[#allocation2 + $0xf0] sm:$0xff]
        %v1049 = vld [vmem:[#allocation2 + $0xf8] sm:$0xff]
        %v1050 = vld [vmem:[#allocation2 + $0x108] sm:$0xff]
        %v1051 = vld [vmem:[#allocation2 + $0x110] sm:$0xff]
        %v1052 = vld [vmem:[#allocation2 + $0x120] sm:$0xff]
        %v1053 = vld [vmem:[#allocation2 + $0x128] sm:$0xff]
        %v1054 = vld [vmem:[#allocation2 + $0x138] sm:$0xff]
        %v1055 = vld [vmem:[#allocation2 + $0x140] sm:$0xff]
        %v1056 = vld [vmem:[#allocation2 + $0x150] sm:$0xff]
        %v1057 = vld [vmem:[#allocation2 + $0x158] sm:$0xff]
        %v1058 = vld [vmem:[#allocation2 + $0x168] sm:$0xff]
        %v1059 = vld [vmem:[#allocation2 + $0x170] sm:$0xff]
        %v1060 = vld [vmem:[#allocation2 + $0x1] sm:$0xff]
        %v1061 = vld [vmem:[#allocation2 + $0x9] sm:$0xff]
        %v1062 = vld [vmem:[#allocation2 + $0x19] sm:$0xff]
        %v1063 = vld [vmem:[#allocation2 + $0x21] sm:$0xff]
        %v1064 = vld [vmem:[#allocation2 + $0x31] sm:$0xff]
        %v1065 = vld [vmem:[#allocation2 + $0x39] sm:$0xff]
        %v1066 = vld [vmem:[#allocation2 + $0x49] sm:$0xff]
        %v1067 = vld [vmem:[#allocation2 + $0x51] sm:$0xff]
        %v1068 = vld [vmem:[#allocation2 + $0x61] sm:$0xff]
        %v1069 = vld [vmem:[#allocation2 + $0x69] sm:$0xff]
        %v1070 = vld [vmem:[#allocation2 + $0x79] sm:$0xff]
        %v1071 = vld [vmem:[#allocation2 + $0x81] sm:$0xff]
        %v1072 = vld [vmem:[#allocation2 + $0x91] sm:$0xff]
        %v1073 = vld [vmem:[#allocation2 + $0x99] sm:$0xff]
        %v1074 = vld [vmem:[#allocation2 + $0xa9] sm:$0xff]
        %v1075 = vld [vmem:[#allocation2 + $0xb1] sm:$0xff]
        %v1076 = vld [vmem:[#allocation2 + $0xc1] sm:$0xff]
        %v1077 = vld [vmem:[#allocation2 + $0xc9] sm:$0xff]
        %v1078 = vld [vmem:[#allocation2 + $0xd9] sm:$0xff]
        %v1079 = vld [vmem:[#allocation2 + $0xe1] sm:$0xff]
        %v1080 = vld [vmem:[#allocation2 + $0xf1] sm:$0xff]
        %v1081 = vld [vmem:[#allocation2 + $0xf9] sm:$0xff]
        %v1082 = vld [vmem:[#allocation2 + $0x109] sm:$0xff]
        %v1083 = vld [vmem:[#allocation2 + $0x111] sm:$0xff]
        %v1084 = vld [vmem:[#allocation2 + $0x121] sm:$0xff]
        %v1085 = vld [vmem:[#allocation2 + $0x129] sm:$0xff]
        %v1086 = vld [vmem:[#allocation2 + $0x139] sm:$0xff]
        %v1087 = vld [vmem:[#allocation2 + $0x141] sm:$0xff]
        %v1088 = vld [vmem:[#allocation2 + $0x151] sm:$0xff]
        %v1089 = vld [vmem:[#allocation2 + $0x159] sm:$0xff]
        %v1090 = vld [vmem:[#allocation2 + $0x169] sm:$0xff]
        %v1091 = vld [vmem:[#allocation2 + $0x171] sm:$0xff]
        %v1092 = vmax.f32 %v1028, %v1060
        %v1093 = vmax.f32 %v1029, %v1061
        %v1094 = vmax.f32 %v1030, %v1062
        %v1095 = vmax.f32 %v1031, %v1063
        %v1096 = vmax.f32 %v1032, %v1064
        %v1097 = vmax.f32 %v1033, %v1065
        %v1098 = vmax.f32 %v1034, %v1066
        %v1099 = vmax.f32 %v1035, %v1067
        %v1100 = vmax.f32 %v1036, %v1068
        %v1101 = vmax.f32 %v1037, %v1069
        %v1102 = vmax.f32 %v1038, %v1070
        %v1103 = vmax.f32 %v1039, %v1071
        %v1104 = vmax.f32 %v1040, %v1072
        %v1105 = vmax.f32 %v1041, %v1073
        %v1106 = vmax.f32 %v1042, %v1074
        %v1107 = vmax.f32 %v1043, %v1075
        %v1108 = vmax.f32 %v1044, %v1076
        %v1109 = vmax.f32 %v1045, %v1077
        %v1110 = vmax.f32 %v1046, %v1078
        %v1111 = vmax.f32 %v1047, %v1079
        %v1112 = vmax.f32 %v1048, %v1080
        %v1113 = vmax.f32 %v1049, %v1081
        %v1114 = vmax.f32 %v1050, %v1082
        %v1115 = vmax.f32 %v1051, %v1083
        %v1116 = vmax.f32 %v1052, %v1084
        %v1117 = vmax.f32 %v1053, %v1085
        %v1118 = vmax.f32 %v1054, %v1086
        %v1119 = vmax.f32 %v1055, %v1087
        %v1120 = vmax.f32 %v1056, %v1088
        %v1121 = vmax.f32 %v1057, %v1089
        %v1122 = vmax.f32 %v1058, %v1090
        %v1123 = vmax.f32 %v1059, %v1091
        %v1124 = vld [vmem:[#allocation2 + $0x2] sm:$0xff]
        %v1125 = vld [vmem:[#allocation2 + $0xa] sm:$0xff]
        %v1126 = vld [vmem:[#allocation2 + $0x1a] sm:$0xff]
        %v1127 = vld [vmem:[#allocation2 + $0x22] sm:$0xff]
        %v1128 = vld [vmem:[#allocation2 + $0x32] sm:$0xff]
        %v1129 = vld [vmem:[#allocation2 + $0x3a] sm:$0xff]
        %v1130 = vld [vmem:[#allocation2 + $0x4a] sm:$0xff]
        %v1131 = vld [vmem:[#allocation2 + $0x52] sm:$0xff]
        %v1132 = vld [vmem:[#allocation2 + $0x62] sm:$0xff]
        %v1133 = vld [vmem:[#allocation2 + $0x6a] sm:$0xff]
        %v1134 = vld [vmem:[#allocation2 + $0x7a] sm:$0xff]
        %v1135 = vld [vmem:[#allocation2 + $0x82] sm:$0xff]
        %v1136 = vld [vmem:[#allocation2 + $0x92] sm:$0xff]
        %v1137 = vld [vmem:[#allocation2 + $0x9a] sm:$0xff]
        %v1138 = vld [vmem:[#allocation2 + $0xaa] sm:$0xff]
        %v1139 = vld [vmem:[#allocation2 + $0xb2] sm:$0xff]
        %v1140 = vld [vmem:[#allocation2 + $0xc2] sm:$0xff]
        %v1141 = vld [vmem:[#allocation2 + $0xca] sm:$0xff]
        %v1142 = vld [vmem:[#allocation2 + $0xda] sm:$0xff]
        %v1143 = vld [vmem:[#allocation2 + $0xe2] sm:$0xff]
        %v1144 = vld [vmem:[#allocation2 + $0xf2] sm:$0xff]
        %v1145 = vld [vmem:[#allocation2 + $0xfa] sm:$0xff]
        %v1146 = vld [vmem:[#allocation2 + $0x10a] sm:$0xff]
        %v1147 = vld [vmem:[#allocation2 + $0x112] sm:$0xff]
        %v1148 = vld [vmem:[#allocation2 + $0x122] sm:$0xff]
        %v1149 = vld [vmem:[#allocation2 + $0x12a] sm:$0xff]
        %v1150 = vld [vmem:[#allocation2 + $0x13a] sm:$0xff]
        %v1151 = vld [vmem:[#allocation2 + $0x142] sm:$0xff]
        %v1152 = vld [vmem:[#allocation2 + $0x152] sm:$0xff]
        %v1153 = vld [vmem:[#allocation2 + $0x15a] sm:$0xff]
        %v1154 = vld [vmem:[#allocation2 + $0x16a] sm:$0xff]
        %v1155 = vld [vmem:[#allocation2 + $0x172] sm:$0xff]
        %v1156 = vmax.f32 %v1092, %v1124
        %v1157 = vmax.f32 %v1093, %v1125
        %v1158 = vmax.f32 %v1094, %v1126
        %v1159 = vmax.f32 %v1095, %v1127
        %v1160 = vmax.f32 %v1096, %v1128
        %v1161 = vmax.f32 %v1097, %v1129
        %v1162 = vmax.f32 %v1098, %v1130
        %v1163 = vmax.f32 %v1099, %v1131
        %v1164 = vmax.f32 %v1100, %v1132
        %v1165 = vmax.f32 %v1101, %v1133
        %v1166 = vmax.f32 %v1102, %v1134
        %v1167 = vmax.f32 %v1103, %v1135
        %v1168 = vmax.f32 %v1104, %v1136
        %v1169 = vmax.f32 %v1105, %v1137
        %v1170 = vmax.f32 %v1106, %v1138
        %v1171 = vmax.f32 %v1107, %v1139
        %v1172 = vmax.f32 %v1108, %v1140
        %v1173 = vmax.f32 %v1109, %v1141
        %v1174 = vmax.f32 %v1110, %v1142
        %v1175 = vmax.f32 %v1111, %v1143
        %v1176 = vmax.f32 %v1112, %v1144
        %v1177 = vmax.f32 %v1113, %v1145
        %v1178 = vmax.f32 %v1114, %v1146
        %v1179 = vmax.f32 %v1115, %v1147
        %v1180 = vmax.f32 %v1116, %v1148
        %v1181 = vmax.f32 %v1117, %v1149
        %v1182 = vmax.f32 %v1118, %v1150
        %v1183 = vmax.f32 %v1119, %v1151
        %v1184 = vmax.f32 %v1120, %v1152
        %v1185 = vmax.f32 %v1121, %v1153
        %v1186 = vmax.f32 %v1122, %v1154
        %v1187 = vmax.f32 %v1123, %v1155
        %v1188 = vld [vmem:[#allocation2 + $0x3] sm:$0xff]
        %v1189 = vld [vmem:[#allocation2 + $0xb] sm:$0xff]
        %v1190 = vld [vmem:[#allocation2 + $0x1b] sm:$0xff]
        %v1191 = vld [vmem:[#allocation2 + $0x23] sm:$0xff]
        %v1192 = vld [vmem:[#allocation2 + $0x33] sm:$0xff]
        %v1193 = vld [vmem:[#allocation2 + $0x3b] sm:$0xff]
        %v1194 = vld [vmem:[#allocation2 + $0x4b] sm:$0xff]
        %v1195 = vld [vmem:[#allocation2 + $0x53] sm:$0xff]
        %v1196 = vld [vmem:[#allocation2 + $0x63] sm:$0xff]
        %v1197 = vld [vmem:[#allocation2 + $0x6b] sm:$0xff]
        %v1198 = vld [vmem:[#allocation2 + $0x7b] sm:$0xff]
        %v1199 = vld [vmem:[#allocation2 + $0x83] sm:$0xff]
        %v1200 = vld [vmem:[#allocation2 + $0x93] sm:$0xff]
        %v1201 = vld [vmem:[#allocation2 + $0x9b] sm:$0xff]
        %v1202 = vld [vmem:[#allocation2 + $0xab] sm:$0xff]
        %v1203 = vld [vmem:[#allocation2 + $0xb3] sm:$0xff]
        %v1204 = vld [vmem:[#allocation2 + $0xc3] sm:$0xff]
        %v1205 = vld [vmem:[#allocation2 + $0xcb] sm:$0xff]
        %v1206 = vld [vmem:[#allocation2 + $0xdb] sm:$0xff]
        %v1207 = vld [vmem:[#allocation2 + $0xe3] sm:$0xff]
        %v1208 = vld [vmem:[#allocation2 + $0xf3] sm:$0xff]
        %v1209 = vld [vmem:[#allocation2 + $0xfb] sm:$0xff]
        %v1210 = vld [vmem:[#allocation2 + $0x10b] sm:$0xff]
        %v1211 = vld [vmem:[#allocation2 + $0x113] sm:$0xff]
        %v1212 = vld [vmem:[#allocation2 + $0x123] sm:$0xff]
        %v1213 = vld [vmem:[#allocation2 + $0x12b] sm:$0xff]
        %v1214 = vld [vmem:[#allocation2 + $0x13b] sm:$0xff]
        %v1215 = vld [vmem:[#allocation2 + $0x143] sm:$0xff]
        %v1216 = vld [vmem:[#allocation2 + $0x153] sm:$0xff]
        %v1217 = vld [vmem:[#allocation2 + $0x15b] sm:$0xff]
        %v1218 = vld [vmem:[#allocation2 + $0x16b] sm:$0xff]
        %v1219 = vld [vmem:[#allocation2 + $0x173] sm:$0xff]
        %v1220 = vmax.f32 %v1156, %v1188
        %v1221 = vmax.f32 %v1157, %v1189
        %v1222 = vmax.f32 %v1158, %v1190
        %v1223 = vmax.f32 %v1159, %v1191
        %v1224 = vmax.f32 %v1160, %v1192
        %v1225 = vmax.f32 %v1161, %v1193
        %v1226 = vmax.f32 %v1162, %v1194
        %v1227 = vmax.f32 %v1163, %v1195
        %v1228 = vmax.f32 %v1164, %v1196
        %v1229 = vmax.f32 %v1165, %v1197
        %v1230 = vmax.f32 %v1166, %v1198
        %v1231 = vmax.f32 %v1167, %v1199
        %v1232 = vmax.f32 %v1168, %v1200
        %v1233 = vmax.f32 %v1169, %v1201
        %v1234 = vmax.f32 %v1170, %v1202
        %v1235 = vmax.f32 %v1171, %v1203
        %v1236 = vmax.f32 %v1172, %v1204
        %v1237 = vmax.f32 %v1173, %v1205
        %v1238 = vmax.f32 %v1174, %v1206
        %v1239 = vmax.f32 %v1175, %v1207
        %v1240 = vmax.f32 %v1176, %v1208
        %v1241 = vmax.f32 %v1177, %v1209
        %v1242 = vmax.f32 %v1178, %v1210
        %v1243 = vmax.f32 %v1179, %v1211
        %v1244 = vmax.f32 %v1180, %v1212
        %v1245 = vmax.f32 %v1181, %v1213
        %v1246 = vmax.f32 %v1182, %v1214
        %v1247 = vmax.f32 %v1183, %v1215
        %v1248 = vmax.f32 %v1184, %v1216
        %v1249 = vmax.f32 %v1185, %v1217
        %v1250 = vmax.f32 %v1186, %v1218
        %v1251 = vmax.f32 %v1187, %v1219
        %v1252 = vld [vmem:[#allocation2 + $0x4] sm:$0xff]
        %v1253 = vld [vmem:[#allocation2 + $0xc] sm:$0xff]
        %v1254 = vld [vmem:[#allocation2 + $0x1c] sm:$0xff]
        %v1255 = vld [vmem:[#allocation2 + $0x24] sm:$0xff]
        %v1256 = vld [vmem:[#allocation2 + $0x34] sm:$0xff]
        %v1257 = vld [vmem:[#allocation2 + $0x3c] sm:$0xff]
        %v1258 = vld [vmem:[#allocation2 + $0x4c] sm:$0xff]
        %v1259 = vld [vmem:[#allocation2 + $0x54] sm:$0xff]
        %v1260 = vld [vmem:[#allocation2 + $0x64] sm:$0xff]
        %v1261 = vld [vmem:[#allocation2 + $0x6c] sm:$0xff]
        %v1262 = vld [vmem:[#allocation2 + $0x7c] sm:$0xff]
        %v1263 = vld [vmem:[#allocation2 + $0x84] sm:$0xff]
        %v1264 = vld [vmem:[#allocation2 + $0x94] sm:$0xff]
        %v1265 = vld [vmem:[#allocation2 + $0x9c] sm:$0xff]
        %v1266 = vld [vmem:[#allocation2 + $0xac] sm:$0xff]
        %v1267 = vld [vmem:[#allocation2 + $0xb4] sm:$0xff]
        %v1268 = vld [vmem:[#allocation2 + $0xc4] sm:$0xff]
        %v1269 = vld [vmem:[#allocation2 + $0xcc] sm:$0xff]
        %v1270 = vld [vmem:[#allocation2 + $0xdc] sm:$0xff]
        %v1271 = vld [vmem:[#allocation2 + $0xe4] sm:$0xff]
        %v1272 = vld [vmem:[#allocation2 + $0xf4] sm:$0xff]
        %v1273 = vld [vmem:[#allocation2 + $0xfc] sm:$0xff]
        %v1274 = vld [vmem:[#allocation2 + $0x10c] sm:$0xff]
        %v1275 = vld [vmem:[#allocation2 + $0x114] sm:$0xff]
        %v1276 = vld [vmem:[#allocation2 + $0x124] sm:$0xff]
        %v1277 = vld [vmem:[#allocation2 + $0x12c] sm:$0xff]
        %v1278 = vld [vmem:[#allocation2 + $0x13c] sm:$0xff]
        %v1279 = vld [vmem:[#allocation2 + $0x144] sm:$0xff]
        %v1280 = vld [vmem:[#allocation2 + $0x154] sm:$0xff]
        %v1281 = vld [vmem:[#allocation2 + $0x15c] sm:$0xff]
        %v1282 = vld [vmem:[#allocation2 + $0x16c] sm:$0xff]
        %v1283 = vld [vmem:[#allocation2 + $0x174] sm:$0xff]
        %v1284 = vmax.f32 %v1220, %v1252
        %v1285 = vmax.f32 %v1221, %v1253
        %v1286 = vmax.f32 %v1222, %v1254
        %v1287 = vmax.f32 %v1223, %v1255
        %v1288 = vmax.f32 %v1224, %v1256
        %v1289 = vmax.f32 %v1225, %v1257
        %v1290 = vmax.f32 %v1226, %v1258
        %v1291 = vmax.f32 %v1227, %v1259
        %v1292 = vmax.f32 %v1228, %v1260
        %v1293 = vmax.f32 %v1229, %v1261
        %v1294 = vmax.f32 %v1230, %v1262
        %v1295 = vmax.f32 %v1231, %v1263
        %v1296 = vmax.f32 %v1232, %v1264
        %v1297 = vmax.f32 %v1233, %v1265
        %v1298 = vmax.f32 %v1234, %v1266
        %v1299 = vmax.f32 %v1235, %v1267
        %v1300 = vmax.f32 %v1236, %v1268
        %v1301 = vmax.f32 %v1237, %v1269
        %v1302 = vmax.f32 %v1238, %v1270
        %v1303 = vmax.f32 %v1239, %v1271
        %v1304 = vmax.f32 %v1240, %v1272
        %v1305 = vmax.f32 %v1241, %v1273
        %v1306 = vmax.f32 %v1242, %v1274
        %v1307 = vmax.f32 %v1243, %v1275
        %v1308 = vmax.f32 %v1244, %v1276
        %v1309 = vmax.f32 %v1245, %v1277
        %v1310 = vmax.f32 %v1246, %v1278
        %v1311 = vmax.f32 %v1247, %v1279
        %v1312 = vmax.f32 %v1248, %v1280
        %v1313 = vmax.f32 %v1249, %v1281
        %v1314 = vmax.f32 %v1250, %v1282
        %v1315 = vmax.f32 %v1251, %v1283
        %s1316 = scalar_lea.vmem [#allocation3], 32
        %1317 = vst [vmem:[%s1316] sm:$0xff] %v1284
        %1318 = vst [vmem:[%s1316 + $0x8] sm:$0xff] %v1285
        %1319 = vst [vmem:[%s1316 + $0x10] sm:$0xff] %v1286
        %1320 = vst [vmem:[%s1316 + $0x18] sm:$0xff] %v1287
        %1321 = vst [vmem:[%s1316 + $0x20] sm:$0xff] %v1288
        %1322 = vst [vmem:[%s1316 + $0x28] sm:$0xff] %v1289
        %1323 = vst [vmem:[%s1316 + $0x30] sm:$0xff] %v1290
        %1324 = vst [vmem:[%s1316 + $0x38] sm:$0xff] %v1291
        %1325 = vst [vmem:[%s1316 + $0x40] sm:$0xff] %v1292
        %1326 = vst [vmem:[%s1316 + $0x48] sm:$0xff] %v1293
        %1327 = vst [vmem:[%s1316 + $0x50] sm:$0xff] %v1294
        %1328 = vst [vmem:[%s1316 + $0x58] sm:$0xff] %v1295
        %1329 = vst [vmem:[%s1316 + $0x60] sm:$0xff] %v1296
        %1330 = vst [vmem:[%s1316 + $0x68] sm:$0xff] %v1297
        %1331 = vst [vmem:[%s1316 + $0x70] sm:$0xff] %v1298
        %1332 = vst [vmem:[%s1316 + $0x78] sm:$0xff] %v1299
        %1333 = vst [vmem:[%s1316 + $0x80] sm:$0xff] %v1300
        %1334 = vst [vmem:[%s1316 + $0x88] sm:$0xff] %v1301
        %1335 = vst [vmem:[%s1316 + $0x90] sm:$0xff] %v1302
        %1336 = vst [vmem:[%s1316 + $0x98] sm:$0xff] %v1303
        %1337 = vst [vmem:[%s1316 + $0xa0] sm:$0xff] %v1304
        %1338 = vst [vmem:[%s1316 + $0xa8] sm:$0xff] %v1305
        %1339 = vst [vmem:[%s1316 + $0xb0] sm:$0xff] %v1306
        %1340 = vst [vmem:[%s1316 + $0xb8] sm:$0xff] %v1307
        %1341 = vst [vmem:[%s1316 + $0xc0] sm:$0xff] %v1308
        %1342 = vst [vmem:[%s1316 + $0xc8] sm:$0xff] %v1309
        %1343 = vst [vmem:[%s1316 + $0xd0] sm:$0xff] %v1310
        %1344 = vst [vmem:[%s1316 + $0xd8] sm:$0xff] %v1311
        %1345 = vst [vmem:[%s1316 + $0xe0] sm:$0xff] %v1312
        %1346 = vst [vmem:[%s1316 + $0xe8] sm:$0xff] %v1313
        %1347 = vst [vmem:[%s1316 + $0xf0] sm:$0xff] %v1314
        %1348 = vst [vmem:[%s1316 + $0xf8] sm:$0xff] %v1315
        %v1349 = vld [vmem:[#allocation3] sm:$0xff]
        %v1350 = vld [vmem:[#allocation3 + $0x8] sm:$0xff]
        %v1351 = vld [vmem:[#allocation3 + $0x10] sm:$0xff]
        %v1352 = vld [vmem:[#allocation3 + $0x18] sm:$0xff]
        %v1353 = vld [vmem:[#allocation3 + $0x20] sm:$0xff]
        %v1354 = vld [vmem:[#allocation3 + $0x28] sm:$0xff]
        %v1355 = vld [vmem:[#allocation3 + $0x30] sm:$0xff]
        %v1356 = vld [vmem:[#allocation3 + $0x38] sm:$0xff]
        %v1357 = vld [vmem:[#allocation3 + $0x40] sm:$0xff]
        %v1358 = vld [vmem:[#allocation3 + $0x48] sm:$0xff]
        %v1359 = vld [vmem:[#allocation3 + $0x50] sm:$0xff]
        %v1360 = vld [vmem:[#allocation3 + $0x58] sm:$0xff]
        %v1361 = vld [vmem:[#allocation3 + $0x60] sm:$0xff]
        %v1362 = vld [vmem:[#allocation3 + $0x68] sm:$0xff]
        %v1363 = vld [vmem:[#allocation3 + $0x70] sm:$0xff]
        %v1364 = vld [vmem:[#allocation3 + $0x78] sm:$0xff]
        %v1365 = vld [vmem:[#allocation3 + $0x80] sm:$0xff]
        %v1366 = vld [vmem:[#allocation3 + $0x88] sm:$0xff]
        %v1367 = vld [vmem:[#allocation3 + $0x90] sm:$0xff]
        %v1368 = vld [vmem:[#allocation3 + $0x98] sm:$0xff]
        %v1369 = vld [vmem:[#allocation3 + $0xa0] sm:$0xff]
        %v1370 = vld [vmem:[#allocation3 + $0xa8] sm:$0xff]
        %v1371 = vld [vmem:[#allocation3 + $0xb0] sm:$0xff]
        %v1372 = vld [vmem:[#allocation3 + $0xb8] sm:$0xff]
        %v1373 = vld [vmem:[#allocation3 + $0xc0] sm:$0xff]
        %v1374 = vld [vmem:[#allocation3 + $0xc8] sm:$0xff]
        %v1375 = vld [vmem:[#allocation3 + $0xd0] sm:$0xff]
        %v1376 = vld [vmem:[#allocation3 + $0xd8] sm:$0xff]
        %v1377 = vld [vmem:[#allocation3 + $0xe0] sm:$0xff]
        %v1378 = vld [vmem:[#allocation3 + $0xe8] sm:$0xff]
        %v1379 = vld [vmem:[#allocation3 + $0xf0] sm:$0xff]
        %v1380 = vld [vmem:[#allocation3 + $0xf8] sm:$0xff]
        %s1381 = scalar_lea.vmem [#allocation3], 16
        %v1382 = vld [vmem:[%s1381] sm:$0xff]
        %v1383 = vld [vmem:[%s1381 + $0x8] sm:$0xff]
        %v1384 = vld [vmem:[%s1381 + $0x10] sm:$0xff]
        %v1385 = vld [vmem:[%s1381 + $0x18] sm:$0xff]
        %v1386 = vld [vmem:[%s1381 + $0x20] sm:$0xff]
        %v1387 = vld [vmem:[%s1381 + $0x28] sm:$0xff]
        %v1388 = vld [vmem:[%s1381 + $0x30] sm:$0xff]
        %v1389 = vld [vmem:[%s1381 + $0x38] sm:$0xff]
        %v1390 = vld [vmem:[%s1381 + $0x40] sm:$0xff]
        %v1391 = vld [vmem:[%s1381 + $0x48] sm:$0xff]
        %v1392 = vld [vmem:[%s1381 + $0x50] sm:$0xff]
        %v1393 = vld [vmem:[%s1381 + $0x58] sm:$0xff]
        %v1394 = vld [vmem:[%s1381 + $0x60] sm:$0xff]
        %v1395 = vld [vmem:[%s1381 + $0x68] sm:$0xff]
        %v1396 = vld [vmem:[%s1381 + $0x70] sm:$0xff]
        %v1397 = vld [vmem:[%s1381 + $0x78] sm:$0xff]
        %v1398 = vld [vmem:[%s1381 + $0x80] sm:$0xff]
        %v1399 = vld [vmem:[%s1381 + $0x88] sm:$0xff]
        %v1400 = vld [vmem:[%s1381 + $0x90] sm:$0xff]
        %v1401 = vld [vmem:[%s1381 + $0x98] sm:$0xff]
        %v1402 = vld [vmem:[%s1381 + $0xa0] sm:$0xff]
        %v1403 = vld [vmem:[%s1381 + $0xa8] sm:$0xff]
        %v1404 = vld [vmem:[%s1381 + $0xb0] sm:$0xff]
        %v1405 = vld [vmem:[%s1381 + $0xb8] sm:$0xff]
        %v1406 = vld [vmem:[%s1381 + $0xc0] sm:$0xff]
        %v1407 = vld [vmem:[%s1381 + $0xc8] sm:$0xff]
        %v1408 = vld [vmem:[%s1381 + $0xd0] sm:$0xff]
        %v1409 = vld [vmem:[%s1381 + $0xd8] sm:$0xff]
        %v1410 = vld [vmem:[%s1381 + $0xe0] sm:$0xff]
        %v1411 = vld [vmem:[%s1381 + $0xe8] sm:$0xff]
        %v1412 = vld [vmem:[%s1381 + $0xf0] sm:$0xff]
        %v1413 = vld [vmem:[%s1381 + $0xf8] sm:$0xff]
        %v1414 = vmax.f32 %v1349, %v1382
        %v1415 = vmax.f32 %v1350, %v1383
        %v1416 = vmax.f32 %v1351, %v1384
        %v1417 = vmax.f32 %v1352, %v1385
        %v1418 = vmax.f32 %v1353, %v1386
        %v1419 = vmax.f32 %v1354, %v1387
        %v1420 = vmax.f32 %v1355, %v1388
        %v1421 = vmax.f32 %v1356, %v1389
        %v1422 = vmax.f32 %v1357, %v1390
        %v1423 = vmax.f32 %v1358, %v1391
        %v1424 = vmax.f32 %v1359, %v1392
        %v1425 = vmax.f32 %v1360, %v1393
        %v1426 = vmax.f32 %v1361, %v1394
        %v1427 = vmax.f32 %v1362, %v1395
        %v1428 = vmax.f32 %v1363, %v1396
        %v1429 = vmax.f32 %v1364, %v1397
        %v1430 = vmax.f32 %v1365, %v1398
        %v1431 = vmax.f32 %v1366, %v1399
        %v1432 = vmax.f32 %v1367, %v1400
        %v1433 = vmax.f32 %v1368, %v1401
        %v1434 = vmax.f32 %v1369, %v1402
        %v1435 = vmax.f32 %v1370, %v1403
        %v1436 = vmax.f32 %v1371, %v1404
        %v1437 = vmax.f32 %v1372, %v1405
        %v1438 = vmax.f32 %v1373, %v1406
        %v1439 = vmax.f32 %v1374, %v1407
        %v1440 = vmax.f32 %v1375, %v1408
        %v1441 = vmax.f32 %v1376, %v1409
        %v1442 = vmax.f32 %v1377, %v1410
        %v1443 = vmax.f32 %v1378, %v1411
        %v1444 = vmax.f32 %v1379, %v1412
        %v1445 = vmax.f32 %v1380, %v1413
        %v1446 = vld [vmem:[%s1316] sm:$0xff]
        %v1447 = vld [vmem:[%s1316 + $0x8] sm:$0xff]
        %v1448 = vld [vmem:[%s1316 + $0x10] sm:$0xff]
        %v1449 = vld [vmem:[%s1316 + $0x18] sm:$0xff]
        %v1450 = vld [vmem:[%s1316 + $0x20] sm:$0xff]
        %v1451 = vld [vmem:[%s1316 + $0x28] sm:$0xff]
        %v1452 = vld [vmem:[%s1316 + $0x30] sm:$0xff]
        %v1453 = vld [vmem:[%s1316 + $0x38] sm:$0xff]
        %v1454 = vld [vmem:[%s1316 + $0x40] sm:$0xff]
        %v1455 = vld [vmem:[%s1316 + $0x48] sm:$0xff]
        %v1456 = vld [vmem:[%s1316 + $0x50] sm:$0xff]
        %v1457 = vld [vmem:[%s1316 + $0x58] sm:$0xff]
        %v1458 = vld [vmem:[%s1316 + $0x60] sm:$0xff]
        %v1459 = vld [vmem:[%s1316 + $0x68] sm:$0xff]
        %v1460 = vld [vmem:[%s1316 + $0x70] sm:$0xff]
        %v1461 = vld [vmem:[%s1316 + $0x78] sm:$0xff]
        %v1462 = vld [vmem:[%s1316 + $0x80] sm:$0xff]
        %v1463 = vld [vmem:[%s1316 + $0x88] sm:$0xff]
        %v1464 = vld [vmem:[%s1316 + $0x90] sm:$0xff]
        %v1465 = vld [vmem:[%s1316 + $0x98] sm:$0xff]
        %v1466 = vld [vmem:[%s1316 + $0xa0] sm:$0xff]
        %v1467 = vld [vmem:[%s1316 + $0xa8] sm:$0xff]
        %v1468 = vld [vmem:[%s1316 + $0xb0] sm:$0xff]
        %v1469 = vld [vmem:[%s1316 + $0xb8] sm:$0xff]
        %v1470 = vld [vmem:[%s1316 + $0xc0] sm:$0xff]
        %v1471 = vld [vmem:[%s1316 + $0xc8] sm:$0xff]
        %v1472 = vld [vmem:[%s1316 + $0xd0] sm:$0xff]
        %v1473 = vld [vmem:[%s1316 + $0xd8] sm:$0xff]
        %v1474 = vld [vmem:[%s1316 + $0xe0] sm:$0xff]
        %v1475 = vld [vmem:[%s1316 + $0xe8] sm:$0xff]
        %v1476 = vld [vmem:[%s1316 + $0xf0] sm:$0xff]
        %v1477 = vld [vmem:[%s1316 + $0xf8] sm:$0xff]
        %v1478 = vmax.f32 %v1414, %v1446
        %v1479 = vmax.f32 %v1415, %v1447
        %v1480 = vmax.f32 %v1416, %v1448
        %v1481 = vmax.f32 %v1417, %v1449
        %v1482 = vmax.f32 %v1418, %v1450
        %v1483 = vmax.f32 %v1419, %v1451
        %v1484 = vmax.f32 %v1420, %v1452
        %v1485 = vmax.f32 %v1421, %v1453
        %v1486 = vmax.f32 %v1422, %v1454
        %v1487 = vmax.f32 %v1423, %v1455
        %v1488 = vmax.f32 %v1424, %v1456
        %v1489 = vmax.f32 %v1425, %v1457
        %v1490 = vmax.f32 %v1426, %v1458
        %v1491 = vmax.f32 %v1427, %v1459
        %v1492 = vmax.f32 %v1428, %v1460
        %v1493 = vmax.f32 %v1429, %v1461
        %v1494 = vmax.f32 %v1430, %v1462
        %v1495 = vmax.f32 %v1431, %v1463
        %v1496 = vmax.f32 %v1432, %v1464
        %v1497 = vmax.f32 %v1433, %v1465
        %v1498 = vmax.f32 %v1434, %v1466
        %v1499 = vmax.f32 %v1435, %v1467
        %v1500 = vmax.f32 %v1436, %v1468
        %v1501 = vmax.f32 %v1437, %v1469
        %v1502 = vmax.f32 %v1438, %v1470
        %v1503 = vmax.f32 %v1439, %v1471
        %v1504 = vmax.f32 %v1440, %v1472
        %v1505 = vmax.f32 %v1441, %v1473
        %v1506 = vmax.f32 %v1442, %v1474
        %v1507 = vmax.f32 %v1443, %v1475
        %v1508 = vmax.f32 %v1444, %v1476
        %v1509 = vmax.f32 %v1445, %v1477
        %s1510 = scalar_lea.vmem [#allocation3], 48
        %v1511 = vld [vmem:[%s1510] sm:$0xff]
        %v1512 = vld [vmem:[%s1510 + $0x8] sm:$0xff]
        %v1513 = vld [vmem:[%s1510 + $0x10] sm:$0xff]
        %v1514 = vld [vmem:[%s1510 + $0x18] sm:$0xff]
        %v1515 = vld [vmem:[%s1510 + $0x20] sm:$0xff]
        %v1516 = vld [vmem:[%s1510 + $0x28] sm:$0xff]
        %v1517 = vld [vmem:[%s1510 + $0x30] sm:$0xff]
        %v1518 = vld [vmem:[%s1510 + $0x38] sm:$0xff]
        %v1519 = vld [vmem:[%s1510 + $0x40] sm:$0xff]
        %v1520 = vld [vmem:[%s1510 + $0x48] sm:$0xff]
        %v1521 = vld [vmem:[%s1510 + $0x50] sm:$0xff]
        %v1522 = vld [vmem:[%s1510 + $0x58] sm:$0xff]
        %v1523 = vld [vmem:[%s1510 + $0x60] sm:$0xff]
        %v1524 = vld [vmem:[%s1510 + $0x68] sm:$0xff]
        %v1525 = vld [vmem:[%s1510 + $0x70] sm:$0xff]
        %v1526 = vld [vmem:[%s1510 + $0x78] sm:$0xff]
        %v1527 = vld [vmem:[%s1510 + $0x80] sm:$0xff]
        %v1528 = vld [vmem:[%s1510 + $0x88] sm:$0xff]
        %v1529 = vld [vmem:[%s1510 + $0x90] sm:$0xff]
        %v1530 = vld [vmem:[%s1510 + $0x98] sm:$0xff]
        %v1531 = vld [vmem:[%s1510 + $0xa0] sm:$0xff]
        %v1532 = vld [vmem:[%s1510 + $0xa8] sm:$0xff]
        %v1533 = vld [vmem:[%s1510 + $0xb0] sm:$0xff]
        %v1534 = vld [vmem:[%s1510 + $0xb8] sm:$0xff]
        %v1535 = vld [vmem:[%s1510 + $0xc0] sm:$0xff]
        %v1536 = vld [vmem:[%s1510 + $0xc8] sm:$0xff]
        %v1537 = vld [vmem:[%s1510 + $0xd0] sm:$0xff]
        %v1538 = vld [vmem:[%s1510 + $0xd8] sm:$0xff]
        %v1539 = vld [vmem:[%s1510 + $0xe0] sm:$0xff]
        %v1540 = vld [vmem:[%s1510 + $0xe8] sm:$0xff]
        %v1541 = vld [vmem:[%s1510 + $0xf0] sm:$0xff]
        %v1542 = vld [vmem:[%s1510 + $0xf8] sm:$0xff]
        %v1543 = vmax.f32 %v1478, %v1511
        %v1544 = vmax.f32 %v1479, %v1512
        %v1545 = vmax.f32 %v1480, %v1513
        %v1546 = vmax.f32 %v1481, %v1514
        %v1547 = vmax.f32 %v1482, %v1515
        %v1548 = vmax.f32 %v1483, %v1516
        %v1549 = vmax.f32 %v1484, %v1517
        %v1550 = vmax.f32 %v1485, %v1518
        %v1551 = vmax.f32 %v1486, %v1519
        %v1552 = vmax.f32 %v1487, %v1520
        %v1553 = vmax.f32 %v1488, %v1521
        %v1554 = vmax.f32 %v1489, %v1522
        %v1555 = vmax.f32 %v1490, %v1523
        %v1556 = vmax.f32 %v1491, %v1524
        %v1557 = vmax.f32 %v1492, %v1525
        %v1558 = vmax.f32 %v1493, %v1526
        %v1559 = vmax.f32 %v1494, %v1527
        %v1560 = vmax.f32 %v1495, %v1528
        %v1561 = vmax.f32 %v1496, %v1529
        %v1562 = vmax.f32 %v1497, %v1530
        %v1563 = vmax.f32 %v1498, %v1531
        %v1564 = vmax.f32 %v1499, %v1532
        %v1565 = vmax.f32 %v1500, %v1533
        %v1566 = vmax.f32 %v1501, %v1534
        %v1567 = vmax.f32 %v1502, %v1535
        %v1568 = vmax.f32 %v1503, %v1536
        %v1569 = vmax.f32 %v1504, %v1537
        %v1570 = vmax.f32 %v1505, %v1538
        %v1571 = vmax.f32 %v1506, %v1539
        %v1572 = vmax.f32 %v1507, %v1540
        %v1573 = vmax.f32 %v1508, %v1541
        %v1574 = vmax.f32 %v1509, %v1542
        %s1575 = scalar_lea.vmem [#allocation3], 64
        %v1576 = vld [vmem:[%s1575] sm:$0xff]
        %v1577 = vld [vmem:[%s1575 + $0x8] sm:$0xff]
        %v1578 = vld [vmem:[%s1575 + $0x10] sm:$0xff]
        %v1579 = vld [vmem:[%s1575 + $0x18] sm:$0xff]
        %v1580 = vld [vmem:[%s1575 + $0x20] sm:$0xff]
        %v1581 = vld [vmem:[%s1575 + $0x28] sm:$0xff]
        %v1582 = vld [vmem:[%s1575 + $0x30] sm:$0xff]
        %v1583 = vld [vmem:[%s1575 + $0x38] sm:$0xff]
        %v1584 = vld [vmem:[%s1575 + $0x40] sm:$0xff]
        %v1585 = vld [vmem:[%s1575 + $0x48] sm:$0xff]
        %v1586 = vld [vmem:[%s1575 + $0x50] sm:$0xff]
        %v1587 = vld [vmem:[%s1575 + $0x58] sm:$0xff]
        %v1588 = vld [vmem:[%s1575 + $0x60] sm:$0xff]
        %v1589 = vld [vmem:[%s1575 + $0x68] sm:$0xff]
        %v1590 = vld [vmem:[%s1575 + $0x70] sm:$0xff]
        %v1591 = vld [vmem:[%s1575 + $0x78] sm:$0xff]
        %v1592 = vld [vmem:[%s1575 + $0x80] sm:$0xff]
        %v1593 = vld [vmem:[%s1575 + $0x88] sm:$0xff]
        %v1594 = vld [vmem:[%s1575 + $0x90] sm:$0xff]
        %v1595 = vld [vmem:[%s1575 + $0x98] sm:$0xff]
        %v1596 = vld [vmem:[%s1575 + $0xa0] sm:$0xff]
        %v1597 = vld [vmem:[%s1575 + $0xa8] sm:$0xff]
        %v1598 = vld [vmem:[%s1575 + $0xb0] sm:$0xff]
        %v1599 = vld [vmem:[%s1575 + $0xb8] sm:$0xff]
        %v1600 = vld [vmem:[%s1575 + $0xc0] sm:$0xff]
        %v1601 = vld [vmem:[%s1575 + $0xc8] sm:$0xff]
        %v1602 = vld [vmem:[%s1575 + $0xd0] sm:$0xff]
        %v1603 = vld [vmem:[%s1575 + $0xd8] sm:$0xff]
        %v1604 = vld [vmem:[%s1575 + $0xe0] sm:$0xff]
        %v1605 = vld [vmem:[%s1575 + $0xe8] sm:$0xff]
        %v1606 = vld [vmem:[%s1575 + $0xf0] sm:$0xff]
        %v1607 = vld [vmem:[%s1575 + $0xf8] sm:$0xff]
        %v1608 = vmax.f32 %v1543, %v1576
        %v1609 = vmax.f32 %v1544, %v1577
        %v1610 = vmax.f32 %v1545, %v1578
        %v1611 = vmax.f32 %v1546, %v1579
        %v1612 = vmax.f32 %v1547, %v1580
        %v1613 = vmax.f32 %v1548, %v1581
        %v1614 = vmax.f32 %v1549, %v1582
        %v1615 = vmax.f32 %v1550, %v1583
        %v1616 = vmax.f32 %v1551, %v1584
        %v1617 = vmax.f32 %v1552, %v1585
        %v1618 = vmax.f32 %v1553, %v1586
        %v1619 = vmax.f32 %v1554, %v1587
        %v1620 = vmax.f32 %v1555, %v1588
        %v1621 = vmax.f32 %v1556, %v1589
        %v1622 = vmax.f32 %v1557, %v1590
        %v1623 = vmax.f32 %v1558, %v1591
        %v1624 = vmax.f32 %v1559, %v1592
        %v1625 = vmax.f32 %v1560, %v1593
        %v1626 = vmax.f32 %v1561, %v1594
        %v1627 = vmax.f32 %v1562, %v1595
        %v1628 = vmax.f32 %v1563, %v1596
        %v1629 = vmax.f32 %v1564, %v1597
        %v1630 = vmax.f32 %v1565, %v1598
        %v1631 = vmax.f32 %v1566, %v1599
        %v1632 = vmax.f32 %v1567, %v1600
        %v1633 = vmax.f32 %v1568, %v1601
        %v1634 = vmax.f32 %v1569, %v1602
        %v1635 = vmax.f32 %v1570, %v1603
        %v1636 = vmax.f32 %v1571, %v1604
        %v1637 = vmax.f32 %v1572, %v1605
        %v1638 = vmax.f32 %v1573, %v1606
        %v1639 = vmax.f32 %v1574, %v1607
        %1640 = vst [vmem:[#allocation2 + $0x2] sm:$0xff] %v1608
        %1641 = vst [vmem:[#allocation2 + $0xa] sm:$0xff] %v1609
        %1642 = vst [vmem:[#allocation2 + $0x1a] sm:$0xff] %v1610
        %1643 = vst [vmem:[#allocation2 + $0x22] sm:$0xff] %v1611
        %1644 = vst [vmem:[#allocation2 + $0x32] sm:$0xff] %v1612
        %1645 = vst [vmem:[#allocation2 + $0x3a] sm:$0xff] %v1613
        %1646 = vst [vmem:[#allocation2 + $0x4a] sm:$0xff] %v1614
        %1647 = vst [vmem:[#allocation2 + $0x52] sm:$0xff] %v1615
        %1648 = vst [vmem:[#allocation2 + $0x62] sm:$0xff] %v1616
        %1649 = vst [vmem:[#allocation2 + $0x6a] sm:$0xff] %v1617
        %1650 = vst [vmem:[#allocation2 + $0x7a] sm:$0xff] %v1618
        %1651 = vst [vmem:[#allocation2 + $0x82] sm:$0xff] %v1619
        %1652 = vst [vmem:[#allocation2 + $0x92] sm:$0xff] %v1620
        %1653 = vst [vmem:[#allocation2 + $0x9a] sm:$0xff] %v1621
        %1654 = vst [vmem:[#allocation2 + $0xaa] sm:$0xff] %v1622
        %1655 = vst [vmem:[#allocation2 + $0xb2] sm:$0xff] %v1623
        %1656 = vst [vmem:[#allocation2 + $0xc2] sm:$0xff] %v1624
        %1657 = vst [vmem:[#allocation2 + $0xca] sm:$0xff] %v1625
        %1658 = vst [vmem:[#allocation2 + $0xda] sm:$0xff] %v1626
        %1659 = vst [vmem:[#allocation2 + $0xe2] sm:$0xff] %v1627
        %1660 = vst [vmem:[#allocation2 + $0xf2] sm:$0xff] %v1628
        %1661 = vst [vmem:[#allocation2 + $0xfa] sm:$0xff] %v1629
        %1662 = vst [vmem:[#allocation2 + $0x10a] sm:$0xff] %v1630
        %1663 = vst [vmem:[#allocation2 + $0x112] sm:$0xff] %v1631
        %1664 = vst [vmem:[#allocation2 + $0x122] sm:$0xff] %v1632
        %1665 = vst [vmem:[#allocation2 + $0x12a] sm:$0xff] %v1633
        %1666 = vst [vmem:[#allocation2 + $0x13a] sm:$0xff] %v1634
        %1667 = vst [vmem:[#allocation2 + $0x142] sm:$0xff] %v1635
        %1668 = vst [vmem:[#allocation2 + $0x152] sm:$0xff] %v1636
        %1669 = vst [vmem:[#allocation2 + $0x15a] sm:$0xff] %v1637
        %1670 = vst [vmem:[#allocation2 + $0x16a] sm:$0xff] %v1638
        %1671 = vst [vmem:[#allocation2 + $0x172] sm:$0xff] %v1639
        %v1672 = vld [vmem:[#allocation2] sm:$0xff]
        %v1673 = vld [vmem:[#allocation2 + $0x8] sm:$0xff]
        %v1674 = vld [vmem:[#allocation2 + $0x18] sm:$0xff]
        %v1675 = vld [vmem:[#allocation2 + $0x20] sm:$0xff]
        %v1676 = vld [vmem:[#allocation2 + $0x30] sm:$0xff]
        %v1677 = vld [vmem:[#allocation2 + $0x38] sm:$0xff]
        %v1678 = vld [vmem:[#allocation2 + $0x48] sm:$0xff]
        %v1679 = vld [vmem:[#allocation2 + $0x50] sm:$0xff]
        %v1680 = vld [vmem:[#allocation2 + $0x60] sm:$0xff]
        %v1681 = vld [vmem:[#allocation2 + $0x68] sm:$0xff]
        %v1682 = vld [vmem:[#allocation2 + $0x78] sm:$0xff]
        %v1683 = vld [vmem:[#allocation2 + $0x80] sm:$0xff]
        %v1684 = vld [vmem:[#allocation2 + $0x90] sm:$0xff]
        %v1685 = vld [vmem:[#allocation2 + $0x98] sm:$0xff]
        %v1686 = vld [vmem:[#allocation2 + $0xa8] sm:$0xff]
        %v1687 = vld [vmem:[#allocation2 + $0xb0] sm:$0xff]
        %v1688 = vld [vmem:[#allocation2 + $0xc0] sm:$0xff]
        %v1689 = vld [vmem:[#allocation2 + $0xc8] sm:$0xff]
        %v1690 = vld [vmem:[#allocation2 + $0xd8] sm:$0xff]
        %v1691 = vld [vmem:[#allocation2 + $0xe0] sm:$0xff]
        %v1692 = vld [vmem:[#allocation2 + $0xf0] sm:$0xff]
        %v1693 = vld [vmem:[#allocation2 + $0xf8] sm:$0xff]
        %v1694 = vld [vmem:[#allocation2 + $0x108] sm:$0xff]
        %v1695 = vld [vmem:[#allocation2 + $0x110] sm:$0xff]
        %v1696 = vld [vmem:[#allocation2 + $0x120] sm:$0xff]
        %v1697 = vld [vmem:[#allocation2 + $0x128] sm:$0xff]
        %v1698 = vld [vmem:[#allocation2 + $0x138] sm:$0xff]
        %v1699 = vld [vmem:[#allocation2 + $0x140] sm:$0xff]
        %v1700 = vld [vmem:[#allocation2 + $0x150] sm:$0xff]
        %v1701 = vld [vmem:[#allocation2 + $0x158] sm:$0xff]
        %v1702 = vld [vmem:[#allocation2 + $0x168] sm:$0xff]
        %v1703 = vld [vmem:[#allocation2 + $0x170] sm:$0xff]
        %v1704 = vld [vmem:[#allocation2 + $0x1] sm:$0xff]
        %v1705 = vld [vmem:[#allocation2 + $0x9] sm:$0xff]
        %v1706 = vld [vmem:[#allocation2 + $0x19] sm:$0xff]
        %v1707 = vld [vmem:[#allocation2 + $0x21] sm:$0xff]
        %v1708 = vld [vmem:[#allocation2 + $0x31] sm:$0xff]
        %v1709 = vld [vmem:[#allocation2 + $0x39] sm:$0xff]
        %v1710 = vld [vmem:[#allocation2 + $0x49] sm:$0xff]
        %v1711 = vld [vmem:[#allocation2 + $0x51] sm:$0xff]
        %v1712 = vld [vmem:[#allocation2 + $0x61] sm:$0xff]
        %v1713 = vld [vmem:[#allocation2 + $0x69] sm:$0xff]
        %v1714 = vld [vmem:[#allocation2 + $0x79] sm:$0xff]
        %v1715 = vld [vmem:[#allocation2 + $0x81] sm:$0xff]
        %v1716 = vld [vmem:[#allocation2 + $0x91] sm:$0xff]
        %v1717 = vld [vmem:[#allocation2 + $0x99] sm:$0xff]
        %v1718 = vld [vmem:[#allocation2 + $0xa9] sm:$0xff]
        %v1719 = vld [vmem:[#allocation2 + $0xb1] sm:$0xff]
        %v1720 = vld [vmem:[#allocation2 + $0xc1] sm:$0xff]
        %v1721 = vld [vmem:[#allocation2 + $0xc9] sm:$0xff]
        %v1722 = vld [vmem:[#allocation2 + $0xd9] sm:$0xff]
        %v1723 = vld [vmem:[#allocation2 + $0xe1] sm:$0xff]
        %v1724 = vld [vmem:[#allocation2 + $0xf1] sm:$0xff]
        %v1725 = vld [vmem:[#allocation2 + $0xf9] sm:$0xff]
        %v1726 = vld [vmem:[#allocation2 + $0x109] sm:$0xff]
        %v1727 = vld [vmem:[#allocation2 + $0x111] sm:$0xff]
        %v1728 = vld [vmem:[#allocation2 + $0x121] sm:$0xff]
        %v1729 = vld [vmem:[#allocation2 + $0x129] sm:$0xff]
        %v1730 = vld [vmem:[#allocation2 + $0x139] sm:$0xff]
        %v1731 = vld [vmem:[#allocation2 + $0x141] sm:$0xff]
        %v1732 = vld [vmem:[#allocation2 + $0x151] sm:$0xff]
        %v1733 = vld [vmem:[#allocation2 + $0x159] sm:$0xff]
        %v1734 = vld [vmem:[#allocation2 + $0x169] sm:$0xff]
        %v1735 = vld [vmem:[#allocation2 + $0x171] sm:$0xff]
        %v1736 = vmax.f32 %v1672, %v1704
        %v1737 = vmax.f32 %v1673, %v1705
        %v1738 = vmax.f32 %v1674, %v1706
        %v1739 = vmax.f32 %v1675, %v1707
        %v1740 = vmax.f32 %v1676, %v1708
        %v1741 = vmax.f32 %v1677, %v1709
        %v1742 = vmax.f32 %v1678, %v1710
        %v1743 = vmax.f32 %v1679, %v1711
        %v1744 = vmax.f32 %v1680, %v1712
        %v1745 = vmax.f32 %v1681, %v1713
        %v1746 = vmax.f32 %v1682, %v1714
        %v1747 = vmax.f32 %v1683, %v1715
        %v1748 = vmax.f32 %v1684, %v1716
        %v1749 = vmax.f32 %v1685, %v1717
        %v1750 = vmax.f32 %v1686, %v1718
        %v1751 = vmax.f32 %v1687, %v1719
        %v1752 = vmax.f32 %v1688, %v1720
        %v1753 = vmax.f32 %v1689, %v1721
        %v1754 = vmax.f32 %v1690, %v1722
        %v1755 = vmax.f32 %v1691, %v1723
        %v1756 = vmax.f32 %v1692, %v1724
        %v1757 = vmax.f32 %v1693, %v1725
        %v1758 = vmax.f32 %v1694, %v1726
        %v1759 = vmax.f32 %v1695, %v1727
        %v1760 = vmax.f32 %v1696, %v1728
        %v1761 = vmax.f32 %v1697, %v1729
        %v1762 = vmax.f32 %v1698, %v1730
        %v1763 = vmax.f32 %v1699, %v1731
        %v1764 = vmax.f32 %v1700, %v1732
        %v1765 = vmax.f32 %v1701, %v1733
        %v1766 = vmax.f32 %v1702, %v1734
        %v1767 = vmax.f32 %v1703, %v1735
        %v1768 = vld [vmem:[#allocation2 + $0x2] sm:$0xff]
        %v1769 = vld [vmem:[#allocation2 + $0xa] sm:$0xff]
        %v1770 = vld [vmem:[#allocation2 + $0x1a] sm:$0xff]
        %v1771 = vld [vmem:[#allocation2 + $0x22] sm:$0xff]
        %v1772 = vld [vmem:[#allocation2 + $0x32] sm:$0xff]
        %v1773 = vld [vmem:[#allocation2 + $0x3a] sm:$0xff]
        %v1774 = vld [vmem:[#allocation2 + $0x4a] sm:$0xff]
        %v1775 = vld [vmem:[#allocation2 + $0x52] sm:$0xff]
        %v1776 = vld [vmem:[#allocation2 + $0x62] sm:$0xff]
        %v1777 = vld [vmem:[#allocation2 + $0x6a] sm:$0xff]
        %v1778 = vld [vmem:[#allocation2 + $0x7a] sm:$0xff]
        %v1779 = vld [vmem:[#allocation2 + $0x82] sm:$0xff]
        %v1780 = vld [vmem:[#allocation2 + $0x92] sm:$0xff]
        %v1781 = vld [vmem:[#allocation2 + $0x9a] sm:$0xff]
        %v1782 = vld [vmem:[#allocation2 + $0xaa] sm:$0xff]
        %v1783 = vld [vmem:[#allocation2 + $0xb2] sm:$0xff]
        %v1784 = vld [vmem:[#allocation2 + $0xc2] sm:$0xff]
        %v1785 = vld [vmem:[#allocation2 + $0xca] sm:$0xff]
        %v1786 = vld [vmem:[#allocation2 + $0xda] sm:$0xff]
        %v1787 = vld [vmem:[#allocation2 + $0xe2] sm:$0xff]
        %v1788 = vld [vmem:[#allocation2 + $0xf2] sm:$0xff]
        %v1789 = vld [vmem:[#allocation2 + $0xfa] sm:$0xff]
        %v1790 = vld [vmem:[#allocation2 + $0x10a] sm:$0xff]
        %v1791 = vld [vmem:[#allocation2 + $0x112] sm:$0xff]
        %v1792 = vld [vmem:[#allocation2 + $0x122] sm:$0xff]
        %v1793 = vld [vmem:[#allocation2 + $0x12a] sm:$0xff]
        %v1794 = vld [vmem:[#allocation2 + $0x13a] sm:$0xff]
        %v1795 = vld [vmem:[#allocation2 + $0x142] sm:$0xff]
        %v1796 = vld [vmem:[#allocation2 + $0x152] sm:$0xff]
        %v1797 = vld [vmem:[#allocation2 + $0x15a] sm:$0xff]
        %v1798 = vld [vmem:[#allocation2 + $0x16a] sm:$0xff]
        %v1799 = vld [vmem:[#allocation2 + $0x172] sm:$0xff]
        %v1800 = vmax.f32 %v1736, %v1768
        %v1801 = vmax.f32 %v1737, %v1769
        %v1802 = vmax.f32 %v1738, %v1770
        %v1803 = vmax.f32 %v1739, %v1771
        %v1804 = vmax.f32 %v1740, %v1772
        %v1805 = vmax.f32 %v1741, %v1773
        %v1806 = vmax.f32 %v1742, %v1774
        %v1807 = vmax.f32 %v1743, %v1775
        %v1808 = vmax.f32 %v1744, %v1776
        %v1809 = vmax.f32 %v1745, %v1777
        %v1810 = vmax.f32 %v1746, %v1778
        %v1811 = vmax.f32 %v1747, %v1779
        %v1812 = vmax.f32 %v1748, %v1780
        %v1813 = vmax.f32 %v1749, %v1781
        %v1814 = vmax.f32 %v1750, %v1782
        %v1815 = vmax.f32 %v1751, %v1783
        %v1816 = vmax.f32 %v1752, %v1784
        %v1817 = vmax.f32 %v1753, %v1785
        %v1818 = vmax.f32 %v1754, %v1786
        %v1819 = vmax.f32 %v1755, %v1787
        %v1820 = vmax.f32 %v1756, %v1788
        %v1821 = vmax.f32 %v1757, %v1789
        %v1822 = vmax.f32 %v1758, %v1790
        %v1823 = vmax.f32 %v1759, %v1791
        %v1824 = vmax.f32 %v1760, %v1792
        %v1825 = vmax.f32 %v1761, %v1793
        %v1826 = vmax.f32 %v1762, %v1794
        %v1827 = vmax.f32 %v1763, %v1795
        %v1828 = vmax.f32 %v1764, %v1796
        %v1829 = vmax.f32 %v1765, %v1797
        %v1830 = vmax.f32 %v1766, %v1798
        %v1831 = vmax.f32 %v1767, %v1799
        %v1832 = vld [vmem:[#allocation2 + $0x3] sm:$0xff]
        %v1833 = vld [vmem:[#allocation2 + $0xb] sm:$0xff]
        %v1834 = vld [vmem:[#allocation2 + $0x1b] sm:$0xff]
        %v1835 = vld [vmem:[#allocation2 + $0x23] sm:$0xff]
        %v1836 = vld [vmem:[#allocation2 + $0x33] sm:$0xff]
        %v1837 = vld [vmem:[#allocation2 + $0x3b] sm:$0xff]
        %v1838 = vld [vmem:[#allocation2 + $0x4b] sm:$0xff]
        %v1839 = vld [vmem:[#allocation2 + $0x53] sm:$0xff]
        %v1840 = vld [vmem:[#allocation2 + $0x63] sm:$0xff]
        %v1841 = vld [vmem:[#allocation2 + $0x6b] sm:$0xff]
        %v1842 = vld [vmem:[#allocation2 + $0x7b] sm:$0xff]
        %v1843 = vld [vmem:[#allocation2 + $0x83] sm:$0xff]
        %v1844 = vld [vmem:[#allocation2 + $0x93] sm:$0xff]
        %v1845 = vld [vmem:[#allocation2 + $0x9b] sm:$0xff]
        %v1846 = vld [vmem:[#allocation2 + $0xab] sm:$0xff]
        %v1847 = vld [vmem:[#allocation2 + $0xb3] sm:$0xff]
        %v1848 = vld [vmem:[#allocation2 + $0xc3] sm:$0xff]
        %v1849 = vld [vmem:[#allocation2 + $0xcb] sm:$0xff]
        %v1850 = vld [vmem:[#allocation2 + $0xdb] sm:$0xff]
        %v1851 = vld [vmem:[#allocation2 + $0xe3] sm:$0xff]
        %v1852 = vld [vmem:[#allocation2 + $0xf3] sm:$0xff]
        %v1853 = vld [vmem:[#allocation2 + $0xfb] sm:$0xff]
        %v1854 = vld [vmem:[#allocation2 + $0x10b] sm:$0xff]
        %v1855 = vld [vmem:[#allocation2 + $0x113] sm:$0xff]
        %v1856 = vld [vmem:[#allocation2 + $0x123] sm:$0xff]
        %v1857 = vld [vmem:[#allocation2 + $0x12b] sm:$0xff]
        %v1858 = vld [vmem:[#allocation2 + $0x13b] sm:$0xff]
        %v1859 = vld [vmem:[#allocation2 + $0x143] sm:$0xff]
        %v1860 = vld [vmem:[#allocation2 + $0x153] sm:$0xff]
        %v1861 = vld [vmem:[#allocation2 + $0x15b] sm:$0xff]
        %v1862 = vld [vmem:[#allocation2 + $0x16b] sm:$0xff]
        %v1863 = vld [vmem:[#allocation2 + $0x173] sm:$0xff]
        %v1864 = vmax.f32 %v1800, %v1832
        %v1865 = vmax.f32 %v1801, %v1833
        %v1866 = vmax.f32 %v1802, %v1834
        %v1867 = vmax.f32 %v1803, %v1835
        %v1868 = vmax.f32 %v1804, %v1836
        %v1869 = vmax.f32 %v1805, %v1837
        %v1870 = vmax.f32 %v1806, %v1838
        %v1871 = vmax.f32 %v1807, %v1839
        %v1872 = vmax.f32 %v1808, %v1840
        %v1873 = vmax.f32 %v1809, %v1841
        %v1874 = vmax.f32 %v1810, %v1842
        %v1875 = vmax.f32 %v1811, %v1843
        %v1876 = vmax.f32 %v1812, %v1844
        %v1877 = vmax.f32 %v1813, %v1845
        %v1878 = vmax.f32 %v1814, %v1846
        %v1879 = vmax.f32 %v1815, %v1847
        %v1880 = vmax.f32 %v1816, %v1848
        %v1881 = vmax.f32 %v1817, %v1849
        %v1882 = vmax.f32 %v1818, %v1850
        %v1883 = vmax.f32 %v1819, %v1851
        %v1884 = vmax.f32 %v1820, %v1852
        %v1885 = vmax.f32 %v1821, %v1853
        %v1886 = vmax.f32 %v1822, %v1854
        %v1887 = vmax.f32 %v1823, %v1855
        %v1888 = vmax.f32 %v1824, %v1856
        %v1889 = vmax.f32 %v1825, %v1857
        %v1890 = vmax.f32 %v1826, %v1858
        %v1891 = vmax.f32 %v1827, %v1859
        %v1892 = vmax.f32 %v1828, %v1860
        %v1893 = vmax.f32 %v1829, %v1861
        %v1894 = vmax.f32 %v1830, %v1862
        %v1895 = vmax.f32 %v1831, %v1863
        %v1896 = vld [vmem:[#allocation2 + $0x4] sm:$0xff]
        %v1897 = vld [vmem:[#allocation2 + $0xc] sm:$0xff]
        %v1898 = vld [vmem:[#allocation2 + $0x1c] sm:$0xff]
        %v1899 = vld [vmem:[#allocation2 + $0x24] sm:$0xff]
        %v1900 = vld [vmem:[#allocation2 + $0x34] sm:$0xff]
        %v1901 = vld [vmem:[#allocation2 + $0x3c] sm:$0xff]
        %v1902 = vld [vmem:[#allocation2 + $0x4c] sm:$0xff]
        %v1903 = vld [vmem:[#allocation2 + $0x54] sm:$0xff]
        %v1904 = vld [vmem:[#allocation2 + $0x64] sm:$0xff]
        %v1905 = vld [vmem:[#allocation2 + $0x6c] sm:$0xff]
        %v1906 = vld [vmem:[#allocation2 + $0x7c] sm:$0xff]
        %v1907 = vld [vmem:[#allocation2 + $0x84] sm:$0xff]
        %v1908 = vld [vmem:[#allocation2 + $0x94] sm:$0xff]
        %v1909 = vld [vmem:[#allocation2 + $0x9c] sm:$0xff]
        %v1910 = vld [vmem:[#allocation2 + $0xac] sm:$0xff]
        %v1911 = vld [vmem:[#allocation2 + $0xb4] sm:$0xff]
        %v1912 = vld [vmem:[#allocation2 + $0xc4] sm:$0xff]
        %v1913 = vld [vmem:[#allocation2 + $0xcc] sm:$0xff]
        %v1914 = vld [vmem:[#allocation2 + $0xdc] sm:$0xff]
        %v1915 = vld [vmem:[#allocation2 + $0xe4] sm:$0xff]
        %v1916 = vld [vmem:[#allocation2 + $0xf4] sm:$0xff]
        %v1917 = vld [vmem:[#allocation2 + $0xfc] sm:$0xff]
        %v1918 = vld [vmem:[#allocation2 + $0x10c] sm:$0xff]
        %v1919 = vld [vmem:[#allocation2 + $0x114] sm:$0xff]
        %v1920 = vld [vmem:[#allocation2 + $0x124] sm:$0xff]
        %v1921 = vld [vmem:[#allocation2 + $0x12c] sm:$0xff]
        %v1922 = vld [vmem:[#allocation2 + $0x13c] sm:$0xff]
        %v1923 = vld [vmem:[#allocation2 + $0x144] sm:$0xff]
        %v1924 = vld [vmem:[#allocation2 + $0x154] sm:$0xff]
        %v1925 = vld [vmem:[#allocation2 + $0x15c] sm:$0xff]
        %v1926 = vld [vmem:[#allocation2 + $0x16c] sm:$0xff]
        %v1927 = vld [vmem:[#allocation2 + $0x174] sm:$0xff]
        %v1928 = vmax.f32 %v1864, %v1896
        %v1929 = vmax.f32 %v1865, %v1897
        %v1930 = vmax.f32 %v1866, %v1898
        %v1931 = vmax.f32 %v1867, %v1899
        %v1932 = vmax.f32 %v1868, %v1900
        %v1933 = vmax.f32 %v1869, %v1901
        %v1934 = vmax.f32 %v1870, %v1902
        %v1935 = vmax.f32 %v1871, %v1903
        %v1936 = vmax.f32 %v1872, %v1904
        %v1937 = vmax.f32 %v1873, %v1905
        %v1938 = vmax.f32 %v1874, %v1906
        %v1939 = vmax.f32 %v1875, %v1907
        %v1940 = vmax.f32 %v1876, %v1908
        %v1941 = vmax.f32 %v1877, %v1909
        %v1942 = vmax.f32 %v1878, %v1910
        %v1943 = vmax.f32 %v1879, %v1911
        %v1944 = vmax.f32 %v1880, %v1912
        %v1945 = vmax.f32 %v1881, %v1913
        %v1946 = vmax.f32 %v1882, %v1914
        %v1947 = vmax.f32 %v1883, %v1915
        %v1948 = vmax.f32 %v1884, %v1916
        %v1949 = vmax.f32 %v1885, %v1917
        %v1950 = vmax.f32 %v1886, %v1918
        %v1951 = vmax.f32 %v1887, %v1919
        %v1952 = vmax.f32 %v1888, %v1920
        %v1953 = vmax.f32 %v1889, %v1921
        %v1954 = vmax.f32 %v1890, %v1922
        %v1955 = vmax.f32 %v1891, %v1923
        %v1956 = vmax.f32 %v1892, %v1924
        %v1957 = vmax.f32 %v1893, %v1925
        %v1958 = vmax.f32 %v1894, %v1926
        %v1959 = vmax.f32 %v1895, %v1927
        %1960 = vst [vmem:[%s1316] sm:$0xff] %v1928
        %1961 = vst [vmem:[%s1316 + $0x8] sm:$0xff] %v1929
        %1962 = vst [vmem:[%s1316 + $0x10] sm:$0xff] %v1930
        %1963 = vst [vmem:[%s1316 + $0x18] sm:$0xff] %v1931
        %1964 = vst [vmem:[%s1316 + $0x20] sm:$0xff] %v1932
        %1965 = vst [vmem:[%s1316 + $0x28] sm:$0xff] %v1933
        %1966 = vst [vmem:[%s1316 + $0x30] sm:$0xff] %v1934
        %1967 = vst [vmem:[%s1316 + $0x38] sm:$0xff] %v1935
        %1968 = vst [vmem:[%s1316 + $0x40] sm:$0xff] %v1936
        %1969 = vst [vmem:[%s1316 + $0x48] sm:$0xff] %v1937
        %1970 = vst [vmem:[%s1316 + $0x50] sm:$0xff] %v1938
        %1971 = vst [vmem:[%s1316 + $0x58] sm:$0xff] %v1939
        %1972 = vst [vmem:[%s1316 + $0x60] sm:$0xff] %v1940
        %1973 = vst [vmem:[%s1316 + $0x68] sm:$0xff] %v1941
        %1974 = vst [vmem:[%s1316 + $0x70] sm:$0xff] %v1942
        %1975 = vst [vmem:[%s1316 + $0x78] sm:$0xff] %v1943
        %1976 = vst [vmem:[%s1316 + $0x80] sm:$0xff] %v1944
        %1977 = vst [vmem:[%s1316 + $0x88] sm:$0xff] %v1945
        %1978 = vst [vmem:[%s1316 + $0x90] sm:$0xff] %v1946
        %1979 = vst [vmem:[%s1316 + $0x98] sm:$0xff] %v1947
        %1980 = vst [vmem:[%s1316 + $0xa0] sm:$0xff] %v1948
        %1981 = vst [vmem:[%s1316 + $0xa8] sm:$0xff] %v1949
        %1982 = vst [vmem:[%s1316 + $0xb0] sm:$0xff] %v1950
        %1983 = vst [vmem:[%s1316 + $0xb8] sm:$0xff] %v1951
        %1984 = vst [vmem:[%s1316 + $0xc0] sm:$0xff] %v1952
        %1985 = vst [vmem:[%s1316 + $0xc8] sm:$0xff] %v1953
        %1986 = vst [vmem:[%s1316 + $0xd0] sm:$0xff] %v1954
        %1987 = vst [vmem:[%s1316 + $0xd8] sm:$0xff] %v1955
        %1988 = vst [vmem:[%s1316 + $0xe0] sm:$0xff] %v1956
        %1989 = vst [vmem:[%s1316 + $0xe8] sm:$0xff] %v1957
        %1990 = vst [vmem:[%s1316 + $0xf0] sm:$0xff] %v1958
        %1991 = vst [vmem:[%s1316 + $0xf8] sm:$0xff] %v1959
        %v1992 = vld [vmem:[#allocation3] sm:$0xff]
        %v1993 = vld [vmem:[#allocation3 + $0x8] sm:$0xff]
        %v1994 = vld [vmem:[#allocation3 + $0x10] sm:$0xff]
        %v1995 = vld [vmem:[#allocation3 + $0x18] sm:$0xff]
        %v1996 = vld [vmem:[#allocation3 + $0x20] sm:$0xff]
        %v1997 = vld [vmem:[#allocation3 + $0x28] sm:$0xff]
        %v1998 = vld [vmem:[#allocation3 + $0x30] sm:$0xff]
        %v1999 = vld [vmem:[#allocation3 + $0x38] sm:$0xff]
        %v2000 = vld [vmem:[#allocation3 + $0x40] sm:$0xff]
        %v2001 = vld [vmem:[#allocation3 + $0x48] sm:$0xff]
        %v2002 = vld [vmem:[#allocation3 + $0x50] sm:$0xff]
        %v2003 = vld [vmem:[#allocation3 + $0x58] sm:$0xff]
        %v2004 = vld [vmem:[#allocation3 + $0x60] sm:$0xff]
        %v2005 = vld [vmem:[#allocation3 + $0x68] sm:$0xff]
        %v2006 = vld [vmem:[#allocation3 + $0x70] sm:$0xff]
        %v2007 = vld [vmem:[#allocation3 + $0x78] sm:$0xff]
        %v2008 = vld [vmem:[#allocation3 + $0x80] sm:$0xff]
        %v2009 = vld [vmem:[#allocation3 + $0x88] sm:$0xff]
        %v2010 = vld [vmem:[#allocation3 + $0x90] sm:$0xff]
        %v2011 = vld [vmem:[#allocation3 + $0x98] sm:$0xff]
        %v2012 = vld [vmem:[#allocation3 + $0xa0] sm:$0xff]
        %v2013 = vld [vmem:[#allocation3 + $0xa8] sm:$0xff]
        %v2014 = vld [vmem:[#allocation3 + $0xb0] sm:$0xff]
        %v2015 = vld [vmem:[#allocation3 + $0xb8] sm:$0xff]
        %v2016 = vld [vmem:[#allocation3 + $0xc0] sm:$0xff]
        %v2017 = vld [vmem:[#allocation3 + $0xc8] sm:$0xff]
        %v2018 = vld [vmem:[#allocation3 + $0xd0] sm:$0xff]
        %v2019 = vld [vmem:[#allocation3 + $0xd8] sm:$0xff]
        %v2020 = vld [vmem:[#allocation3 + $0xe0] sm:$0xff]
        %v2021 = vld [vmem:[#allocation3 + $0xe8] sm:$0xff]
        %v2022 = vld [vmem:[#allocation3 + $0xf0] sm:$0xff]
        %v2023 = vld [vmem:[#allocation3 + $0xf8] sm:$0xff]
        %v2024 = vld [vmem:[%s1381] sm:$0xff]
        %v2025 = vld [vmem:[%s1381 + $0x8] sm:$0xff]
        %v2026 = vld [vmem:[%s1381 + $0x10] sm:$0xff]
        %v2027 = vld [vmem:[%s1381 + $0x18] sm:$0xff]
        %v2028 = vld [vmem:[%s1381 + $0x20] sm:$0xff]
        %v2029 = vld [vmem:[%s1381 + $0x28] sm:$0xff]
        %v2030 = vld [vmem:[%s1381 + $0x30] sm:$0xff]
        %v2031 = vld [vmem:[%s1381 + $0x38] sm:$0xff]
        %v2032 = vld [vmem:[%s1381 + $0x40] sm:$0xff]
        %v2033 = vld [vmem:[%s1381 + $0x48] sm:$0xff]
        %v2034 = vld [vmem:[%s1381 + $0x50] sm:$0xff]
        %v2035 = vld [vmem:[%s1381 + $0x58] sm:$0xff]
        %v2036 = vld [vmem:[%s1381 + $0x60] sm:$0xff]
        %v2037 = vld [vmem:[%s1381 + $0x68] sm:$0xff]
        %v2038 = vld [vmem:[%s1381 + $0x70] sm:$0xff]
        %v2039 = vld [vmem:[%s1381 + $0x78] sm:$0xff]
        %v2040 = vld [vmem:[%s1381 + $0x80] sm:$0xff]
        %v2041 = vld [vmem:[%s1381 + $0x88] sm:$0xff]
        %v2042 = vld [vmem:[%s1381 + $0x90] sm:$0xff]
        %v2043 = vld [vmem:[%s1381 + $0x98] sm:$0xff]
        %v2044 = vld [vmem:[%s1381 + $0xa0] sm:$0xff]
        %v2045 = vld [vmem:[%s1381 + $0xa8] sm:$0xff]
        %v2046 = vld [vmem:[%s1381 + $0xb0] sm:$0xff]
        %v2047 = vld [vmem:[%s1381 + $0xb8] sm:$0xff]
        %v2048 = vld [vmem:[%s1381 + $0xc0] sm:$0xff]
        %v2049 = vld [vmem:[%s1381 + $0xc8] sm:$0xff]
        %v2050 = vld [vmem:[%s1381 + $0xd0] sm:$0xff]
        %v2051 = vld [vmem:[%s1381 + $0xd8] sm:$0xff]
        %v2052 = vld [vmem:[%s1381 + $0xe0] sm:$0xff]
        %v2053 = vld [vmem:[%s1381 + $0xe8] sm:$0xff]
        %v2054 = vld [vmem:[%s1381 + $0xf0] sm:$0xff]
        %v2055 = vld [vmem:[%s1381 + $0xf8] sm:$0xff]
        %v2056 = vmax.f32 %v1992, %v2024
        %v2057 = vmax.f32 %v1993, %v2025
        %v2058 = vmax.f32 %v1994, %v2026
        %v2059 = vmax.f32 %v1995, %v2027
        %v2060 = vmax.f32 %v1996, %v2028
        %v2061 = vmax.f32 %v1997, %v2029
        %v2062 = vmax.f32 %v1998, %v2030
        %v2063 = vmax.f32 %v1999, %v2031
        %v2064 = vmax.f32 %v2000, %v2032
        %v2065 = vmax.f32 %v2001, %v2033
        %v2066 = vmax.f32 %v2002, %v2034
        %v2067 = vmax.f32 %v2003, %v2035
        %v2068 = vmax.f32 %v2004, %v2036
        %v2069 = vmax.f32 %v2005, %v2037
        %v2070 = vmax.f32 %v2006, %v2038
        %v2071 = vmax.f32 %v2007, %v2039
        %v2072 = vmax.f32 %v2008, %v2040
        %v2073 = vmax.f32 %v2009, %v2041
        %v2074 = vmax.f32 %v2010, %v2042
        %v2075 = vmax.f32 %v2011, %v2043
        %v2076 = vmax.f32 %v2012, %v2044
        %v2077 = vmax.f32 %v2013, %v2045
        %v2078 = vmax.f32 %v2014, %v2046
        %v2079 = vmax.f32 %v2015, %v2047
        %v2080 = vmax.f32 %v2016, %v2048
        %v2081 = vmax.f32 %v2017, %v2049
        %v2082 = vmax.f32 %v2018, %v2050
        %v2083 = vmax.f32 %v2019, %v2051
        %v2084 = vmax.f32 %v2020, %v2052
        %v2085 = vmax.f32 %v2021, %v2053
        %v2086 = vmax.f32 %v2022, %v2054
        %v2087 = vmax.f32 %v2023, %v2055
        %v2088 = vld [vmem:[%s1316] sm:$0xff]
        %v2089 = vld [vmem:[%s1316 + $0x8] sm:$0xff]
        %v2090 = vld [vmem:[%s1316 + $0x10] sm:$0xff]
        %v2091 = vld [vmem:[%s1316 + $0x18] sm:$0xff]
        %v2092 = vld [vmem:[%s1316 + $0x20] sm:$0xff]
        %v2093 = vld [vmem:[%s1316 + $0x28] sm:$0xff]
        %v2094 = vld [vmem:[%s1316 + $0x30] sm:$0xff]
        %v2095 = vld [vmem:[%s1316 + $0x38] sm:$0xff]
        %v2096 = vld [vmem:[%s1316 + $0x40] sm:$0xff]
        %v2097 = vld [vmem:[%s1316 + $0x48] sm:$0xff]
        %v2098 = vld [vmem:[%s1316 + $0x50] sm:$0xff]
        %v2099 = vld [vmem:[%s1316 + $0x58] sm:$0xff]
        %v2100 = vld [vmem:[%s1316 + $0x60] sm:$0xff]
        %v2101 = vld [vmem:[%s1316 + $0x68] sm:$0xff]
        %v2102 = vld [vmem:[%s1316 + $0x70] sm:$0xff]
        %v2103 = vld [vmem:[%s1316 + $0x78] sm:$0xff]
        %v2104 = vld [vmem:[%s1316 + $0x80] sm:$0xff]
        %v2105 = vld [vmem:[%s1316 + $0x88] sm:$0xff]
        %v2106 = vld [vmem:[%s1316 + $0x90] sm:$0xff]
        %v2107 = vld [vmem:[%s1316 + $0x98] sm:$0xff]
        %v2108 = vld [vmem:[%s1316 + $0xa0] sm:$0xff]
        %v2109 = vld [vmem:[%s1316 + $0xa8] sm:$0xff]
        %v2110 = vld [vmem:[%s1316 + $0xb0] sm:$0xff]
        %v2111 = vld [vmem:[%s1316 + $0xb8] sm:$0xff]
        %v2112 = vld [vmem:[%s1316 + $0xc0] sm:$0xff]
        %v2113 = vld [vmem:[%s1316 + $0xc8] sm:$0xff]
        %v2114 = vld [vmem:[%s1316 + $0xd0] sm:$0xff]
        %v2115 = vld [vmem:[%s1316 + $0xd8] sm:$0xff]
        %v2116 = vld [vmem:[%s1316 + $0xe0] sm:$0xff]
        %v2117 = vld [vmem:[%s1316 + $0xe8] sm:$0xff]
        %v2118 = vld [vmem:[%s1316 + $0xf0] sm:$0xff]
        %v2119 = vld [vmem:[%s1316 + $0xf8] sm:$0xff]
        %v2120 = vmax.f32 %v2056, %v2088
        %v2121 = vmax.f32 %v2057, %v2089
        %v2122 = vmax.f32 %v2058, %v2090
        %v2123 = vmax.f32 %v2059, %v2091
        %v2124 = vmax.f32 %v2060, %v2092
        %v2125 = vmax.f32 %v2061, %v2093
        %v2126 = vmax.f32 %v2062, %v2094
        %v2127 = vmax.f32 %v2063, %v2095
        %v2128 = vmax.f32 %v2064, %v2096
        %v2129 = vmax.f32 %v2065, %v2097
        %v2130 = vmax.f32 %v2066, %v2098
        %v2131 = vmax.f32 %v2067, %v2099
        %v2132 = vmax.f32 %v2068, %v2100
        %v2133 = vmax.f32 %v2069, %v2101
        %v2134 = vmax.f32 %v2070, %v2102
        %v2135 = vmax.f32 %v2071, %v2103
        %v2136 = vmax.f32 %v2072, %v2104
        %v2137 = vmax.f32 %v2073, %v2105
        %v2138 = vmax.f32 %v2074, %v2106
        %v2139 = vmax.f32 %v2075, %v2107
        %v2140 = vmax.f32 %v2076, %v2108
        %v2141 = vmax.f32 %v2077, %v2109
        %v2142 = vmax.f32 %v2078, %v2110
        %v2143 = vmax.f32 %v2079, %v2111
        %v2144 = vmax.f32 %v2080, %v2112
        %v2145 = vmax.f32 %v2081, %v2113
        %v2146 = vmax.f32 %v2082, %v2114
        %v2147 = vmax.f32 %v2083, %v2115
        %v2148 = vmax.f32 %v2084, %v2116
        %v2149 = vmax.f32 %v2085, %v2117
        %v2150 = vmax.f32 %v2086, %v2118
        %v2151 = vmax.f32 %v2087, %v2119
        %v2152 = vld [vmem:[%s1510] sm:$0xff]
        %v2153 = vld [vmem:[%s1510 + $0x8] sm:$0xff]
        %v2154 = vld [vmem:[%s1510 + $0x10] sm:$0xff]
        %v2155 = vld [vmem:[%s1510 + $0x18] sm:$0xff]
        %v2156 = vld [vmem:[%s1510 + $0x20] sm:$0xff]
        %v2157 = vld [vmem:[%s1510 + $0x28] sm:$0xff]
        %v2158 = vld [vmem:[%s1510 + $0x30] sm:$0xff]
        %v2159 = vld [vmem:[%s1510 + $0x38] sm:$0xff]
        %v2160 = vld [vmem:[%s1510 + $0x40] sm:$0xff]
        %v2161 = vld [vmem:[%s1510 + $0x48] sm:$0xff]
        %v2162 = vld [vmem:[%s1510 + $0x50] sm:$0xff]
        %v2163 = vld [vmem:[%s1510 + $0x58] sm:$0xff]
        %v2164 = vld [vmem:[%s1510 + $0x60] sm:$0xff]
        %v2165 = vld [vmem:[%s1510 + $0x68] sm:$0xff]
        %v2166 = vld [vmem:[%s1510 + $0x70] sm:$0xff]
        %v2167 = vld [vmem:[%s1510 + $0x78] sm:$0xff]
        %v2168 = vld [vmem:[%s1510 + $0x80] sm:$0xff]
        %v2169 = vld [vmem:[%s1510 + $0x88] sm:$0xff]
        %v2170 = vld [vmem:[%s1510 + $0x90] sm:$0xff]
        %v2171 = vld [vmem:[%s1510 + $0x98] sm:$0xff]
        %v2172 = vld [vmem:[%s1510 + $0xa0] sm:$0xff]
        %v2173 = vld [vmem:[%s1510 + $0xa8] sm:$0xff]
        %v2174 = vld [vmem:[%s1510 + $0xb0] sm:$0xff]
        %v2175 = vld [vmem:[%s1510 + $0xb8] sm:$0xff]
        %v2176 = vld [vmem:[%s1510 + $0xc0] sm:$0xff]
        %v2177 = vld [vmem:[%s1510 + $0xc8] sm:$0xff]
        %v2178 = vld [vmem:[%s1510 + $0xd0] sm:$0xff]
        %v2179 = vld [vmem:[%s1510 + $0xd8] sm:$0xff]
        %v2180 = vld [vmem:[%s1510 + $0xe0] sm:$0xff]
        %v2181 = vld [vmem:[%s1510 + $0xe8] sm:$0xff]
        %v2182 = vld [vmem:[%s1510 + $0xf0] sm:$0xff]
        %v2183 = vld [vmem:[%s1510 + $0xf8] sm:$0xff]
        %v2184 = vmax.f32 %v2120, %v2152
        %v2185 = vmax.f32 %v2121, %v2153
        %v2186 = vmax.f32 %v2122, %v2154
        %v2187 = vmax.f32 %v2123, %v2155
        %v2188 = vmax.f32 %v2124, %v2156
        %v2189 = vmax.f32 %v2125, %v2157
        %v2190 = vmax.f32 %v2126, %v2158
        %v2191 = vmax.f32 %v2127, %v2159
        %v2192 = vmax.f32 %v2128, %v2160
        %v2193 = vmax.f32 %v2129, %v2161
        %v2194 = vmax.f32 %v2130, %v2162
        %v2195 = vmax.f32 %v2131, %v2163
        %v2196 = vmax.f32 %v2132, %v2164
        %v2197 = vmax.f32 %v2133, %v2165
        %v2198 = vmax.f32 %v2134, %v2166
        %v2199 = vmax.f32 %v2135, %v2167
        %v2200 = vmax.f32 %v2136, %v2168
        %v2201 = vmax.f32 %v2137, %v2169
        %v2202 = vmax.f32 %v2138, %v2170
        %v2203 = vmax.f32 %v2139, %v2171
        %v2204 = vmax.f32 %v2140, %v2172
        %v2205 = vmax.f32 %v2141, %v2173
        %v2206 = vmax.f32 %v2142, %v2174
        %v2207 = vmax.f32 %v2143, %v2175
        %v2208 = vmax.f32 %v2144, %v2176
        %v2209 = vmax.f32 %v2145, %v2177
        %v2210 = vmax.f32 %v2146, %v2178
        %v2211 = vmax.f32 %v2147, %v2179
        %v2212 = vmax.f32 %v2148, %v2180
        %v2213 = vmax.f32 %v2149, %v2181
        %v2214 = vmax.f32 %v2150, %v2182
        %v2215 = vmax.f32 %v2151, %v2183
        %v2216 = vld [vmem:[%s1575] sm:$0xff]
        %v2217 = vld [vmem:[%s1575 + $0x8] sm:$0xff]
        %v2218 = vld [vmem:[%s1575 + $0x10] sm:$0xff]
        %v2219 = vld [vmem:[%s1575 + $0x18] sm:$0xff]
        %v2220 = vld [vmem:[%s1575 + $0x20] sm:$0xff]
        %v2221 = vld [vmem:[%s1575 + $0x28] sm:$0xff]
        %v2222 = vld [vmem:[%s1575 + $0x30] sm:$0xff]
        %v2223 = vld [vmem:[%s1575 + $0x38] sm:$0xff]
        %v2224 = vld [vmem:[%s1575 + $0x40] sm:$0xff]
        %v2225 = vld [vmem:[%s1575 + $0x48] sm:$0xff]
        %v2226 = vld [vmem:[%s1575 + $0x50] sm:$0xff]
        %v2227 = vld [vmem:[%s1575 + $0x58] sm:$0xff]
        %v2228 = vld [vmem:[%s1575 + $0x60] sm:$0xff]
        %v2229 = vld [vmem:[%s1575 + $0x68] sm:$0xff]
        %v2230 = vld [vmem:[%s1575 + $0x70] sm:$0xff]
        %v2231 = vld [vmem:[%s1575 + $0x78] sm:$0xff]
        %v2232 = vld [vmem:[%s1575 + $0x80] sm:$0xff]
        %v2233 = vld [vmem:[%s1575 + $0x88] sm:$0xff]
        %v2234 = vld [vmem:[%s1575 + $0x90] sm:$0xff]
        %v2235 = vld [vmem:[%s1575 + $0x98] sm:$0xff]
        %v2236 = vld [vmem:[%s1575 + $0xa0] sm:$0xff]
        %v2237 = vld [vmem:[%s1575 + $0xa8] sm:$0xff]
        %v2238 = vld [vmem:[%s1575 + $0xb0] sm:$0xff]
        %v2239 = vld [vmem:[%s1575 + $0xb8] sm:$0xff]
        %v2240 = vld [vmem:[%s1575 + $0xc0] sm:$0xff]
        %v2241 = vld [vmem:[%s1575 + $0xc8] sm:$0xff]
        %v2242 = vld [vmem:[%s1575 + $0xd0] sm:$0xff]
        %v2243 = vld [vmem:[%s1575 + $0xd8] sm:$0xff]
        %v2244 = vld [vmem:[%s1575 + $0xe0] sm:$0xff]
        %v2245 = vld [vmem:[%s1575 + $0xe8] sm:$0xff]
        %v2246 = vld [vmem:[%s1575 + $0xf0] sm:$0xff]
        %v2247 = vld [vmem:[%s1575 + $0xf8] sm:$0xff]
        %v2248 = vmax.f32 %v2184, %v2216
        %v2249 = vmax.f32 %v2185, %v2217
        %v2250 = vmax.f32 %v2186, %v2218
        %v2251 = vmax.f32 %v2187, %v2219
        %v2252 = vmax.f32 %v2188, %v2220
        %v2253 = vmax.f32 %v2189, %v2221
        %v2254 = vmax.f32 %v2190, %v2222
        %v2255 = vmax.f32 %v2191, %v2223
        %v2256 = vmax.f32 %v2192, %v2224
        %v2257 = vmax.f32 %v2193, %v2225
        %v2258 = vmax.f32 %v2194, %v2226
        %v2259 = vmax.f32 %v2195, %v2227
        %v2260 = vmax.f32 %v2196, %v2228
        %v2261 = vmax.f32 %v2197, %v2229
        %v2262 = vmax.f32 %v2198, %v2230
        %v2263 = vmax.f32 %v2199, %v2231
        %v2264 = vmax.f32 %v2200, %v2232
        %v2265 = vmax.f32 %v2201, %v2233
        %v2266 = vmax.f32 %v2202, %v2234
        %v2267 = vmax.f32 %v2203, %v2235
        %v2268 = vmax.f32 %v2204, %v2236
        %v2269 = vmax.f32 %v2205, %v2237
        %v2270 = vmax.f32 %v2206, %v2238
        %v2271 = vmax.f32 %v2207, %v2239
        %v2272 = vmax.f32 %v2208, %v2240
        %v2273 = vmax.f32 %v2209, %v2241
        %v2274 = vmax.f32 %v2210, %v2242
        %v2275 = vmax.f32 %v2211, %v2243
        %v2276 = vmax.f32 %v2212, %v2244
        %v2277 = vmax.f32 %v2213, %v2245
        %v2278 = vmax.f32 %v2214, %v2246
        %v2279 = vmax.f32 %v2215, %v2247
        %2280 = vst [vmem:[#allocation2 + $0x2] sm:$0xff] %v2248
        %2281 = vst [vmem:[#allocation2 + $0xa] sm:$0xff] %v2249
        %2282 = vst [vmem:[#allocation2 + $0x1a] sm:$0xff] %v2250
        %2283 = vst [vmem:[#allocation2 + $0x22] sm:$0xff] %v2251
        %2284 = vst [vmem:[#allocation2 + $0x32] sm:$0xff] %v2252
        %2285 = vst [vmem:[#allocation2 + $0x3a] sm:$0xff] %v2253
        %2286 = vst [vmem:[#allocation2 + $0x4a] sm:$0xff] %v2254
        %2287 = vst [vmem:[#allocation2 + $0x52] sm:$0xff] %v2255
        %2288 = vst [vmem:[#allocation2 + $0x62] sm:$0xff] %v2256
        %2289 = vst [vmem:[#allocation2 + $0x6a] sm:$0xff] %v2257
        %2290 = vst [vmem:[#allocation2 + $0x7a] sm:$0xff] %v2258
        %2291 = vst [vmem:[#allocation2 + $0x82] sm:$0xff] %v2259
        %2292 = vst [vmem:[#allocation2 + $0x92] sm:$0xff] %v2260
        %2293 = vst [vmem:[#allocation2 + $0x9a] sm:$0xff] %v2261
        %2294 = vst [vmem:[#allocation2 + $0xaa] sm:$0xff] %v2262
        %2295 = vst [vmem:[#allocation2 + $0xb2] sm:$0xff] %v2263
        %2296 = vst [vmem:[#allocation2 + $0xc2] sm:$0xff] %v2264
        %2297 = vst [vmem:[#allocation2 + $0xca] sm:$0xff] %v2265
        %2298 = vst [vmem:[#allocation2 + $0xda] sm:$0xff] %v2266
        %2299 = vst [vmem:[#allocation2 + $0xe2] sm:$0xff] %v2267
        %2300 = vst [vmem:[#allocation2 + $0xf2] sm:$0xff] %v2268
        %2301 = vst [vmem:[#allocation2 + $0xfa] sm:$0xff] %v2269
        %2302 = vst [vmem:[#allocation2 + $0x10a] sm:$0xff] %v2270
        %2303 = vst [vmem:[#allocation2 + $0x112] sm:$0xff] %v2271
        %2304 = vst [vmem:[#allocation2 + $0x122] sm:$0xff] %v2272
        %2305 = vst [vmem:[#allocation2 + $0x12a] sm:$0xff] %v2273
        %2306 = vst [vmem:[#allocation2 + $0x13a] sm:$0xff] %v2274
        %2307 = vst [vmem:[#allocation2 + $0x142] sm:$0xff] %v2275
        %2308 = vst [vmem:[#allocation2 + $0x152] sm:$0xff] %v2276
        %2309 = vst [vmem:[#allocation2 + $0x15a] sm:$0xff] %v2277
        %2310 = vst [vmem:[#allocation2 + $0x16a] sm:$0xff] %v2278
        %2311 = vst [vmem:[#allocation2 + $0x172] sm:$0xff] %v2279
        %v2312 = vld [vmem:[#allocation2] sm:$0xff]
        %v2313 = vld [vmem:[#allocation2 + $0x8] sm:$0xff]
        %v2314 = vld [vmem:[#allocation2 + $0x18] sm:$0xff]
        %v2315 = vld [vmem:[#allocation2 + $0x20] sm:$0xff]
        %v2316 = vld [vmem:[#allocation2 + $0x30] sm:$0xff]
        %v2317 = vld [vmem:[#allocation2 + $0x38] sm:$0xff]
        %v2318 = vld [vmem:[#allocation2 + $0x48] sm:$0xff]
        %v2319 = vld [vmem:[#allocation2 + $0x50] sm:$0xff]
        %v2320 = vld [vmem:[#allocation2 + $0x60] sm:$0xff]
        %v2321 = vld [vmem:[#allocation2 + $0x68] sm:$0xff]
        %v2322 = vld [vmem:[#allocation2 + $0x78] sm:$0xff]
        %v2323 = vld [vmem:[#allocation2 + $0x80] sm:$0xff]
        %v2324 = vld [vmem:[#allocation2 + $0x90] sm:$0xff]
        %v2325 = vld [vmem:[#allocation2 + $0x98] sm:$0xff]
        %v2326 = vld [vmem:[#allocation2 + $0xa8] sm:$0xff]
        %v2327 = vld [vmem:[#allocation2 + $0xb0] sm:$0xff]
        %v2328 = vld [vmem:[#allocation2 + $0xc0] sm:$0xff]
        %v2329 = vld [vmem:[#allocation2 + $0xc8] sm:$0xff]
        %v2330 = vld [vmem:[#allocation2 + $0xd8] sm:$0xff]
        %v2331 = vld [vmem:[#allocation2 + $0xe0] sm:$0xff]
        %v2332 = vld [vmem:[#allocation2 + $0xf0] sm:$0xff]
        %v2333 = vld [vmem:[#allocation2 + $0xf8] sm:$0xff]
        %v2334 = vld [vmem:[#allocation2 + $0x108] sm:$0xff]
        %v2335 = vld [vmem:[#allocation2 + $0x110] sm:$0xff]
        %v2336 = vld [vmem:[#allocation2 + $0x120] sm:$0xff]
        %v2337 = vld [vmem:[#allocation2 + $0x128] sm:$0xff]
        %v2338 = vld [vmem:[#allocation2 + $0x138] sm:$0xff]
        %v2339 = vld [vmem:[#allocation2 + $0x140] sm:$0xff]
        %v2340 = vld [vmem:[#allocation2 + $0x150] sm:$0xff]
        %v2341 = vld [vmem:[#allocation2 + $0x158] sm:$0xff]
        %v2342 = vld [vmem:[#allocation2 + $0x168] sm:$0xff]
        %v2343 = vld [vmem:[#allocation2 + $0x170] sm:$0xff]
        %v2344 = vld [vmem:[#allocation2 + $0x1] sm:$0xff]
        %v2345 = vld [vmem:[#allocation2 + $0x9] sm:$0xff]
        %v2346 = vld [vmem:[#allocation2 + $0x19] sm:$0xff]
        %v2347 = vld [vmem:[#allocation2 + $0x21] sm:$0xff]
        %v2348 = vld [vmem:[#allocation2 + $0x31] sm:$0xff]
        %v2349 = vld [vmem:[#allocation2 + $0x39] sm:$0xff]
        %v2350 = vld [vmem:[#allocation2 + $0x49] sm:$0xff]
        %v2351 = vld [vmem:[#allocation2 + $0x51] sm:$0xff]
        %v2352 = vld [vmem:[#allocation2 + $0x61] sm:$0xff]
        %v2353 = vld [vmem:[#allocation2 + $0x69] sm:$0xff]
        %v2354 = vld [vmem:[#allocation2 + $0x79] sm:$0xff]
        %v2355 = vld [vmem:[#allocation2 + $0x81] sm:$0xff]
        %v2356 = vld [vmem:[#allocation2 + $0x91] sm:$0xff]
        %v2357 = vld [vmem:[#allocation2 + $0x99] sm:$0xff]
        %v2358 = vld [vmem:[#allocation2 + $0xa9] sm:$0xff]
        %v2359 = vld [vmem:[#allocation2 + $0xb1] sm:$0xff]
        %v2360 = vld [vmem:[#allocation2 + $0xc1] sm:$0xff]
        %v2361 = vld [vmem:[#allocation2 + $0xc9] sm:$0xff]
        %v2362 = vld [vmem:[#allocation2 + $0xd9] sm:$0xff]
        %v2363 = vld [vmem:[#allocation2 + $0xe1] sm:$0xff]
        %v2364 = vld [vmem:[#allocation2 + $0xf1] sm:$0xff]
        %v2365 = vld [vmem:[#allocation2 + $0xf9] sm:$0xff]
        %v2366 = vld [vmem:[#allocation2 + $0x109] sm:$0xff]
        %v2367 = vld [vmem:[#allocation2 + $0x111] sm:$0xff]
        %v2368 = vld [vmem:[#allocation2 + $0x121] sm:$0xff]
        %v2369 = vld [vmem:[#allocation2 + $0x129] sm:$0xff]
        %v2370 = vld [vmem:[#allocation2 + $0x139] sm:$0xff]
        %v2371 = vld [vmem:[#allocation2 + $0x141] sm:$0xff]
        %v2372 = vld [vmem:[#allocation2 + $0x151] sm:$0xff]
        %v2373 = vld [vmem:[#allocation2 + $0x159] sm:$0xff]
        %v2374 = vld [vmem:[#allocation2 + $0x169] sm:$0xff]
        %v2375 = vld [vmem:[#allocation2 + $0x171] sm:$0xff]
        %v2376 = vmax.f32 %v2312, %v2344
        %v2377 = vmax.f32 %v2313, %v2345
        %v2378 = vmax.f32 %v2314, %v2346
        %v2379 = vmax.f32 %v2315, %v2347
        %v2380 = vmax.f32 %v2316, %v2348
        %v2381 = vmax.f32 %v2317, %v2349
        %v2382 = vmax.f32 %v2318, %v2350
        %v2383 = vmax.f32 %v2319, %v2351
        %v2384 = vmax.f32 %v2320, %v2352
        %v2385 = vmax.f32 %v2321, %v2353
        %v2386 = vmax.f32 %v2322, %v2354
        %v2387 = vmax.f32 %v2323, %v2355
        %v2388 = vmax.f32 %v2324, %v2356
        %v2389 = vmax.f32 %v2325, %v2357
        %v2390 = vmax.f32 %v2326, %v2358
        %v2391 = vmax.f32 %v2327, %v2359
        %v2392 = vmax.f32 %v2328, %v2360
        %v2393 = vmax.f32 %v2329, %v2361
        %v2394 = vmax.f32 %v2330, %v2362
        %v2395 = vmax.f32 %v2331, %v2363
        %v2396 = vmax.f32 %v2332, %v2364
        %v2397 = vmax.f32 %v2333, %v2365
        %v2398 = vmax.f32 %v2334, %v2366
        %v2399 = vmax.f32 %v2335, %v2367
        %v2400 = vmax.f32 %v2336, %v2368
        %v2401 = vmax.f32 %v2337, %v2369
        %v2402 = vmax.f32 %v2338, %v2370
        %v2403 = vmax.f32 %v2339, %v2371
        %v2404 = vmax.f32 %v2340, %v2372
        %v2405 = vmax.f32 %v2341, %v2373
        %v2406 = vmax.f32 %v2342, %v2374
        %v2407 = vmax.f32 %v2343, %v2375
        %v2408 = vld [vmem:[#allocation2 + $0x2] sm:$0xff]
        %v2409 = vld [vmem:[#allocation2 + $0xa] sm:$0xff]
        %v2410 = vld [vmem:[#allocation2 + $0x1a] sm:$0xff]
        %v2411 = vld [vmem:[#allocation2 + $0x22] sm:$0xff]
        %v2412 = vld [vmem:[#allocation2 + $0x32] sm:$0xff]
        %v2413 = vld [vmem:[#allocation2 + $0x3a] sm:$0xff]
        %v2414 = vld [vmem:[#allocation2 + $0x4a] sm:$0xff]
        %v2415 = vld [vmem:[#allocation2 + $0x52] sm:$0xff]
        %v2416 = vld [vmem:[#allocation2 + $0x62] sm:$0xff]
        %v2417 = vld [vmem:[#allocation2 + $0x6a] sm:$0xff]
        %v2418 = vld [vmem:[#allocation2 + $0x7a] sm:$0xff]
        %v2419 = vld [vmem:[#allocation2 + $0x82] sm:$0xff]
        %v2420 = vld [vmem:[#allocation2 + $0x92] sm:$0xff]
        %v2421 = vld [vmem:[#allocation2 + $0x9a] sm:$0xff]
        %v2422 = vld [vmem:[#allocation2 + $0xaa] sm:$0xff]
        %v2423 = vld [vmem:[#allocation2 + $0xb2] sm:$0xff]
        %v2424 = vld [vmem:[#allocation2 + $0xc2] sm:$0xff]
        %v2425 = vld [vmem:[#allocation2 + $0xca] sm:$0xff]
        %v2426 = vld [vmem:[#allocation2 + $0xda] sm:$0xff]
        %v2427 = vld [vmem:[#allocation2 + $0xe2] sm:$0xff]
        %v2428 = vld [vmem:[#allocation2 + $0xf2] sm:$0xff]
        %v2429 = vld [vmem:[#allocation2 + $0xfa] sm:$0xff]
        %v2430 = vld [vmem:[#allocation2 + $0x10a] sm:$0xff]
        %v2431 = vld [vmem:[#allocation2 + $0x112] sm:$0xff]
        %v2432 = vld [vmem:[#allocation2 + $0x122] sm:$0xff]
        %v2433 = vld [vmem:[#allocation2 + $0x12a] sm:$0xff]
        %v2434 = vld [vmem:[#allocation2 + $0x13a] sm:$0xff]
        %v2435 = vld [vmem:[#allocation2 + $0x142] sm:$0xff]
        %v2436 = vld [vmem:[#allocation2 + $0x152] sm:$0xff]
        %v2437 = vld [vmem:[#allocation2 + $0x15a] sm:$0xff]
        %v2438 = vld [vmem:[#allocation2 + $0x16a] sm:$0xff]
        %v2439 = vld [vmem:[#allocation2 + $0x172] sm:$0xff]
        %v2440 = vmax.f32 %v2376, %v2408
        %v2441 = vmax.f32 %v2377, %v2409
        %v2442 = vmax.f32 %v2378, %v2410
        %v2443 = vmax.f32 %v2379, %v2411
        %v2444 = vmax.f32 %v2380, %v2412
        %v2445 = vmax.f32 %v2381, %v2413
        %v2446 = vmax.f32 %v2382, %v2414
        %v2447 = vmax.f32 %v2383, %v2415
        %v2448 = vmax.f32 %v2384, %v2416
        %v2449 = vmax.f32 %v2385, %v2417
        %v2450 = vmax.f32 %v2386, %v2418
        %v2451 = vmax.f32 %v2387, %v2419
        %v2452 = vmax.f32 %v2388, %v2420
        %v2453 = vmax.f32 %v2389, %v2421
        %v2454 = vmax.f32 %v2390, %v2422
        %v2455 = vmax.f32 %v2391, %v2423
        %v2456 = vmax.f32 %v2392, %v2424
        %v2457 = vmax.f32 %v2393, %v2425
        %v2458 = vmax.f32 %v2394, %v2426
        %v2459 = vmax.f32 %v2395, %v2427
        %v2460 = vmax.f32 %v2396, %v2428
        %v2461 = vmax.f32 %v2397, %v2429
        %v2462 = vmax.f32 %v2398, %v2430
        %v2463 = vmax.f32 %v2399, %v2431
        %v2464 = vmax.f32 %v2400, %v2432
        %v2465 = vmax.f32 %v2401, %v2433
        %v2466 = vmax.f32 %v2402, %v2434
        %v2467 = vmax.f32 %v2403, %v2435
        %v2468 = vmax.f32 %v2404, %v2436
        %v2469 = vmax.f32 %v2405, %v2437
        %v2470 = vmax.f32 %v2406, %v2438
        %v2471 = vmax.f32 %v2407, %v2439
        %v2472 = vld [vmem:[#allocation2 + $0x3] sm:$0xff]
        %v2473 = vld [vmem:[#allocation2 + $0xb] sm:$0xff]
        %v2474 = vld [vmem:[#allocation2 + $0x1b] sm:$0xff]
        %v2475 = vld [vmem:[#allocation2 + $0x23] sm:$0xff]
        %v2476 = vld [vmem:[#allocation2 + $0x33] sm:$0xff]
        %v2477 = vld [vmem:[#allocation2 + $0x3b] sm:$0xff]
        %v2478 = vld [vmem:[#allocation2 + $0x4b] sm:$0xff]
        %v2479 = vld [vmem:[#allocation2 + $0x53] sm:$0xff]
        %v2480 = vld [vmem:[#allocation2 + $0x63] sm:$0xff]
        %v2481 = vld [vmem:[#allocation2 + $0x6b] sm:$0xff]
        %v2482 = vld [vmem:[#allocation2 + $0x7b] sm:$0xff]
        %v2483 = vld [vmem:[#allocation2 + $0x83] sm:$0xff]
        %v2484 = vld [vmem:[#allocation2 + $0x93] sm:$0xff]
        %v2485 = vld [vmem:[#allocation2 + $0x9b] sm:$0xff]
        %v2486 = vld [vmem:[#allocation2 + $0xab] sm:$0xff]
        %v2487 = vld [vmem:[#allocation2 + $0xb3] sm:$0xff]
        %v2488 = vld [vmem:[#allocation2 + $0xc3] sm:$0xff]
        %v2489 = vld [vmem:[#allocation2 + $0xcb] sm:$0xff]
        %v2490 = vld [vmem:[#allocation2 + $0xdb] sm:$0xff]
        %v2491 = vld [vmem:[#allocation2 + $0xe3] sm:$0xff]
        %v2492 = vld [vmem:[#allocation2 + $0xf3] sm:$0xff]
        %v2493 = vld [vmem:[#allocation2 + $0xfb] sm:$0xff]
        %v2494 = vld [vmem:[#allocation2 + $0x10b] sm:$0xff]
        %v2495 = vld [vmem:[#allocation2 + $0x113] sm:$0xff]
        %v2496 = vld [vmem:[#allocation2 + $0x123] sm:$0xff]
        %v2497 = vld [vmem:[#allocation2 + $0x12b] sm:$0xff]
        %v2498 = vld [vmem:[#allocation2 + $0x13b] sm:$0xff]
        %v2499 = vld [vmem:[#allocation2 + $0x143] sm:$0xff]
        %v2500 = vld [vmem:[#allocation2 + $0x153] sm:$0xff]
        %v2501 = vld [vmem:[#allocation2 + $0x15b] sm:$0xff]
        %v2502 = vld [vmem:[#allocation2 + $0x16b] sm:$0xff]
        %v2503 = vld [vmem:[#allocation2 + $0x173] sm:$0xff]
        %v2504 = vmax.f32 %v2440, %v2472
        %v2505 = vmax.f32 %v2441, %v2473
        %v2506 = vmax.f32 %v2442, %v2474
        %v2507 = vmax.f32 %v2443, %v2475
        %v2508 = vmax.f32 %v2444, %v2476
        %v2509 = vmax.f32 %v2445, %v2477
        %v2510 = vmax.f32 %v2446, %v2478
        %v2511 = vmax.f32 %v2447, %v2479
        %v2512 = vmax.f32 %v2448, %v2480
        %v2513 = vmax.f32 %v2449, %v2481
        %v2514 = vmax.f32 %v2450, %v2482
        %v2515 = vmax.f32 %v2451, %v2483
        %v2516 = vmax.f32 %v2452, %v2484
        %v2517 = vmax.f32 %v2453, %v2485
        %v2518 = vmax.f32 %v2454, %v2486
        %v2519 = vmax.f32 %v2455, %v2487
        %v2520 = vmax.f32 %v2456, %v2488
        %v2521 = vmax.f32 %v2457, %v2489
        %v2522 = vmax.f32 %v2458, %v2490
        %v2523 = vmax.f32 %v2459, %v2491
        %v2524 = vmax.f32 %v2460, %v2492
        %v2525 = vmax.f32 %v2461, %v2493
        %v2526 = vmax.f32 %v2462, %v2494
        %v2527 = vmax.f32 %v2463, %v2495
        %v2528 = vmax.f32 %v2464, %v2496
        %v2529 = vmax.f32 %v2465, %v2497
        %v2530 = vmax.f32 %v2466, %v2498
        %v2531 = vmax.f32 %v2467, %v2499
        %v2532 = vmax.f32 %v2468, %v2500
        %v2533 = vmax.f32 %v2469, %v2501
        %v2534 = vmax.f32 %v2470, %v2502
        %v2535 = vmax.f32 %v2471, %v2503
        %v2536 = vld [vmem:[#allocation2 + $0x4] sm:$0xff]
        %v2537 = vld [vmem:[#allocation2 + $0xc] sm:$0xff]
        %v2538 = vld [vmem:[#allocation2 + $0x1c] sm:$0xff]
        %v2539 = vld [vmem:[#allocation2 + $0x24] sm:$0xff]
        %v2540 = vld [vmem:[#allocation2 + $0x34] sm:$0xff]
        %v2541 = vld [vmem:[#allocation2 + $0x3c] sm:$0xff]
        %v2542 = vld [vmem:[#allocation2 + $0x4c] sm:$0xff]
        %v2543 = vld [vmem:[#allocation2 + $0x54] sm:$0xff]
        %v2544 = vld [vmem:[#allocation2 + $0x64] sm:$0xff]
        %v2545 = vld [vmem:[#allocation2 + $0x6c] sm:$0xff]
        %v2546 = vld [vmem:[#allocation2 + $0x7c] sm:$0xff]
        %v2547 = vld [vmem:[#allocation2 + $0x84] sm:$0xff]
        %v2548 = vld [vmem:[#allocation2 + $0x94] sm:$0xff]
        %v2549 = vld [vmem:[#allocation2 + $0x9c] sm:$0xff]
        %v2550 = vld [vmem:[#allocation2 + $0xac] sm:$0xff]
        %v2551 = vld [vmem:[#allocation2 + $0xb4] sm:$0xff]
        %v2552 = vld [vmem:[#allocation2 + $0xc4] sm:$0xff]
        %v2553 = vld [vmem:[#allocation2 + $0xcc] sm:$0xff]
        %v2554 = vld [vmem:[#allocation2 + $0xdc] sm:$0xff]
        %v2555 = vld [vmem:[#allocation2 + $0xe4] sm:$0xff]
        %v2556 = vld [vmem:[#allocation2 + $0xf4] sm:$0xff]
        %v2557 = vld [vmem:[#allocation2 + $0xfc] sm:$0xff]
        %v2558 = vld [vmem:[#allocation2 + $0x10c] sm:$0xff]
        %v2559 = vld [vmem:[#allocation2 + $0x114] sm:$0xff]
        %v2560 = vld [vmem:[#allocation2 + $0x124] sm:$0xff]
        %v2561 = vld [vmem:[#allocation2 + $0x12c] sm:$0xff]
        %v2562 = vld [vmem:[#allocation2 + $0x13c] sm:$0xff]
        %v2563 = vld [vmem:[#allocation2 + $0x144] sm:$0xff]
        %v2564 = vld [vmem:[#allocation2 + $0x154] sm:$0xff]
        %v2565 = vld [vmem:[#allocation2 + $0x15c] sm:$0xff]
        %v2566 = vld [vmem:[#allocation2 + $0x16c] sm:$0xff]
        %v2567 = vld [vmem:[#allocation2 + $0x174] sm:$0xff]
        %v2568 = vmax.f32 %v2504, %v2536
        %v2569 = vmax.f32 %v2505, %v2537
        %v2570 = vmax.f32 %v2506, %v2538
        %v2571 = vmax.f32 %v2507, %v2539
        %v2572 = vmax.f32 %v2508, %v2540
        %v2573 = vmax.f32 %v2509, %v2541
        %v2574 = vmax.f32 %v2510, %v2542
        %v2575 = vmax.f32 %v2511, %v2543
        %v2576 = vmax.f32 %v2512, %v2544
        %v2577 = vmax.f32 %v2513, %v2545
        %v2578 = vmax.f32 %v2514, %v2546
        %v2579 = vmax.f32 %v2515, %v2547
        %v2580 = vmax.f32 %v2516, %v2548
        %v2581 = vmax.f32 %v2517, %v2549
        %v2582 = vmax.f32 %v2518, %v2550
        %v2583 = vmax.f32 %v2519, %v2551
        %v2584 = vmax.f32 %v2520, %v2552
        %v2585 = vmax.f32 %v2521, %v2553
        %v2586 = vmax.f32 %v2522, %v2554
        %v2587 = vmax.f32 %v2523, %v2555
        %v2588 = vmax.f32 %v2524, %v2556
        %v2589 = vmax.f32 %v2525, %v2557
        %v2590 = vmax.f32 %v2526, %v2558
        %v2591 = vmax.f32 %v2527, %v2559
        %v2592 = vmax.f32 %v2528, %v2560
        %v2593 = vmax.f32 %v2529, %v2561
        %v2594 = vmax.f32 %v2530, %v2562
        %v2595 = vmax.f32 %v2531, %v2563
        %v2596 = vmax.f32 %v2532, %v2564
        %v2597 = vmax.f32 %v2533, %v2565
        %v2598 = vmax.f32 %v2534, %v2566
        %v2599 = vmax.f32 %v2535, %v2567
        %2600 = vst [vmem:[%s1316] sm:$0xff] %v2568
        %2601 = vst [vmem:[%s1316 + $0x8] sm:$0xff] %v2569
        %2602 = vst [vmem:[%s1316 + $0x10] sm:$0xff] %v2570
        %2603 = vst [vmem:[%s1316 + $0x18] sm:$0xff] %v2571
        %2604 = vst [vmem:[%s1316 + $0x20] sm:$0xff] %v2572
        %2605 = vst [vmem:[%s1316 + $0x28] sm:$0xff] %v2573
        %2606 = vst [vmem:[%s1316 + $0x30] sm:$0xff] %v2574
        %2607 = vst [vmem:[%s1316 + $0x38] sm:$0xff] %v2575
        %2608 = vst [vmem:[%s1316 + $0x40] sm:$0xff] %v2576
        %2609 = vst [vmem:[%s1316 + $0x48] sm:$0xff] %v2577
        %2610 = vst [vmem:[%s1316 + $0x50] sm:$0xff] %v2578
        %2611 = vst [vmem:[%s1316 + $0x58] sm:$0xff] %v2579
        %2612 = vst [vmem:[%s1316 + $0x60] sm:$0xff] %v2580
        %2613 = vst [vmem:[%s1316 + $0x68] sm:$0xff] %v2581
        %2614 = vst [vmem:[%s1316 + $0x70] sm:$0xff] %v2582
        %2615 = vst [vmem:[%s1316 + $0x78] sm:$0xff] %v2583
        %2616 = vst [vmem:[%s1316 + $0x80] sm:$0xff] %v2584
        %2617 = vst [vmem:[%s1316 + $0x88] sm:$0xff] %v2585
        %2618 = vst [vmem:[%s1316 + $0x90] sm:$0xff] %v2586
        %2619 = vst [vmem:[%s1316 + $0x98] sm:$0xff] %v2587
        %2620 = vst [vmem:[%s1316 + $0xa0] sm:$0xff] %v2588
        %2621 = vst [vmem:[%s1316 + $0xa8] sm:$0xff] %v2589
        %2622 = vst [vmem:[%s1316 + $0xb0] sm:$0xff] %v2590
        %2623 = vst [vmem:[%s1316 + $0xb8] sm:$0xff] %v2591
        %2624 = vst [vmem:[%s1316 + $0xc0] sm:$0xff] %v2592
        %2625 = vst [vmem:[%s1316 + $0xc8] sm:$0xff] %v2593
        %2626 = vst [vmem:[%s1316 + $0xd0] sm:$0xff] %v2594
        %2627 = vst [vmem:[%s1316 + $0xd8] sm:$0xff] %v2595
        %2628 = vst [vmem:[%s1316 + $0xe0] sm:$0xff] %v2596
        %2629 = vst [vmem:[%s1316 + $0xe8] sm:$0xff] %v2597
        %2630 = vst [vmem:[%s1316 + $0xf0] sm:$0xff] %v2598
        %2631 = vst [vmem:[%s1316 + $0xf8] sm:$0xff] %v2599
        %v2632 = vld [vmem:[#allocation3] sm:$0xff]
        %v2633 = vld [vmem:[#allocation3 + $0x8] sm:$0xff]
        %v2634 = vld [vmem:[#allocation3 + $0x10] sm:$0xff]
        %v2635 = vld [vmem:[#allocation3 + $0x18] sm:$0xff]
        %v2636 = vld [vmem:[#allocation3 + $0x20] sm:$0xff]
        %v2637 = vld [vmem:[#allocation3 + $0x28] sm:$0xff]
        %v2638 = vld [vmem:[#allocation3 + $0x30] sm:$0xff]
        %v2639 = vld [vmem:[#allocation3 + $0x38] sm:$0xff]
        %v2640 = vld [vmem:[#allocation3 + $0x40] sm:$0xff]
        %v2641 = vld [vmem:[#allocation3 + $0x48] sm:$0xff]
        %v2642 = vld [vmem:[#allocation3 + $0x50] sm:$0xff]
        %v2643 = vld [vmem:[#allocation3 + $0x58] sm:$0xff]
        %v2644 = vld [vmem:[#allocation3 + $0x60] sm:$0xff]
        %v2645 = vld [vmem:[#allocation3 + $0x68] sm:$0xff]
        %v2646 = vld [vmem:[#allocation3 + $0x70] sm:$0xff]
        %v2647 = vld [vmem:[#allocation3 + $0x78] sm:$0xff]
        %v2648 = vld [vmem:[#allocation3 + $0x80] sm:$0xff]
        %v2649 = vld [vmem:[#allocation3 + $0x88] sm:$0xff]
        %v2650 = vld [vmem:[#allocation3 + $0x90] sm:$0xff]
        %v2651 = vld [vmem:[#allocation3 + $0x98] sm:$0xff]
        %v2652 = vld [vmem:[#allocation3 + $0xa0] sm:$0xff]
        %v2653 = vld [vmem:[#allocation3 + $0xa8] sm:$0xff]
        %v2654 = vld [vmem:[#allocation3 + $0xb0] sm:$0xff]
        %v2655 = vld [vmem:[#allocation3 + $0xb8] sm:$0xff]
        %v2656 = vld [vmem:[#allocation3 + $0xc0] sm:$0xff]
        %v2657 = vld [vmem:[#allocation3 + $0xc8] sm:$0xff]
        %v2658 = vld [vmem:[#allocation3 + $0xd0] sm:$0xff]
        %v2659 = vld [vmem:[#allocation3 + $0xd8] sm:$0xff]
        %v2660 = vld [vmem:[#allocation3 + $0xe0] sm:$0xff]
        %v2661 = vld [vmem:[#allocation3 + $0xe8] sm:$0xff]
        %v2662 = vld [vmem:[#allocation3 + $0xf0] sm:$0xff]
        %v2663 = vld [vmem:[#allocation3 + $0xf8] sm:$0xff]
        %v2664 = vld [vmem:[%s1381] sm:$0xff]
        %v2665 = vld [vmem:[%s1381 + $0x8] sm:$0xff]
        %v2666 = vld [vmem:[%s1381 + $0x10] sm:$0xff]
        %v2667 = vld [vmem:[%s1381 + $0x18] sm:$0xff]
        %v2668 = vld [vmem:[%s1381 + $0x20] sm:$0xff]
        %v2669 = vld [vmem:[%s1381 + $0x28] sm:$0xff]
        %v2670 = vld [vmem:[%s1381 + $0x30] sm:$0xff]
        %v2671 = vld [vmem:[%s1381 + $0x38] sm:$0xff]
        %v2672 = vld [vmem:[%s1381 + $0x40] sm:$0xff]
        %v2673 = vld [vmem:[%s1381 + $0x48] sm:$0xff]
        %v2674 = vld [vmem:[%s1381 + $0x50] sm:$0xff]
        %v2675 = vld [vmem:[%s1381 + $0x58] sm:$0xff]
        %v2676 = vld [vmem:[%s1381 + $0x60] sm:$0xff]
        %v2677 = vld [vmem:[%s1381 + $0x68] sm:$0xff]
        %v2678 = vld [vmem:[%s1381 + $0x70] sm:$0xff]
        %v2679 = vld [vmem:[%s1381 + $0x78] sm:$0xff]
        %v2680 = vld [vmem:[%s1381 + $0x80] sm:$0xff]
        %v2681 = vld [vmem:[%s1381 + $0x88] sm:$0xff]
        %v2682 = vld [vmem:[%s1381 + $0x90] sm:$0xff]
        %v2683 = vld [vmem:[%s1381 + $0x98] sm:$0xff]
        %v2684 = vld [vmem:[%s1381 + $0xa0] sm:$0xff]
        %v2685 = vld [vmem:[%s1381 + $0xa8] sm:$0xff]
        %v2686 = vld [vmem:[%s1381 + $0xb0] sm:$0xff]
        %v2687 = vld [vmem:[%s1381 + $0xb8] sm:$0xff]
        %v2688 = vld [vmem:[%s1381 + $0xc0] sm:$0xff]
        %v2689 = vld [vmem:[%s1381 + $0xc8] sm:$0xff]
        %v2690 = vld [vmem:[%s1381 + $0xd0] sm:$0xff]
        %v2691 = vld [vmem:[%s1381 + $0xd8] sm:$0xff]
        %v2692 = vld [vmem:[%s1381 + $0xe0] sm:$0xff]
        %v2693 = vld [vmem:[%s1381 + $0xe8] sm:$0xff]
        %v2694 = vld [vmem:[%s1381 + $0xf0] sm:$0xff]
        %v2695 = vld [vmem:[%s1381 + $0xf8] sm:$0xff]
        %v2696 = vmax.f32 %v2632, %v2664
        %v2697 = vmax.f32 %v2633, %v2665
        %v2698 = vmax.f32 %v2634, %v2666
        %v2699 = vmax.f32 %v2635, %v2667
        %v2700 = vmax.f32 %v2636, %v2668
        %v2701 = vmax.f32 %v2637, %v2669
        %v2702 = vmax.f32 %v2638, %v2670
        %v2703 = vmax.f32 %v2639, %v2671
        %v2704 = vmax.f32 %v2640, %v2672
        %v2705 = vmax.f32 %v2641, %v2673
        %v2706 = vmax.f32 %v2642, %v2674
        %v2707 = vmax.f32 %v2643, %v2675
        %v2708 = vmax.f32 %v2644, %v2676
        %v2709 = vmax.f32 %v2645, %v2677
        %v2710 = vmax.f32 %v2646, %v2678
        %v2711 = vmax.f32 %v2647, %v2679
        %v2712 = vmax.f32 %v2648, %v2680
        %v2713 = vmax.f32 %v2649, %v2681
        %v2714 = vmax.f32 %v2650, %v2682
        %v2715 = vmax.f32 %v2651, %v2683
        %v2716 = vmax.f32 %v2652, %v2684
        %v2717 = vmax.f32 %v2653, %v2685
        %v2718 = vmax.f32 %v2654, %v2686
        %v2719 = vmax.f32 %v2655, %v2687
        %v2720 = vmax.f32 %v2656, %v2688
        %v2721 = vmax.f32 %v2657, %v2689
        %v2722 = vmax.f32 %v2658, %v2690
        %v2723 = vmax.f32 %v2659, %v2691
        %v2724 = vmax.f32 %v2660, %v2692
        %v2725 = vmax.f32 %v2661, %v2693
        %v2726 = vmax.f32 %v2662, %v2694
        %v2727 = vmax.f32 %v2663, %v2695
        %v2728 = vld [vmem:[%s1316] sm:$0xff]
        %v2729 = vld [vmem:[%s1316 + $0x8] sm:$0xff]
        %v2730 = vld [vmem:[%s1316 + $0x10] sm:$0xff]
        %v2731 = vld [vmem:[%s1316 + $0x18] sm:$0xff]
        %v2732 = vld [vmem:[%s1316 + $0x20] sm:$0xff]
        %v2733 = vld [vmem:[%s1316 + $0x28] sm:$0xff]
        %v2734 = vld [vmem:[%s1316 + $0x30] sm:$0xff]
        %v2735 = vld [vmem:[%s1316 + $0x38] sm:$0xff]
        %v2736 = vld [vmem:[%s1316 + $0x40] sm:$0xff]
        %v2737 = vld [vmem:[%s1316 + $0x48] sm:$0xff]
        %v2738 = vld [vmem:[%s1316 + $0x50] sm:$0xff]
        %v2739 = vld [vmem:[%s1316 + $0x58] sm:$0xff]
        %v2740 = vld [vmem:[%s1316 + $0x60] sm:$0xff]
        %v2741 = vld [vmem:[%s1316 + $0x68] sm:$0xff]
        %v2742 = vld [vmem:[%s1316 + $0x70] sm:$0xff]
        %v2743 = vld [vmem:[%s1316 + $0x78] sm:$0xff]
        %v2744 = vld [vmem:[%s1316 + $0x80] sm:$0xff]
        %v2745 = vld [vmem:[%s1316 + $0x88] sm:$0xff]
        %v2746 = vld [vmem:[%s1316 + $0x90] sm:$0xff]
        %v2747 = vld [vmem:[%s1316 + $0x98] sm:$0xff]
        %v2748 = vld [vmem:[%s1316 + $0xa0] sm:$0xff]
        %v2749 = vld [vmem:[%s1316 + $0xa8] sm:$0xff]
        %v2750 = vld [vmem:[%s1316 + $0xb0] sm:$0xff]
        %v2751 = vld [vmem:[%s1316 + $0xb8] sm:$0xff]
        %v2752 = vld [vmem:[%s1316 + $0xc0] sm:$0xff]
        %v2753 = vld [vmem:[%s1316 + $0xc8] sm:$0xff]
        %v2754 = vld [vmem:[%s1316 + $0xd0] sm:$0xff]
        %v2755 = vld [vmem:[%s1316 + $0xd8] sm:$0xff]
        %v2756 = vld [vmem:[%s1316 + $0xe0] sm:$0xff]
        %v2757 = vld [vmem:[%s1316 + $0xe8] sm:$0xff]
        %v2758 = vld [vmem:[%s1316 + $0xf0] sm:$0xff]
        %v2759 = vld [vmem:[%s1316 + $0xf8] sm:$0xff]
        %v2760 = vmax.f32 %v2696, %v2728
        %v2761 = vmax.f32 %v2697, %v2729
        %v2762 = vmax.f32 %v2698, %v2730
        %v2763 = vmax.f32 %v2699, %v2731
        %v2764 = vmax.f32 %v2700, %v2732
        %v2765 = vmax.f32 %v2701, %v2733
        %v2766 = vmax.f32 %v2702, %v2734
        %v2767 = vmax.f32 %v2703, %v2735
        %v2768 = vmax.f32 %v2704, %v2736
        %v2769 = vmax.f32 %v2705, %v2737
        %v2770 = vmax.f32 %v2706, %v2738
        %v2771 = vmax.f32 %v2707, %v2739
        %v2772 = vmax.f32 %v2708, %v2740
        %v2773 = vmax.f32 %v2709, %v2741
        %v2774 = vmax.f32 %v2710, %v2742
        %v2775 = vmax.f32 %v2711, %v2743
        %v2776 = vmax.f32 %v2712, %v2744
        %v2777 = vmax.f32 %v2713, %v2745
        %v2778 = vmax.f32 %v2714, %v2746
        %v2779 = vmax.f32 %v2715, %v2747
        %v2780 = vmax.f32 %v2716, %v2748
        %v2781 = vmax.f32 %v2717, %v2749
        %v2782 = vmax.f32 %v2718, %v2750
        %v2783 = vmax.f32 %v2719, %v2751
        %v2784 = vmax.f32 %v2720, %v2752
        %v2785 = vmax.f32 %v2721, %v2753
        %v2786 = vmax.f32 %v2722, %v2754
        %v2787 = vmax.f32 %v2723, %v2755
        %v2788 = vmax.f32 %v2724, %v2756
        %v2789 = vmax.f32 %v2725, %v2757
        %v2790 = vmax.f32 %v2726, %v2758
        %v2791 = vmax.f32 %v2727, %v2759
        %v2792 = vld [vmem:[%s1510] sm:$0xff]
        %v2793 = vld [vmem:[%s1510 + $0x8] sm:$0xff]
        %v2794 = vld [vmem:[%s1510 + $0x10] sm:$0xff]
        %v2795 = vld [vmem:[%s1510 + $0x18] sm:$0xff]
        %v2796 = vld [vmem:[%s1510 + $0x20] sm:$0xff]
        %v2797 = vld [vmem:[%s1510 + $0x28] sm:$0xff]
        %v2798 = vld [vmem:[%s1510 + $0x30] sm:$0xff]
        %v2799 = vld [vmem:[%s1510 + $0x38] sm:$0xff]
        %v2800 = vld [vmem:[%s1510 + $0x40] sm:$0xff]
        %v2801 = vld [vmem:[%s1510 + $0x48] sm:$0xff]
        %v2802 = vld [vmem:[%s1510 + $0x50] sm:$0xff]
        %v2803 = vld [vmem:[%s1510 + $0x58] sm:$0xff]
        %v2804 = vld [vmem:[%s1510 + $0x60] sm:$0xff]
        %v2805 = vld [vmem:[%s1510 + $0x68] sm:$0xff]
        %v2806 = vld [vmem:[%s1510 + $0x70] sm:$0xff]
        %v2807 = vld [vmem:[%s1510 + $0x78] sm:$0xff]
        %v2808 = vld [vmem:[%s1510 + $0x80] sm:$0xff]
        %v2809 = vld [vmem:[%s1510 + $0x88] sm:$0xff]
        %v2810 = vld [vmem:[%s1510 + $0x90] sm:$0xff]
        %v2811 = vld [vmem:[%s1510 + $0x98] sm:$0xff]
        %v2812 = vld [vmem:[%s1510 + $0xa0] sm:$0xff]
        %v2813 = vld [vmem:[%s1510 + $0xa8] sm:$0xff]
        %v2814 = vld [vmem:[%s1510 + $0xb0] sm:$0xff]
        %v2815 = vld [vmem:[%s1510 + $0xb8] sm:$0xff]
        %v2816 = vld [vmem:[%s1510 + $0xc0] sm:$0xff]
        %v2817 = vld [vmem:[%s1510 + $0xc8] sm:$0xff]
        %v2818 = vld [vmem:[%s1510 + $0xd0] sm:$0xff]
        %v2819 = vld [vmem:[%s1510 + $0xd8] sm:$0xff]
        %v2820 = vld [vmem:[%s1510 + $0xe0] sm:$0xff]
        %v2821 = vld [vmem:[%s1510 + $0xe8] sm:$0xff]
        %v2822 = vld [vmem:[%s1510 + $0xf0] sm:$0xff]
        %v2823 = vld [vmem:[%s1510 + $0xf8] sm:$0xff]
        %v2824 = vmax.f32 %v2760, %v2792
        %v2825 = vmax.f32 %v2761, %v2793
        %v2826 = vmax.f32 %v2762, %v2794
        %v2827 = vmax.f32 %v2763, %v2795
        %v2828 = vmax.f32 %v2764, %v2796
        %v2829 = vmax.f32 %v2765, %v2797
        %v2830 = vmax.f32 %v2766, %v2798
        %v2831 = vmax.f32 %v2767, %v2799
        %v2832 = vmax.f32 %v2768, %v2800
        %v2833 = vmax.f32 %v2769, %v2801
        %v2834 = vmax.f32 %v2770, %v2802
        %v2835 = vmax.f32 %v2771, %v2803
        %v2836 = vmax.f32 %v2772, %v2804
        %v2837 = vmax.f32 %v2773, %v2805
        %v2838 = vmax.f32 %v2774, %v2806
        %v2839 = vmax.f32 %v2775, %v2807
        %v2840 = vmax.f32 %v2776, %v2808
        %v2841 = vmax.f32 %v2777, %v2809
        %v2842 = vmax.f32 %v2778, %v2810
        %v2843 = vmax.f32 %v2779, %v2811
        %v2844 = vmax.f32 %v2780, %v2812
        %v2845 = vmax.f32 %v2781, %v2813
        %v2846 = vmax.f32 %v2782, %v2814
        %v2847 = vmax.f32 %v2783, %v2815
        %v2848 = vmax.f32 %v2784, %v2816
        %v2849 = vmax.f32 %v2785, %v2817
        %v2850 = vmax.f32 %v2786, %v2818
        %v2851 = vmax.f32 %v2787, %v2819
        %v2852 = vmax.f32 %v2788, %v2820
        %v2853 = vmax.f32 %v2789, %v2821
        %v2854 = vmax.f32 %v2790, %v2822
        %v2855 = vmax.f32 %v2791, %v2823
        %v2856 = vld [vmem:[%s1575] sm:$0xff]
        %v2857 = vld [vmem:[%s1575 + $0x8] sm:$0xff]
        %v2858 = vld [vmem:[%s1575 + $0x10] sm:$0xff]
        %v2859 = vld [vmem:[%s1575 + $0x18] sm:$0xff]
        %v2860 = vld [vmem:[%s1575 + $0x20] sm:$0xff]
        %v2861 = vld [vmem:[%s1575 + $0x28] sm:$0xff]
        %v2862 = vld [vmem:[%s1575 + $0x30] sm:$0xff]
        %v2863 = vld [vmem:[%s1575 + $0x38] sm:$0xff]
        %v2864 = vld [vmem:[%s1575 + $0x40] sm:$0xff]
        %v2865 = vld [vmem:[%s1575 + $0x48] sm:$0xff]
        %v2866 = vld [vmem:[%s1575 + $0x50] sm:$0xff]
        %v2867 = vld [vmem:[%s1575 + $0x58] sm:$0xff]
        %v2868 = vld [vmem:[%s1575 + $0x60] sm:$0xff]
        %v2869 = vld [vmem:[%s1575 + $0x68] sm:$0xff]
        %v2870 = vld [vmem:[%s1575 + $0x70] sm:$0xff]
        %v2871 = vld [vmem:[%s1575 + $0x78] sm:$0xff]
        %v2872 = vld [vmem:[%s1575 + $0x80] sm:$0xff]
        %v2873 = vld [vmem:[%s1575 + $0x88] sm:$0xff]
        %v2874 = vld [vmem:[%s1575 + $0x90] sm:$0xff]
        %v2875 = vld [vmem:[%s1575 + $0x98] sm:$0xff]
        %v2876 = vld [vmem:[%s1575 + $0xa0] sm:$0xff]
        %v2877 = vld [vmem:[%s1575 + $0xa8] sm:$0xff]
        %v2878 = vld [vmem:[%s1575 + $0xb0] sm:$0xff]
        %v2879 = vld [vmem:[%s1575 + $0xb8] sm:$0xff]
        %v2880 = vld [vmem:[%s1575 + $0xc0] sm:$0xff]
        %v2881 = vld [vmem:[%s1575 + $0xc8] sm:$0xff]
        %v2882 = vld [vmem:[%s1575 + $0xd0] sm:$0xff]
        %v2883 = vld [vmem:[%s1575 + $0xd8] sm:$0xff]
        %v2884 = vld [vmem:[%s1575 + $0xe0] sm:$0xff]
        %v2885 = vld [vmem:[%s1575 + $0xe8] sm:$0xff]
        %v2886 = vld [vmem:[%s1575 + $0xf0] sm:$0xff]
        %v2887 = vld [vmem:[%s1575 + $0xf8] sm:$0xff]
        %v2888 = vmax.f32 %v2824, %v2856
        %v2889 = vmax.f32 %v2825, %v2857
        %v2890 = vmax.f32 %v2826, %v2858
        %v2891 = vmax.f32 %v2827, %v2859
        %v2892 = vmax.f32 %v2828, %v2860
        %v2893 = vmax.f32 %v2829, %v2861
        %v2894 = vmax.f32 %v2830, %v2862
        %v2895 = vmax.f32 %v2831, %v2863
        %v2896 = vmax.f32 %v2832, %v2864
        %v2897 = vmax.f32 %v2833, %v2865
        %v2898 = vmax.f32 %v2834, %v2866
        %v2899 = vmax.f32 %v2835, %v2867
        %v2900 = vmax.f32 %v2836, %v2868
        %v2901 = vmax.f32 %v2837, %v2869
        %v2902 = vmax.f32 %v2838, %v2870
        %v2903 = vmax.f32 %v2839, %v2871
        %v2904 = vmax.f32 %v2840, %v2872
        %v2905 = vmax.f32 %v2841, %v2873
        %v2906 = vmax.f32 %v2842, %v2874
        %v2907 = vmax.f32 %v2843, %v2875
        %v2908 = vmax.f32 %v2844, %v2876
        %v2909 = vmax.f32 %v2845, %v2877
        %v2910 = vmax.f32 %v2846, %v2878
        %v2911 = vmax.f32 %v2847, %v2879
        %v2912 = vmax.f32 %v2848, %v2880
        %v2913 = vmax.f32 %v2849, %v2881
        %v2914 = vmax.f32 %v2850, %v2882
        %v2915 = vmax.f32 %v2851, %v2883
        %v2916 = vmax.f32 %v2852, %v2884
        %v2917 = vmax.f32 %v2853, %v2885
        %v2918 = vmax.f32 %v2854, %v2886
        %v2919 = vmax.f32 %v2855, %v2887
        %v2920 = vld [vmem:[#allocation9] sm:$0xff]
        %v2921 = vld [vmem:[#allocation9 + $0x8] sm:$0xff]
        %v2922 = vld [vmem:[#allocation9 + $0x10] sm:$0xff]
        %v2923 = vld [vmem:[#allocation9 + $0x18] sm:$0xff]
        %v2924 = vld [vmem:[#allocation9 + $0x20] sm:$0xff]
        %v2925 = vld [vmem:[#allocation9 + $0x28] sm:$0xff]
        %v2926 = vld [vmem:[#allocation9 + $0x30] sm:$0xff]
        %v2927 = vld [vmem:[#allocation9 + $0x38] sm:$0xff]
        %v2928 = vld [vmem:[#allocation9 + $0x40] sm:$0xff]
        %v2929 = vld [vmem:[#allocation9 + $0x48] sm:$0xff]
        %v2930 = vld [vmem:[#allocation9 + $0x50] sm:$0xff]
        %v2931 = vld [vmem:[#allocation9 + $0x58] sm:$0xff]
        %v2932 = vld [vmem:[#allocation9 + $0x60] sm:$0xff]
        %v2933 = vld [vmem:[#allocation9 + $0x68] sm:$0xff]
        %v2934 = vld [vmem:[#allocation9 + $0x70] sm:$0xff]
        %v2935 = vld [vmem:[#allocation9 + $0x78] sm:$0xff]
        %s2936 = scalar_lea.vmem [#allocation9], 128
        %v2937 = vld [vmem:[%s2936] sm:$0xff]
        %v2938 = vld [vmem:[%s2936 + $0x8] sm:$0xff]
        %v2939 = vld [vmem:[%s2936 + $0x10] sm:$0xff]
        %v2940 = vld [vmem:[%s2936 + $0x18] sm:$0xff]
        %v2941 = vld [vmem:[%s2936 + $0x20] sm:$0xff]
        %v2942 = vld [vmem:[%s2936 + $0x28] sm:$0xff]
        %v2943 = vld [vmem:[%s2936 + $0x30] sm:$0xff]
        %v2944 = vld [vmem:[%s2936 + $0x38] sm:$0xff]
        %v2945 = vld [vmem:[%s2936 + $0x40] sm:$0xff]
        %v2946 = vld [vmem:[%s2936 + $0x48] sm:$0xff]
        %v2947 = vld [vmem:[%s2936 + $0x50] sm:$0xff]
        %v2948 = vld [vmem:[%s2936 + $0x58] sm:$0xff]
        %v2949 = vld [vmem:[%s2936 + $0x60] sm:$0xff]
        %v2950 = vld [vmem:[%s2936 + $0x68] sm:$0xff]
        %v2951 = vld [vmem:[%s2936 + $0x70] sm:$0xff]
        %v2952 = vld [vmem:[%s2936 + $0x78] sm:$0xff]
        %2953 = vmatprep.subr.mxu0 0.0
        %2954 = vmatpush1.msra.mxu0 %v2952
        %2955 = vmatprep.subr.mxu0 0.0
        %2956 = vmatpush1.msra.mxu0 %v2951
        %2957 = vmatprep.subr.mxu0 0.0
        %2958 = vmatpush1.msra.mxu0 %v2950
        %2959 = vmatprep.subr.mxu0 0.0
        %2960 = vmatpush1.msra.mxu0 %v2949
        %2961 = vmatprep.subr.mxu0 0.0
        %2962 = vmatpush1.msra.mxu0 %v2948
        %2963 = vmatprep.subr.mxu0 0.0
        %2964 = vmatpush1.msra.mxu0 %v2947
        %2965 = vmatprep.subr.mxu0 0.0
        %2966 = vmatpush1.msra.mxu0 %v2946
        %2967 = vmatprep.subr.mxu0 0.0
        %2968 = vmatpush1.msra.mxu0 %v2945
        %2969 = vmatprep.subr.mxu0 0.0
        %2970 = vmatpush1.msra.mxu0 %v2944
        %2971 = vmatprep.subr.mxu0 0.0
        %2972 = vmatpush1.msra.mxu0 %v2943
        %2973 = vmatprep.subr.mxu0 0.0
        %2974 = vmatpush1.msra.mxu0 %v2942
        %2975 = vmatprep.subr.mxu0 0.0
        %2976 = vmatpush1.msra.mxu0 %v2941
        %2977 = vmatprep.subr.mxu0 0.0
        %2978 = vmatpush1.msra.mxu0 %v2940
        %2979 = vmatprep.subr.mxu0 0.0
        %2980 = vmatpush1.msra.mxu0 %v2939
        %2981 = vmatprep.subr.mxu0 0.0
        %2982 = vmatpush1.msra.mxu0 %v2938
        %2983 = vmatprep.subr.mxu0 0.0
        %2984 = vmatpush1.msra.mxu0 %v2937
        %2985 = vmatprep.subr.mxu0 0.0
        %2986 = vmatpush2.msra.mxu0 0.0
        %2987 = vmatprep.subr.mxu0 0.0
        %2988 = vmatpush2.msra.mxu0 0.0
        %2989 = vmatprep.subr.mxu0 0.0
        %2990 = vmatpush2.msra.mxu0 0.0
        %2991 = vmatprep.subr.mxu0 0.0
        %2992 = vmatpush2.msra.mxu0 0.0
        %2993 = vmatprep.subr.mxu0 0.0
        %2994 = vmatpush2.msra.mxu0 0.0
        %2995 = vmatprep.subr.mxu0 0.0
        %2996 = vmatpush2.msra.mxu0 0.0
        %2997 = vmatprep.subr.mxu0 0.0
        %2998 = vmatpush2.msra.mxu0 0.0
        %2999 = vmatprep.subr.mxu0 0.0
        %3000 = vmatpush2.msra.mxu0 0.0
        %3001 = vmatprep.subr.mxu0 0.0
        %3002 = vmatpush2.msra.mxu0 0.0
        %3003 = vmatprep.subr.mxu0 0.0
        %3004 = vmatpush2.msra.mxu0 0.0
        %3005 = vmatprep.subr.mxu0 0.0
        %3006 = vmatpush2.msra.mxu0 0.0
        %3007 = vmatprep.subr.mxu0 0.0
        %3008 = vmatpush2.msra.mxu0 0.0
        %3009 = vmatprep.subr.mxu0 0.0
        %3010 = vmatpush2.msra.mxu0 0.0
        %3011 = vmatprep.subr.mxu0 0.0
        %3012 = vmatpush2.msra.mxu0 0.0
        %3013 = vmatprep.subr.mxu0 0.0
        %3014 = vmatpush2.msra.mxu0 0.0
        %3015 = vmatprep.subr.mxu0 0.0
        %3016 = vmatpush2.msra.mxu0 0.0
        %3017 = vmatprep.mubr.f32.mxu0 0.0
        %3018 = vmatmul.mubr.f32.gmra.mxu0 %v1608
        %v3019 = vpop.f32.mrf.mxu0
        %v3020 = vadd.f32 0.0, %v3019
        %v3021 = vpop.f32.mrf.mxu0
        %3022 = vmatprep.mubr.f32.mxu0 0.0
        %3023 = vmatmul.mubr.f32.gmra.mxu0 %v1609
        %v3024 = vpop.f32.mrf.mxu0
        %v3025 = vadd.f32 0.0, %v3024
        %v3026 = vpop.f32.mrf.mxu0
        %3027 = vmatprep.mubr.f32.mxu0 0.0
        %3028 = vmatmul.mubr.f32.gmra.mxu0 %v1610
        %v3029 = vpop.f32.mrf.mxu0
        %v3030 = vadd.f32 0.0, %v3029
        %v3031 = vpop.f32.mrf.mxu0
        %3032 = vmatprep.mubr.f32.mxu0 0.0
        %3033 = vmatmul.mubr.f32.gmra.mxu0 %v1611
        %v3034 = vpop.f32.mrf.mxu0
        %v3035 = vadd.f32 0.0, %v3034
        %v3036 = vpop.f32.mrf.mxu0
        %3037 = vmatprep.mubr.f32.mxu0 0.0
        %3038 = vmatmul.mubr.f32.gmra.mxu0 %v1612
        %v3039 = vpop.f32.mrf.mxu0
        %v3040 = vadd.f32 0.0, %v3039
        %v3041 = vpop.f32.mrf.mxu0
        %3042 = vmatprep.mubr.f32.mxu0 0.0
        %3043 = vmatmul.mubr.f32.gmra.mxu0 %v1613
        %v3044 = vpop.f32.mrf.mxu0
        %v3045 = vadd.f32 0.0, %v3044
        %v3046 = vpop.f32.mrf.mxu0
        %3047 = vmatprep.mubr.f32.mxu0 0.0
        %3048 = vmatmul.mubr.f32.gmra.mxu0 %v1614
        %v3049 = vpop.f32.mrf.mxu0
        %v3050 = vadd.f32 0.0, %v3049
        %v3051 = vpop.f32.mrf.mxu0
        %3052 = vmatprep.mubr.f32.mxu0 0.0
        %3053 = vmatmul.mubr.f32.gmra.mxu0 %v1615
        %v3054 = vpop.f32.mrf.mxu0
        %v3055 = vadd.f32 0.0, %v3054
        %v3056 = vpop.f32.mrf.mxu0
        %3057 = vmatprep.mubr.f32.mxu0 0.0
        %3058 = vmatmul.mubr.f32.gmra.mxu0 %v1616
        %v3059 = vpop.f32.mrf.mxu0
        %v3060 = vadd.f32 0.0, %v3059
        %v3061 = vpop.f32.mrf.mxu0
        %3062 = vmatprep.mubr.f32.mxu0 0.0
        %3063 = vmatmul.mubr.f32.gmra.mxu0 %v1617
        %v3064 = vpop.f32.mrf.mxu0
        %v3065 = vadd.f32 0.0, %v3064
        %v3066 = vpop.f32.mrf.mxu0
        %3067 = vmatprep.mubr.f32.mxu0 0.0
        %3068 = vmatmul.mubr.f32.gmra.mxu0 %v1618
        %v3069 = vpop.f32.mrf.mxu0
        %v3070 = vadd.f32 0.0, %v3069
        %v3071 = vpop.f32.mrf.mxu0
        %3072 = vmatprep.mubr.f32.mxu0 0.0
        %3073 = vmatmul.mubr.f32.gmra.mxu0 %v1619
        %v3074 = vpop.f32.mrf.mxu0
        %v3075 = vadd.f32 0.0, %v3074
        %v3076 = vpop.f32.mrf.mxu0
        %3077 = vmatprep.mubr.f32.mxu0 0.0
        %3078 = vmatmul.mubr.f32.gmra.mxu0 %v1620
        %v3079 = vpop.f32.mrf.mxu0
        %v3080 = vadd.f32 0.0, %v3079
        %v3081 = vpop.f32.mrf.mxu0
        %3082 = vmatprep.mubr.f32.mxu0 0.0
        %3083 = vmatmul.mubr.f32.gmra.mxu0 %v1621
        %v3084 = vpop.f32.mrf.mxu0
        %v3085 = vadd.f32 0.0, %v3084
        %v3086 = vpop.f32.mrf.mxu0
        %3087 = vmatprep.mubr.f32.mxu0 0.0
        %3088 = vmatmul.mubr.f32.gmra.mxu0 %v1622
        %v3089 = vpop.f32.mrf.mxu0
        %v3090 = vadd.f32 0.0, %v3089
        %v3091 = vpop.f32.mrf.mxu0
        %3092 = vmatprep.mubr.f32.mxu0 0.0
        %3093 = vmatmul.mubr.f32.gmra.mxu0 %v1623
        %v3094 = vpop.f32.mrf.mxu0
        %v3095 = vadd.f32 0.0, %v3094
        %v3096 = vpop.f32.mrf.mxu0
        %3097 = vmatprep.mubr.f32.mxu0 0.0
        %3098 = vmatmul.mubr.f32.gmra.mxu0 %v1624
        %v3099 = vpop.f32.mrf.mxu0
        %v3100 = vadd.f32 0.0, %v3099
        %v3101 = vpop.f32.mrf.mxu0
        %3102 = vmatprep.mubr.f32.mxu0 0.0
        %3103 = vmatmul.mubr.f32.gmra.mxu0 %v1625
        %v3104 = vpop.f32.mrf.mxu0
        %v3105 = vadd.f32 0.0, %v3104
        %v3106 = vpop.f32.mrf.mxu0
        %3107 = vmatprep.mubr.f32.mxu0 0.0
        %3108 = vmatmul.mubr.f32.gmra.mxu0 %v1626
        %v3109 = vpop.f32.mrf.mxu0
        %v3110 = vadd.f32 0.0, %v3109
        %v3111 = vpop.f32.mrf.mxu0
        %3112 = vmatprep.mubr.f32.mxu0 0.0
        %3113 = vmatmul.mubr.f32.gmra.mxu0 %v1627
        %v3114 = vpop.f32.mrf.mxu0
        %v3115 = vadd.f32 0.0, %v3114
        %v3116 = vpop.f32.mrf.mxu0
        %3117 = vmatprep.mubr.f32.mxu0 0.0
        %3118 = vmatmul.mubr.f32.gmra.mxu0 %v1628
        %v3119 = vpop.f32.mrf.mxu0
        %v3120 = vadd.f32 0.0, %v3119
        %v3121 = vpop.f32.mrf.mxu0
        %3122 = vmatprep.mubr.f32.mxu0 0.0
        %3123 = vmatmul.mubr.f32.gmra.mxu0 %v1629
        %v3124 = vpop.f32.mrf.mxu0
        %v3125 = vadd.f32 0.0, %v3124
        %v3126 = vpop.f32.mrf.mxu0
        %3127 = vmatprep.mubr.f32.mxu0 0.0
        %3128 = vmatmul.mubr.f32.gmra.mxu0 %v1630
        %v3129 = vpop.f32.mrf.mxu0
        %v3130 = vadd.f32 0.0, %v3129
        %v3131 = vpop.f32.mrf.mxu0
        %3132 = vmatprep.mubr.f32.mxu0 0.0
        %3133 = vmatmul.mubr.f32.gmra.mxu0 %v1631
        %v3134 = vpop.f32.mrf.mxu0
        %v3135 = vadd.f32 0.0, %v3134
        %v3136 = vpop.f32.mrf.mxu0
        %3137 = vmatprep.mubr.f32.mxu0 0.0
        %3138 = vmatmul.mubr.f32.gmra.mxu0 %v1632
        %v3139 = vpop.f32.mrf.mxu0
        %v3140 = vadd.f32 0.0, %v3139
        %v3141 = vpop.f32.mrf.mxu0
        %3142 = vmatprep.mubr.f32.mxu0 0.0
        %3143 = vmatmul.mubr.f32.gmra.mxu0 %v1633
        %v3144 = vpop.f32.mrf.mxu0
        %v3145 = vadd.f32 0.0, %v3144
        %v3146 = vpop.f32.mrf.mxu0
        %3147 = vmatprep.mubr.f32.mxu0 0.0
        %3148 = vmatmul.mubr.f32.gmra.mxu0 %v1634
        %v3149 = vpop.f32.mrf.mxu0
        %v3150 = vadd.f32 0.0, %v3149
        %v3151 = vpop.f32.mrf.mxu0
        %3152 = vmatprep.mubr.f32.mxu0 0.0
        %3153 = vmatmul.mubr.f32.gmra.mxu0 %v1635
        %v3154 = vpop.f32.mrf.mxu0
        %v3155 = vadd.f32 0.0, %v3154
        %v3156 = vpop.f32.mrf.mxu0
        %3157 = vmatprep.mubr.f32.mxu0 0.0
        %3158 = vmatmul.mubr.f32.gmra.mxu0 %v1636
        %v3159 = vpop.f32.mrf.mxu0
        %v3160 = vadd.f32 0.0, %v3159
        %v3161 = vpop.f32.mrf.mxu0
        %3162 = vmatprep.mubr.f32.mxu0 0.0
        %3163 = vmatmul.mubr.f32.gmra.mxu0 %v1637
        %v3164 = vpop.f32.mrf.mxu0
        %v3165 = vadd.f32 0.0, %v3164
        %v3166 = vpop.f32.mrf.mxu0
        %3167 = vmatprep.mubr.f32.mxu0 0.0
        %3168 = vmatmul.mubr.f32.gmra.mxu0 %v1638
        %v3169 = vpop.f32.mrf.mxu0
        %v3170 = vadd.f32 0.0, %v3169
        %v3171 = vpop.f32.mrf.mxu0
        %3172 = vmatprep.mubr.f32.mxu0 0.0
        %3173 = vmatmul.mubr.f32.gmra.mxu0 %v1639
        %v3174 = vpop.f32.mrf.mxu0
        %v3175 = vadd.f32 0.0, %v3174
        %v3176 = vpop.f32.mrf.mxu0
        %3177 = vdwg.mxu0
        %3178 = vmatprep.subr.mxu0 0.0
        %3179 = vmatpush1.msra.mxu0 %v2935
        %3180 = vmatprep.subr.mxu0 0.0
        %3181 = vmatpush1.msra.mxu0 %v2934
        %3182 = vmatprep.subr.mxu0 0.0
        %3183 = vmatpush1.msra.mxu0 %v2933
        %3184 = vmatprep.subr.mxu0 0.0
        %3185 = vmatpush1.msra.mxu0 %v2932
        %3186 = vmatprep.subr.mxu0 0.0
        %3187 = vmatpush1.msra.mxu0 %v2931
        %3188 = vmatprep.subr.mxu0 0.0
        %3189 = vmatpush1.msra.mxu0 %v2930
        %3190 = vmatprep.subr.mxu0 0.0
        %3191 = vmatpush1.msra.mxu0 %v2929
        %3192 = vmatprep.subr.mxu0 0.0
        %3193 = vmatpush1.msra.mxu0 %v2928
        %3194 = vmatprep.subr.mxu0 0.0
        %3195 = vmatpush1.msra.mxu0 %v2927
        %3196 = vmatprep.subr.mxu0 0.0
        %3197 = vmatpush1.msra.mxu0 %v2926
        %3198 = vmatprep.subr.mxu0 0.0
        %3199 = vmatpush1.msra.mxu0 %v2925
        %3200 = vmatprep.subr.mxu0 0.0
        %3201 = vmatpush1.msra.mxu0 %v2924
        %3202 = vmatprep.subr.mxu0 0.0
        %3203 = vmatpush1.msra.mxu0 %v2923
        %3204 = vmatprep.subr.mxu0 0.0
        %3205 = vmatpush1.msra.mxu0 %v2922
        %3206 = vmatprep.subr.mxu0 0.0
        %3207 = vmatpush1.msra.mxu0 %v2921
        %3208 = vmatprep.subr.mxu0 0.0
        %3209 = vmatpush1.msra.mxu0 %v2920
        %3210 = vmatprep.subr.mxu0 0.0
        %3211 = vmatpush2.msra.mxu0 0.0
        %3212 = vmatprep.subr.mxu0 0.0
        %3213 = vmatpush2.msra.mxu0 0.0
        %3214 = vmatprep.subr.mxu0 0.0
        %3215 = vmatpush2.msra.mxu0 0.0
        %3216 = vmatprep.subr.mxu0 0.0
        %3217 = vmatpush2.msra.mxu0 0.0
        %3218 = vmatprep.subr.mxu0 0.0
        %3219 = vmatpush2.msra.mxu0 0.0
        %3220 = vmatprep.subr.mxu0 0.0
        %3221 = vmatpush2.msra.mxu0 0.0
        %3222 = vmatprep.subr.mxu0 0.0
        %3223 = vmatpush2.msra.mxu0 0.0
        %3224 = vmatprep.subr.mxu0 0.0
        %3225 = vmatpush2.msra.mxu0 0.0
        %3226 = vmatprep.subr.mxu0 0.0
        %3227 = vmatpush2.msra.mxu0 0.0
        %3228 = vmatprep.subr.mxu0 0.0
        %3229 = vmatpush2.msra.mxu0 0.0
        %3230 = vmatprep.subr.mxu0 0.0
        %3231 = vmatpush2.msra.mxu0 0.0
        %3232 = vmatprep.subr.mxu0 0.0
        %3233 = vmatpush2.msra.mxu0 0.0
        %3234 = vmatprep.subr.mxu0 0.0
        %3235 = vmatpush2.msra.mxu0 0.0
        %3236 = vmatprep.subr.mxu0 0.0
        %3237 = vmatpush2.msra.mxu0 0.0
        %3238 = vmatprep.subr.mxu0 0.0
        %3239 = vmatpush2.msra.mxu0 0.0
        %3240 = vmatprep.subr.mxu0 0.0
        %3241 = vmatpush2.msra.mxu0 0.0
        %3242 = vmatprep.mubr.f32.mxu0 0.0
        %3243 = vmatmul.mubr.f32.gmra.mxu0 %v923
        %v3244 = vpop.f32.mrf.mxu0
        %v3245 = vadd.f32 %v3020, %v3244
        %v3246 = vpop.f32.mrf.mxu0
        %3247 = vmatprep.mubr.f32.mxu0 0.0
        %3248 = vmatmul.mubr.f32.gmra.mxu0 %v924
        %v3249 = vpop.f32.mrf.mxu0
        %v3250 = vadd.f32 %v3025, %v3249
        %v3251 = vpop.f32.mrf.mxu0
        %3252 = vmatprep.mubr.f32.mxu0 0.0
        %3253 = vmatmul.mubr.f32.gmra.mxu0 %v925
        %v3254 = vpop.f32.mrf.mxu0
        %v3255 = vadd.f32 %v3030, %v3254
        %v3256 = vpop.f32.mrf.mxu0
        %3257 = vmatprep.mubr.f32.mxu0 0.0
        %3258 = vmatmul.mubr.f32.gmra.mxu0 %v926
        %v3259 = vpop.f32.mrf.mxu0
        %v3260 = vadd.f32 %v3035, %v3259
        %v3261 = vpop.f32.mrf.mxu0
        %3262 = vmatprep.mubr.f32.mxu0 0.0
        %3263 = vmatmul.mubr.f32.gmra.mxu0 %v927
        %v3264 = vpop.f32.mrf.mxu0
        %v3265 = vadd.f32 %v3040, %v3264
        %v3266 = vpop.f32.mrf.mxu0
        %3267 = vmatprep.mubr.f32.mxu0 0.0
        %3268 = vmatmul.mubr.f32.gmra.mxu0 %v928
        %v3269 = vpop.f32.mrf.mxu0
        %v3270 = vadd.f32 %v3045, %v3269
        %v3271 = vpop.f32.mrf.mxu0
        %3272 = vmatprep.mubr.f32.mxu0 0.0
        %3273 = vmatmul.mubr.f32.gmra.mxu0 %v929
        %v3274 = vpop.f32.mrf.mxu0
        %v3275 = vadd.f32 %v3050, %v3274
        %v3276 = vpop.f32.mrf.mxu0
        %3277 = vmatprep.mubr.f32.mxu0 0.0
        %3278 = vmatmul.mubr.f32.gmra.mxu0 %v930
        %v3279 = vpop.f32.mrf.mxu0
        %v3280 = vadd.f32 %v3055, %v3279
        %v3281 = vpop.f32.mrf.mxu0
        %3282 = vmatprep.mubr.f32.mxu0 0.0
        %3283 = vmatmul.mubr.f32.gmra.mxu0 %v931
        %v3284 = vpop.f32.mrf.mxu0
        %v3285 = vadd.f32 %v3060, %v3284
        %v3286 = vpop.f32.mrf.mxu0
        %3287 = vmatprep.mubr.f32.mxu0 0.0
        %3288 = vmatmul.mubr.f32.gmra.mxu0 %v932
        %v3289 = vpop.f32.mrf.mxu0
        %v3290 = vadd.f32 %v3065, %v3289
        %v3291 = vpop.f32.mrf.mxu0
        %3292 = vmatprep.mubr.f32.mxu0 0.0
        %3293 = vmatmul.mubr.f32.gmra.mxu0 %v933
        %v3294 = vpop.f32.mrf.mxu0
        %v3295 = vadd.f32 %v3070, %v3294
        %v3296 = vpop.f32.mrf.mxu0
        %3297 = vmatprep.mubr.f32.mxu0 0.0
        %3298 = vmatmul.mubr.f32.gmra.mxu0 %v934
        %v3299 = vpop.f32.mrf.mxu0
        %v3300 = vadd.f32 %v3075, %v3299
        %v3301 = vpop.f32.mrf.mxu0
        %3302 = vmatprep.mubr.f32.mxu0 0.0
        %3303 = vmatmul.mubr.f32.gmra.mxu0 %v935
        %v3304 = vpop.f32.mrf.mxu0
        %v3305 = vadd.f32 %v3080, %v3304
        %v3306 = vpop.f32.mrf.mxu0
        %3307 = vmatprep.mubr.f32.mxu0 0.0
        %3308 = vmatmul.mubr.f32.gmra.mxu0 %v936
        %v3309 = vpop.f32.mrf.mxu0
        %v3310 = vadd.f32 %v3085, %v3309
        %v3311 = vpop.f32.mrf.mxu0
        %3312 = vmatprep.mubr.f32.mxu0 0.0
        %3313 = vmatmul.mubr.f32.gmra.mxu0 %v937
        %v3314 = vpop.f32.mrf.mxu0
        %v3315 = vadd.f32 %v3090, %v3314
        %v3316 = vpop.f32.mrf.mxu0
        %3317 = vmatprep.mubr.f32.mxu0 0.0
        %3318 = vmatmul.mubr.f32.gmra.mxu0 %v938
        %v3319 = vpop.f32.mrf.mxu0
        %v3320 = vadd.f32 %v3095, %v3319
        %v3321 = vpop.f32.mrf.mxu0
        %3322 = vmatprep.mubr.f32.mxu0 0.0
        %3323 = vmatmul.mubr.f32.gmra.mxu0 %v939
        %v3324 = vpop.f32.mrf.mxu0
        %v3325 = vadd.f32 %v3100, %v3324
        %v3326 = vpop.f32.mrf.mxu0
        %3327 = vmatprep.mubr.f32.mxu0 0.0
        %3328 = vmatmul.mubr.f32.gmra.mxu0 %v940
        %v3329 = vpop.f32.mrf.mxu0
        %v3330 = vadd.f32 %v3105, %v3329
        %v3331 = vpop.f32.mrf.mxu0
        %3332 = vmatprep.mubr.f32.mxu0 0.0
        %3333 = vmatmul.mubr.f32.gmra.mxu0 %v941
        %v3334 = vpop.f32.mrf.mxu0
        %v3335 = vadd.f32 %v3110, %v3334
        %v3336 = vpop.f32.mrf.mxu0
        %3337 = vmatprep.mubr.f32.mxu0 0.0
        %3338 = vmatmul.mubr.f32.gmra.mxu0 %v942
        %v3339 = vpop.f32.mrf.mxu0
        %v3340 = vadd.f32 %v3115, %v3339
        %v3341 = vpop.f32.mrf.mxu0
        %3342 = vmatprep.mubr.f32.mxu0 0.0
        %3343 = vmatmul.mubr.f32.gmra.mxu0 %v943
        %v3344 = vpop.f32.mrf.mxu0
        %v3345 = vadd.f32 %v3120, %v3344
        %v3346 = vpop.f32.mrf.mxu0
        %3347 = vmatprep.mubr.f32.mxu0 0.0
        %3348 = vmatmul.mubr.f32.gmra.mxu0 %v944
        %v3349 = vpop.f32.mrf.mxu0
        %v3350 = vadd.f32 %v3125, %v3349
        %v3351 = vpop.f32.mrf.mxu0
        %3352 = vmatprep.mubr.f32.mxu0 0.0
        %3353 = vmatmul.mubr.f32.gmra.mxu0 %v945
        %v3354 = vpop.f32.mrf.mxu0
        %v3355 = vadd.f32 %v3130, %v3354
        %v3356 = vpop.f32.mrf.mxu0
        %3357 = vmatprep.mubr.f32.mxu0 0.0
        %3358 = vmatmul.mubr.f32.gmra.mxu0 %v946
        %v3359 = vpop.f32.mrf.mxu0
        %v3360 = vadd.f32 %v3135, %v3359
        %v3361 = vpop.f32.mrf.mxu0
        %3362 = vmatprep.mubr.f32.mxu0 0.0
        %3363 = vmatmul.mubr.f32.gmra.mxu0 %v947
        %v3364 = vpop.f32.mrf.mxu0
        %v3365 = vadd.f32 %v3140, %v3364
        %v3366 = vpop.f32.mrf.mxu0
        %3367 = vmatprep.mubr.f32.mxu0 0.0
        %3368 = vmatmul.mubr.f32.gmra.mxu0 %v948
        %v3369 = vpop.f32.mrf.mxu0
        %v3370 = vadd.f32 %v3145, %v3369
        %v3371 = vpop.f32.mrf.mxu0
        %3372 = vmatprep.mubr.f32.mxu0 0.0
        %3373 = vmatmul.mubr.f32.gmra.mxu0 %v949
        %v3374 = vpop.f32.mrf.mxu0
        %v3375 = vadd.f32 %v3150, %v3374
        %v3376 = vpop.f32.mrf.mxu0
        %3377 = vmatprep.mubr.f32.mxu0 0.0
        %3378 = vmatmul.mubr.f32.gmra.mxu0 %v950
        %v3379 = vpop.f32.mrf.mxu0
        %v3380 = vadd.f32 %v3155, %v3379
        %v3381 = vpop.f32.mrf.mxu0
        %3382 = vmatprep.mubr.f32.mxu0 0.0
        %3383 = vmatmul.mubr.f32.gmra.mxu0 %v951
        %v3384 = vpop.f32.mrf.mxu0
        %v3385 = vadd.f32 %v3160, %v3384
        %v3386 = vpop.f32.mrf.mxu0
        %3387 = vmatprep.mubr.f32.mxu0 0.0
        %3388 = vmatmul.mubr.f32.gmra.mxu0 %v952
        %v3389 = vpop.f32.mrf.mxu0
        %v3390 = vadd.f32 %v3165, %v3389
        %v3391 = vpop.f32.mrf.mxu0
        %3392 = vmatprep.mubr.f32.mxu0 0.0
        %3393 = vmatmul.mubr.f32.gmra.mxu0 %v953
        %v3394 = vpop.f32.mrf.mxu0
        %v3395 = vadd.f32 %v3170, %v3394
        %v3396 = vpop.f32.mrf.mxu0
        %3397 = vmatprep.mubr.f32.mxu0 0.0
        %3398 = vmatmul.mubr.f32.gmra.mxu0 %v954
        %v3399 = vpop.f32.mrf.mxu0
        %v3400 = vadd.f32 %v3175, %v3399
        %v3401 = vpop.f32.mrf.mxu0
        %3402 = vdwg.mxu0
        %s3403 = scalar_lea.vmem [#allocation9], 256
        %v3404 = vld [vmem:[%s3403] sm:$0xff]
        %v3405 = vld [vmem:[%s3403 + $0x8] sm:$0xff]
        %v3406 = vld [vmem:[%s3403 + $0x10] sm:$0xff]
        %v3407 = vld [vmem:[%s3403 + $0x18] sm:$0xff]
        %v3408 = vld [vmem:[%s3403 + $0x20] sm:$0xff]
        %v3409 = vld [vmem:[%s3403 + $0x28] sm:$0xff]
        %v3410 = vld [vmem:[%s3403 + $0x30] sm:$0xff]
        %v3411 = vld [vmem:[%s3403 + $0x38] sm:$0xff]
        %v3412 = vld [vmem:[%s3403 + $0x40] sm:$0xff]
        %v3413 = vld [vmem:[%s3403 + $0x48] sm:$0xff]
        %v3414 = vld [vmem:[%s3403 + $0x50] sm:$0xff]
        %v3415 = vld [vmem:[%s3403 + $0x58] sm:$0xff]
        %v3416 = vld [vmem:[%s3403 + $0x60] sm:$0xff]
        %v3417 = vld [vmem:[%s3403 + $0x68] sm:$0xff]
        %v3418 = vld [vmem:[%s3403 + $0x70] sm:$0xff]
        %v3419 = vld [vmem:[%s3403 + $0x78] sm:$0xff]
        %3420 = vmatprep.subr.mxu0 0.0
        %3421 = vmatpush1.msra.mxu0 %v3419
        %3422 = vmatprep.subr.mxu0 0.0
        %3423 = vmatpush1.msra.mxu0 %v3418
        %3424 = vmatprep.subr.mxu0 0.0
        %3425 = vmatpush1.msra.mxu0 %v3417
        %3426 = vmatprep.subr.mxu0 0.0
        %3427 = vmatpush1.msra.mxu0 %v3416
        %3428 = vmatprep.subr.mxu0 0.0
        %3429 = vmatpush1.msra.mxu0 %v3415
        %3430 = vmatprep.subr.mxu0 0.0
        %3431 = vmatpush1.msra.mxu0 %v3414
        %3432 = vmatprep.subr.mxu0 0.0
        %3433 = vmatpush1.msra.mxu0 %v3413
        %3434 = vmatprep.subr.mxu0 0.0
        %3435 = vmatpush1.msra.mxu0 %v3412
        %3436 = vmatprep.subr.mxu0 0.0
        %3437 = vmatpush1.msra.mxu0 %v3411
        %3438 = vmatprep.subr.mxu0 0.0
        %3439 = vmatpush1.msra.mxu0 %v3410
        %3440 = vmatprep.subr.mxu0 0.0
        %3441 = vmatpush1.msra.mxu0 %v3409
        %3442 = vmatprep.subr.mxu0 0.0
        %3443 = vmatpush1.msra.mxu0 %v3408
        %3444 = vmatprep.subr.mxu0 0.0
        %3445 = vmatpush1.msra.mxu0 %v3407
        %3446 = vmatprep.subr.mxu0 0.0
        %3447 = vmatpush1.msra.mxu0 %v3406
        %3448 = vmatprep.subr.mxu0 0.0
        %3449 = vmatpush1.msra.mxu0 %v3405
        %3450 = vmatprep.subr.mxu0 0.0
        %3451 = vmatpush1.msra.mxu0 %v3404
        %3452 = vmatprep.subr.mxu0 0.0
        %3453 = vmatpush2.msra.mxu0 0.0
        %3454 = vmatprep.subr.mxu0 0.0
        %3455 = vmatpush2.msra.mxu0 0.0
        %3456 = vmatprep.subr.mxu0 0.0
        %3457 = vmatpush2.msra.mxu0 0.0
        %3458 = vmatprep.subr.mxu0 0.0
        %3459 = vmatpush2.msra.mxu0 0.0
        %3460 = vmatprep.subr.mxu0 0.0
        %3461 = vmatpush2.msra.mxu0 0.0
        %3462 = vmatprep.subr.mxu0 0.0
        %3463 = vmatpush2.msra.mxu0 0.0
        %3464 = vmatprep.subr.mxu0 0.0
        %3465 = vmatpush2.msra.mxu0 0.0
        %3466 = vmatprep.subr.mxu0 0.0
        %3467 = vmatpush2.msra.mxu0 0.0
        %3468 = vmatprep.subr.mxu0 0.0
        %3469 = vmatpush2.msra.mxu0 0.0
        %3470 = vmatprep.subr.mxu0 0.0
        %3471 = vmatpush2.msra.mxu0 0.0
        %3472 = vmatprep.subr.mxu0 0.0
        %3473 = vmatpush2.msra.mxu0 0.0
        %3474 = vmatprep.subr.mxu0 0.0
        %3475 = vmatpush2.msra.mxu0 0.0
        %3476 = vmatprep.subr.mxu0 0.0
        %3477 = vmatpush2.msra.mxu0 0.0
        %3478 = vmatprep.subr.mxu0 0.0
        %3479 = vmatpush2.msra.mxu0 0.0
        %3480 = vmatprep.subr.mxu0 0.0
        %3481 = vmatpush2.msra.mxu0 0.0
        %3482 = vmatprep.subr.mxu0 0.0
        %3483 = vmatpush2.msra.mxu0 0.0
        %3484 = vmatprep.mubr.f32.mxu0 0.0
        %3485 = vmatmul.mubr.f32.gmra.mxu0 %v2248
        %v3486 = vpop.f32.mrf.mxu0
        %v3487 = vadd.f32 0.0, %v3486
        %v3488 = vpop.f32.mrf.mxu0
        %3489 = vmatprep.mubr.f32.mxu0 0.0
        %3490 = vmatmul.mubr.f32.gmra.mxu0 %v2249
        %v3491 = vpop.f32.mrf.mxu0
        %v3492 = vadd.f32 0.0, %v3491
        %v3493 = vpop.f32.mrf.mxu0
        %3494 = vmatprep.mubr.f32.mxu0 0.0
        %3495 = vmatmul.mubr.f32.gmra.mxu0 %v2250
        %v3496 = vpop.f32.mrf.mxu0
        %v3497 = vadd.f32 0.0, %v3496
        %v3498 = vpop.f32.mrf.mxu0
        %3499 = vmatprep.mubr.f32.mxu0 0.0
        %3500 = vmatmul.mubr.f32.gmra.mxu0 %v2251
        %v3501 = vpop.f32.mrf.mxu0
        %v3502 = vadd.f32 0.0, %v3501
        %v3503 = vpop.f32.mrf.mxu0
        %3504 = vmatprep.mubr.f32.mxu0 0.0
        %3505 = vmatmul.mubr.f32.gmra.mxu0 %v2252
        %v3506 = vpop.f32.mrf.mxu0
        %v3507 = vadd.f32 0.0, %v3506
        %v3508 = vpop.f32.mrf.mxu0
        %3509 = vmatprep.mubr.f32.mxu0 0.0
        %3510 = vmatmul.mubr.f32.gmra.mxu0 %v2253
        %v3511 = vpop.f32.mrf.mxu0
        %v3512 = vadd.f32 0.0, %v3511
        %v3513 = vpop.f32.mrf.mxu0
        %3514 = vmatprep.mubr.f32.mxu0 0.0
        %3515 = vmatmul.mubr.f32.gmra.mxu0 %v2254
        %v3516 = vpop.f32.mrf.mxu0
        %v3517 = vadd.f32 0.0, %v3516
        %v3518 = vpop.f32.mrf.mxu0
        %3519 = vmatprep.mubr.f32.mxu0 0.0
        %3520 = vmatmul.mubr.f32.gmra.mxu0 %v2255
        %v3521 = vpop.f32.mrf.mxu0
        %v3522 = vadd.f32 0.0, %v3521
        %v3523 = vpop.f32.mrf.mxu0
        %3524 = vmatprep.mubr.f32.mxu0 0.0
        %3525 = vmatmul.mubr.f32.gmra.mxu0 %v2256
        %v3526 = vpop.f32.mrf.mxu0
        %v3527 = vadd.f32 0.0, %v3526
        %v3528 = vpop.f32.mrf.mxu0
        %3529 = vmatprep.mubr.f32.mxu0 0.0
        %3530 = vmatmul.mubr.f32.gmra.mxu0 %v2257
        %v3531 = vpop.f32.mrf.mxu0
        %v3532 = vadd.f32 0.0, %v3531
        %v3533 = vpop.f32.mrf.mxu0
        %3534 = vmatprep.mubr.f32.mxu0 0.0
        %3535 = vmatmul.mubr.f32.gmra.mxu0 %v2258
        %v3536 = vpop.f32.mrf.mxu0
        %v3537 = vadd.f32 0.0, %v3536
        %v3538 = vpop.f32.mrf.mxu0
        %3539 = vmatprep.mubr.f32.mxu0 0.0
        %3540 = vmatmul.mubr.f32.gmra.mxu0 %v2259
        %v3541 = vpop.f32.mrf.mxu0
        %v3542 = vadd.f32 0.0, %v3541
        %v3543 = vpop.f32.mrf.mxu0
        %3544 = vmatprep.mubr.f32.mxu0 0.0
        %3545 = vmatmul.mubr.f32.gmra.mxu0 %v2260
        %v3546 = vpop.f32.mrf.mxu0
        %v3547 = vadd.f32 0.0, %v3546
        %v3548 = vpop.f32.mrf.mxu0
        %3549 = vmatprep.mubr.f32.mxu0 0.0
        %3550 = vmatmul.mubr.f32.gmra.mxu0 %v2261
        %v3551 = vpop.f32.mrf.mxu0
        %v3552 = vadd.f32 0.0, %v3551
        %v3553 = vpop.f32.mrf.mxu0
        %3554 = vmatprep.mubr.f32.mxu0 0.0
        %3555 = vmatmul.mubr.f32.gmra.mxu0 %v2262
        %v3556 = vpop.f32.mrf.mxu0
        %v3557 = vadd.f32 0.0, %v3556
        %v3558 = vpop.f32.mrf.mxu0
        %3559 = vmatprep.mubr.f32.mxu0 0.0
        %3560 = vmatmul.mubr.f32.gmra.mxu0 %v2263
        %v3561 = vpop.f32.mrf.mxu0
        %v3562 = vadd.f32 0.0, %v3561
        %v3563 = vpop.f32.mrf.mxu0
        %3564 = vmatprep.mubr.f32.mxu0 0.0
        %3565 = vmatmul.mubr.f32.gmra.mxu0 %v2264
        %v3566 = vpop.f32.mrf.mxu0
        %v3567 = vadd.f32 0.0, %v3566
        %v3568 = vpop.f32.mrf.mxu0
        %3569 = vmatprep.mubr.f32.mxu0 0.0
        %3570 = vmatmul.mubr.f32.gmra.mxu0 %v2265
        %v3571 = vpop.f32.mrf.mxu0
        %v3572 = vadd.f32 0.0, %v3571
        %v3573 = vpop.f32.mrf.mxu0
        %3574 = vmatprep.mubr.f32.mxu0 0.0
        %3575 = vmatmul.mubr.f32.gmra.mxu0 %v2266
        %v3576 = vpop.f32.mrf.mxu0
        %v3577 = vadd.f32 0.0, %v3576
        %v3578 = vpop.f32.mrf.mxu0
        %3579 = vmatprep.mubr.f32.mxu0 0.0
        %3580 = vmatmul.mubr.f32.gmra.mxu0 %v2267
        %v3581 = vpop.f32.mrf.mxu0
        %v3582 = vadd.f32 0.0, %v3581
        %v3583 = vpop.f32.mrf.mxu0
        %3584 = vmatprep.mubr.f32.mxu0 0.0
        %3585 = vmatmul.mubr.f32.gmra.mxu0 %v2268
        %v3586 = vpop.f32.mrf.mxu0
        %v3587 = vadd.f32 0.0, %v3586
        %v3588 = vpop.f32.mrf.mxu0
        %3589 = vmatprep.mubr.f32.mxu0 0.0
        %3590 = vmatmul.mubr.f32.gmra.mxu0 %v2269
        %v3591 = vpop.f32.mrf.mxu0
        %v3592 = vadd.f32 0.0, %v3591
        %v3593 = vpop.f32.mrf.mxu0
        %3594 = vmatprep.mubr.f32.mxu0 0.0
        %3595 = vmatmul.mubr.f32.gmra.mxu0 %v2270
        %v3596 = vpop.f32.mrf.mxu0
        %v3597 = vadd.f32 0.0, %v3596
        %v3598 = vpop.f32.mrf.mxu0
        %3599 = vmatprep.mubr.f32.mxu0 0.0
        %3600 = vmatmul.mubr.f32.gmra.mxu0 %v2271
        %v3601 = vpop.f32.mrf.mxu0
        %v3602 = vadd.f32 0.0, %v3601
        %v3603 = vpop.f32.mrf.mxu0
        %3604 = vmatprep.mubr.f32.mxu0 0.0
        %3605 = vmatmul.mubr.f32.gmra.mxu0 %v2272
        %v3606 = vpop.f32.mrf.mxu0
        %v3607 = vadd.f32 0.0, %v3606
        %v3608 = vpop.f32.mrf.mxu0
        %3609 = vmatprep.mubr.f32.mxu0 0.0
        %3610 = vmatmul.mubr.f32.gmra.mxu0 %v2273
        %v3611 = vpop.f32.mrf.mxu0
        %v3612 = vadd.f32 0.0, %v3611
        %v3613 = vpop.f32.mrf.mxu0
        %3614 = vmatprep.mubr.f32.mxu0 0.0
        %3615 = vmatmul.mubr.f32.gmra.mxu0 %v2274
        %v3616 = vpop.f32.mrf.mxu0
        %v3617 = vadd.f32 0.0, %v3616
        %v3618 = vpop.f32.mrf.mxu0
        %3619 = vmatprep.mubr.f32.mxu0 0.0
        %3620 = vmatmul.mubr.f32.gmra.mxu0 %v2275
        %v3621 = vpop.f32.mrf.mxu0
        %v3622 = vadd.f32 0.0, %v3621
        %v3623 = vpop.f32.mrf.mxu0
        %3624 = vmatprep.mubr.f32.mxu0 0.0
        %3625 = vmatmul.mubr.f32.gmra.mxu0 %v2276
        %v3626 = vpop.f32.mrf.mxu0
        %v3627 = vadd.f32 0.0, %v3626
        %v3628 = vpop.f32.mrf.mxu0
        %3629 = vmatprep.mubr.f32.mxu0 0.0
        %3630 = vmatmul.mubr.f32.gmra.mxu0 %v2277
        %v3631 = vpop.f32.mrf.mxu0
        %v3632 = vadd.f32 0.0, %v3631
        %v3633 = vpop.f32.mrf.mxu0
        %3634 = vmatprep.mubr.f32.mxu0 0.0
        %3635 = vmatmul.mubr.f32.gmra.mxu0 %v2278
        %v3636 = vpop.f32.mrf.mxu0
        %v3637 = vadd.f32 0.0, %v3636
        %v3638 = vpop.f32.mrf.mxu0
        %3639 = vmatprep.mubr.f32.mxu0 0.0
        %3640 = vmatmul.mubr.f32.gmra.mxu0 %v2279
        %v3641 = vpop.f32.mrf.mxu0
        %v3642 = vadd.f32 0.0, %v3641
        %v3643 = vpop.f32.mrf.mxu0
        %3644 = vdwg.mxu0
        %v3645 = vadd.f32 %v3245, %v3487
        %v3646 = vadd.f32 %v3250, %v3492
        %v3647 = vadd.f32 %v3255, %v3497
        %v3648 = vadd.f32 %v3260, %v3502
        %v3649 = vadd.f32 %v3265, %v3507
        %v3650 = vadd.f32 %v3270, %v3512
        %v3651 = vadd.f32 %v3275, %v3517
        %v3652 = vadd.f32 %v3280, %v3522
        %v3653 = vadd.f32 %v3285, %v3527
        %v3654 = vadd.f32 %v3290, %v3532
        %v3655 = vadd.f32 %v3295, %v3537
        %v3656 = vadd.f32 %v3300, %v3542
        %v3657 = vadd.f32 %v3305, %v3547
        %v3658 = vadd.f32 %v3310, %v3552
        %v3659 = vadd.f32 %v3315, %v3557
        %v3660 = vadd.f32 %v3320, %v3562
        %v3661 = vadd.f32 %v3325, %v3567
        %v3662 = vadd.f32 %v3330, %v3572
        %v3663 = vadd.f32 %v3335, %v3577
        %v3664 = vadd.f32 %v3340, %v3582
        %v3665 = vadd.f32 %v3345, %v3587
        %v3666 = vadd.f32 %v3350, %v3592
        %v3667 = vadd.f32 %v3355, %v3597
        %v3668 = vadd.f32 %v3360, %v3602
        %v3669 = vadd.f32 %v3365, %v3607
        %v3670 = vadd.f32 %v3370, %v3612
        %v3671 = vadd.f32 %v3375, %v3617
        %v3672 = vadd.f32 %v3380, %v3622
        %v3673 = vadd.f32 %v3385, %v3627
        %v3674 = vadd.f32 %v3390, %v3632
        %v3675 = vadd.f32 %v3395, %v3637
        %v3676 = vadd.f32 %v3400, %v3642
        %s3677 = scalar_lea.vmem [#allocation9], 384
        %v3678 = vld [vmem:[%s3677] sm:$0xff]
        %v3679 = vld [vmem:[%s3677 + $0x8] sm:$0xff]
        %v3680 = vld [vmem:[%s3677 + $0x10] sm:$0xff]
        %v3681 = vld [vmem:[%s3677 + $0x18] sm:$0xff]
        %v3682 = vld [vmem:[%s3677 + $0x20] sm:$0xff]
        %v3683 = vld [vmem:[%s3677 + $0x28] sm:$0xff]
        %v3684 = vld [vmem:[%s3677 + $0x30] sm:$0xff]
        %v3685 = vld [vmem:[%s3677 + $0x38] sm:$0xff]
        %v3686 = vld [vmem:[%s3677 + $0x40] sm:$0xff]
        %v3687 = vld [vmem:[%s3677 + $0x48] sm:$0xff]
        %v3688 = vld [vmem:[%s3677 + $0x50] sm:$0xff]
        %v3689 = vld [vmem:[%s3677 + $0x58] sm:$0xff]
        %v3690 = vld [vmem:[%s3677 + $0x60] sm:$0xff]
        %v3691 = vld [vmem:[%s3677 + $0x68] sm:$0xff]
        %v3692 = vld [vmem:[%s3677 + $0x70] sm:$0xff]
        %v3693 = vld [vmem:[%s3677 + $0x78] sm:$0xff]
        %3694 = vmatprep.subr.mxu0 0.0
        %3695 = vmatpush1.msra.mxu0 %v3693
        %3696 = vmatprep.subr.mxu0 0.0
        %3697 = vmatpush1.msra.mxu0 %v3692
        %3698 = vmatprep.subr.mxu0 0.0
        %3699 = vmatpush1.msra.mxu0 %v3691
        %3700 = vmatprep.subr.mxu0 0.0
        %3701 = vmatpush1.msra.mxu0 %v3690
        %3702 = vmatprep.subr.mxu0 0.0
        %3703 = vmatpush1.msra.mxu0 %v3689
        %3704 = vmatprep.subr.mxu0 0.0
        %3705 = vmatpush1.msra.mxu0 %v3688
        %3706 = vmatprep.subr.mxu0 0.0
        %3707 = vmatpush1.msra.mxu0 %v3687
        %3708 = vmatprep.subr.mxu0 0.0
        %3709 = vmatpush1.msra.mxu0 %v3686
        %3710 = vmatprep.subr.mxu0 0.0
        %3711 = vmatpush1.msra.mxu0 %v3685
        %3712 = vmatprep.subr.mxu0 0.0
        %3713 = vmatpush1.msra.mxu0 %v3684
        %3714 = vmatprep.subr.mxu0 0.0
        %3715 = vmatpush1.msra.mxu0 %v3683
        %3716 = vmatprep.subr.mxu0 0.0
        %3717 = vmatpush1.msra.mxu0 %v3682
        %3718 = vmatprep.subr.mxu0 0.0
        %3719 = vmatpush1.msra.mxu0 %v3681
        %3720 = vmatprep.subr.mxu0 0.0
        %3721 = vmatpush1.msra.mxu0 %v3680
        %3722 = vmatprep.subr.mxu0 0.0
        %3723 = vmatpush1.msra.mxu0 %v3679
        %3724 = vmatprep.subr.mxu0 0.0
        %3725 = vmatpush1.msra.mxu0 %v3678
        %3726 = vmatprep.subr.mxu0 0.0
        %3727 = vmatpush2.msra.mxu0 0.0
        %3728 = vmatprep.subr.mxu0 0.0
        %3729 = vmatpush2.msra.mxu0 0.0
        %3730 = vmatprep.subr.mxu0 0.0
        %3731 = vmatpush2.msra.mxu0 0.0
        %3732 = vmatprep.subr.mxu0 0.0
        %3733 = vmatpush2.msra.mxu0 0.0
        %3734 = vmatprep.subr.mxu0 0.0
        %3735 = vmatpush2.msra.mxu0 0.0
        %3736 = vmatprep.subr.mxu0 0.0
        %3737 = vmatpush2.msra.mxu0 0.0
        %3738 = vmatprep.subr.mxu0 0.0
        %3739 = vmatpush2.msra.mxu0 0.0
        %3740 = vmatprep.subr.mxu0 0.0
        %3741 = vmatpush2.msra.mxu0 0.0
        %3742 = vmatprep.subr.mxu0 0.0
        %3743 = vmatpush2.msra.mxu0 0.0
        %3744 = vmatprep.subr.mxu0 0.0
        %3745 = vmatpush2.msra.mxu0 0.0
        %3746 = vmatprep.subr.mxu0 0.0
        %3747 = vmatpush2.msra.mxu0 0.0
        %3748 = vmatprep.subr.mxu0 0.0
        %3749 = vmatpush2.msra.mxu0 0.0
        %3750 = vmatprep.subr.mxu0 0.0
        %3751 = vmatpush2.msra.mxu0 0.0
        %3752 = vmatprep.subr.mxu0 0.0
        %3753 = vmatpush2.msra.mxu0 0.0
        %3754 = vmatprep.subr.mxu0 0.0
        %3755 = vmatpush2.msra.mxu0 0.0
        %3756 = vmatprep.subr.mxu0 0.0
        %3757 = vmatpush2.msra.mxu0 0.0
        %3758 = vmatprep.mubr.f32.mxu0 0.0
        %3759 = vmatmul.mubr.f32.gmra.mxu0 %v2888
        %v3760 = vpop.f32.mrf.mxu0
        %v3761 = vadd.f32 0.0, %v3760
        %v3762 = vpop.f32.mrf.mxu0
        %3763 = vmatprep.mubr.f32.mxu0 0.0
        %3764 = vmatmul.mubr.f32.gmra.mxu0 %v2889
        %v3765 = vpop.f32.mrf.mxu0
        %v3766 = vadd.f32 0.0, %v3765
        %v3767 = vpop.f32.mrf.mxu0
        %3768 = vmatprep.mubr.f32.mxu0 0.0
        %3769 = vmatmul.mubr.f32.gmra.mxu0 %v2890
        %v3770 = vpop.f32.mrf.mxu0
        %v3771 = vadd.f32 0.0, %v3770
        %v3772 = vpop.f32.mrf.mxu0
        %3773 = vmatprep.mubr.f32.mxu0 0.0
        %3774 = vmatmul.mubr.f32.gmra.mxu0 %v2891
        %v3775 = vpop.f32.mrf.mxu0
        %v3776 = vadd.f32 0.0, %v3775
        %v3777 = vpop.f32.mrf.mxu0
        %3778 = vmatprep.mubr.f32.mxu0 0.0
        %3779 = vmatmul.mubr.f32.gmra.mxu0 %v2892
        %v3780 = vpop.f32.mrf.mxu0
        %v3781 = vadd.f32 0.0, %v3780
        %v3782 = vpop.f32.mrf.mxu0
        %3783 = vmatprep.mubr.f32.mxu0 0.0
        %3784 = vmatmul.mubr.f32.gmra.mxu0 %v2893
        %v3785 = vpop.f32.mrf.mxu0
        %v3786 = vadd.f32 0.0, %v3785
        %v3787 = vpop.f32.mrf.mxu0
        %3788 = vmatprep.mubr.f32.mxu0 0.0
        %3789 = vmatmul.mubr.f32.gmra.mxu0 %v2894
        %v3790 = vpop.f32.mrf.mxu0
        %v3791 = vadd.f32 0.0, %v3790
        %v3792 = vpop.f32.mrf.mxu0
        %3793 = vmatprep.mubr.f32.mxu0 0.0
        %3794 = vmatmul.mubr.f32.gmra.mxu0 %v2895
        %v3795 = vpop.f32.mrf.mxu0
        %v3796 = vadd.f32 0.0, %v3795
        %v3797 = vpop.f32.mrf.mxu0
        %3798 = vmatprep.mubr.f32.mxu0 0.0
        %3799 = vmatmul.mubr.f32.gmra.mxu0 %v2896
        %v3800 = vpop.f32.mrf.mxu0
        %v3801 = vadd.f32 0.0, %v3800
        %v3802 = vpop.f32.mrf.mxu0
        %3803 = vmatprep.mubr.f32.mxu0 0.0
        %3804 = vmatmul.mubr.f32.gmra.mxu0 %v2897
        %v3805 = vpop.f32.mrf.mxu0
        %v3806 = vadd.f32 0.0, %v3805
        %v3807 = vpop.f32.mrf.mxu0
        %3808 = vmatprep.mubr.f32.mxu0 0.0
        %3809 = vmatmul.mubr.f32.gmra.mxu0 %v2898
        %v3810 = vpop.f32.mrf.mxu0
        %v3811 = vadd.f32 0.0, %v3810
        %v3812 = vpop.f32.mrf.mxu0
        %3813 = vmatprep.mubr.f32.mxu0 0.0
        %3814 = vmatmul.mubr.f32.gmra.mxu0 %v2899
        %v3815 = vpop.f32.mrf.mxu0
        %v3816 = vadd.f32 0.0, %v3815
        %v3817 = vpop.f32.mrf.mxu0
        %3818 = vmatprep.mubr.f32.mxu0 0.0
        %3819 = vmatmul.mubr.f32.gmra.mxu0 %v2900
        %v3820 = vpop.f32.mrf.mxu0
        %v3821 = vadd.f32 0.0, %v3820
        %v3822 = vpop.f32.mrf.mxu0
        %3823 = vmatprep.mubr.f32.mxu0 0.0
        %3824 = vmatmul.mubr.f32.gmra.mxu0 %v2901
        %v3825 = vpop.f32.mrf.mxu0
        %v3826 = vadd.f32 0.0, %v3825
        %v3827 = vpop.f32.mrf.mxu0
        %3828 = vmatprep.mubr.f32.mxu0 0.0
        %3829 = vmatmul.mubr.f32.gmra.mxu0 %v2902
        %v3830 = vpop.f32.mrf.mxu0
        %v3831 = vadd.f32 0.0, %v3830
        %v3832 = vpop.f32.mrf.mxu0
        %3833 = vmatprep.mubr.f32.mxu0 0.0
        %3834 = vmatmul.mubr.f32.gmra.mxu0 %v2903
        %v3835 = vpop.f32.mrf.mxu0
        %v3836 = vadd.f32 0.0, %v3835
        %v3837 = vpop.f32.mrf.mxu0
        %3838 = vmatprep.mubr.f32.mxu0 0.0
        %3839 = vmatmul.mubr.f32.gmra.mxu0 %v2904
        %v3840 = vpop.f32.mrf.mxu0
        %v3841 = vadd.f32 0.0, %v3840
        %v3842 = vpop.f32.mrf.mxu0
        %3843 = vmatprep.mubr.f32.mxu0 0.0
        %3844 = vmatmul.mubr.f32.gmra.mxu0 %v2905
        %v3845 = vpop.f32.mrf.mxu0
        %v3846 = vadd.f32 0.0, %v3845
        %v3847 = vpop.f32.mrf.mxu0
        %3848 = vmatprep.mubr.f32.mxu0 0.0
        %3849 = vmatmul.mubr.f32.gmra.mxu0 %v2906
        %v3850 = vpop.f32.mrf.mxu0
        %v3851 = vadd.f32 0.0, %v3850
        %v3852 = vpop.f32.mrf.mxu0
        %3853 = vmatprep.mubr.f32.mxu0 0.0
        %3854 = vmatmul.mubr.f32.gmra.mxu0 %v2907
        %v3855 = vpop.f32.mrf.mxu0
        %v3856 = vadd.f32 0.0, %v3855
        %v3857 = vpop.f32.mrf.mxu0
        %3858 = vmatprep.mubr.f32.mxu0 0.0
        %3859 = vmatmul.mubr.f32.gmra.mxu0 %v2908
        %v3860 = vpop.f32.mrf.mxu0
        %v3861 = vadd.f32 0.0, %v3860
        %v3862 = vpop.f32.mrf.mxu0
        %3863 = vmatprep.mubr.f32.mxu0 0.0
        %3864 = vmatmul.mubr.f32.gmra.mxu0 %v2909
        %v3865 = vpop.f32.mrf.mxu0
        %v3866 = vadd.f32 0.0, %v3865
        %v3867 = vpop.f32.mrf.mxu0
        %3868 = vmatprep.mubr.f32.mxu0 0.0
        %3869 = vmatmul.mubr.f32.gmra.mxu0 %v2910
        %v3870 = vpop.f32.mrf.mxu0
        %v3871 = vadd.f32 0.0, %v3870
        %v3872 = vpop.f32.mrf.mxu0
        %3873 = vmatprep.mubr.f32.mxu0 0.0
        %3874 = vmatmul.mubr.f32.gmra.mxu0 %v2911
        %v3875 = vpop.f32.mrf.mxu0
        %v3876 = vadd.f32 0.0, %v3875
        %v3877 = vpop.f32.mrf.mxu0
        %3878 = vmatprep.mubr.f32.mxu0 0.0
        %3879 = vmatmul.mubr.f32.gmra.mxu0 %v2912
        %v3880 = vpop.f32.mrf.mxu0
        %v3881 = vadd.f32 0.0, %v3880
        %v3882 = vpop.f32.mrf.mxu0
        %3883 = vmatprep.mubr.f32.mxu0 0.0
        %3884 = vmatmul.mubr.f32.gmra.mxu0 %v2913
        %v3885 = vpop.f32.mrf.mxu0
        %v3886 = vadd.f32 0.0, %v3885
        %v3887 = vpop.f32.mrf.mxu0
        %3888 = vmatprep.mubr.f32.mxu0 0.0
        %3889 = vmatmul.mubr.f32.gmra.mxu0 %v2914
        %v3890 = vpop.f32.mrf.mxu0
        %v3891 = vadd.f32 0.0, %v3890
        %v3892 = vpop.f32.mrf.mxu0
        %3893 = vmatprep.mubr.f32.mxu0 0.0
        %3894 = vmatmul.mubr.f32.gmra.mxu0 %v2915
        %v3895 = vpop.f32.mrf.mxu0
        %v3896 = vadd.f32 0.0, %v3895
        %v3897 = vpop.f32.mrf.mxu0
        %3898 = vmatprep.mubr.f32.mxu0 0.0
        %3899 = vmatmul.mubr.f32.gmra.mxu0 %v2916
        %v3900 = vpop.f32.mrf.mxu0
        %v3901 = vadd.f32 0.0, %v3900
        %v3902 = vpop.f32.mrf.mxu0
        %3903 = vmatprep.mubr.f32.mxu0 0.0
        %3904 = vmatmul.mubr.f32.gmra.mxu0 %v2917
        %v3905 = vpop.f32.mrf.mxu0
        %v3906 = vadd.f32 0.0, %v3905
        %v3907 = vpop.f32.mrf.mxu0
        %3908 = vmatprep.mubr.f32.mxu0 0.0
        %3909 = vmatmul.mubr.f32.gmra.mxu0 %v2918
        %v3910 = vpop.f32.mrf.mxu0
        %v3911 = vadd.f32 0.0, %v3910
        %v3912 = vpop.f32.mrf.mxu0
        %3913 = vmatprep.mubr.f32.mxu0 0.0
        %3914 = vmatmul.mubr.f32.gmra.mxu0 %v2919
        %v3915 = vpop.f32.mrf.mxu0
        %v3916 = vadd.f32 0.0, %v3915
        %v3917 = vpop.f32.mrf.mxu0
        %3918 = vdwg.mxu0
        %v3919 = vadd.f32 %v3645, %v3761
        %v3920 = vadd.f32 %v3646, %v3766
        %v3921 = vadd.f32 %v3647, %v3771
        %v3922 = vadd.f32 %v3648, %v3776
        %v3923 = vadd.f32 %v3649, %v3781
        %v3924 = vadd.f32 %v3650, %v3786
        %v3925 = vadd.f32 %v3651, %v3791
        %v3926 = vadd.f32 %v3652, %v3796
        %v3927 = vadd.f32 %v3653, %v3801
        %v3928 = vadd.f32 %v3654, %v3806
        %v3929 = vadd.f32 %v3655, %v3811
        %v3930 = vadd.f32 %v3656, %v3816
        %v3931 = vadd.f32 %v3657, %v3821
        %v3932 = vadd.f32 %v3658, %v3826
        %v3933 = vadd.f32 %v3659, %v3831
        %v3934 = vadd.f32 %v3660, %v3836
        %v3935 = vadd.f32 %v3661, %v3841
        %v3936 = vadd.f32 %v3662, %v3846
        %v3937 = vadd.f32 %v3663, %v3851
        %v3938 = vadd.f32 %v3664, %v3856
        %v3939 = vadd.f32 %v3665, %v3861
        %v3940 = vadd.f32 %v3666, %v3866
        %v3941 = vadd.f32 %v3667, %v3871
        %v3942 = vadd.f32 %v3668, %v3876
        %v3943 = vadd.f32 %v3669, %v3881
        %v3944 = vadd.f32 %v3670, %v3886
        %v3945 = vadd.f32 %v3671, %v3891
        %v3946 = vadd.f32 %v3672, %v3896
        %v3947 = vadd.f32 %v3673, %v3901
        %v3948 = vadd.f32 %v3674, %v3906
        %v3949 = vadd.f32 %v3675, %v3911
        %v3950 = vadd.f32 %v3676, %v3916
        %v3951 = vld [vmem:[%s4] sm:$0x1]
        %v3953 = vlaneseq
        %v3954 = vshrl.u32 %v3953, 7
        %v3955 = vsub.s32 0, %v3954
        %v3956 = vrot.slane %v3951, %v3955
        %v3958 = vadd.f32 %v3919, %v3956
        %v3959 = vadd.f32 %v3920, %v3956
        %v3960 = vadd.f32 %v3921, %v3956
        %v3961 = vadd.f32 %v3922, %v3956
        %v3962 = vadd.f32 %v3923, %v3956
        %v3963 = vadd.f32 %v3924, %v3956
        %v3964 = vadd.f32 %v3925, %v3956
        %v3965 = vadd.f32 %v3926, %v3956
        %v3966 = vadd.f32 %v3927, %v3956
        %v3967 = vadd.f32 %v3928, %v3956
        %v3968 = vadd.f32 %v3929, %v3956
        %v3969 = vadd.f32 %v3930, %v3956
        %v3970 = vadd.f32 %v3931, %v3956
        %v3971 = vadd.f32 %v3932, %v3956
        %v3972 = vadd.f32 %v3933, %v3956
        %v3973 = vadd.f32 %v3934, %v3956
        %v3974 = vadd.f32 %v3935, %v3956
        %v3975 = vadd.f32 %v3936, %v3956
        %v3976 = vadd.f32 %v3937, %v3956
        %v3977 = vadd.f32 %v3938, %v3956
        %v3978 = vadd.f32 %v3939, %v3956
        %v3979 = vadd.f32 %v3940, %v3956
        %v3980 = vadd.f32 %v3941, %v3956
        %v3981 = vadd.f32 %v3942, %v3956
        %v3982 = vadd.f32 %v3943, %v3956
        %v3983 = vadd.f32 %v3944, %v3956
        %v3984 = vadd.f32 %v3945, %v3956
        %v3985 = vadd.f32 %v3946, %v3956
        %v3986 = vadd.f32 %v3947, %v3956
        %v3987 = vadd.f32 %v3948, %v3956
        %v3988 = vadd.f32 %v3949, %v3956
        %v3989 = vadd.f32 %v3950, %v3956
        %v3990 = vxor.u32 %v3958, 2147483648
        %v3991 = vxor.u32 %v3959, 2147483648
        %v3992 = vxor.u32 %v3960, 2147483648
        %v3993 = vxor.u32 %v3961, 2147483648
        %v3994 = vxor.u32 %v3962, 2147483648
        %v3995 = vxor.u32 %v3963, 2147483648
        %v3996 = vxor.u32 %v3964, 2147483648
        %v3997 = vxor.u32 %v3965, 2147483648
        %v3998 = vxor.u32 %v3966, 2147483648
        %v3999 = vxor.u32 %v3967, 2147483648
        %v4000 = vxor.u32 %v3968, 2147483648
        %v4001 = vxor.u32 %v3969, 2147483648
        %v4002 = vxor.u32 %v3970, 2147483648
        %v4003 = vxor.u32 %v3971, 2147483648
        %v4004 = vxor.u32 %v3972, 2147483648
        %v4005 = vxor.u32 %v3973, 2147483648
        %v4006 = vxor.u32 %v3974, 2147483648
        %v4007 = vxor.u32 %v3975, 2147483648
        %v4008 = vxor.u32 %v3976, 2147483648
        %v4009 = vxor.u32 %v3977, 2147483648
        %v4010 = vxor.u32 %v3978, 2147483648
        %v4011 = vxor.u32 %v3979, 2147483648
        %v4012 = vxor.u32 %v3980, 2147483648
        %v4013 = vxor.u32 %v3981, 2147483648
        %v4014 = vxor.u32 %v3982, 2147483648
        %v4015 = vxor.u32 %v3983, 2147483648
        %v4016 = vxor.u32 %v3984, 2147483648
        %v4017 = vxor.u32 %v3985, 2147483648
        %v4018 = vxor.u32 %v3986, 2147483648
        %v4019 = vxor.u32 %v3987, 2147483648
        %v4020 = vxor.u32 %v3988, 2147483648
        %v4021 = vxor.u32 %v3989, 2147483648
        %v4022 = vmul.f32 %v3990, 1.442695
        %v4023 = vpow.pop %v4022
        %v4024 = vmul.f32 %v3991, 1.442695
        %v4025 = vpow.pop %v4024
        %v4026 = vmul.f32 %v3992, 1.442695
        %v4027 = vpow.pop %v4026
        %v4028 = vmul.f32 %v3993, 1.442695
        %v4029 = vpow.pop %v4028
        %v4030 = vmul.f32 %v3994, 1.442695
        %v4031 = vpow.pop %v4030
        %v4032 = vmul.f32 %v3995, 1.442695
        %v4033 = vpow.pop %v4032
        %v4034 = vmul.f32 %v3996, 1.442695
        %v4035 = vpow.pop %v4034
        %v4036 = vmul.f32 %v3997, 1.442695
        %v4037 = vpow.pop %v4036
        %v4038 = vmul.f32 %v3998, 1.442695
        %v4039 = vpow.pop %v4038
        %v4040 = vmul.f32 %v3999, 1.442695
        %v4041 = vpow.pop %v4040
        %v4042 = vmul.f32 %v4000, 1.442695
        %v4043 = vpow.pop %v4042
        %v4044 = vmul.f32 %v4001, 1.442695
        %v4045 = vpow.pop %v4044
        %v4046 = vmul.f32 %v4002, 1.442695
        %v4047 = vpow.pop %v4046
        %v4048 = vmul.f32 %v4003, 1.442695
        %v4049 = vpow.pop %v4048
        %v4050 = vmul.f32 %v4004, 1.442695
        %v4051 = vpow.pop %v4050
        %v4052 = vmul.f32 %v4005, 1.442695
        %v4053 = vpow.pop %v4052
        %v4054 = vmul.f32 %v4006, 1.442695
        %v4055 = vpow.pop %v4054
        %v4056 = vmul.f32 %v4007, 1.442695
        %v4057 = vpow.pop %v4056
        %v4058 = vmul.f32 %v4008, 1.442695
        %v4059 = vpow.pop %v4058
        %v4060 = vmul.f32 %v4009, 1.442695
        %v4061 = vpow.pop %v4060
        %v4062 = vmul.f32 %v4010, 1.442695
        %v4063 = vpow.pop %v4062
        %v4064 = vmul.f32 %v4011, 1.442695
        %v4065 = vpow.pop %v4064
        %v4066 = vmul.f32 %v4012, 1.442695
        %v4067 = vpow.pop %v4066
        %v4068 = vmul.f32 %v4013, 1.442695
        %v4069 = vpow.pop %v4068
        %v4070 = vmul.f32 %v4014, 1.442695
        %v4071 = vpow.pop %v4070
        %v4072 = vmul.f32 %v4015, 1.442695
        %v4073 = vpow.pop %v4072
        %v4074 = vmul.f32 %v4016, 1.442695
        %v4075 = vpow.pop %v4074
        %v4076 = vmul.f32 %v4017, 1.442695
        %v4077 = vpow.pop %v4076
        %v4078 = vmul.f32 %v4018, 1.442695
        %v4079 = vpow.pop %v4078
        %v4080 = vmul.f32 %v4019, 1.442695
        %v4081 = vpow.pop %v4080
        %v4082 = vmul.f32 %v4020, 1.442695
        %v4083 = vpow.pop %v4082
        %v4084 = vmul.f32 %v4021, 1.442695
        %v4085 = vpow.pop %v4084
        %v4086 = vadd.f32 %v4023, 1.0
        %v4087 = vadd.f32 %v4025, 1.0
        %v4088 = vadd.f32 %v4027, 1.0
        %v4089 = vadd.f32 %v4029, 1.0
        %v4090 = vadd.f32 %v4031, 1.0
        %v4091 = vadd.f32 %v4033, 1.0
        %v4092 = vadd.f32 %v4035, 1.0
        %v4093 = vadd.f32 %v4037, 1.0
        %v4094 = vadd.f32 %v4039, 1.0
        %v4095 = vadd.f32 %v4041, 1.0
        %v4096 = vadd.f32 %v4043, 1.0
        %v4097 = vadd.f32 %v4045, 1.0
        %v4098 = vadd.f32 %v4047, 1.0
        %v4099 = vadd.f32 %v4049, 1.0
        %v4100 = vadd.f32 %v4051, 1.0
        %v4101 = vadd.f32 %v4053, 1.0
        %v4102 = vadd.f32 %v4055, 1.0
        %v4103 = vadd.f32 %v4057, 1.0
        %v4104 = vadd.f32 %v4059, 1.0
        %v4105 = vadd.f32 %v4061, 1.0
        %v4106 = vadd.f32 %v4063, 1.0
        %v4107 = vadd.f32 %v4065, 1.0
        %v4108 = vadd.f32 %v4067, 1.0
        %v4109 = vadd.f32 %v4069, 1.0
        %v4110 = vadd.f32 %v4071, 1.0
        %v4111 = vadd.f32 %v4073, 1.0
        %v4112 = vadd.f32 %v4075, 1.0
        %v4113 = vadd.f32 %v4077, 1.0
        %v4114 = vadd.f32 %v4079, 1.0
        %v4115 = vadd.f32 %v4081, 1.0
        %v4116 = vadd.f32 %v4083, 1.0
        %v4117 = vadd.f32 %v4085, 1.0
        %v4118 = vrcp.pop %v4086
        %v4119 = vmul.f32 1.0, %v4118
        %v4120 = vrcp.pop %v4087
        %v4121 = vmul.f32 1.0, %v4120
        %v4122 = vrcp.pop %v4088
        %v4123 = vmul.f32 1.0, %v4122
        %v4124 = vrcp.pop %v4089
        %v4125 = vmul.f32 1.0, %v4124
        %v4126 = vrcp.pop %v4090
        %v4127 = vmul.f32 1.0, %v4126
        %v4128 = vrcp.pop %v4091
        %v4129 = vmul.f32 1.0, %v4128
        %v4130 = vrcp.pop %v4092
        %v4131 = vmul.f32 1.0, %v4130
        %v4132 = vrcp.pop %v4093
        %v4133 = vmul.f32 1.0, %v4132
        %v4134 = vrcp.pop %v4094
        %v4135 = vmul.f32 1.0, %v4134
        %v4136 = vrcp.pop %v4095
        %v4137 = vmul.f32 1.0, %v4136
        %v4138 = vrcp.pop %v4096
        %v4139 = vmul.f32 1.0, %v4138
        %v4140 = vrcp.pop %v4097
        %v4141 = vmul.f32 1.0, %v4140
        %v4142 = vrcp.pop %v4098
        %v4143 = vmul.f32 1.0, %v4142
        %v4144 = vrcp.pop %v4099
        %v4145 = vmul.f32 1.0, %v4144
        %v4146 = vrcp.pop %v4100
        %v4147 = vmul.f32 1.0, %v4146
        %v4148 = vrcp.pop %v4101
        %v4149 = vmul.f32 1.0, %v4148
        %v4150 = vrcp.pop %v4102
        %v4151 = vmul.f32 1.0, %v4150
        %v4152 = vrcp.pop %v4103
        %v4153 = vmul.f32 1.0, %v4152
        %v4154 = vrcp.pop %v4104
        %v4155 = vmul.f32 1.0, %v4154
        %v4156 = vrcp.pop %v4105
        %v4157 = vmul.f32 1.0, %v4156
        %v4158 = vrcp.pop %v4106
        %v4159 = vmul.f32 1.0, %v4158
        %v4160 = vrcp.pop %v4107
        %v4161 = vmul.f32 1.0, %v4160
        %v4162 = vrcp.pop %v4108
        %v4163 = vmul.f32 1.0, %v4162
        %v4164 = vrcp.pop %v4109
        %v4165 = vmul.f32 1.0, %v4164
        %v4166 = vrcp.pop %v4110
        %v4167 = vmul.f32 1.0, %v4166
        %v4168 = vrcp.pop %v4111
        %v4169 = vmul.f32 1.0, %v4168
        %v4170 = vrcp.pop %v4112
        %v4171 = vmul.f32 1.0, %v4170
        %v4172 = vrcp.pop %v4113
        %v4173 = vmul.f32 1.0, %v4172
        %v4174 = vrcp.pop %v4114
        %v4175 = vmul.f32 1.0, %v4174
        %v4176 = vrcp.pop %v4115
        %v4177 = vmul.f32 1.0, %v4176
        %v4178 = vrcp.pop %v4116
        %v4179 = vmul.f32 1.0, %v4178
        %v4180 = vrcp.pop %v4117
        %v4181 = vmul.f32 1.0, %v4180
        %v4182 = vmul.f32 %v3958, %v4119
        %v4183 = vmul.f32 %v3959, %v4121
        %v4184 = vmul.f32 %v3960, %v4123
        %v4185 = vmul.f32 %v3961, %v4125
        %v4186 = vmul.f32 %v3962, %v4127
        %v4187 = vmul.f32 %v3963, %v4129
        %v4188 = vmul.f32 %v3964, %v4131
        %v4189 = vmul.f32 %v3965, %v4133
        %v4190 = vmul.f32 %v3966, %v4135
        %v4191 = vmul.f32 %v3967, %v4137
        %v4192 = vmul.f32 %v3968, %v4139
        %v4193 = vmul.f32 %v3969, %v4141
        %v4194 = vmul.f32 %v3970, %v4143
        %v4195 = vmul.f32 %v3971, %v4145
        %v4196 = vmul.f32 %v3972, %v4147
        %v4197 = vmul.f32 %v3973, %v4149
        %v4198 = vmul.f32 %v3974, %v4151
        %v4199 = vmul.f32 %v3975, %v4153
        %v4200 = vmul.f32 %v3976, %v4155
        %v4201 = vmul.f32 %v3977, %v4157
        %v4202 = vmul.f32 %v3978, %v4159
        %v4203 = vmul.f32 %v3979, %v4161
        %v4204 = vmul.f32 %v3980, %v4163
        %v4205 = vmul.f32 %v3981, %v4165
        %v4206 = vmul.f32 %v3982, %v4167
        %v4207 = vmul.f32 %v3983, %v4169
        %v4208 = vmul.f32 %v3984, %v4171
        %v4209 = vmul.f32 %v3985, %v4173
        %v4210 = vmul.f32 %v3986, %v4175
        %v4211 = vmul.f32 %v3987, %v4177
        %v4212 = vmul.f32 %v3988, %v4179
        %v4213 = vmul.f32 %v3989, %v4181
        %4214 = vst [vmem:[%s309] sm:$0xff] %v4182
        %4215 = vst [vmem:[%s309 + $0x8] sm:$0xff] %v4183
        %4216 = vst [vmem:[%s309 + $0x10] sm:$0xff] %v4184
        %4217 = vst [vmem:[%s309 + $0x18] sm:$0xff] %v4185
        %4218 = vst [vmem:[%s309 + $0x20] sm:$0xff] %v4186
        %4219 = vst [vmem:[%s309 + $0x28] sm:$0xff] %v4187
        %4220 = vst [vmem:[%s309 + $0x30] sm:$0xff] %v4188
        %4221 = vst [vmem:[%s309 + $0x38] sm:$0xff] %v4189
        %4222 = vst [vmem:[%s309 + $0x40] sm:$0xff] %v4190
        %4223 = vst [vmem:[%s309 + $0x48] sm:$0xff] %v4191
        %4224 = vst [vmem:[%s309 + $0x50] sm:$0xff] %v4192
        %4225 = vst [vmem:[%s309 + $0x58] sm:$0xff] %v4193
        %4226 = vst [vmem:[%s309 + $0x60] sm:$0xff] %v4194
        %4227 = vst [vmem:[%s309 + $0x68] sm:$0xff] %v4195
        %4228 = vst [vmem:[%s309 + $0x70] sm:$0xff] %v4196
        %4229 = vst [vmem:[%s309 + $0x78] sm:$0xff] %v4197
        %4230 = vst [vmem:[%s309 + $0x80] sm:$0xff] %v4198
        %4231 = vst [vmem:[%s309 + $0x88] sm:$0xff] %v4199
        %4232 = vst [vmem:[%s309 + $0x90] sm:$0xff] %v4200
        %4233 = vst [vmem:[%s309 + $0x98] sm:$0xff] %v4201
        %4234 = vst [vmem:[%s309 + $0xa0] sm:$0xff] %v4202
        %4235 = vst [vmem:[%s309 + $0xa8] sm:$0xff] %v4203
        %4236 = vst [vmem:[%s309 + $0xb0] sm:$0xff] %v4204
        %4237 = vst [vmem:[%s309 + $0xb8] sm:$0xff] %v4205
        %4238 = vst [vmem:[%s309 + $0xc0] sm:$0xff] %v4206
        %4239 = vst [vmem:[%s309 + $0xc8] sm:$0xff] %v4207
        %4240 = vst [vmem:[%s309 + $0xd0] sm:$0xff] %v4208
        %4241 = vst [vmem:[%s309 + $0xd8] sm:$0xff] %v4209
        %4242 = vst [vmem:[%s309 + $0xe0] sm:$0xff] %v4210
        %4243 = vst [vmem:[%s309 + $0xe8] sm:$0xff] %v4211
        %4244 = vst [vmem:[%s309 + $0xf0] sm:$0xff] %v4212
        %4245 = vst [vmem:[%s309 + $0xf8] sm:$0xff] %v4213
        %s4246 = sand.u32 %s168, 1
        %s4247 = scalar_lea.sflag [#allocation6], %s4246
        %s4248 = sand.u32 %s168, 1
        %s4249 = smul.addr %s4248, 256
        %s4250 = scalar_lea.vmem [#allocation10], %s4249
        // Predicated region
        $region53: #{tpu_custom_call.1} parent=39 // pred_check
          %p4251 = pneg %p178
        $region54: #{tpu_custom_call.1} parent=39 // pred_check_branch
          %4253 = sbr.rel (%p4251) target = $region56
        $region55: #{tpu_custom_call.1} parent=39 // pred_region
          %s4255 = ssub.s32 4096, 4096
          %4256 = vsyncadd %s4247, %s4255
          %s4257 = smul.addr %s27, 32
          %s4258 = smul.addr %s4257, 128
          %s4259 = scalar_lea.hbm %s5, %s4258
          %s4260 = sshll.u32 %s4250, 4
          %s4261 = int_to_ptr.vmem [resolvable:$true] %s4260
          %4266 = dma.vmem_to_hbm [thread:$0]  %s4261, 4096, %s4259, %s4247, 128, 128, 8
        $region56: #{tpu_custom_call.1} parent=39 // pred_fallthru
          _
      $region40: #{tpu_custom_call.1} parent=5 // pred_fallthru
        _
      %p4267 = scmp.le.s32.totalorder 2, %s18
      // Predicated region
      $region57: #{tpu_custom_call.1} parent=5 // pred_check
        %p4268 = pneg %p4267
      $region58: #{tpu_custom_call.1} parent=5 // pred_check_branch
        %4270 = sbr.rel (%p4268) target = $region60
      $region59: #{tpu_custom_call.1} parent=5 // pred_region
        %s4271 = ssub.s32 %s18, 2
        // Predicated region
        $region61: #{tpu_custom_call.1} parent=59 // pred_check
          %p4272 = pneg %p184
        $region62: #{tpu_custom_call.1} parent=59 // pred_check_branch
          %4274 = sbr.rel (%p4272) target = $region64
        $region63: #{tpu_custom_call.1} parent=59 // pred_region
          %s4275 = sand.u32 %s169, 1
          %s4276 = scalar_lea.sflag [#allocation6], %s4275
          %s4277 = sand.u32 %s169, 1
          %s4278 = smul.addr %s4277, 256
          %s4279 = scalar_lea.vmem [#allocation10], %s4278
          %4280 = dma.done %s4276, 4096
        $region64: #{tpu_custom_call.1} parent=59 // pred_fallthru
          _
      $region60: #{tpu_custom_call.1} parent=5 // pred_fallthru
        _
    $region6: #{tpu_custom_call.1} parent=1 // loop_footer
      %s22 = sadd.s32 1, %s18
    $region7: #{tpu_custom_call.1} parent=1 // loop_footer_branch
      %17 = sbr.rel target = $region3
    $region8: #{tpu_custom_call.1} parent=1 // loop_exit
      _
    %4281 = vsyncpa [#allocation5], 1
    %s4282 = scalar_lea.sflag [#allocation5], 1
    %4283 = vsyncpa %s4282, 1
    %4284 = vsyncpa [#allocation8], 1
    %4285 = vsyncpa [#allocation6], 1
    %s4286 = scalar_lea.sflag [#allocation6], 1
    %4287 = vsyncpa %s4286, 1

// kernel: tpu_custom_call.1
$region0: #{tpu_custom_call.1}
  #allocation0 [shape = 'u32[]', space=smem, size = 0x4, offset = 0x4, fixed_abs, tag = 'smem constant byte address 0x4 - core index']
  #allocation1 [shape = 'u32[144,128]{1,0:T(1,128)}', space=vmem, size = 0x12000, scoped, tag = 'internal scratch']
  #allocation2 [shape = 'f32[16,20,128]{2,1,0:T(8,128)}', space=vmem, size = 0x30000, scoped, tag = 'scratch operand']
  #allocation3 [shape = 'f32[20,16,128]{2,1,0:T(8,128)}', space=vmem, size = 0x28000, scoped, tag = 'scratch operand']
  %s0 = inlined_call_operand.vmem [shape: f32[2,256,64], index: 0, kind: input, shape index: {}]
  %s1 = inlined_call_operand.vmem [shape: f32[64,128], index: 1, kind: input, shape index: {}]
  %s2 = inlined_call_operand.vmem [shape: f32[1,128], index: 2, kind: input, shape index: {}]
  %s3 = inlined_call_operand.vmem [shape: f32[4,128,128], index: 3, kind: input, shape index: {}]
  %s4 = inlined_call_operand.vmem [shape: f32[1,128], index: 4, kind: input, shape index: {}]
  %s5 = inlined_call_operand.hbm [shape: f32[2,256,128], index: 5, kind: output, shape index: {}]
  %s6 = sld [smem:[#allocation0]]
  $region53: #{tpu_custom_call.1} parent=0
    _
  %s8 = ssub.s32 1, %s6
  %s9 = scalar_select 0, %s8, %s6
  $region1: #{tpu_custom_call.1} parent=0
    #allocation4 [shape = 'u8[262144]{0}', space=vmem, size = 0x40000, scoped, tag = 'output window, operand 0']
    #allocation5 [shape = 's32[2]{0}', space=sflag, size = 0x8, scoped, tag = 'scoped memory for tpu_custom_call.1']
    %10 = vsyncpa [#allocation5], 0
    %s11 = scalar_lea.sflag [#allocation5], 1
    %12 = vsyncpa %s11, 0
    loop: start=0, step=1, limit=4
    $region2: #{tpu_custom_call.1} parent=1 // loop_pre_header
      _
    $region3: #{tpu_custom_call.1} parent=1 // loop_header
      %s14 = sphi 0, %s18
      %p15 = scmp.ge.s32.totalorder %s14, 4
      %s21 = sphi 0, %s33
      %s22 = sphi 0, %s29
      %s23 = sphi 0, %s21
      %s24 = sphi 0, %s22
      %s25 = sphi 0, %s23
      %s26 = sphi 0, %s24
      %s36 = sphi 0, %s38
      %s39 = sphi 0, %s36
      %s40 = sphi 0, %s39
      %s56 = sphi 0, %s40
      %s62 = sphi 0, %s64
      %s65 = sphi 0, %s62
      %s66 = sphi 0, %s65
      %s82 = sphi 0, %s66
      %s88 = sphi 0, %s90
      %s91 = sphi 0, %s88
      %s92 = sphi 0, %s91
      %s108 = sphi 0, %s92
      %s114 = sphi 0, %s116
      %s117 = sphi 0, %s114
      %s118 = sphi 0, %s117
      %s134 = sphi 0, %s118
      %s138 = sphi 0, %s138
      %s140 = sphi 0, %s138
      %s141 = sphi 0, %s140
      %s155 = sphi 0, %s141
      %s161 = sphi 0, %s163
      %s164 = sphi 0, %s161
      %s165 = sphi 0, %s164
      %s181 = sphi 0, %s165
    $region4: #{tpu_custom_call.1} parent=1 // loop_header_branch
      %17 = sbr.rel (%p15) target = $region8
    $region5: #{tpu_custom_call.1} parent=1 // loop_body
      %s19 = ssub.s32 %s14, 1
      %s20 = ssub.s32 %s14, 2
      %s27 = sadd.s32 1, %s22
      %p28 = scmp.ge.s32.totalorder %s27, 1
      %s29 = scalar_select %p28, 0, %s27
      %s30 = sadd.s32 1, %s21
      %s31 = scalar_select %p28, %s30, %s21
      %p32 = scmp.ge.s32.totalorder %s31, 2
      %s33 = scalar_select %p32, 0, %s31
      %s34 = ssub.s32 %s21, %s33
      %p35 = scmp.eq.s32.totalorder %s34, 0
      %s37 = sadd.s32 %s36, 1
      %s38 = scalar_select %p35, %s36, %s37
      %p41 = pneg %p35
      %p42 = scmp.eq.s32.totalorder %s14, 1
      %p43 = por %p41, %p42
      %p44 = scmp.ne.s32.totalorder %s36, %s39
      %p45 = scmp.eq.s32.totalorder %s14, 0
      %p46 = por %p44, %p45
      %p47 = scmp.ne.s32.totalorder %s36, %s39
      %p48 = scmp.eq.s32.totalorder %s19, 1
      %p49 = por %p47, %p48
      %p50 = scmp.ne.s32.totalorder %s39, %s40
      %p51 = scmp.eq.s32.totalorder %s19, 0
      %p52 = por %p50, %p51
      %p53 = scmp.ne.s32.totalorder %s39, %s40
      %p54 = scmp.eq.s32.totalorder %s20, 1
      %p55 = por %p53, %p54
      %p57 = scmp.ne.s32.totalorder %s40, %s56
      %p58 = scmp.eq.s32.totalorder %s20, 0
      %p59 = por %p57, %p58
      %s60 = ssub.s32 %s22, %s29
      %p61 = scmp.eq.s32.totalorder %s60, 0
      %s63 = sadd.s32 %s62, 1
      %s64 = scalar_select %p61, %s62, %s63
      %p67 = pneg %p61
      %p68 = scmp.eq.s32.totalorder %s14, 1
      %p69 = por %p67, %p68
      %p70 = scmp.ne.s32.totalorder %s62, %s65
      %p71 = scmp.eq.s32.totalorder %s14, 0
      %p72 = por %p70, %p71
      %p73 = scmp.ne.s32.totalorder %s62, %s65
      %p74 = scmp.eq.s32.totalorder %s19, 1
      %p75 = por %p73, %p74
      %p76 = scmp.ne.s32.totalorder %s65, %s66
      %p77 = scmp.eq.s32.totalorder %s19, 0
      %p78 = por %p76, %p77
      %p79 = scmp.ne.s32.totalorder %s65, %s66
      %p80 = scmp.eq.s32.totalorder %s20, 1
      %p81 = por %p79, %p80
      %p83 = scmp.ne.s32.totalorder %s66, %s82
      %p84 = scmp.eq.s32.totalorder %s20, 0
      %p85 = por %p83, %p84
      %s86 = ssub.s32 %s22, %s29
      %p87 = scmp.eq.s32.totalorder %s86, 0
      %s89 = sadd.s32 %s88, 1
      %s90 = scalar_select %p87, %s88, %s89
      %p93 = pneg %p87
      %p94 = scmp.eq.s32.totalorder %s14, 1
      %p95 = por %p93, %p94
      %p96 = scmp.ne.s32.totalorder %s88, %s91
      %p97 = scmp.eq.s32.totalorder %s14, 0
      %p98 = por %p96, %p97
      %p99 = scmp.ne.s32.totalorder %s88, %s91
      %p100 = scmp.eq.s32.totalorder %s19, 1
      %p101 = por %p99, %p100
      %p102 = scmp.ne.s32.totalorder %s91, %s92
      %p103 = scmp.eq.s32.totalorder %s19, 0
      %p104 = por %p102, %p103
      %p105 = scmp.ne.s32.totalorder %s91, %s92
      %p106 = scmp.eq.s32.totalorder %s20, 1
      %p107 = por %p105, %p106
      %p109 = scmp.ne.s32.totalorder %s92, %s108
      %p110 = scmp.eq.s32.totalorder %s20, 0
      %p111 = por %p109, %p110
      %s112 = ssub.s32 %s22, %s29
      %p113 = scmp.eq.s32.totalorder %s112, 0
      %s115 = sadd.s32 %s114, 1
      %s116 = scalar_select %p113, %s114, %s115
      %p119 = pneg %p113
      %p120 = scmp.eq.s32.totalorder %s14, 1
      %p121 = por %p119, %p120
      %p122 = scmp.ne.s32.totalorder %s114, %s117
      %p123 = scmp.eq.s32.totalorder %s14, 0
      %p124 = por %p122, %p123
      %p125 = scmp.ne.s32.totalorder %s114, %s117
      %p126 = scmp.eq.s32.totalorder %s19, 1
      %p127 = por %p125, %p126
      %p128 = scmp.ne.s32.totalorder %s117, %s118
      %p129 = scmp.eq.s32.totalorder %s19, 0
      %p130 = por %p128, %p129
      %p131 = scmp.ne.s32.totalorder %s117, %s118
      %p132 = scmp.eq.s32.totalorder %s20, 1
      %p133 = por %p131, %p132
      %p135 = scmp.ne.s32.totalorder %s118, %s134
      %p136 = scmp.eq.s32.totalorder %s20, 0
      %p137 = por %p135, %p136
      %s139 = sadd.s32 %s138, 1
      %p142 = scmp.eq.s32.totalorder %s14, 1
      %p143 = scmp.ne.s32.totalorder %s138, %s140
      %p144 = scmp.eq.s32.totalorder %s14, 0
      %p145 = por %p143, %p144
      %p146 = scmp.ne.s32.totalorder %s138, %s140
      %p147 = scmp.eq.s32.totalorder %s19, 1
      %p148 = por %p146, %p147
      %p149 = scmp.ne.s32.totalorder %s140, %s141
      %p150 = scmp.eq.s32.totalorder %s19, 0
      %p151 = por %p149, %p150
      %p152 = scmp.ne.s32.totalorder %s140, %s141
      %p153 = scmp.eq.s32.totalorder %s20, 1
      %p154 = por %p152, %p153
      %p156 = scmp.ne.s32.totalorder %s141, %s155
      %p157 = scmp.eq.s32.totalorder %s20, 0
      %p158 = por %p156, %p157
      %s159 = ssub.s32 %s21, %s33
      %p160 = scmp.eq.s32.totalorder %s159, 0
      %s162 = sadd.s32 %s161, 1
      %s163 = scalar_select %p160, %s161, %s162
      %p166 = pneg %p160
      %p167 = scmp.eq.s32.totalorder %s14, 1
      %p168 = por %p166, %p167
      %p169 = scmp.ne.s32.totalorder %s161, %s164
      %p170 = scmp.eq.s32.totalorder %s14, 0
      %p171 = por %p169, %p170
      %p172 = scmp.ne.s32.totalorder %s161, %s164
      %p173 = scmp.eq.s32.totalorder %s19, 1
      %p174 = por %p172, %p173
      %p175 = scmp.ne.s32.totalorder %s164, %s165
      %p176 = scmp.eq.s32.totalorder %s19, 0
      %p177 = por %p175, %p176
      %p178 = scmp.ne.s32.totalorder %s164, %s165
      %p179 = scmp.eq.s32.totalorder %s20, 1
      %p180 = por %p178, %p179
      %p182 = scmp.ne.s32.totalorder %s165, %s181
      %p183 = scmp.eq.s32.totalorder %s20, 0
      %p184 = por %p182, %p183
      %p185 = scmp.le.s32.totalorder 1, %s14
      %p186 = scmp.lt.s32.totalorder %s14, 3
      %p187 = pnand %p185, %p186
      %p188 = pneg %p187
      // Predicated region
      $region9: #{tpu_custom_call.1} parent=5 // pred_check
        _
      $region10: #{tpu_custom_call.1} parent=5 // pred_check_branch
        %190 = sbr.rel (%p187) target = $region12
      $region11: #{tpu_custom_call.1} parent=5 // pred_region
        %s191 = ssub.s32 %s14, 1
        // Predicated region
        $region13: #{tpu_custom_call.1} parent=11 // pred_check
          %p192 = pneg %p78
        $region14: #{tpu_custom_call.1} parent=11 // pred_check_branch
          %194 = sbr.rel (%p192) target = $region16
        $region15: #{tpu_custom_call.1} parent=11 // pred_region
          %p195 = scmp.lt.s32.totalorder %s24, 0
          %s196 = scalar_select %p195, %s24, 0
          %s197 = smul.addr %s196, 8
          %s198 = scalar_lea.vmem %s1, %s197
        $region16: #{tpu_custom_call.1} parent=11 // pred_fallthru
          _
        // Predicated region
        $region17: #{tpu_custom_call.1} parent=11 // pred_check
          %p199 = pneg %p104
        $region18: #{tpu_custom_call.1} parent=11 // pred_check_branch
          %201 = sbr.rel (%p199) target = $region20
        $region19: #{tpu_custom_call.1} parent=11 // pred_region
          %p202 = scmp.lt.s32.totalorder %s24, 0
          %s203 = scalar_select %p202, %s24, 0
          %s204 = scalar_lea.vmem %s2, %s203
        $region20: #{tpu_custom_call.1} parent=11 // pred_fallthru
          _
        // Predicated region
        $region21: #{tpu_custom_call.1} parent=11 // pred_check
          %p205 = pneg %p130
        $region22: #{tpu_custom_call.1} parent=11 // pred_check_branch
          %207 = sbr.rel (%p205) target = $region24
        $region23: #{tpu_custom_call.1} parent=11 // pred_region
          %s208 = smul.u32 16, %s24
          %p209 = scmp.lt.s32.totalorder %s208, 15
          %s210 = scalar_select %p209, %s208, 15
          %s211 = smul.addr %s210, 8
          %s212 = scalar_lea.vmem %s3, %s211
          %s213 = smul.u32 16, %s24
        $region24: #{tpu_custom_call.1} parent=11 // pred_fallthru
          _
        // Predicated region
        $region25: #{tpu_custom_call.1} parent=11 // pred_check
          %p214 = pneg %p151
        $region26: #{tpu_custom_call.1} parent=11 // pred_check_branch
          %216 = sbr.rel (%p214) target = $region28
        $region27: #{tpu_custom_call.1} parent=11 // pred_region
          _
        $region28: #{tpu_custom_call.1} parent=11 // pred_fallthru
          _
      $region12: #{tpu_custom_call.1} parent=5 // pred_fallthru
        _
      %p217 = scmp.lt.s32.totalorder %s14, 2
      // Predicated region
      $region29: #{tpu_custom_call.1} parent=5 // pred_check
        %p218 = pneg %p217
      $region30: #{tpu_custom_call.1} parent=5 // pred_check_branch
        %220 = sbr.rel (%p218) target = $region32
      $region31: #{tpu_custom_call.1} parent=5 // pred_region
        // Predicated region
        $region33: #{tpu_custom_call.1} parent=31 // pred_check
          %p221 = pneg %p46
        $region34: #{tpu_custom_call.1} parent=31 // pred_check_branch
          %223 = sbr.rel (%p221) target = $region36
        $region35: #{tpu_custom_call.1} parent=31 // pred_region
          %p224 = scmp.lt.s32.totalorder %s21, 1
          %s225 = scalar_select %p224, %s21, 1
          %s226 = smul.addr %s225, 32
          %s227 = smul.addr %s226, 8
          %s228 = scalar_lea.vmem %s0, %s227
        $region36: #{tpu_custom_call.1} parent=31 // pred_fallthru
          _
      $region32: #{tpu_custom_call.1} parent=5 // pred_fallthru
        _
      %p229 = scmp.le.s32.totalorder 1, %s14
      %p230 = scmp.lt.s32.totalorder %s14, 3
      %p231 = pnand %p229, %p230
      %p232 = pneg %p231
      // Predicated region
      $region37: #{tpu_custom_call.1} parent=5 // pred_check
        _
      $region38: #{tpu_custom_call.1} parent=5 // pred_check_branch
        %234 = sbr.rel (%p231) target = $region40
      $region39: #{tpu_custom_call.1} parent=5 // pred_region
        %s235 = ssub.s32 %s14, 1
        %p236 = scmp.lt.s32.totalorder %s23, 1
        %s237 = scalar_select %p236, %s23, 1
        %s238 = smul.addr %s237, 32
        %s239 = smul.addr %s238, 8
        %s240 = scalar_lea.vmem %s0, %s239
        %p241 = pneg %p52
        %p242 = pneg %p49
        %p243 = scmp.lt.s32.totalorder %s24, 0
        %s244 = scalar_select %p243, %s24, 0
        %s245 = smul.addr %s244, 8
        %s246 = scalar_lea.vmem %s1, %s245
        %p247 = pneg %p78
        %p248 = pneg %p75
        %p249 = scmp.lt.s32.totalorder %s24, 0
        %s250 = scalar_select %p249, %s24, 0
        %s251 = scalar_lea.vmem %s2, %s250
        %p252 = pneg %p104
        %p253 = pneg %p101
        %s254 = smul.u32 16, %s24
        %p255 = scmp.lt.s32.totalorder %s254, 15
        %s256 = scalar_select %p255, %s254, 15
        %s257 = smul.addr %s256, 8
        %s258 = scalar_lea.vmem %s3, %s257
        %p259 = pneg %p130
        %p260 = pneg %p127
        %p261 = pneg %p151
        %p262 = pneg %p148
        %p263 = pneg %p177
        %p264 = pneg %p174
        %s265 = sand.u32 %s164, 1
        %s266 = scalar_lea.sflag [#allocation5], %s265
        %s267 = sand.u32 %s164, 1
        %s268 = smul.addr %s267, 256
        %s269 = scalar_lea.vmem [#allocation4], %s268
        %p270 = scmp.lt.s32.totalorder %s23, 1
        %s271 = scalar_select %p270, %s23, 1
        %s272 = smul.addr %s271, 32
        %s273 = smul.addr %s272, 8
        %s274 = scalar_lea.vmem %s0, %s273
        %p275 = scmp.lt.s32.totalorder %s24, 0
        %s276 = scalar_select %p275, %s24, 0
        %s277 = smul.addr %s276, 8
        %s278 = scalar_lea.vmem %s1, %s277
        %p279 = scmp.lt.s32.totalorder %s24, 0
        %s280 = scalar_select %p279, %s24, 0
        %s281 = scalar_lea.vmem %s2, %s280
        %s282 = smul.u32 16, %s24
        %p283 = scmp.lt.s32.totalorder %s282, 15
        %s284 = scalar_select %p283, %s282, 15
        %s285 = smul.addr %s284, 8
        %s286 = scalar_lea.vmem %s3, %s285
        %s287 = smul.u32 16, %s24
        %v288 = vld [vmem:[%s274] sm:$0xff]
        %v289 = vld [vmem:[%s274 + $0x8] sm:$0xff]
        %v290 = vld [vmem:[%s274 + $0x10] sm:$0xff]
        %v291 = vld [vmem:[%s274 + $0x18] sm:$0xff]
        %v292 = vld [vmem:[%s274 + $0x20] sm:$0xff]
        %v293 = vld [vmem:[%s274 + $0x28] sm:$0xff]
        %v294 = vld [vmem:[%s274 + $0x30] sm:$0xff]
        %v295 = vld [vmem:[%s274 + $0x38] sm:$0xff]
        %v296 = vld [vmem:[%s274 + $0x40] sm:$0xff]
        %v297 = vld [vmem:[%s274 + $0x48] sm:$0xff]
        %v298 = vld [vmem:[%s274 + $0x50] sm:$0xff]
        %v299 = vld [vmem:[%s274 + $0x58] sm:$0xff]
        %v300 = vld [vmem:[%s274 + $0x60] sm:$0xff]
        %v301 = vld [vmem:[%s274 + $0x68] sm:$0xff]
        %v302 = vld [vmem:[%s274 + $0x70] sm:$0xff]
        %v303 = vld [vmem:[%s274 + $0x78] sm:$0xff]
        %v304 = vld [vmem:[%s274 + $0x80] sm:$0xff]
        %v305 = vld [vmem:[%s274 + $0x88] sm:$0xff]
        %v306 = vld [vmem:[%s274 + $0x90] sm:$0xff]
        %v307 = vld [vmem:[%s274 + $0x98] sm:$0xff]
        %v308 = vld [vmem:[%s274 + $0xa0] sm:$0xff]
        %v309 = vld [vmem:[%s274 + $0xa8] sm:$0xff]
        %v310 = vld [vmem:[%s274 + $0xb0] sm:$0xff]
        %v311 = vld [vmem:[%s274 + $0xb8] sm:$0xff]
        %v312 = vld [vmem:[%s274 + $0xc0] sm:$0xff]
        %v313 = vld [vmem:[%s274 + $0xc8] sm:$0xff]
        %v314 = vld [vmem:[%s274 + $0xd0] sm:$0xff]
        %v315 = vld [vmem:[%s274 + $0xd8] sm:$0xff]
        %v316 = vld [vmem:[%s274 + $0xe0] sm:$0xff]
        %v317 = vld [vmem:[%s274 + $0xe8] sm:$0xff]
        %v318 = vld [vmem:[%s274 + $0xf0] sm:$0xff]
        %v319 = vld [vmem:[%s274 + $0xf8] sm:$0xff]
        %v320 = vld [vmem:[%s278] sm:$0xff]
        %v321 = vld [vmem:[%s278 + $0x8] sm:$0xff]
        %v322 = vld [vmem:[%s278 + $0x10] sm:$0xff]
        %v323 = vld [vmem:[%s278 + $0x18] sm:$0xff]
        %v324 = vld [vmem:[%s278 + $0x20] sm:$0xff]
        %v325 = vld [vmem:[%s278 + $0x28] sm:$0xff]
        %v326 = vld [vmem:[%s278 + $0x30] sm:$0xff]
        %v327 = vld [vmem:[%s278 + $0x38] sm:$0xff]
        %v328 = vld [vmem:[%s281] sm:$0x1]
        %v330 = vlaneseq
        %v331 = vshrl.u32 %v330, 7
        %v332 = vsub.s32 0, %v331
        %v333 = vrot.slane %v328, %v332
        %vm335 = vcmask 523264
        %v337 = vsel %vm335, %v288, 0
        %v340 = vsel %vm335, %v289, 0
        %v343 = vsel %vm335, %v290, 0
        %v346 = vsel %vm335, %v291, 0
        %v349 = vsel %vm335, %v292, 0
        %v352 = vsel %vm335, %v293, 0
        %v355 = vsel %vm335, %v294, 0
        %v358 = vsel %vm335, %v295, 0
        %v361 = vsel %vm335, %v296, 0
        %v364 = vsel %vm335, %v297, 0
        %v367 = vsel %vm335, %v298, 0
        %v370 = vsel %vm335, %v299, 0
        %v373 = vsel %vm335, %v300, 0
        %v376 = vsel %vm335, %v301, 0
        %v379 = vsel %vm335, %v302, 0
        %v382 = vsel %vm335, %v303, 0
        %v385 = vsel %vm335, %v304, 0
        %v388 = vsel %vm335, %v305, 0
        %v391 = vsel %vm335, %v306, 0
        %v394 = vsel %vm335, %v307, 0
        %v397 = vsel %vm335, %v308, 0
        %v400 = vsel %vm335, %v309, 0
        %v403 = vsel %vm335, %v310, 0
        %v406 = vsel %vm335, %v311, 0
        %v409 = vsel %vm335, %v312, 0
        %v412 = vsel %vm335, %v313, 0
        %v415 = vsel %vm335, %v314, 0
        %v418 = vsel %vm335, %v315, 0
        %v421 = vsel %vm335, %v316, 0
        %v424 = vsel %vm335, %v317, 0
        %v427 = vsel %vm335, %v318, 0
        %v430 = vsel %vm335, %v319, 0
        %432 = vmatprep.subr.mxu0 0.0
        %433 = vmatpush1.msra.mxu0 0.0
        %434 = vmatprep.subr.mxu0 0.0
        %435 = vmatpush1.msra.mxu0 0.0
        %436 = vmatprep.subr.mxu0 0.0
        %437 = vmatpush1.msra.mxu0 0.0
        %438 = vmatprep.subr.mxu0 0.0
        %439 = vmatpush1.msra.mxu0 0.0
        %440 = vmatprep.subr.mxu0 0.0
        %441 = vmatpush1.msra.mxu0 0.0
        %442 = vmatprep.subr.mxu0 0.0
        %443 = vmatpush1.msra.mxu0 0.0
        %444 = vmatprep.subr.mxu0 0.0
        %445 = vmatpush1.msra.mxu0 0.0
        %446 = vmatprep.subr.mxu0 0.0
        %447 = vmatpush1.msra.mxu0 0.0
        %448 = vmatprep.subr.mxu0 0.0
        %449 = vmatpush1.msra.mxu0 %v327
        %450 = vmatprep.subr.mxu0 0.0
        %451 = vmatpush1.msra.mxu0 %v326
        %452 = vmatprep.subr.mxu0 0.0
        %453 = vmatpush1.msra.mxu0 %v325
        %454 = vmatprep.subr.mxu0 0.0
        %455 = vmatpush1.msra.mxu0 %v324
        %456 = vmatprep.subr.mxu0 0.0
        %457 = vmatpush1.msra.mxu0 %v323
        %458 = vmatprep.subr.mxu0 0.0
        %459 = vmatpush1.msra.mxu0 %v322
        %460 = vmatprep.subr.mxu0 0.0
        %461 = vmatpush1.msra.mxu0 %v321
        %462 = vmatprep.subr.mxu0 0.0
        %463 = vmatpush1.msra.mxu0 %v320
        %464 = vmatprep.subr.mxu0 0.0
        %465 = vmatpush2.msra.mxu0 0.0
        %466 = vmatprep.subr.mxu0 0.0
        %467 = vmatpush2.msra.mxu0 0.0
        %468 = vmatprep.subr.mxu0 0.0
        %469 = vmatpush2.msra.mxu0 0.0
        %470 = vmatprep.subr.mxu0 0.0
        %471 = vmatpush2.msra.mxu0 0.0
        %472 = vmatprep.subr.mxu0 0.0
        %473 = vmatpush2.msra.mxu0 0.0
        %474 = vmatprep.subr.mxu0 0.0
        %475 = vmatpush2.msra.mxu0 0.0
        %476 = vmatprep.subr.mxu0 0.0
        %477 = vmatpush2.msra.mxu0 0.0
        %478 = vmatprep.subr.mxu0 0.0
        %479 = vmatpush2.msra.mxu0 0.0
        %480 = vmatprep.subr.mxu0 0.0
        %481 = vmatpush2.msra.mxu0 0.0
        %482 = vmatprep.subr.mxu0 0.0
        %483 = vmatpush2.msra.mxu0 0.0
        %484 = vmatprep.subr.mxu0 0.0
        %485 = vmatpush2.msra.mxu0 0.0
        %486 = vmatprep.subr.mxu0 0.0
        %487 = vmatpush2.msra.mxu0 0.0
        %488 = vmatprep.subr.mxu0 0.0
        %489 = vmatpush2.msra.mxu0 0.0
        %490 = vmatprep.subr.mxu0 0.0
        %491 = vmatpush2.msra.mxu0 0.0
        %492 = vmatprep.subr.mxu0 0.0
        %493 = vmatpush2.msra.mxu0 0.0
        %494 = vmatprep.subr.mxu0 0.0
        %495 = vmatpush2.msra.mxu0 0.0
        %496 = vmatprep.mubr.f32.mxu0 0.0
        %497 = vmatmul.mubr.f32.gmra.mxu0 %v337
        %v498 = vpop.f32.mrf.mxu0
        %v499 = vadd.f32 %v333, %v498
        %v500 = vpop.f32.mrf.mxu0
        %501 = vmatprep.mubr.f32.mxu0 0.0
        %502 = vmatmul.mubr.f32.gmra.mxu0 %v340
        %v503 = vpop.f32.mrf.mxu0
        %v504 = vadd.f32 %v333, %v503
        %v505 = vpop.f32.mrf.mxu0
        %506 = vmatprep.mubr.f32.mxu0 0.0
        %507 = vmatmul.mubr.f32.gmra.mxu0 %v343
        %v508 = vpop.f32.mrf.mxu0
        %v509 = vadd.f32 %v333, %v508
        %v510 = vpop.f32.mrf.mxu0
        %511 = vmatprep.mubr.f32.mxu0 0.0
        %512 = vmatmul.mubr.f32.gmra.mxu0 %v346
        %v513 = vpop.f32.mrf.mxu0
        %v514 = vadd.f32 %v333, %v513
        %v515 = vpop.f32.mrf.mxu0
        %516 = vmatprep.mubr.f32.mxu0 0.0
        %517 = vmatmul.mubr.f32.gmra.mxu0 %v349
        %v518 = vpop.f32.mrf.mxu0
        %v519 = vadd.f32 %v333, %v518
        %v520 = vpop.f32.mrf.mxu0
        %521 = vmatprep.mubr.f32.mxu0 0.0
        %522 = vmatmul.mubr.f32.gmra.mxu0 %v352
        %v523 = vpop.f32.mrf.mxu0
        %v524 = vadd.f32 %v333, %v523
        %v525 = vpop.f32.mrf.mxu0
        %526 = vmatprep.mubr.f32.mxu0 0.0
        %527 = vmatmul.mubr.f32.gmra.mxu0 %v355
        %v528 = vpop.f32.mrf.mxu0
        %v529 = vadd.f32 %v333, %v528
        %v530 = vpop.f32.mrf.mxu0
        %531 = vmatprep.mubr.f32.mxu0 0.0
        %532 = vmatmul.mubr.f32.gmra.mxu0 %v358
        %v533 = vpop.f32.mrf.mxu0
        %v534 = vadd.f32 %v333, %v533
        %v535 = vpop.f32.mrf.mxu0
        %536 = vmatprep.mubr.f32.mxu0 0.0
        %537 = vmatmul.mubr.f32.gmra.mxu0 %v361
        %v538 = vpop.f32.mrf.mxu0
        %v539 = vadd.f32 %v333, %v538
        %v540 = vpop.f32.mrf.mxu0
        %541 = vmatprep.mubr.f32.mxu0 0.0
        %542 = vmatmul.mubr.f32.gmra.mxu0 %v364
        %v543 = vpop.f32.mrf.mxu0
        %v544 = vadd.f32 %v333, %v543
        %v545 = vpop.f32.mrf.mxu0
        %546 = vmatprep.mubr.f32.mxu0 0.0
        %547 = vmatmul.mubr.f32.gmra.mxu0 %v367
        %v548 = vpop.f32.mrf.mxu0
        %v549 = vadd.f32 %v333, %v548
        %v550 = vpop.f32.mrf.mxu0
        %551 = vmatprep.mubr.f32.mxu0 0.0
        %552 = vmatmul.mubr.f32.gmra.mxu0 %v370
        %v553 = vpop.f32.mrf.mxu0
        %v554 = vadd.f32 %v333, %v553
        %v555 = vpop.f32.mrf.mxu0
        %556 = vmatprep.mubr.f32.mxu0 0.0
        %557 = vmatmul.mubr.f32.gmra.mxu0 %v373
        %v558 = vpop.f32.mrf.mxu0
        %v559 = vadd.f32 %v333, %v558
        %v560 = vpop.f32.mrf.mxu0
        %561 = vmatprep.mubr.f32.mxu0 0.0
        %562 = vmatmul.mubr.f32.gmra.mxu0 %v376
        %v563 = vpop.f32.mrf.mxu0
        %v564 = vadd.f32 %v333, %v563
        %v565 = vpop.f32.mrf.mxu0
        %566 = vmatprep.mubr.f32.mxu0 0.0
        %567 = vmatmul.mubr.f32.gmra.mxu0 %v379
        %v568 = vpop.f32.mrf.mxu0
        %v569 = vadd.f32 %v333, %v568
        %v570 = vpop.f32.mrf.mxu0
        %571 = vmatprep.mubr.f32.mxu0 0.0
        %572 = vmatmul.mubr.f32.gmra.mxu0 %v382
        %v573 = vpop.f32.mrf.mxu0
        %v574 = vadd.f32 %v333, %v573
        %v575 = vpop.f32.mrf.mxu0
        %576 = vmatprep.mubr.f32.mxu0 0.0
        %577 = vmatmul.mubr.f32.gmra.mxu0 %v385
        %v578 = vpop.f32.mrf.mxu0
        %v579 = vadd.f32 %v333, %v578
        %v580 = vpop.f32.mrf.mxu0
        %581 = vmatprep.mubr.f32.mxu0 0.0
        %582 = vmatmul.mubr.f32.gmra.mxu0 %v388
        %v583 = vpop.f32.mrf.mxu0
        %v584 = vadd.f32 %v333, %v583
        %v585 = vpop.f32.mrf.mxu0
        %586 = vmatprep.mubr.f32.mxu0 0.0
        %587 = vmatmul.mubr.f32.gmra.mxu0 %v391
        %v588 = vpop.f32.mrf.mxu0
        %v589 = vadd.f32 %v333, %v588
        %v590 = vpop.f32.mrf.mxu0
        %591 = vmatprep.mubr.f32.mxu0 0.0
        %592 = vmatmul.mubr.f32.gmra.mxu0 %v394
        %v593 = vpop.f32.mrf.mxu0
        %v594 = vadd.f32 %v333, %v593
        %v595 = vpop.f32.mrf.mxu0
        %596 = vmatprep.mubr.f32.mxu0 0.0
        %597 = vmatmul.mubr.f32.gmra.mxu0 %v397
        %v598 = vpop.f32.mrf.mxu0
        %v599 = vadd.f32 %v333, %v598
        %v600 = vpop.f32.mrf.mxu0
        %601 = vmatprep.mubr.f32.mxu0 0.0
        %602 = vmatmul.mubr.f32.gmra.mxu0 %v400
        %v603 = vpop.f32.mrf.mxu0
        %v604 = vadd.f32 %v333, %v603
        %v605 = vpop.f32.mrf.mxu0
        %606 = vmatprep.mubr.f32.mxu0 0.0
        %607 = vmatmul.mubr.f32.gmra.mxu0 %v403
        %v608 = vpop.f32.mrf.mxu0
        %v609 = vadd.f32 %v333, %v608
        %v610 = vpop.f32.mrf.mxu0
        %611 = vmatprep.mubr.f32.mxu0 0.0
        %612 = vmatmul.mubr.f32.gmra.mxu0 %v406
        %v613 = vpop.f32.mrf.mxu0
        %v614 = vadd.f32 %v333, %v613
        %v615 = vpop.f32.mrf.mxu0
        %616 = vmatprep.mubr.f32.mxu0 0.0
        %617 = vmatmul.mubr.f32.gmra.mxu0 %v409
        %v618 = vpop.f32.mrf.mxu0
        %v619 = vadd.f32 %v333, %v618
        %v620 = vpop.f32.mrf.mxu0
        %621 = vmatprep.mubr.f32.mxu0 0.0
        %622 = vmatmul.mubr.f32.gmra.mxu0 %v412
        %v623 = vpop.f32.mrf.mxu0
        %v624 = vadd.f32 %v333, %v623
        %v625 = vpop.f32.mrf.mxu0
        %626 = vmatprep.mubr.f32.mxu0 0.0
        %627 = vmatmul.mubr.f32.gmra.mxu0 %v415
        %v628 = vpop.f32.mrf.mxu0
        %v629 = vadd.f32 %v333, %v628
        %v630 = vpop.f32.mrf.mxu0
        %631 = vmatprep.mubr.f32.mxu0 0.0
        %632 = vmatmul.mubr.f32.gmra.mxu0 %v418
        %v633 = vpop.f32.mrf.mxu0
        %v634 = vadd.f32 %v333, %v633
        %v635 = vpop.f32.mrf.mxu0
        %636 = vmatprep.mubr.f32.mxu0 0.0
        %637 = vmatmul.mubr.f32.gmra.mxu0 %v421
        %v638 = vpop.f32.mrf.mxu0
        %v639 = vadd.f32 %v333, %v638
        %v640 = vpop.f32.mrf.mxu0
        %641 = vmatprep.mubr.f32.mxu0 0.0
        %642 = vmatmul.mubr.f32.gmra.mxu0 %v424
        %v643 = vpop.f32.mrf.mxu0
        %v644 = vadd.f32 %v333, %v643
        %v645 = vpop.f32.mrf.mxu0
        %646 = vmatprep.mubr.f32.mxu0 0.0
        %647 = vmatmul.mubr.f32.gmra.mxu0 %v427
        %v648 = vpop.f32.mrf.mxu0
        %v649 = vadd.f32 %v333, %v648
        %v650 = vpop.f32.mrf.mxu0
        %651 = vmatprep.mubr.f32.mxu0 0.0
        %652 = vmatmul.mubr.f32.gmra.mxu0 %v430
        %v653 = vpop.f32.mrf.mxu0
        %v654 = vadd.f32 %v333, %v653
        %v655 = vpop.f32.mrf.mxu0
        %656 = vdwg.mxu0
        %v657 = vxor.u32 %v499, 2147483648
        %v658 = vxor.u32 %v504, 2147483648
        %v659 = vxor.u32 %v509, 2147483648
        %v660 = vxor.u32 %v514, 2147483648
        %v661 = vxor.u32 %v519, 2147483648
        %v662 = vxor.u32 %v524, 2147483648
        %v663 = vxor.u32 %v529, 2147483648
        %v664 = vxor.u32 %v534, 2147483648
        %v665 = vxor.u32 %v539, 2147483648
        %v666 = vxor.u32 %v544, 2147483648
        %v667 = vxor.u32 %v549, 2147483648
        %v668 = vxor.u32 %v554, 2147483648
        %v669 = vxor.u32 %v559, 2147483648
        %v670 = vxor.u32 %v564, 2147483648
        %v671 = vxor.u32 %v569, 2147483648
        %v672 = vxor.u32 %v574, 2147483648
        %v673 = vxor.u32 %v579, 2147483648
        %v674 = vxor.u32 %v584, 2147483648
        %v675 = vxor.u32 %v589, 2147483648
        %v676 = vxor.u32 %v594, 2147483648
        %v677 = vxor.u32 %v599, 2147483648
        %v678 = vxor.u32 %v604, 2147483648
        %v679 = vxor.u32 %v609, 2147483648
        %v680 = vxor.u32 %v614, 2147483648
        %v681 = vxor.u32 %v619, 2147483648
        %v682 = vxor.u32 %v624, 2147483648
        %v683 = vxor.u32 %v629, 2147483648
        %v684 = vxor.u32 %v634, 2147483648
        %v685 = vxor.u32 %v639, 2147483648
        %v686 = vxor.u32 %v644, 2147483648
        %v687 = vxor.u32 %v649, 2147483648
        %v688 = vxor.u32 %v654, 2147483648
        %v689 = vmul.f32 %v657, 1.442695
        %v690 = vpow.pop %v689
        %v691 = vmul.f32 %v658, 1.442695
        %v692 = vpow.pop %v691
        %v693 = vmul.f32 %v659, 1.442695
        %v694 = vpow.pop %v693
        %v695 = vmul.f32 %v660, 1.442695
        %v696 = vpow.pop %v695
        %v697 = vmul.f32 %v661, 1.442695
        %v698 = vpow.pop %v697
        %v699 = vmul.f32 %v662, 1.442695
        %v700 = vpow.pop %v699
        %v701 = vmul.f32 %v663, 1.442695
        %v702 = vpow.pop %v701
        %v703 = vmul.f32 %v664, 1.442695
        %v704 = vpow.pop %v703
        %v705 = vmul.f32 %v665, 1.442695
        %v706 = vpow.pop %v705
        %v707 = vmul.f32 %v666, 1.442695
        %v708 = vpow.pop %v707
        %v709 = vmul.f32 %v667, 1.442695
        %v710 = vpow.pop %v709
        %v711 = vmul.f32 %v668, 1.442695
        %v712 = vpow.pop %v711
        %v713 = vmul.f32 %v669, 1.442695
        %v714 = vpow.pop %v713
        %v715 = vmul.f32 %v670, 1.442695
        %v716 = vpow.pop %v715
        %v717 = vmul.f32 %v671, 1.442695
        %v718 = vpow.pop %v717
        %v719 = vmul.f32 %v672, 1.442695
        %v720 = vpow.pop %v719
        %v721 = vmul.f32 %v673, 1.442695
        %v722 = vpow.pop %v721
        %v723 = vmul.f32 %v674, 1.442695
        %v724 = vpow.pop %v723
        %v725 = vmul.f32 %v675, 1.442695
        %v726 = vpow.pop %v725
        %v727 = vmul.f32 %v676, 1.442695
        %v728 = vpow.pop %v727
        %v729 = vmul.f32 %v677, 1.442695
        %v730 = vpow.pop %v729
        %v731 = vmul.f32 %v678, 1.442695
        %v732 = vpow.pop %v731
        %v733 = vmul.f32 %v679, 1.442695
        %v734 = vpow.pop %v733
        %v735 = vmul.f32 %v680, 1.442695
        %v736 = vpow.pop %v735
        %v737 = vmul.f32 %v681, 1.442695
        %v738 = vpow.pop %v737
        %v739 = vmul.f32 %v682, 1.442695
        %v740 = vpow.pop %v739
        %v741 = vmul.f32 %v683, 1.442695
        %v742 = vpow.pop %v741
        %v743 = vmul.f32 %v684, 1.442695
        %v744 = vpow.pop %v743
        %v745 = vmul.f32 %v685, 1.442695
        %v746 = vpow.pop %v745
        %v747 = vmul.f32 %v686, 1.442695
        %v748 = vpow.pop %v747
        %v749 = vmul.f32 %v687, 1.442695
        %v750 = vpow.pop %v749
        %v751 = vmul.f32 %v688, 1.442695
        %v752 = vpow.pop %v751
        %v753 = vadd.f32 %v690, 1.0
        %v754 = vadd.f32 %v692, 1.0
        %v755 = vadd.f32 %v694, 1.0
        %v756 = vadd.f32 %v696, 1.0
        %v757 = vadd.f32 %v698, 1.0
        %v758 = vadd.f32 %v700, 1.0
        %v759 = vadd.f32 %v702, 1.0
        %v760 = vadd.f32 %v704, 1.0
        %v761 = vadd.f32 %v706, 1.0
        %v762 = vadd.f32 %v708, 1.0
        %v763 = vadd.f32 %v710, 1.0
        %v764 = vadd.f32 %v712, 1.0
        %v765 = vadd.f32 %v714, 1.0
        %v766 = vadd.f32 %v716, 1.0
        %v767 = vadd.f32 %v718, 1.0
        %v768 = vadd.f32 %v720, 1.0
        %v769 = vadd.f32 %v722, 1.0
        %v770 = vadd.f32 %v724, 1.0
        %v771 = vadd.f32 %v726, 1.0
        %v772 = vadd.f32 %v728, 1.0
        %v773 = vadd.f32 %v730, 1.0
        %v774 = vadd.f32 %v732, 1.0
        %v775 = vadd.f32 %v734, 1.0
        %v776 = vadd.f32 %v736, 1.0
        %v777 = vadd.f32 %v738, 1.0
        %v778 = vadd.f32 %v740, 1.0
        %v779 = vadd.f32 %v742, 1.0
        %v780 = vadd.f32 %v744, 1.0
        %v781 = vadd.f32 %v746, 1.0
        %v782 = vadd.f32 %v748, 1.0
        %v783 = vadd.f32 %v750, 1.0
        %v784 = vadd.f32 %v752, 1.0
        %v785 = vrcp.pop %v753
        %v786 = vmul.f32 1.0, %v785
        %v787 = vrcp.pop %v754
        %v788 = vmul.f32 1.0, %v787
        %v789 = vrcp.pop %v755
        %v790 = vmul.f32 1.0, %v789
        %v791 = vrcp.pop %v756
        %v792 = vmul.f32 1.0, %v791
        %v793 = vrcp.pop %v757
        %v794 = vmul.f32 1.0, %v793
        %v795 = vrcp.pop %v758
        %v796 = vmul.f32 1.0, %v795
        %v797 = vrcp.pop %v759
        %v798 = vmul.f32 1.0, %v797
        %v799 = vrcp.pop %v760
        %v800 = vmul.f32 1.0, %v799
        %v801 = vrcp.pop %v761
        %v802 = vmul.f32 1.0, %v801
        %v803 = vrcp.pop %v762
        %v804 = vmul.f32 1.0, %v803
        %v805 = vrcp.pop %v763
        %v806 = vmul.f32 1.0, %v805
        %v807 = vrcp.pop %v764
        %v808 = vmul.f32 1.0, %v807
        %v809 = vrcp.pop %v765
        %v810 = vmul.f32 1.0, %v809
        %v811 = vrcp.pop %v766
        %v812 = vmul.f32 1.0, %v811
        %v813 = vrcp.pop %v767
        %v814 = vmul.f32 1.0, %v813
        %v815 = vrcp.pop %v768
        %v816 = vmul.f32 1.0, %v815
        %v817 = vrcp.pop %v769
        %v818 = vmul.f32 1.0, %v817
        %v819 = vrcp.pop %v770
        %v820 = vmul.f32 1.0, %v819
        %v821 = vrcp.pop %v771
        %v822 = vmul.f32 1.0, %v821
        %v823 = vrcp.pop %v772
        %v824 = vmul.f32 1.0, %v823
        %v825 = vrcp.pop %v773
        %v826 = vmul.f32 1.0, %v825
        %v827 = vrcp.pop %v774
        %v828 = vmul.f32 1.0, %v827
        %v829 = vrcp.pop %v775
        %v830 = vmul.f32 1.0, %v829
        %v831 = vrcp.pop %v776
        %v832 = vmul.f32 1.0, %v831
        %v833 = vrcp.pop %v777
        %v834 = vmul.f32 1.0, %v833
        %v835 = vrcp.pop %v778
        %v836 = vmul.f32 1.0, %v835
        %v837 = vrcp.pop %v779
        %v838 = vmul.f32 1.0, %v837
        %v839 = vrcp.pop %v780
        %v840 = vmul.f32 1.0, %v839
        %v841 = vrcp.pop %v781
        %v842 = vmul.f32 1.0, %v841
        %v843 = vrcp.pop %v782
        %v844 = vmul.f32 1.0, %v843
        %v845 = vrcp.pop %v783
        %v846 = vmul.f32 1.0, %v845
        %v847 = vrcp.pop %v784
        %v848 = vmul.f32 1.0, %v847
        %v849 = vmul.f32 %v499, %v786
        %v850 = vmul.f32 %v504, %v788
        %v851 = vmul.f32 %v509, %v790
        %v852 = vmul.f32 %v514, %v792
        %v853 = vmul.f32 %v519, %v794
        %v854 = vmul.f32 %v524, %v796
        %v855 = vmul.f32 %v529, %v798
        %v856 = vmul.f32 %v534, %v800
        %v857 = vmul.f32 %v539, %v802
        %v858 = vmul.f32 %v544, %v804
        %v859 = vmul.f32 %v549, %v806
        %v860 = vmul.f32 %v554, %v808
        %v861 = vmul.f32 %v559, %v810
        %v862 = vmul.f32 %v564, %v812
        %v863 = vmul.f32 %v569, %v814
        %v864 = vmul.f32 %v574, %v816
        %v865 = vmul.f32 %v579, %v818
        %v866 = vmul.f32 %v584, %v820
        %v867 = vmul.f32 %v589, %v822
        %v868 = vmul.f32 %v594, %v824
        %v869 = vmul.f32 %v599, %v826
        %v870 = vmul.f32 %v604, %v828
        %v871 = vmul.f32 %v609, %v830
        %v872 = vmul.f32 %v614, %v832
        %v873 = vmul.f32 %v619, %v834
        %v874 = vmul.f32 %v624, %v836
        %v875 = vmul.f32 %v629, %v838
        %v876 = vmul.f32 %v634, %v840
        %v877 = vmul.f32 %v639, %v842
        %v878 = vmul.f32 %v644, %v844
        %v879 = vmul.f32 %v649, %v846
        %v880 = vmul.f32 %v654, %v848
        %881 = vst [vmem:[#allocation2] sm:$0x3] -inf
        %882 = vst [vmem:[#allocation2 + $0x18] sm:$0x3] -inf
        %883 = vst [vmem:[#allocation2 + $0x30] sm:$0x3] -inf
        %884 = vst [vmem:[#allocation2 + $0x48] sm:$0x3] -inf
        %885 = vst [vmem:[#allocation2 + $0x60] sm:$0x3] -inf
        %886 = vst [vmem:[#allocation2 + $0x78] sm:$0x3] -inf
        %887 = vst [vmem:[#allocation2 + $0x90] sm:$0x3] -inf
        %888 = vst [vmem:[#allocation2 + $0xa8] sm:$0x3] -inf
        %889 = vst [vmem:[#allocation2 + $0xc0] sm:$0x3] -inf
        %890 = vst [vmem:[#allocation2 + $0xd8] sm:$0x3] -inf
        %891 = vst [vmem:[#allocation2 + $0xf0] sm:$0x3] -inf
        %892 = vst [vmem:[#allocation2 + $0x108] sm:$0x3] -inf
        %893 = vst [vmem:[#allocation2 + $0x120] sm:$0x3] -inf
        %894 = vst [vmem:[#allocation2 + $0x138] sm:$0x3] -inf
        %895 = vst [vmem:[#allocation2 + $0x150] sm:$0x3] -inf
        %896 = vst [vmem:[#allocation2 + $0x168] sm:$0x3] -inf
        %897 = vst [vmem:[#allocation2 + $0x12] sm:$0x3] -inf
        %898 = vst [vmem:[#allocation2 + $0x2a] sm:$0x3] -inf
        %899 = vst [vmem:[#allocation2 + $0x42] sm:$0x3] -inf
        %900 = vst [vmem:[#allocation2 + $0x5a] sm:$0x3] -inf
        %901 = vst [vmem:[#allocation2 + $0x72] sm:$0x3] -inf
        %902 = vst [vmem:[#allocation2 + $0x8a] sm:$0x3] -inf
        %903 = vst [vmem:[#allocation2 + $0xa2] sm:$0x3] -inf
        %904 = vst [vmem:[#allocation2 + $0xba] sm:$0x3] -inf
        %905 = vst [vmem:[#allocation2 + $0xd2] sm:$0x3] -inf
        %906 = vst [vmem:[#allocation2 + $0xea] sm:$0x3] -inf
        %907 = vst [vmem:[#allocation2 + $0x102] sm:$0x3] -inf
        %908 = vst [vmem:[#allocation2 + $0x11a] sm:$0x3] -inf
        %909 = vst [vmem:[#allocation2 + $0x132] sm:$0x3] -inf
        %910 = vst [vmem:[#allocation2 + $0x14a] sm:$0x3] -inf
        %911 = vst [vmem:[#allocation2 + $0x162] sm:$0x3] -inf
        %912 = vst [vmem:[#allocation2 + $0x17a] sm:$0x3] -inf
        %913 = vst [vmem:[#allocation3] sm:$0xff] -inf
        %914 = vst [vmem:[#allocation3 + $0x8] sm:$0xff] -inf
        %915 = vst [vmem:[#allocation3 + $0x10] sm:$0xff] -inf
        %916 = vst [vmem:[#allocation3 + $0x18] sm:$0xff] -inf
        %s917 = scalar_lea.vmem [#allocation3], 288
        %918 = vst [vmem:[%s917] sm:$0xff] -inf
        %919 = vst [vmem:[%s917 + $0x8] sm:$0xff] -inf
        %920 = vst [vmem:[%s917 + $0x10] sm:$0xff] -inf
        %921 = vst [vmem:[%s917 + $0x18] sm:$0xff] -inf
        %922 = vst [vmem:[#allocation2 + $0x2] sm:$0xff] %v849
        %923 = vst [vmem:[#allocation2 + $0xa] sm:$0xff] %v850
        %924 = vst [vmem:[#allocation2 + $0x1a] sm:$0xff] %v851
        %925 = vst [vmem:[#allocation2 + $0x22] sm:$0xff] %v852
        %926 = vst [vmem:[#allocation2 + $0x32] sm:$0xff] %v853
        %927 = vst [vmem:[#allocation2 + $0x3a] sm:$0xff] %v854
        %928 = vst [vmem:[#allocation2 + $0x4a] sm:$0xff] %v855
        %929 = vst [vmem:[#allocation2 + $0x52] sm:$0xff] %v856
        %930 = vst [vmem:[#allocation2 + $0x62] sm:$0xff] %v857
        %931 = vst [vmem:[#allocation2 + $0x6a] sm:$0xff] %v858
        %932 = vst [vmem:[#allocation2 + $0x7a] sm:$0xff] %v859
        %933 = vst [vmem:[#allocation2 + $0x82] sm:$0xff] %v860
        %934 = vst [vmem:[#allocation2 + $0x92] sm:$0xff] %v861
        %935 = vst [vmem:[#allocation2 + $0x9a] sm:$0xff] %v862
        %936 = vst [vmem:[#allocation2 + $0xaa] sm:$0xff] %v863
        %937 = vst [vmem:[#allocation2 + $0xb2] sm:$0xff] %v864
        %938 = vst [vmem:[#allocation2 + $0xc2] sm:$0xff] %v865
        %939 = vst [vmem:[#allocation2 + $0xca] sm:$0xff] %v866
        %940 = vst [vmem:[#allocation2 + $0xda] sm:$0xff] %v867
        %941 = vst [vmem:[#allocation2 + $0xe2] sm:$0xff] %v868
        %942 = vst [vmem:[#allocation2 + $0xf2] sm:$0xff] %v869
        %943 = vst [vmem:[#allocation2 + $0xfa] sm:$0xff] %v870
        %944 = vst [vmem:[#allocation2 + $0x10a] sm:$0xff] %v871
        %945 = vst [vmem:[#allocation2 + $0x112] sm:$0xff] %v872
        %946 = vst [vmem:[#allocation2 + $0x122] sm:$0xff] %v873
        %947 = vst [vmem:[#allocation2 + $0x12a] sm:$0xff] %v874
        %948 = vst [vmem:[#allocation2 + $0x13a] sm:$0xff] %v875
        %949 = vst [vmem:[#allocation2 + $0x142] sm:$0xff] %v876
        %950 = vst [vmem:[#allocation2 + $0x152] sm:$0xff] %v877
        %951 = vst [vmem:[#allocation2 + $0x15a] sm:$0xff] %v878
        %952 = vst [vmem:[#allocation2 + $0x16a] sm:$0xff] %v879
        %953 = vst [vmem:[#allocation2 + $0x172] sm:$0xff] %v880
        %v954 = vld [vmem:[#allocation2] sm:$0xff]
        %v955 = vld [vmem:[#allocation2 + $0x8] sm:$0xff]
        %v956 = vld [vmem:[#allocation2 + $0x18] sm:$0xff]
        %v957 = vld [vmem:[#allocation2 + $0x20] sm:$0xff]
        %v958 = vld [vmem:[#allocation2 + $0x30] sm:$0xff]
        %v959 = vld [vmem:[#allocation2 + $0x38] sm:$0xff]
        %v960 = vld [vmem:[#allocation2 + $0x48] sm:$0xff]
        %v961 = vld [vmem:[#allocation2 + $0x50] sm:$0xff]
        %v962 = vld [vmem:[#allocation2 + $0x60] sm:$0xff]
        %v963 = vld [vmem:[#allocation2 + $0x68] sm:$0xff]
        %v964 = vld [vmem:[#allocation2 + $0x78] sm:$0xff]
        %v965 = vld [vmem:[#allocation2 + $0x80] sm:$0xff]
        %v966 = vld [vmem:[#allocation2 + $0x90] sm:$0xff]
        %v967 = vld [vmem:[#allocation2 + $0x98] sm:$0xff]
        %v968 = vld [vmem:[#allocation2 + $0xa8] sm:$0xff]
        %v969 = vld [vmem:[#allocation2 + $0xb0] sm:$0xff]
        %v970 = vld [vmem:[#allocation2 + $0xc0] sm:$0xff]
        %v971 = vld [vmem:[#allocation2 + $0xc8] sm:$0xff]
        %v972 = vld [vmem:[#allocation2 + $0xd8] sm:$0xff]
        %v973 = vld [vmem:[#allocation2 + $0xe0] sm:$0xff]
        %v974 = vld [vmem:[#allocation2 + $0xf0] sm:$0xff]
        %v975 = vld [vmem:[#allocation2 + $0xf8] sm:$0xff]
        %v976 = vld [vmem:[#allocation2 + $0x108] sm:$0xff]
        %v977 = vld [vmem:[#allocation2 + $0x110] sm:$0xff]
        %v978 = vld [vmem:[#allocation2 + $0x120] sm:$0xff]
        %v979 = vld [vmem:[#allocation2 + $0x128] sm:$0xff]
        %v980 = vld [vmem:[#allocation2 + $0x138] sm:$0xff]
        %v981 = vld [vmem:[#allocation2 + $0x140] sm:$0xff]
        %v982 = vld [vmem:[#allocation2 + $0x150] sm:$0xff]
        %v983 = vld [vmem:[#allocation2 + $0x158] sm:$0xff]
        %v984 = vld [vmem:[#allocation2 + $0x168] sm:$0xff]
        %v985 = vld [vmem:[#allocation2 + $0x170] sm:$0xff]
        %v986 = vld [vmem:[#allocation2 + $0x1] sm:$0xff]
        %v987 = vld [vmem:[#allocation2 + $0x9] sm:$0xff]
        %v988 = vld [vmem:[#allocation2 + $0x19] sm:$0xff]
        %v989 = vld [vmem:[#allocation2 + $0x21] sm:$0xff]
        %v990 = vld [vmem:[#allocation2 + $0x31] sm:$0xff]
        %v991 = vld [vmem:[#allocation2 + $0x39] sm:$0xff]
        %v992 = vld [vmem:[#allocation2 + $0x49] sm:$0xff]
        %v993 = vld [vmem:[#allocation2 + $0x51] sm:$0xff]
        %v994 = vld [vmem:[#allocation2 + $0x61] sm:$0xff]
        %v995 = vld [vmem:[#allocation2 + $0x69] sm:$0xff]
        %v996 = vld [vmem:[#allocation2 + $0x79] sm:$0xff]
        %v997 = vld [vmem:[#allocation2 + $0x81] sm:$0xff]
        %v998 = vld [vmem:[#allocation2 + $0x91] sm:$0xff]
        %v999 = vld [vmem:[#allocation2 + $0x99] sm:$0xff]
        %v1000 = vld [vmem:[#allocation2 + $0xa9] sm:$0xff]
        %v1001 = vld [vmem:[#allocation2 + $0xb1] sm:$0xff]
        %v1002 = vld [vmem:[#allocation2 + $0xc1] sm:$0xff]
        %v1003 = vld [vmem:[#allocation2 + $0xc9] sm:$0xff]
        %v1004 = vld [vmem:[#allocation2 + $0xd9] sm:$0xff]
        %v1005 = vld [vmem:[#allocation2 + $0xe1] sm:$0xff]
        %v1006 = vld [vmem:[#allocation2 + $0xf1] sm:$0xff]
        %v1007 = vld [vmem:[#allocation2 + $0xf9] sm:$0xff]
        %v1008 = vld [vmem:[#allocation2 + $0x109] sm:$0xff]
        %v1009 = vld [vmem:[#allocation2 + $0x111] sm:$0xff]
        %v1010 = vld [vmem:[#allocation2 + $0x121] sm:$0xff]
        %v1011 = vld [vmem:[#allocation2 + $0x129] sm:$0xff]
        %v1012 = vld [vmem:[#allocation2 + $0x139] sm:$0xff]
        %v1013 = vld [vmem:[#allocation2 + $0x141] sm:$0xff]
        %v1014 = vld [vmem:[#allocation2 + $0x151] sm:$0xff]
        %v1015 = vld [vmem:[#allocation2 + $0x159] sm:$0xff]
        %v1016 = vld [vmem:[#allocation2 + $0x169] sm:$0xff]
        %v1017 = vld [vmem:[#allocation2 + $0x171] sm:$0xff]
        %v1018 = vmax.f32 %v954, %v986
        %v1019 = vmax.f32 %v955, %v987
        %v1020 = vmax.f32 %v956, %v988
        %v1021 = vmax.f32 %v957, %v989
        %v1022 = vmax.f32 %v958, %v990
        %v1023 = vmax.f32 %v959, %v991
        %v1024 = vmax.f32 %v960, %v992
        %v1025 = vmax.f32 %v961, %v993
        %v1026 = vmax.f32 %v962, %v994
        %v1027 = vmax.f32 %v963, %v995
        %v1028 = vmax.f32 %v964, %v996
        %v1029 = vmax.f32 %v965, %v997
        %v1030 = vmax.f32 %v966, %v998
        %v1031 = vmax.f32 %v967, %v999
        %v1032 = vmax.f32 %v968, %v1000
        %v1033 = vmax.f32 %v969, %v1001
        %v1034 = vmax.f32 %v970, %v1002
        %v1035 = vmax.f32 %v971, %v1003
        %v1036 = vmax.f32 %v972, %v1004
        %v1037 = vmax.f32 %v973, %v1005
        %v1038 = vmax.f32 %v974, %v1006
        %v1039 = vmax.f32 %v975, %v1007
        %v1040 = vmax.f32 %v976, %v1008
        %v1041 = vmax.f32 %v977, %v1009
        %v1042 = vmax.f32 %v978, %v1010
        %v1043 = vmax.f32 %v979, %v1011
        %v1044 = vmax.f32 %v980, %v1012
        %v1045 = vmax.f32 %v981, %v1013
        %v1046 = vmax.f32 %v982, %v1014
        %v1047 = vmax.f32 %v983, %v1015
        %v1048 = vmax.f32 %v984, %v1016
        %v1049 = vmax.f32 %v985, %v1017
        %v1050 = vld [vmem:[#allocation2 + $0x2] sm:$0xff]
        %v1051 = vld [vmem:[#allocation2 + $0xa] sm:$0xff]
        %v1052 = vld [vmem:[#allocation2 + $0x1a] sm:$0xff]
        %v1053 = vld [vmem:[#allocation2 + $0x22] sm:$0xff]
        %v1054 = vld [vmem:[#allocation2 + $0x32] sm:$0xff]
        %v1055 = vld [vmem:[#allocation2 + $0x3a] sm:$0xff]
        %v1056 = vld [vmem:[#allocation2 + $0x4a] sm:$0xff]
        %v1057 = vld [vmem:[#allocation2 + $0x52] sm:$0xff]
        %v1058 = vld [vmem:[#allocation2 + $0x62] sm:$0xff]
        %v1059 = vld [vmem:[#allocation2 + $0x6a] sm:$0xff]
        %v1060 = vld [vmem:[#allocation2 + $0x7a] sm:$0xff]
        %v1061 = vld [vmem:[#allocation2 + $0x82] sm:$0xff]
        %v1062 = vld [vmem:[#allocation2 + $0x92] sm:$0xff]
        %v1063 = vld [vmem:[#allocation2 + $0x9a] sm:$0xff]
        %v1064 = vld [vmem:[#allocation2 + $0xaa] sm:$0xff]
        %v1065 = vld [vmem:[#allocation2 + $0xb2] sm:$0xff]
        %v1066 = vld [vmem:[#allocation2 + $0xc2] sm:$0xff]
        %v1067 = vld [vmem:[#allocation2 + $0xca] sm:$0xff]
        %v1068 = vld [vmem:[#allocation2 + $0xda] sm:$0xff]
        %v1069 = vld [vmem:[#allocation2 + $0xe2] sm:$0xff]
        %v1070 = vld [vmem:[#allocation2 + $0xf2] sm:$0xff]
        %v1071 = vld [vmem:[#allocation2 + $0xfa] sm:$0xff]
        %v1072 = vld [vmem:[#allocation2 + $0x10a] sm:$0xff]
        %v1073 = vld [vmem:[#allocation2 + $0x112] sm:$0xff]
        %v1074 = vld [vmem:[#allocation2 + $0x122] sm:$0xff]
        %v1075 = vld [vmem:[#allocation2 + $0x12a] sm:$0xff]
        %v1076 = vld [vmem:[#allocation2 + $0x13a] sm:$0xff]
        %v1077 = vld [vmem:[#allocation2 + $0x142] sm:$0xff]
        %v1078 = vld [vmem:[#allocation2 + $0x152] sm:$0xff]
        %v1079 = vld [vmem:[#allocation2 + $0x15a] sm:$0xff]
        %v1080 = vld [vmem:[#allocation2 + $0x16a] sm:$0xff]
        %v1081 = vld [vmem:[#allocation2 + $0x172] sm:$0xff]
        %v1082 = vmax.f32 %v1018, %v1050
        %v1083 = vmax.f32 %v1019, %v1051
        %v1084 = vmax.f32 %v1020, %v1052
        %v1085 = vmax.f32 %v1021, %v1053
        %v1086 = vmax.f32 %v1022, %v1054
        %v1087 = vmax.f32 %v1023, %v1055
        %v1088 = vmax.f32 %v1024, %v1056
        %v1089 = vmax.f32 %v1025, %v1057
        %v1090 = vmax.f32 %v1026, %v1058
        %v1091 = vmax.f32 %v1027, %v1059
        %v1092 = vmax.f32 %v1028, %v1060
        %v1093 = vmax.f32 %v1029, %v1061
        %v1094 = vmax.f32 %v1030, %v1062
        %v1095 = vmax.f32 %v1031, %v1063
        %v1096 = vmax.f32 %v1032, %v1064
        %v1097 = vmax.f32 %v1033, %v1065
        %v1098 = vmax.f32 %v1034, %v1066
        %v1099 = vmax.f32 %v1035, %v1067
        %v1100 = vmax.f32 %v1036, %v1068
        %v1101 = vmax.f32 %v1037, %v1069
        %v1102 = vmax.f32 %v1038, %v1070
        %v1103 = vmax.f32 %v1039, %v1071
        %v1104 = vmax.f32 %v1040, %v1072
        %v1105 = vmax.f32 %v1041, %v1073
        %v1106 = vmax.f32 %v1042, %v1074
        %v1107 = vmax.f32 %v1043, %v1075
        %v1108 = vmax.f32 %v1044, %v1076
        %v1109 = vmax.f32 %v1045, %v1077
        %v1110 = vmax.f32 %v1046, %v1078
        %v1111 = vmax.f32 %v1047, %v1079
        %v1112 = vmax.f32 %v1048, %v1080
        %v1113 = vmax.f32 %v1049, %v1081
        %v1114 = vld [vmem:[#allocation2 + $0x3] sm:$0xff]
        %v1115 = vld [vmem:[#allocation2 + $0xb] sm:$0xff]
        %v1116 = vld [vmem:[#allocation2 + $0x1b] sm:$0xff]
        %v1117 = vld [vmem:[#allocation2 + $0x23] sm:$0xff]
        %v1118 = vld [vmem:[#allocation2 + $0x33] sm:$0xff]
        %v1119 = vld [vmem:[#allocation2 + $0x3b] sm:$0xff]
        %v1120 = vld [vmem:[#allocation2 + $0x4b] sm:$0xff]
        %v1121 = vld [vmem:[#allocation2 + $0x53] sm:$0xff]
        %v1122 = vld [vmem:[#allocation2 + $0x63] sm:$0xff]
        %v1123 = vld [vmem:[#allocation2 + $0x6b] sm:$0xff]
        %v1124 = vld [vmem:[#allocation2 + $0x7b] sm:$0xff]
        %v1125 = vld [vmem:[#allocation2 + $0x83] sm:$0xff]
        %v1126 = vld [vmem:[#allocation2 + $0x93] sm:$0xff]
        %v1127 = vld [vmem:[#allocation2 + $0x9b] sm:$0xff]
        %v1128 = vld [vmem:[#allocation2 + $0xab] sm:$0xff]
        %v1129 = vld [vmem:[#allocation2 + $0xb3] sm:$0xff]
        %v1130 = vld [vmem:[#allocation2 + $0xc3] sm:$0xff]
        %v1131 = vld [vmem:[#allocation2 + $0xcb] sm:$0xff]
        %v1132 = vld [vmem:[#allocation2 + $0xdb] sm:$0xff]
        %v1133 = vld [vmem:[#allocation2 + $0xe3] sm:$0xff]
        %v1134 = vld [vmem:[#allocation2 + $0xf3] sm:$0xff]
        %v1135 = vld [vmem:[#allocation2 + $0xfb] sm:$0xff]
        %v1136 = vld [vmem:[#allocation2 + $0x10b] sm:$0xff]
        %v1137 = vld [vmem:[#allocation2 + $0x113] sm:$0xff]
        %v1138 = vld [vmem:[#allocation2 + $0x123] sm:$0xff]
        %v1139 = vld [vmem:[#allocation2 + $0x12b] sm:$0xff]
        %v1140 = vld [vmem:[#allocation2 + $0x13b] sm:$0xff]
        %v1141 = vld [vmem:[#allocation2 + $0x143] sm:$0xff]
        %v1142 = vld [vmem:[#allocation2 + $0x153] sm:$0xff]
        %v1143 = vld [vmem:[#allocation2 + $0x15b] sm:$0xff]
        %v1144 = vld [vmem:[#allocation2 + $0x16b] sm:$0xff]
        %v1145 = vld [vmem:[#allocation2 + $0x173] sm:$0xff]
        %v1146 = vmax.f32 %v1082, %v1114
        %v1147 = vmax.f32 %v1083, %v1115
        %v1148 = vmax.f32 %v1084, %v1116
        %v1149 = vmax.f32 %v1085, %v1117
        %v1150 = vmax.f32 %v1086, %v1118
        %v1151 = vmax.f32 %v1087, %v1119
        %v1152 = vmax.f32 %v1088, %v1120
        %v1153 = vmax.f32 %v1089, %v1121
        %v1154 = vmax.f32 %v1090, %v1122
        %v1155 = vmax.f32 %v1091, %v1123
        %v1156 = vmax.f32 %v1092, %v1124
        %v1157 = vmax.f32 %v1093, %v1125
        %v1158 = vmax.f32 %v1094, %v1126
        %v1159 = vmax.f32 %v1095, %v1127
        %v1160 = vmax.f32 %v1096, %v1128
        %v1161 = vmax.f32 %v1097, %v1129
        %v1162 = vmax.f32 %v1098, %v1130
        %v1163 = vmax.f32 %v1099, %v1131
        %v1164 = vmax.f32 %v1100, %v1132
        %v1165 = vmax.f32 %v1101, %v1133
        %v1166 = vmax.f32 %v1102, %v1134
        %v1167 = vmax.f32 %v1103, %v1135
        %v1168 = vmax.f32 %v1104, %v1136
        %v1169 = vmax.f32 %v1105, %v1137
        %v1170 = vmax.f32 %v1106, %v1138
        %v1171 = vmax.f32 %v1107, %v1139
        %v1172 = vmax.f32 %v1108, %v1140
        %v1173 = vmax.f32 %v1109, %v1141
        %v1174 = vmax.f32 %v1110, %v1142
        %v1175 = vmax.f32 %v1111, %v1143
        %v1176 = vmax.f32 %v1112, %v1144
        %v1177 = vmax.f32 %v1113, %v1145
        %v1178 = vld [vmem:[#allocation2 + $0x4] sm:$0xff]
        %v1179 = vld [vmem:[#allocation2 + $0xc] sm:$0xff]
        %v1180 = vld [vmem:[#allocation2 + $0x1c] sm:$0xff]
        %v1181 = vld [vmem:[#allocation2 + $0x24] sm:$0xff]
        %v1182 = vld [vmem:[#allocation2 + $0x34] sm:$0xff]
        %v1183 = vld [vmem:[#allocation2 + $0x3c] sm:$0xff]
        %v1184 = vld [vmem:[#allocation2 + $0x4c] sm:$0xff]
        %v1185 = vld [vmem:[#allocation2 + $0x54] sm:$0xff]
        %v1186 = vld [vmem:[#allocation2 + $0x64] sm:$0xff]
        %v1187 = vld [vmem:[#allocation2 + $0x6c] sm:$0xff]
        %v1188 = vld [vmem:[#allocation2 + $0x7c] sm:$0xff]
        %v1189 = vld [vmem:[#allocation2 + $0x84] sm:$0xff]
        %v1190 = vld [vmem:[#allocation2 + $0x94] sm:$0xff]
        %v1191 = vld [vmem:[#allocation2 + $0x9c] sm:$0xff]
        %v1192 = vld [vmem:[#allocation2 + $0xac] sm:$0xff]
        %v1193 = vld [vmem:[#allocation2 + $0xb4] sm:$0xff]
        %v1194 = vld [vmem:[#allocation2 + $0xc4] sm:$0xff]
        %v1195 = vld [vmem:[#allocation2 + $0xcc] sm:$0xff]
        %v1196 = vld [vmem:[#allocation2 + $0xdc] sm:$0xff]
        %v1197 = vld [vmem:[#allocation2 + $0xe4] sm:$0xff]
        %v1198 = vld [vmem:[#allocation2 + $0xf4] sm:$0xff]
        %v1199 = vld [vmem:[#allocation2 + $0xfc] sm:$0xff]
        %v1200 = vld [vmem:[#allocation2 + $0x10c] sm:$0xff]
        %v1201 = vld [vmem:[#allocation2 + $0x114] sm:$0xff]
        %v1202 = vld [vmem:[#allocation2 + $0x124] sm:$0xff]
        %v1203 = vld [vmem:[#allocation2 + $0x12c] sm:$0xff]
        %v1204 = vld [vmem:[#allocation2 + $0x13c] sm:$0xff]
        %v1205 = vld [vmem:[#allocation2 + $0x144] sm:$0xff]
        %v1206 = vld [vmem:[#allocation2 + $0x154] sm:$0xff]
        %v1207 = vld [vmem:[#allocation2 + $0x15c] sm:$0xff]
        %v1208 = vld [vmem:[#allocation2 + $0x16c] sm:$0xff]
        %v1209 = vld [vmem:[#allocation2 + $0x174] sm:$0xff]
        %v1210 = vmax.f32 %v1146, %v1178
        %v1211 = vmax.f32 %v1147, %v1179
        %v1212 = vmax.f32 %v1148, %v1180
        %v1213 = vmax.f32 %v1149, %v1181
        %v1214 = vmax.f32 %v1150, %v1182
        %v1215 = vmax.f32 %v1151, %v1183
        %v1216 = vmax.f32 %v1152, %v1184
        %v1217 = vmax.f32 %v1153, %v1185
        %v1218 = vmax.f32 %v1154, %v1186
        %v1219 = vmax.f32 %v1155, %v1187
        %v1220 = vmax.f32 %v1156, %v1188
        %v1221 = vmax.f32 %v1157, %v1189
        %v1222 = vmax.f32 %v1158, %v1190
        %v1223 = vmax.f32 %v1159, %v1191
        %v1224 = vmax.f32 %v1160, %v1192
        %v1225 = vmax.f32 %v1161, %v1193
        %v1226 = vmax.f32 %v1162, %v1194
        %v1227 = vmax.f32 %v1163, %v1195
        %v1228 = vmax.f32 %v1164, %v1196
        %v1229 = vmax.f32 %v1165, %v1197
        %v1230 = vmax.f32 %v1166, %v1198
        %v1231 = vmax.f32 %v1167, %v1199
        %v1232 = vmax.f32 %v1168, %v1200
        %v1233 = vmax.f32 %v1169, %v1201
        %v1234 = vmax.f32 %v1170, %v1202
        %v1235 = vmax.f32 %v1171, %v1203
        %v1236 = vmax.f32 %v1172, %v1204
        %v1237 = vmax.f32 %v1173, %v1205
        %v1238 = vmax.f32 %v1174, %v1206
        %v1239 = vmax.f32 %v1175, %v1207
        %v1240 = vmax.f32 %v1176, %v1208
        %v1241 = vmax.f32 %v1177, %v1209
        %s1242 = scalar_lea.vmem [#allocation3], 32
        %1243 = vst [vmem:[%s1242] sm:$0xff] %v1210
        %1244 = vst [vmem:[%s1242 + $0x8] sm:$0xff] %v1211
        %1245 = vst [vmem:[%s1242 + $0x10] sm:$0xff] %v1212
        %1246 = vst [vmem:[%s1242 + $0x18] sm:$0xff] %v1213
        %1247 = vst [vmem:[%s1242 + $0x20] sm:$0xff] %v1214
        %1248 = vst [vmem:[%s1242 + $0x28] sm:$0xff] %v1215
        %1249 = vst [vmem:[%s1242 + $0x30] sm:$0xff] %v1216
        %1250 = vst [vmem:[%s1242 + $0x38] sm:$0xff] %v1217
        %1251 = vst [vmem:[%s1242 + $0x40] sm:$0xff] %v1218
        %1252 = vst [vmem:[%s1242 + $0x48] sm:$0xff] %v1219
        %1253 = vst [vmem:[%s1242 + $0x50] sm:$0xff] %v1220
        %1254 = vst [vmem:[%s1242 + $0x58] sm:$0xff] %v1221
        %1255 = vst [vmem:[%s1242 + $0x60] sm:$0xff] %v1222
        %1256 = vst [vmem:[%s1242 + $0x68] sm:$0xff] %v1223
        %1257 = vst [vmem:[%s1242 + $0x70] sm:$0xff] %v1224
        %1258 = vst [vmem:[%s1242 + $0x78] sm:$0xff] %v1225
        %1259 = vst [vmem:[%s1242 + $0x80] sm:$0xff] %v1226
        %1260 = vst [vmem:[%s1242 + $0x88] sm:$0xff] %v1227
        %1261 = vst [vmem:[%s1242 + $0x90] sm:$0xff] %v1228
        %1262 = vst [vmem:[%s1242 + $0x98] sm:$0xff] %v1229
        %1263 = vst [vmem:[%s1242 + $0xa0] sm:$0xff] %v1230
        %1264 = vst [vmem:[%s1242 + $0xa8] sm:$0xff] %v1231
        %1265 = vst [vmem:[%s1242 + $0xb0] sm:$0xff] %v1232
        %1266 = vst [vmem:[%s1242 + $0xb8] sm:$0xff] %v1233
        %1267 = vst [vmem:[%s1242 + $0xc0] sm:$0xff] %v1234
        %1268 = vst [vmem:[%s1242 + $0xc8] sm:$0xff] %v1235
        %1269 = vst [vmem:[%s1242 + $0xd0] sm:$0xff] %v1236
        %1270 = vst [vmem:[%s1242 + $0xd8] sm:$0xff] %v1237
        %1271 = vst [vmem:[%s1242 + $0xe0] sm:$0xff] %v1238
        %1272 = vst [vmem:[%s1242 + $0xe8] sm:$0xff] %v1239
        %1273 = vst [vmem:[%s1242 + $0xf0] sm:$0xff] %v1240
        %1274 = vst [vmem:[%s1242 + $0xf8] sm:$0xff] %v1241
        %v1275 = vld [vmem:[#allocation3] sm:$0xff]
        %v1276 = vld [vmem:[#allocation3 + $0x8] sm:$0xff]
        %v1277 = vld [vmem:[#allocation3 + $0x10] sm:$0xff]
        %v1278 = vld [vmem:[#allocation3 + $0x18] sm:$0xff]
        %v1279 = vld [vmem:[#allocation3 + $0x20] sm:$0xff]
        %v1280 = vld [vmem:[#allocation3 + $0x28] sm:$0xff]
        %v1281 = vld [vmem:[#allocation3 + $0x30] sm:$0xff]
        %v1282 = vld [vmem:[#allocation3 + $0x38] sm:$0xff]
        %v1283 = vld [vmem:[#allocation3 + $0x40] sm:$0xff]
        %v1284 = vld [vmem:[#allocation3 + $0x48] sm:$0xff]
        %v1285 = vld [vmem:[#allocation3 + $0x50] sm:$0xff]
        %v1286 = vld [vmem:[#allocation3 + $0x58] sm:$0xff]
        %v1287 = vld [vmem:[#allocation3 + $0x60] sm:$0xff]
        %v1288 = vld [vmem:[#allocation3 + $0x68] sm:$0xff]
        %v1289 = vld [vmem:[#allocation3 + $0x70] sm:$0xff]
        %v1290 = vld [vmem:[#allocation3 + $0x78] sm:$0xff]
        %v1291 = vld [vmem:[#allocation3 + $0x80] sm:$0xff]
        %v1292 = vld [vmem:[#allocation3 + $0x88] sm:$0xff]
        %v1293 = vld [vmem:[#allocation3 + $0x90] sm:$0xff]
        %v1294 = vld [vmem:[#allocation3 + $0x98] sm:$0xff]
        %v1295 = vld [vmem:[#allocation3 + $0xa0] sm:$0xff]
        %v1296 = vld [vmem:[#allocation3 + $0xa8] sm:$0xff]
        %v1297 = vld [vmem:[#allocation3 + $0xb0] sm:$0xff]
        %v1298 = vld [vmem:[#allocation3 + $0xb8] sm:$0xff]
        %v1299 = vld [vmem:[#allocation3 + $0xc0] sm:$0xff]
        %v1300 = vld [vmem:[#allocation3 + $0xc8] sm:$0xff]
        %v1301 = vld [vmem:[#allocation3 + $0xd0] sm:$0xff]
        %v1302 = vld [vmem:[#allocation3 + $0xd8] sm:$0xff]
        %v1303 = vld [vmem:[#allocation3 + $0xe0] sm:$0xff]
        %v1304 = vld [vmem:[#allocation3 + $0xe8] sm:$0xff]
        %v1305 = vld [vmem:[#allocation3 + $0xf0] sm:$0xff]
        %v1306 = vld [vmem:[#allocation3 + $0xf8] sm:$0xff]
        %s1307 = scalar_lea.vmem [#allocation3], 16
        %v1308 = vld [vmem:[%s1307] sm:$0xff]
        %v1309 = vld [vmem:[%s1307 + $0x8] sm:$0xff]
        %v1310 = vld [vmem:[%s1307 + $0x10] sm:$0xff]
        %v1311 = vld [vmem:[%s1307 + $0x18] sm:$0xff]
        %v1312 = vld [vmem:[%s1307 + $0x20] sm:$0xff]
        %v1313 = vld [vmem:[%s1307 + $0x28] sm:$0xff]
        %v1314 = vld [vmem:[%s1307 + $0x30] sm:$0xff]
        %v1315 = vld [vmem:[%s1307 + $0x38] sm:$0xff]
        %v1316 = vld [vmem:[%s1307 + $0x40] sm:$0xff]
        %v1317 = vld [vmem:[%s1307 + $0x48] sm:$0xff]
        %v1318 = vld [vmem:[%s1307 + $0x50] sm:$0xff]
        %v1319 = vld [vmem:[%s1307 + $0x58] sm:$0xff]
        %v1320 = vld [vmem:[%s1307 + $0x60] sm:$0xff]
        %v1321 = vld [vmem:[%s1307 + $0x68] sm:$0xff]
        %v1322 = vld [vmem:[%s1307 + $0x70] sm:$0xff]
        %v1323 = vld [vmem:[%s1307 + $0x78] sm:$0xff]
        %v1324 = vld [vmem:[%s1307 + $0x80] sm:$0xff]
        %v1325 = vld [vmem:[%s1307 + $0x88] sm:$0xff]
        %v1326 = vld [vmem:[%s1307 + $0x90] sm:$0xff]
        %v1327 = vld [vmem:[%s1307 + $0x98] sm:$0xff]
        %v1328 = vld [vmem:[%s1307 + $0xa0] sm:$0xff]
        %v1329 = vld [vmem:[%s1307 + $0xa8] sm:$0xff]
        %v1330 = vld [vmem:[%s1307 + $0xb0] sm:$0xff]
        %v1331 = vld [vmem:[%s1307 + $0xb8] sm:$0xff]
        %v1332 = vld [vmem:[%s1307 + $0xc0] sm:$0xff]
        %v1333 = vld [vmem:[%s1307 + $0xc8] sm:$0xff]
        %v1334 = vld [vmem:[%s1307 + $0xd0] sm:$0xff]
        %v1335 = vld [vmem:[%s1307 + $0xd8] sm:$0xff]
        %v1336 = vld [vmem:[%s1307 + $0xe0] sm:$0xff]
        %v1337 = vld [vmem:[%s1307 + $0xe8] sm:$0xff]
        %v1338 = vld [vmem:[%s1307 + $0xf0] sm:$0xff]
        %v1339 = vld [vmem:[%s1307 + $0xf8] sm:$0xff]
        %v1340 = vmax.f32 %v1275, %v1308
        %v1341 = vmax.f32 %v1276, %v1309
        %v1342 = vmax.f32 %v1277, %v1310
        %v1343 = vmax.f32 %v1278, %v1311
        %v1344 = vmax.f32 %v1279, %v1312
        %v1345 = vmax.f32 %v1280, %v1313
        %v1346 = vmax.f32 %v1281, %v1314
        %v1347 = vmax.f32 %v1282, %v1315
        %v1348 = vmax.f32 %v1283, %v1316
        %v1349 = vmax.f32 %v1284, %v1317
        %v1350 = vmax.f32 %v1285, %v1318
        %v1351 = vmax.f32 %v1286, %v1319
        %v1352 = vmax.f32 %v1287, %v1320
        %v1353 = vmax.f32 %v1288, %v1321
        %v1354 = vmax.f32 %v1289, %v1322
        %v1355 = vmax.f32 %v1290, %v1323
        %v1356 = vmax.f32 %v1291, %v1324
        %v1357 = vmax.f32 %v1292, %v1325
        %v1358 = vmax.f32 %v1293, %v1326
        %v1359 = vmax.f32 %v1294, %v1327
        %v1360 = vmax.f32 %v1295, %v1328
        %v1361 = vmax.f32 %v1296, %v1329
        %v1362 = vmax.f32 %v1297, %v1330
        %v1363 = vmax.f32 %v1298, %v1331
        %v1364 = vmax.f32 %v1299, %v1332
        %v1365 = vmax.f32 %v1300, %v1333
        %v1366 = vmax.f32 %v1301, %v1334
        %v1367 = vmax.f32 %v1302, %v1335
        %v1368 = vmax.f32 %v1303, %v1336
        %v1369 = vmax.f32 %v1304, %v1337
        %v1370 = vmax.f32 %v1305, %v1338
        %v1371 = vmax.f32 %v1306, %v1339
        %v1372 = vld [vmem:[%s1242] sm:$0xff]
        %v1373 = vld [vmem:[%s1242 + $0x8] sm:$0xff]
        %v1374 = vld [vmem:[%s1242 + $0x10] sm:$0xff]
        %v1375 = vld [vmem:[%s1242 + $0x18] sm:$0xff]
        %v1376 = vld [vmem:[%s1242 + $0x20] sm:$0xff]
        %v1377 = vld [vmem:[%s1242 + $0x28] sm:$0xff]
        %v1378 = vld [vmem:[%s1242 + $0x30] sm:$0xff]
        %v1379 = vld [vmem:[%s1242 + $0x38] sm:$0xff]
        %v1380 = vld [vmem:[%s1242 + $0x40] sm:$0xff]
        %v1381 = vld [vmem:[%s1242 + $0x48] sm:$0xff]
        %v1382 = vld [vmem:[%s1242 + $0x50] sm:$0xff]
        %v1383 = vld [vmem:[%s1242 + $0x58] sm:$0xff]
        %v1384 = vld [vmem:[%s1242 + $0x60] sm:$0xff]
        %v1385 = vld [vmem:[%s1242 + $0x68] sm:$0xff]
        %v1386 = vld [vmem:[%s1242 + $0x70] sm:$0xff]
        %v1387 = vld [vmem:[%s1242 + $0x78] sm:$0xff]
        %v1388 = vld [vmem:[%s1242 + $0x80] sm:$0xff]
        %v1389 = vld [vmem:[%s1242 + $0x88] sm:$0xff]
        %v1390 = vld [vmem:[%s1242 + $0x90] sm:$0xff]
        %v1391 = vld [vmem:[%s1242 + $0x98] sm:$0xff]
        %v1392 = vld [vmem:[%s1242 + $0xa0] sm:$0xff]
        %v1393 = vld [vmem:[%s1242 + $0xa8] sm:$0xff]
        %v1394 = vld [vmem:[%s1242 + $0xb0] sm:$0xff]
        %v1395 = vld [vmem:[%s1242 + $0xb8] sm:$0xff]
        %v1396 = vld [vmem:[%s1242 + $0xc0] sm:$0xff]
        %v1397 = vld [vmem:[%s1242 + $0xc8] sm:$0xff]
        %v1398 = vld [vmem:[%s1242 + $0xd0] sm:$0xff]
        %v1399 = vld [vmem:[%s1242 + $0xd8] sm:$0xff]
        %v1400 = vld [vmem:[%s1242 + $0xe0] sm:$0xff]
        %v1401 = vld [vmem:[%s1242 + $0xe8] sm:$0xff]
        %v1402 = vld [vmem:[%s1242 + $0xf0] sm:$0xff]
        %v1403 = vld [vmem:[%s1242 + $0xf8] sm:$0xff]
        %v1404 = vmax.f32 %v1340, %v1372
        %v1405 = vmax.f32 %v1341, %v1373
        %v1406 = vmax.f32 %v1342, %v1374
        %v1407 = vmax.f32 %v1343, %v1375
        %v1408 = vmax.f32 %v1344, %v1376
        %v1409 = vmax.f32 %v1345, %v1377
        %v1410 = vmax.f32 %v1346, %v1378
        %v1411 = vmax.f32 %v1347, %v1379
        %v1412 = vmax.f32 %v1348, %v1380
        %v1413 = vmax.f32 %v1349, %v1381
        %v1414 = vmax.f32 %v1350, %v1382
        %v1415 = vmax.f32 %v1351, %v1383
        %v1416 = vmax.f32 %v1352, %v1384
        %v1417 = vmax.f32 %v1353, %v1385
        %v1418 = vmax.f32 %v1354, %v1386
        %v1419 = vmax.f32 %v1355, %v1387
        %v1420 = vmax.f32 %v1356, %v1388
        %v1421 = vmax.f32 %v1357, %v1389
        %v1422 = vmax.f32 %v1358, %v1390
        %v1423 = vmax.f32 %v1359, %v1391
        %v1424 = vmax.f32 %v1360, %v1392
        %v1425 = vmax.f32 %v1361, %v1393
        %v1426 = vmax.f32 %v1362, %v1394
        %v1427 = vmax.f32 %v1363, %v1395
        %v1428 = vmax.f32 %v1364, %v1396
        %v1429 = vmax.f32 %v1365, %v1397
        %v1430 = vmax.f32 %v1366, %v1398
        %v1431 = vmax.f32 %v1367, %v1399
        %v1432 = vmax.f32 %v1368, %v1400
        %v1433 = vmax.f32 %v1369, %v1401
        %v1434 = vmax.f32 %v1370, %v1402
        %v1435 = vmax.f32 %v1371, %v1403
        %s1436 = scalar_lea.vmem [#allocation3], 48
        %v1437 = vld [vmem:[%s1436] sm:$0xff]
        %v1438 = vld [vmem:[%s1436 + $0x8] sm:$0xff]
        %v1439 = vld [vmem:[%s1436 + $0x10] sm:$0xff]
        %v1440 = vld [vmem:[%s1436 + $0x18] sm:$0xff]
        %v1441 = vld [vmem:[%s1436 + $0x20] sm:$0xff]
        %v1442 = vld [vmem:[%s1436 + $0x28] sm:$0xff]
        %v1443 = vld [vmem:[%s1436 + $0x30] sm:$0xff]
        %v1444 = vld [vmem:[%s1436 + $0x38] sm:$0xff]
        %v1445 = vld [vmem:[%s1436 + $0x40] sm:$0xff]
        %v1446 = vld [vmem:[%s1436 + $0x48] sm:$0xff]
        %v1447 = vld [vmem:[%s1436 + $0x50] sm:$0xff]
        %v1448 = vld [vmem:[%s1436 + $0x58] sm:$0xff]
        %v1449 = vld [vmem:[%s1436 + $0x60] sm:$0xff]
        %v1450 = vld [vmem:[%s1436 + $0x68] sm:$0xff]
        %v1451 = vld [vmem:[%s1436 + $0x70] sm:$0xff]
        %v1452 = vld [vmem:[%s1436 + $0x78] sm:$0xff]
        %v1453 = vld [vmem:[%s1436 + $0x80] sm:$0xff]
        %v1454 = vld [vmem:[%s1436 + $0x88] sm:$0xff]
        %v1455 = vld [vmem:[%s1436 + $0x90] sm:$0xff]
        %v1456 = vld [vmem:[%s1436 + $0x98] sm:$0xff]
        %v1457 = vld [vmem:[%s1436 + $0xa0] sm:$0xff]
        %v1458 = vld [vmem:[%s1436 + $0xa8] sm:$0xff]
        %v1459 = vld [vmem:[%s1436 + $0xb0] sm:$0xff]
        %v1460 = vld [vmem:[%s1436 + $0xb8] sm:$0xff]
        %v1461 = vld [vmem:[%s1436 + $0xc0] sm:$0xff]
        %v1462 = vld [vmem:[%s1436 + $0xc8] sm:$0xff]
        %v1463 = vld [vmem:[%s1436 + $0xd0] sm:$0xff]
        %v1464 = vld [vmem:[%s1436 + $0xd8] sm:$0xff]
        %v1465 = vld [vmem:[%s1436 + $0xe0] sm:$0xff]
        %v1466 = vld [vmem:[%s1436 + $0xe8] sm:$0xff]
        %v1467 = vld [vmem:[%s1436 + $0xf0] sm:$0xff]
        %v1468 = vld [vmem:[%s1436 + $0xf8] sm:$0xff]
        %v1469 = vmax.f32 %v1404, %v1437
        %v1470 = vmax.f32 %v1405, %v1438
        %v1471 = vmax.f32 %v1406, %v1439
        %v1472 = vmax.f32 %v1407, %v1440
        %v1473 = vmax.f32 %v1408, %v1441
        %v1474 = vmax.f32 %v1409, %v1442
        %v1475 = vmax.f32 %v1410, %v1443
        %v1476 = vmax.f32 %v1411, %v1444
        %v1477 = vmax.f32 %v1412, %v1445
        %v1478 = vmax.f32 %v1413, %v1446
        %v1479 = vmax.f32 %v1414, %v1447
        %v1480 = vmax.f32 %v1415, %v1448
        %v1481 = vmax.f32 %v1416, %v1449
        %v1482 = vmax.f32 %v1417, %v1450
        %v1483 = vmax.f32 %v1418, %v1451
        %v1484 = vmax.f32 %v1419, %v1452
        %v1485 = vmax.f32 %v1420, %v1453
        %v1486 = vmax.f32 %v1421, %v1454
        %v1487 = vmax.f32 %v1422, %v1455
        %v1488 = vmax.f32 %v1423, %v1456
        %v1489 = vmax.f32 %v1424, %v1457
        %v1490 = vmax.f32 %v1425, %v1458
        %v1491 = vmax.f32 %v1426, %v1459
        %v1492 = vmax.f32 %v1427, %v1460
        %v1493 = vmax.f32 %v1428, %v1461
        %v1494 = vmax.f32 %v1429, %v1462
        %v1495 = vmax.f32 %v1430, %v1463
        %v1496 = vmax.f32 %v1431, %v1464
        %v1497 = vmax.f32 %v1432, %v1465
        %v1498 = vmax.f32 %v1433, %v1466
        %v1499 = vmax.f32 %v1434, %v1467
        %v1500 = vmax.f32 %v1435, %v1468
        %s1501 = scalar_lea.vmem [#allocation3], 64
        %v1502 = vld [vmem:[%s1501] sm:$0xff]
        %v1503 = vld [vmem:[%s1501 + $0x8] sm:$0xff]
        %v1504 = vld [vmem:[%s1501 + $0x10] sm:$0xff]
        %v1505 = vld [vmem:[%s1501 + $0x18] sm:$0xff]
        %v1506 = vld [vmem:[%s1501 + $0x20] sm:$0xff]
        %v1507 = vld [vmem:[%s1501 + $0x28] sm:$0xff]
        %v1508 = vld [vmem:[%s1501 + $0x30] sm:$0xff]
        %v1509 = vld [vmem:[%s1501 + $0x38] sm:$0xff]
        %v1510 = vld [vmem:[%s1501 + $0x40] sm:$0xff]
        %v1511 = vld [vmem:[%s1501 + $0x48] sm:$0xff]
        %v1512 = vld [vmem:[%s1501 + $0x50] sm:$0xff]
        %v1513 = vld [vmem:[%s1501 + $0x58] sm:$0xff]
        %v1514 = vld [vmem:[%s1501 + $0x60] sm:$0xff]
        %v1515 = vld [vmem:[%s1501 + $0x68] sm:$0xff]
        %v1516 = vld [vmem:[%s1501 + $0x70] sm:$0xff]
        %v1517 = vld [vmem:[%s1501 + $0x78] sm:$0xff]
        %v1518 = vld [vmem:[%s1501 + $0x80] sm:$0xff]
        %v1519 = vld [vmem:[%s1501 + $0x88] sm:$0xff]
        %v1520 = vld [vmem:[%s1501 + $0x90] sm:$0xff]
        %v1521 = vld [vmem:[%s1501 + $0x98] sm:$0xff]
        %v1522 = vld [vmem:[%s1501 + $0xa0] sm:$0xff]
        %v1523 = vld [vmem:[%s1501 + $0xa8] sm:$0xff]
        %v1524 = vld [vmem:[%s1501 + $0xb0] sm:$0xff]
        %v1525 = vld [vmem:[%s1501 + $0xb8] sm:$0xff]
        %v1526 = vld [vmem:[%s1501 + $0xc0] sm:$0xff]
        %v1527 = vld [vmem:[%s1501 + $0xc8] sm:$0xff]
        %v1528 = vld [vmem:[%s1501 + $0xd0] sm:$0xff]
        %v1529 = vld [vmem:[%s1501 + $0xd8] sm:$0xff]
        %v1530 = vld [vmem:[%s1501 + $0xe0] sm:$0xff]
        %v1531 = vld [vmem:[%s1501 + $0xe8] sm:$0xff]
        %v1532 = vld [vmem:[%s1501 + $0xf0] sm:$0xff]
        %v1533 = vld [vmem:[%s1501 + $0xf8] sm:$0xff]
        %v1534 = vmax.f32 %v1469, %v1502
        %v1535 = vmax.f32 %v1470, %v1503
        %v1536 = vmax.f32 %v1471, %v1504
        %v1537 = vmax.f32 %v1472, %v1505
        %v1538 = vmax.f32 %v1473, %v1506
        %v1539 = vmax.f32 %v1474, %v1507
        %v1540 = vmax.f32 %v1475, %v1508
        %v1541 = vmax.f32 %v1476, %v1509
        %v1542 = vmax.f32 %v1477, %v1510
        %v1543 = vmax.f32 %v1478, %v1511
        %v1544 = vmax.f32 %v1479, %v1512
        %v1545 = vmax.f32 %v1480, %v1513
        %v1546 = vmax.f32 %v1481, %v1514
        %v1547 = vmax.f32 %v1482, %v1515
        %v1548 = vmax.f32 %v1483, %v1516
        %v1549 = vmax.f32 %v1484, %v1517
        %v1550 = vmax.f32 %v1485, %v1518
        %v1551 = vmax.f32 %v1486, %v1519
        %v1552 = vmax.f32 %v1487, %v1520
        %v1553 = vmax.f32 %v1488, %v1521
        %v1554 = vmax.f32 %v1489, %v1522
        %v1555 = vmax.f32 %v1490, %v1523
        %v1556 = vmax.f32 %v1491, %v1524
        %v1557 = vmax.f32 %v1492, %v1525
        %v1558 = vmax.f32 %v1493, %v1526
        %v1559 = vmax.f32 %v1494, %v1527
        %v1560 = vmax.f32 %v1495, %v1528
        %v1561 = vmax.f32 %v1496, %v1529
        %v1562 = vmax.f32 %v1497, %v1530
        %v1563 = vmax.f32 %v1498, %v1531
        %v1564 = vmax.f32 %v1499, %v1532
        %v1565 = vmax.f32 %v1500, %v1533
        %1566 = vst [vmem:[#allocation2 + $0x2] sm:$0xff] %v1534
        %1567 = vst [vmem:[#allocation2 + $0xa] sm:$0xff] %v1535
        %1568 = vst [vmem:[#allocation2 + $0x1a] sm:$0xff] %v1536
        %1569 = vst [vmem:[#allocation2 + $0x22] sm:$0xff] %v1537
        %1570 = vst [vmem:[#allocation2 + $0x32] sm:$0xff] %v1538
        %1571 = vst [vmem:[#allocation2 + $0x3a] sm:$0xff] %v1539
        %1572 = vst [vmem:[#allocation2 + $0x4a] sm:$0xff] %v1540
        %1573 = vst [vmem:[#allocation2 + $0x52] sm:$0xff] %v1541
        %1574 = vst [vmem:[#allocation2 + $0x62] sm:$0xff] %v1542
        %1575 = vst [vmem:[#allocation2 + $0x6a] sm:$0xff] %v1543
        %1576 = vst [vmem:[#allocation2 + $0x7a] sm:$0xff] %v1544
        %1577 = vst [vmem:[#allocation2 + $0x82] sm:$0xff] %v1545
        %1578 = vst [vmem:[#allocation2 + $0x92] sm:$0xff] %v1546
        %1579 = vst [vmem:[#allocation2 + $0x9a] sm:$0xff] %v1547
        %1580 = vst [vmem:[#allocation2 + $0xaa] sm:$0xff] %v1548
        %1581 = vst [vmem:[#allocation2 + $0xb2] sm:$0xff] %v1549
        %1582 = vst [vmem:[#allocation2 + $0xc2] sm:$0xff] %v1550
        %1583 = vst [vmem:[#allocation2 + $0xca] sm:$0xff] %v1551
        %1584 = vst [vmem:[#allocation2 + $0xda] sm:$0xff] %v1552
        %1585 = vst [vmem:[#allocation2 + $0xe2] sm:$0xff] %v1553
        %1586 = vst [vmem:[#allocation2 + $0xf2] sm:$0xff] %v1554
        %1587 = vst [vmem:[#allocation2 + $0xfa] sm:$0xff] %v1555
        %1588 = vst [vmem:[#allocation2 + $0x10a] sm:$0xff] %v1556
        %1589 = vst [vmem:[#allocation2 + $0x112] sm:$0xff] %v1557
        %1590 = vst [vmem:[#allocation2 + $0x122] sm:$0xff] %v1558
        %1591 = vst [vmem:[#allocation2 + $0x12a] sm:$0xff] %v1559
        %1592 = vst [vmem:[#allocation2 + $0x13a] sm:$0xff] %v1560
        %1593 = vst [vmem:[#allocation2 + $0x142] sm:$0xff] %v1561
        %1594 = vst [vmem:[#allocation2 + $0x152] sm:$0xff] %v1562
        %1595 = vst [vmem:[#allocation2 + $0x15a] sm:$0xff] %v1563
        %1596 = vst [vmem:[#allocation2 + $0x16a] sm:$0xff] %v1564
        %1597 = vst [vmem:[#allocation2 + $0x172] sm:$0xff] %v1565
        %v1598 = vld [vmem:[#allocation2] sm:$0xff]
        %v1599 = vld [vmem:[#allocation2 + $0x8] sm:$0xff]
        %v1600 = vld [vmem:[#allocation2 + $0x18] sm:$0xff]
        %v1601 = vld [vmem:[#allocation2 + $0x20] sm:$0xff]
        %v1602 = vld [vmem:[#allocation2 + $0x30] sm:$0xff]
        %v1603 = vld [vmem:[#allocation2 + $0x38] sm:$0xff]
        %v1604 = vld [vmem:[#allocation2 + $0x48] sm:$0xff]
        %v1605 = vld [vmem:[#allocation2 + $0x50] sm:$0xff]
        %v1606 = vld [vmem:[#allocation2 + $0x60] sm:$0xff]
        %v1607 = vld [vmem:[#allocation2 + $0x68] sm:$0xff]
        %v1608 = vld [vmem:[#allocation2 + $0x78] sm:$0xff]
        %v1609 = vld [vmem:[#allocation2 + $0x80] sm:$0xff]
        %v1610 = vld [vmem:[#allocation2 + $0x90] sm:$0xff]
        %v1611 = vld [vmem:[#allocation2 + $0x98] sm:$0xff]
        %v1612 = vld [vmem:[#allocation2 + $0xa8] sm:$0xff]
        %v1613 = vld [vmem:[#allocation2 + $0xb0] sm:$0xff]
        %v1614 = vld [vmem:[#allocation2 + $0xc0] sm:$0xff]
        %v1615 = vld [vmem:[#allocation2 + $0xc8] sm:$0xff]
        %v1616 = vld [vmem:[#allocation2 + $0xd8] sm:$0xff]
        %v1617 = vld [vmem:[#allocation2 + $0xe0] sm:$0xff]
        %v1618 = vld [vmem:[#allocation2 + $0xf0] sm:$0xff]
        %v1619 = vld [vmem:[#allocation2 + $0xf8] sm:$0xff]
        %v1620 = vld [vmem:[#allocation2 + $0x108] sm:$0xff]
        %v1621 = vld [vmem:[#allocation2 + $0x110] sm:$0xff]
        %v1622 = vld [vmem:[#allocation2 + $0x120] sm:$0xff]
        %v1623 = vld [vmem:[#allocation2 + $0x128] sm:$0xff]
        %v1624 = vld [vmem:[#allocation2 + $0x138] sm:$0xff]
        %v1625 = vld [vmem:[#allocation2 + $0x140] sm:$0xff]
        %v1626 = vld [vmem:[#allocation2 + $0x150] sm:$0xff]
        %v1627 = vld [vmem:[#allocation2 + $0x158] sm:$0xff]
        %v1628 = vld [vmem:[#allocation2 + $0x168] sm:$0xff]
        %v1629 = vld [vmem:[#allocation2 + $0x170] sm:$0xff]
        %v1630 = vld [vmem:[#allocation2 + $0x1] sm:$0xff]
        %v1631 = vld [vmem:[#allocation2 + $0x9] sm:$0xff]
        %v1632 = vld [vmem:[#allocation2 + $0x19] sm:$0xff]
        %v1633 = vld [vmem:[#allocation2 + $0x21] sm:$0xff]
        %v1634 = vld [vmem:[#allocation2 + $0x31] sm:$0xff]
        %v1635 = vld [vmem:[#allocation2 + $0x39] sm:$0xff]
        %v1636 = vld [vmem:[#allocation2 + $0x49] sm:$0xff]
        %v1637 = vld [vmem:[#allocation2 + $0x51] sm:$0xff]
        %v1638 = vld [vmem:[#allocation2 + $0x61] sm:$0xff]
        %v1639 = vld [vmem:[#allocation2 + $0x69] sm:$0xff]
        %v1640 = vld [vmem:[#allocation2 + $0x79] sm:$0xff]
        %v1641 = vld [vmem:[#allocation2 + $0x81] sm:$0xff]
        %v1642 = vld [vmem:[#allocation2 + $0x91] sm:$0xff]
        %v1643 = vld [vmem:[#allocation2 + $0x99] sm:$0xff]
        %v1644 = vld [vmem:[#allocation2 + $0xa9] sm:$0xff]
        %v1645 = vld [vmem:[#allocation2 + $0xb1] sm:$0xff]
        %v1646 = vld [vmem:[#allocation2 + $0xc1] sm:$0xff]
        %v1647 = vld [vmem:[#allocation2 + $0xc9] sm:$0xff]
        %v1648 = vld [vmem:[#allocation2 + $0xd9] sm:$0xff]
        %v1649 = vld [vmem:[#allocation2 + $0xe1] sm:$0xff]
        %v1650 = vld [vmem:[#allocation2 + $0xf1] sm:$0xff]
        %v1651 = vld [vmem:[#allocation2 + $0xf9] sm:$0xff]
        %v1652 = vld [vmem:[#allocation2 + $0x109] sm:$0xff]
        %v1653 = vld [vmem:[#allocation2 + $0x111] sm:$0xff]
        %v1654 = vld [vmem:[#allocation2 + $0x121] sm:$0xff]
        %v1655 = vld [vmem:[#allocation2 + $0x129] sm:$0xff]
        %v1656 = vld [vmem:[#allocation2 + $0x139] sm:$0xff]
        %v1657 = vld [vmem:[#allocation2 + $0x141] sm:$0xff]
        %v1658 = vld [vmem:[#allocation2 + $0x151] sm:$0xff]
        %v1659 = vld [vmem:[#allocation2 + $0x159] sm:$0xff]
        %v1660 = vld [vmem:[#allocation2 + $0x169] sm:$0xff]
        %v1661 = vld [vmem:[#allocation2 + $0x171] sm:$0xff]
        %v1662 = vmax.f32 %v1598, %v1630
        %v1663 = vmax.f32 %v1599, %v1631
        %v1664 = vmax.f32 %v1600, %v1632
        %v1665 = vmax.f32 %v1601, %v1633
        %v1666 = vmax.f32 %v1602, %v1634
        %v1667 = vmax.f32 %v1603, %v1635
        %v1668 = vmax.f32 %v1604, %v1636
        %v1669 = vmax.f32 %v1605, %v1637
        %v1670 = vmax.f32 %v1606, %v1638
        %v1671 = vmax.f32 %v1607, %v1639
        %v1672 = vmax.f32 %v1608, %v1640
        %v1673 = vmax.f32 %v1609, %v1641
        %v1674 = vmax.f32 %v1610, %v1642
        %v1675 = vmax.f32 %v1611, %v1643
        %v1676 = vmax.f32 %v1612, %v1644
        %v1677 = vmax.f32 %v1613, %v1645
        %v1678 = vmax.f32 %v1614, %v1646
        %v1679 = vmax.f32 %v1615, %v1647
        %v1680 = vmax.f32 %v1616, %v1648
        %v1681 = vmax.f32 %v1617, %v1649
        %v1682 = vmax.f32 %v1618, %v1650
        %v1683 = vmax.f32 %v1619, %v1651
        %v1684 = vmax.f32 %v1620, %v1652
        %v1685 = vmax.f32 %v1621, %v1653
        %v1686 = vmax.f32 %v1622, %v1654
        %v1687 = vmax.f32 %v1623, %v1655
        %v1688 = vmax.f32 %v1624, %v1656
        %v1689 = vmax.f32 %v1625, %v1657
        %v1690 = vmax.f32 %v1626, %v1658
        %v1691 = vmax.f32 %v1627, %v1659
        %v1692 = vmax.f32 %v1628, %v1660
        %v1693 = vmax.f32 %v1629, %v1661
        %v1694 = vld [vmem:[#allocation2 + $0x2] sm:$0xff]
        %v1695 = vld [vmem:[#allocation2 + $0xa] sm:$0xff]
        %v1696 = vld [vmem:[#allocation2 + $0x1a] sm:$0xff]
        %v1697 = vld [vmem:[#allocation2 + $0x22] sm:$0xff]
        %v1698 = vld [vmem:[#allocation2 + $0x32] sm:$0xff]
        %v1699 = vld [vmem:[#allocation2 + $0x3a] sm:$0xff]
        %v1700 = vld [vmem:[#allocation2 + $0x4a] sm:$0xff]
        %v1701 = vld [vmem:[#allocation2 + $0x52] sm:$0xff]
        %v1702 = vld [vmem:[#allocation2 + $0x62] sm:$0xff]
        %v1703 = vld [vmem:[#allocation2 + $0x6a] sm:$0xff]
        %v1704 = vld [vmem:[#allocation2 + $0x7a] sm:$0xff]
        %v1705 = vld [vmem:[#allocation2 + $0x82] sm:$0xff]
        %v1706 = vld [vmem:[#allocation2 + $0x92] sm:$0xff]
        %v1707 = vld [vmem:[#allocation2 + $0x9a] sm:$0xff]
        %v1708 = vld [vmem:[#allocation2 + $0xaa] sm:$0xff]
        %v1709 = vld [vmem:[#allocation2 + $0xb2] sm:$0xff]
        %v1710 = vld [vmem:[#allocation2 + $0xc2] sm:$0xff]
        %v1711 = vld [vmem:[#allocation2 + $0xca] sm:$0xff]
        %v1712 = vld [vmem:[#allocation2 + $0xda] sm:$0xff]
        %v1713 = vld [vmem:[#allocation2 + $0xe2] sm:$0xff]
        %v1714 = vld [vmem:[#allocation2 + $0xf2] sm:$0xff]
        %v1715 = vld [vmem:[#allocation2 + $0xfa] sm:$0xff]
        %v1716 = vld [vmem:[#allocation2 + $0x10a] sm:$0xff]
        %v1717 = vld [vmem:[#allocation2 + $0x112] sm:$0xff]
        %v1718 = vld [vmem:[#allocation2 + $0x122] sm:$0xff]
        %v1719 = vld [vmem:[#allocation2 + $0x12a] sm:$0xff]
        %v1720 = vld [vmem:[#allocation2 + $0x13a] sm:$0xff]
        %v1721 = vld [vmem:[#allocation2 + $0x142] sm:$0xff]
        %v1722 = vld [vmem:[#allocation2 + $0x152] sm:$0xff]
        %v1723 = vld [vmem:[#allocation2 + $0x15a] sm:$0xff]
        %v1724 = vld [vmem:[#allocation2 + $0x16a] sm:$0xff]
        %v1725 = vld [vmem:[#allocation2 + $0x172] sm:$0xff]
        %v1726 = vmax.f32 %v1662, %v1694
        %v1727 = vmax.f32 %v1663, %v1695
        %v1728 = vmax.f32 %v1664, %v1696
        %v1729 = vmax.f32 %v1665, %v1697
        %v1730 = vmax.f32 %v1666, %v1698
        %v1731 = vmax.f32 %v1667, %v1699
        %v1732 = vmax.f32 %v1668, %v1700
        %v1733 = vmax.f32 %v1669, %v1701
        %v1734 = vmax.f32 %v1670, %v1702
        %v1735 = vmax.f32 %v1671, %v1703
        %v1736 = vmax.f32 %v1672, %v1704
        %v1737 = vmax.f32 %v1673, %v1705
        %v1738 = vmax.f32 %v1674, %v1706
        %v1739 = vmax.f32 %v1675, %v1707
        %v1740 = vmax.f32 %v1676, %v1708
        %v1741 = vmax.f32 %v1677, %v1709
        %v1742 = vmax.f32 %v1678, %v1710
        %v1743 = vmax.f32 %v1679, %v1711
        %v1744 = vmax.f32 %v1680, %v1712
        %v1745 = vmax.f32 %v1681, %v1713
        %v1746 = vmax.f32 %v1682, %v1714
        %v1747 = vmax.f32 %v1683, %v1715
        %v1748 = vmax.f32 %v1684, %v1716
        %v1749 = vmax.f32 %v1685, %v1717
        %v1750 = vmax.f32 %v1686, %v1718
        %v1751 = vmax.f32 %v1687, %v1719
        %v1752 = vmax.f32 %v1688, %v1720
        %v1753 = vmax.f32 %v1689, %v1721
        %v1754 = vmax.f32 %v1690, %v1722
        %v1755 = vmax.f32 %v1691, %v1723
        %v1756 = vmax.f32 %v1692, %v1724
        %v1757 = vmax.f32 %v1693, %v1725
        %v1758 = vld [vmem:[#allocation2 + $0x3] sm:$0xff]
        %v1759 = vld [vmem:[#allocation2 + $0xb] sm:$0xff]
        %v1760 = vld [vmem:[#allocation2 + $0x1b] sm:$0xff]
        %v1761 = vld [vmem:[#allocation2 + $0x23] sm:$0xff]
        %v1762 = vld [vmem:[#allocation2 + $0x33] sm:$0xff]
        %v1763 = vld [vmem:[#allocation2 + $0x3b] sm:$0xff]
        %v1764 = vld [vmem:[#allocation2 + $0x4b] sm:$0xff]
        %v1765 = vld [vmem:[#allocation2 + $0x53] sm:$0xff]
        %v1766 = vld [vmem:[#allocation2 + $0x63] sm:$0xff]
        %v1767 = vld [vmem:[#allocation2 + $0x6b] sm:$0xff]
        %v1768 = vld [vmem:[#allocation2 + $0x7b] sm:$0xff]
        %v1769 = vld [vmem:[#allocation2 + $0x83] sm:$0xff]
        %v1770 = vld [vmem:[#allocation2 + $0x93] sm:$0xff]
        %v1771 = vld [vmem:[#allocation2 + $0x9b] sm:$0xff]
        %v1772 = vld [vmem:[#allocation2 + $0xab] sm:$0xff]
        %v1773 = vld [vmem:[#allocation2 + $0xb3] sm:$0xff]
        %v1774 = vld [vmem:[#allocation2 + $0xc3] sm:$0xff]
        %v1775 = vld [vmem:[#allocation2 + $0xcb] sm:$0xff]
        %v1776 = vld [vmem:[#allocation2 + $0xdb] sm:$0xff]
        %v1777 = vld [vmem:[#allocation2 + $0xe3] sm:$0xff]
        %v1778 = vld [vmem:[#allocation2 + $0xf3] sm:$0xff]
        %v1779 = vld [vmem:[#allocation2 + $0xfb] sm:$0xff]
        %v1780 = vld [vmem:[#allocation2 + $0x10b] sm:$0xff]
        %v1781 = vld [vmem:[#allocation2 + $0x113] sm:$0xff]
        %v1782 = vld [vmem:[#allocation2 + $0x123] sm:$0xff]
        %v1783 = vld [vmem:[#allocation2 + $0x12b] sm:$0xff]
        %v1784 = vld [vmem:[#allocation2 + $0x13b] sm:$0xff]
        %v1785 = vld [vmem:[#allocation2 + $0x143] sm:$0xff]
        %v1786 = vld [vmem:[#allocation2 + $0x153] sm:$0xff]
        %v1787 = vld [vmem:[#allocation2 + $0x15b] sm:$0xff]
        %v1788 = vld [vmem:[#allocation2 + $0x16b] sm:$0xff]
        %v1789 = vld [vmem:[#allocation2 + $0x173] sm:$0xff]
        %v1790 = vmax.f32 %v1726, %v1758
        %v1791 = vmax.f32 %v1727, %v1759
        %v1792 = vmax.f32 %v1728, %v1760
        %v1793 = vmax.f32 %v1729, %v1761
        %v1794 = vmax.f32 %v1730, %v1762
        %v1795 = vmax.f32 %v1731, %v1763
        %v1796 = vmax.f32 %v1732, %v1764
        %v1797 = vmax.f32 %v1733, %v1765
        %v1798 = vmax.f32 %v1734, %v1766
        %v1799 = vmax.f32 %v1735, %v1767
        %v1800 = vmax.f32 %v1736, %v1768
        %v1801 = vmax.f32 %v1737, %v1769
        %v1802 = vmax.f32 %v1738, %v1770
        %v1803 = vmax.f32 %v1739, %v1771
        %v1804 = vmax.f32 %v1740, %v1772
        %v1805 = vmax.f32 %v1741, %v1773
        %v1806 = vmax.f32 %v1742, %v1774
        %v1807 = vmax.f32 %v1743, %v1775
        %v1808 = vmax.f32 %v1744, %v1776
        %v1809 = vmax.f32 %v1745, %v1777
        %v1810 = vmax.f32 %v1746, %v1778
        %v1811 = vmax.f32 %v1747, %v1779
        %v1812 = vmax.f32 %v1748, %v1780
        %v1813 = vmax.f32 %v1749, %v1781
        %v1814 = vmax.f32 %v1750, %v1782
        %v1815 = vmax.f32 %v1751, %v1783
        %v1816 = vmax.f32 %v1752, %v1784
        %v1817 = vmax.f32 %v1753, %v1785
        %v1818 = vmax.f32 %v1754, %v1786
        %v1819 = vmax.f32 %v1755, %v1787
        %v1820 = vmax.f32 %v1756, %v1788
        %v1821 = vmax.f32 %v1757, %v1789
        %v1822 = vld [vmem:[#allocation2 + $0x4] sm:$0xff]
        %v1823 = vld [vmem:[#allocation2 + $0xc] sm:$0xff]
        %v1824 = vld [vmem:[#allocation2 + $0x1c] sm:$0xff]
        %v1825 = vld [vmem:[#allocation2 + $0x24] sm:$0xff]
        %v1826 = vld [vmem:[#allocation2 + $0x34] sm:$0xff]
        %v1827 = vld [vmem:[#allocation2 + $0x3c] sm:$0xff]
        %v1828 = vld [vmem:[#allocation2 + $0x4c] sm:$0xff]
        %v1829 = vld [vmem:[#allocation2 + $0x54] sm:$0xff]
        %v1830 = vld [vmem:[#allocation2 + $0x64] sm:$0xff]
        %v1831 = vld [vmem:[#allocation2 + $0x6c] sm:$0xff]
        %v1832 = vld [vmem:[#allocation2 + $0x7c] sm:$0xff]
        %v1833 = vld [vmem:[#allocation2 + $0x84] sm:$0xff]
        %v1834 = vld [vmem:[#allocation2 + $0x94] sm:$0xff]
        %v1835 = vld [vmem:[#allocation2 + $0x9c] sm:$0xff]
        %v1836 = vld [vmem:[#allocation2 + $0xac] sm:$0xff]
        %v1837 = vld [vmem:[#allocation2 + $0xb4] sm:$0xff]
        %v1838 = vld [vmem:[#allocation2 + $0xc4] sm:$0xff]
        %v1839 = vld [vmem:[#allocation2 + $0xcc] sm:$0xff]
        %v1840 = vld [vmem:[#allocation2 + $0xdc] sm:$0xff]
        %v1841 = vld [vmem:[#allocation2 + $0xe4] sm:$0xff]
        %v1842 = vld [vmem:[#allocation2 + $0xf4] sm:$0xff]
        %v1843 = vld [vmem:[#allocation2 + $0xfc] sm:$0xff]
        %v1844 = vld [vmem:[#allocation2 + $0x10c] sm:$0xff]
        %v1845 = vld [vmem:[#allocation2 + $0x114] sm:$0xff]
        %v1846 = vld [vmem:[#allocation2 + $0x124] sm:$0xff]
        %v1847 = vld [vmem:[#allocation2 + $0x12c] sm:$0xff]
        %v1848 = vld [vmem:[#allocation2 + $0x13c] sm:$0xff]
        %v1849 = vld [vmem:[#allocation2 + $0x144] sm:$0xff]
        %v1850 = vld [vmem:[#allocation2 + $0x154] sm:$0xff]
        %v1851 = vld [vmem:[#allocation2 + $0x15c] sm:$0xff]
        %v1852 = vld [vmem:[#allocation2 + $0x16c] sm:$0xff]
        %v1853 = vld [vmem:[#allocation2 + $0x174] sm:$0xff]
        %v1854 = vmax.f32 %v1790, %v1822
        %v1855 = vmax.f32 %v1791, %v1823
        %v1856 = vmax.f32 %v1792, %v1824
        %v1857 = vmax.f32 %v1793, %v1825
        %v1858 = vmax.f32 %v1794, %v1826
        %v1859 = vmax.f32 %v1795, %v1827
        %v1860 = vmax.f32 %v1796, %v1828
        %v1861 = vmax.f32 %v1797, %v1829
        %v1862 = vmax.f32 %v1798, %v1830
        %v1863 = vmax.f32 %v1799, %v1831
        %v1864 = vmax.f32 %v1800, %v1832
        %v1865 = vmax.f32 %v1801, %v1833
        %v1866 = vmax.f32 %v1802, %v1834
        %v1867 = vmax.f32 %v1803, %v1835
        %v1868 = vmax.f32 %v1804, %v1836
        %v1869 = vmax.f32 %v1805, %v1837
        %v1870 = vmax.f32 %v1806, %v1838
        %v1871 = vmax.f32 %v1807, %v1839
        %v1872 = vmax.f32 %v1808, %v1840
        %v1873 = vmax.f32 %v1809, %v1841
        %v1874 = vmax.f32 %v1810, %v1842
        %v1875 = vmax.f32 %v1811, %v1843
        %v1876 = vmax.f32 %v1812, %v1844
        %v1877 = vmax.f32 %v1813, %v1845
        %v1878 = vmax.f32 %v1814, %v1846
        %v1879 = vmax.f32 %v1815, %v1847
        %v1880 = vmax.f32 %v1816, %v1848
        %v1881 = vmax.f32 %v1817, %v1849
        %v1882 = vmax.f32 %v1818, %v1850
        %v1883 = vmax.f32 %v1819, %v1851
        %v1884 = vmax.f32 %v1820, %v1852
        %v1885 = vmax.f32 %v1821, %v1853
        %1886 = vst [vmem:[%s1242] sm:$0xff] %v1854
        %1887 = vst [vmem:[%s1242 + $0x8] sm:$0xff] %v1855
        %1888 = vst [vmem:[%s1242 + $0x10] sm:$0xff] %v1856
        %1889 = vst [vmem:[%s1242 + $0x18] sm:$0xff] %v1857
        %1890 = vst [vmem:[%s1242 + $0x20] sm:$0xff] %v1858
        %1891 = vst [vmem:[%s1242 + $0x28] sm:$0xff] %v1859
        %1892 = vst [vmem:[%s1242 + $0x30] sm:$0xff] %v1860
        %1893 = vst [vmem:[%s1242 + $0x38] sm:$0xff] %v1861
        %1894 = vst [vmem:[%s1242 + $0x40] sm:$0xff] %v1862
        %1895 = vst [vmem:[%s1242 + $0x48] sm:$0xff] %v1863
        %1896 = vst [vmem:[%s1242 + $0x50] sm:$0xff] %v1864
        %1897 = vst [vmem:[%s1242 + $0x58] sm:$0xff] %v1865
        %1898 = vst [vmem:[%s1242 + $0x60] sm:$0xff] %v1866
        %1899 = vst [vmem:[%s1242 + $0x68] sm:$0xff] %v1867
        %1900 = vst [vmem:[%s1242 + $0x70] sm:$0xff] %v1868
        %1901 = vst [vmem:[%s1242 + $0x78] sm:$0xff] %v1869
        %1902 = vst [vmem:[%s1242 + $0x80] sm:$0xff] %v1870
        %1903 = vst [vmem:[%s1242 + $0x88] sm:$0xff] %v1871
        %1904 = vst [vmem:[%s1242 + $0x90] sm:$0xff] %v1872
        %1905 = vst [vmem:[%s1242 + $0x98] sm:$0xff] %v1873
        %1906 = vst [vmem:[%s1242 + $0xa0] sm:$0xff] %v1874
        %1907 = vst [vmem:[%s1242 + $0xa8] sm:$0xff] %v1875
        %1908 = vst [vmem:[%s1242 + $0xb0] sm:$0xff] %v1876
        %1909 = vst [vmem:[%s1242 + $0xb8] sm:$0xff] %v1877
        %1910 = vst [vmem:[%s1242 + $0xc0] sm:$0xff] %v1878
        %1911 = vst [vmem:[%s1242 + $0xc8] sm:$0xff] %v1879
        %1912 = vst [vmem:[%s1242 + $0xd0] sm:$0xff] %v1880
        %1913 = vst [vmem:[%s1242 + $0xd8] sm:$0xff] %v1881
        %1914 = vst [vmem:[%s1242 + $0xe0] sm:$0xff] %v1882
        %1915 = vst [vmem:[%s1242 + $0xe8] sm:$0xff] %v1883
        %1916 = vst [vmem:[%s1242 + $0xf0] sm:$0xff] %v1884
        %1917 = vst [vmem:[%s1242 + $0xf8] sm:$0xff] %v1885
        %v1918 = vld [vmem:[#allocation3] sm:$0xff]
        %v1919 = vld [vmem:[#allocation3 + $0x8] sm:$0xff]
        %v1920 = vld [vmem:[#allocation3 + $0x10] sm:$0xff]
        %v1921 = vld [vmem:[#allocation3 + $0x18] sm:$0xff]
        %v1922 = vld [vmem:[#allocation3 + $0x20] sm:$0xff]
        %v1923 = vld [vmem:[#allocation3 + $0x28] sm:$0xff]
        %v1924 = vld [vmem:[#allocation3 + $0x30] sm:$0xff]
        %v1925 = vld [vmem:[#allocation3 + $0x38] sm:$0xff]
        %v1926 = vld [vmem:[#allocation3 + $0x40] sm:$0xff]
        %v1927 = vld [vmem:[#allocation3 + $0x48] sm:$0xff]
        %v1928 = vld [vmem:[#allocation3 + $0x50] sm:$0xff]
        %v1929 = vld [vmem:[#allocation3 + $0x58] sm:$0xff]
        %v1930 = vld [vmem:[#allocation3 + $0x60] sm:$0xff]
        %v1931 = vld [vmem:[#allocation3 + $0x68] sm:$0xff]
        %v1932 = vld [vmem:[#allocation3 + $0x70] sm:$0xff]
        %v1933 = vld [vmem:[#allocation3 + $0x78] sm:$0xff]
        %v1934 = vld [vmem:[#allocation3 + $0x80] sm:$0xff]
        %v1935 = vld [vmem:[#allocation3 + $0x88] sm:$0xff]
        %v1936 = vld [vmem:[#allocation3 + $0x90] sm:$0xff]
        %v1937 = vld [vmem:[#allocation3 + $0x98] sm:$0xff]
        %v1938 = vld [vmem:[#allocation3 + $0xa0] sm:$0xff]
        %v1939 = vld [vmem:[#allocation3 + $0xa8] sm:$0xff]
        %v1940 = vld [vmem:[#allocation3 + $0xb0] sm:$0xff]
        %v1941 = vld [vmem:[#allocation3 + $0xb8] sm:$0xff]
        %v1942 = vld [vmem:[#allocation3 + $0xc0] sm:$0xff]
        %v1943 = vld [vmem:[#allocation3 + $0xc8] sm:$0xff]
        %v1944 = vld [vmem:[#allocation3 + $0xd0] sm:$0xff]
        %v1945 = vld [vmem:[#allocation3 + $0xd8] sm:$0xff]
        %v1946 = vld [vmem:[#allocation3 + $0xe0] sm:$0xff]
        %v1947 = vld [vmem:[#allocation3 + $0xe8] sm:$0xff]
        %v1948 = vld [vmem:[#allocation3 + $0xf0] sm:$0xff]
        %v1949 = vld [vmem:[#allocation3 + $0xf8] sm:$0xff]
        %v1950 = vld [vmem:[%s1307] sm:$0xff]
        %v1951 = vld [vmem:[%s1307 + $0x8] sm:$0xff]
        %v1952 = vld [vmem:[%s1307 + $0x10] sm:$0xff]
        %v1953 = vld [vmem:[%s1307 + $0x18] sm:$0xff]
        %v1954 = vld [vmem:[%s1307 + $0x20] sm:$0xff]
        %v1955 = vld [vmem:[%s1307 + $0x28] sm:$0xff]
        %v1956 = vld [vmem:[%s1307 + $0x30] sm:$0xff]
        %v1957 = vld [vmem:[%s1307 + $0x38] sm:$0xff]
        %v1958 = vld [vmem:[%s1307 + $0x40] sm:$0xff]
        %v1959 = vld [vmem:[%s1307 + $0x48] sm:$0xff]
        %v1960 = vld [vmem:[%s1307 + $0x50] sm:$0xff]
        %v1961 = vld [vmem:[%s1307 + $0x58] sm:$0xff]
        %v1962 = vld [vmem:[%s1307 + $0x60] sm:$0xff]
        %v1963 = vld [vmem:[%s1307 + $0x68] sm:$0xff]
        %v1964 = vld [vmem:[%s1307 + $0x70] sm:$0xff]
        %v1965 = vld [vmem:[%s1307 + $0x78] sm:$0xff]
        %v1966 = vld [vmem:[%s1307 + $0x80] sm:$0xff]
        %v1967 = vld [vmem:[%s1307 + $0x88] sm:$0xff]
        %v1968 = vld [vmem:[%s1307 + $0x90] sm:$0xff]
        %v1969 = vld [vmem:[%s1307 + $0x98] sm:$0xff]
        %v1970 = vld [vmem:[%s1307 + $0xa0] sm:$0xff]
        %v1971 = vld [vmem:[%s1307 + $0xa8] sm:$0xff]
        %v1972 = vld [vmem:[%s1307 + $0xb0] sm:$0xff]
        %v1973 = vld [vmem:[%s1307 + $0xb8] sm:$0xff]
        %v1974 = vld [vmem:[%s1307 + $0xc0] sm:$0xff]
        %v1975 = vld [vmem:[%s1307 + $0xc8] sm:$0xff]
        %v1976 = vld [vmem:[%s1307 + $0xd0] sm:$0xff]
        %v1977 = vld [vmem:[%s1307 + $0xd8] sm:$0xff]
        %v1978 = vld [vmem:[%s1307 + $0xe0] sm:$0xff]
        %v1979 = vld [vmem:[%s1307 + $0xe8] sm:$0xff]
        %v1980 = vld [vmem:[%s1307 + $0xf0] sm:$0xff]
        %v1981 = vld [vmem:[%s1307 + $0xf8] sm:$0xff]
        %v1982 = vmax.f32 %v1918, %v1950
        %v1983 = vmax.f32 %v1919, %v1951
        %v1984 = vmax.f32 %v1920, %v1952
        %v1985 = vmax.f32 %v1921, %v1953
        %v1986 = vmax.f32 %v1922, %v1954
        %v1987 = vmax.f32 %v1923, %v1955
        %v1988 = vmax.f32 %v1924, %v1956
        %v1989 = vmax.f32 %v1925, %v1957
        %v1990 = vmax.f32 %v1926, %v1958
        %v1991 = vmax.f32 %v1927, %v1959
        %v1992 = vmax.f32 %v1928, %v1960
        %v1993 = vmax.f32 %v1929, %v1961
        %v1994 = vmax.f32 %v1930, %v1962
        %v1995 = vmax.f32 %v1931, %v1963
        %v1996 = vmax.f32 %v1932, %v1964
        %v1997 = vmax.f32 %v1933, %v1965
        %v1998 = vmax.f32 %v1934, %v1966
        %v1999 = vmax.f32 %v1935, %v1967
        %v2000 = vmax.f32 %v1936, %v1968
        %v2001 = vmax.f32 %v1937, %v1969
        %v2002 = vmax.f32 %v1938, %v1970
        %v2003 = vmax.f32 %v1939, %v1971
        %v2004 = vmax.f32 %v1940, %v1972
        %v2005 = vmax.f32 %v1941, %v1973
        %v2006 = vmax.f32 %v1942, %v1974
        %v2007 = vmax.f32 %v1943, %v1975
        %v2008 = vmax.f32 %v1944, %v1976
        %v2009 = vmax.f32 %v1945, %v1977
        %v2010 = vmax.f32 %v1946, %v1978
        %v2011 = vmax.f32 %v1947, %v1979
        %v2012 = vmax.f32 %v1948, %v1980
        %v2013 = vmax.f32 %v1949, %v1981
        %v2014 = vld [vmem:[%s1242] sm:$0xff]
        %v2015 = vld [vmem:[%s1242 + $0x8] sm:$0xff]
        %v2016 = vld [vmem:[%s1242 + $0x10] sm:$0xff]
        %v2017 = vld [vmem:[%s1242 + $0x18] sm:$0xff]
        %v2018 = vld [vmem:[%s1242 + $0x20] sm:$0xff]
        %v2019 = vld [vmem:[%s1242 + $0x28] sm:$0xff]
        %v2020 = vld [vmem:[%s1242 + $0x30] sm:$0xff]
        %v2021 = vld [vmem:[%s1242 + $0x38] sm:$0xff]
        %v2022 = vld [vmem:[%s1242 + $0x40] sm:$0xff]
        %v2023 = vld [vmem:[%s1242 + $0x48] sm:$0xff]
        %v2024 = vld [vmem:[%s1242 + $0x50] sm:$0xff]
        %v2025 = vld [vmem:[%s1242 + $0x58] sm:$0xff]
        %v2026 = vld [vmem:[%s1242 + $0x60] sm:$0xff]
        %v2027 = vld [vmem:[%s1242 + $0x68] sm:$0xff]
        %v2028 = vld [vmem:[%s1242 + $0x70] sm:$0xff]
        %v2029 = vld [vmem:[%s1242 + $0x78] sm:$0xff]
        %v2030 = vld [vmem:[%s1242 + $0x80] sm:$0xff]
        %v2031 = vld [vmem:[%s1242 + $0x88] sm:$0xff]
        %v2032 = vld [vmem:[%s1242 + $0x90] sm:$0xff]
        %v2033 = vld [vmem:[%s1242 + $0x98] sm:$0xff]
        %v2034 = vld [vmem:[%s1242 + $0xa0] sm:$0xff]
        %v2035 = vld [vmem:[%s1242 + $0xa8] sm:$0xff]
        %v2036 = vld [vmem:[%s1242 + $0xb0] sm:$0xff]
        %v2037 = vld [vmem:[%s1242 + $0xb8] sm:$0xff]
        %v2038 = vld [vmem:[%s1242 + $0xc0] sm:$0xff]
        %v2039 = vld [vmem:[%s1242 + $0xc8] sm:$0xff]
        %v2040 = vld [vmem:[%s1242 + $0xd0] sm:$0xff]
        %v2041 = vld [vmem:[%s1242 + $0xd8] sm:$0xff]
        %v2042 = vld [vmem:[%s1242 + $0xe0] sm:$0xff]
        %v2043 = vld [vmem:[%s1242 + $0xe8] sm:$0xff]
        %v2044 = vld [vmem:[%s1242 + $0xf0] sm:$0xff]
        %v2045 = vld [vmem:[%s1242 + $0xf8] sm:$0xff]
        %v2046 = vmax.f32 %v1982, %v2014
        %v2047 = vmax.f32 %v1983, %v2015
        %v2048 = vmax.f32 %v1984, %v2016
        %v2049 = vmax.f32 %v1985, %v2017
        %v2050 = vmax.f32 %v1986, %v2018
        %v2051 = vmax.f32 %v1987, %v2019
        %v2052 = vmax.f32 %v1988, %v2020
        %v2053 = vmax.f32 %v1989, %v2021
        %v2054 = vmax.f32 %v1990, %v2022
        %v2055 = vmax.f32 %v1991, %v2023
        %v2056 = vmax.f32 %v1992, %v2024
        %v2057 = vmax.f32 %v1993, %v2025
        %v2058 = vmax.f32 %v1994, %v2026
        %v2059 = vmax.f32 %v1995, %v2027
        %v2060 = vmax.f32 %v1996, %v2028
        %v2061 = vmax.f32 %v1997, %v2029
        %v2062 = vmax.f32 %v1998, %v2030
        %v2063 = vmax.f32 %v1999, %v2031
        %v2064 = vmax.f32 %v2000, %v2032
        %v2065 = vmax.f32 %v2001, %v2033
        %v2066 = vmax.f32 %v2002, %v2034
        %v2067 = vmax.f32 %v2003, %v2035
        %v2068 = vmax.f32 %v2004, %v2036
        %v2069 = vmax.f32 %v2005, %v2037
        %v2070 = vmax.f32 %v2006, %v2038
        %v2071 = vmax.f32 %v2007, %v2039
        %v2072 = vmax.f32 %v2008, %v2040
        %v2073 = vmax.f32 %v2009, %v2041
        %v2074 = vmax.f32 %v2010, %v2042
        %v2075 = vmax.f32 %v2011, %v2043
        %v2076 = vmax.f32 %v2012, %v2044
        %v2077 = vmax.f32 %v2013, %v2045
        %v2078 = vld [vmem:[%s1436] sm:$0xff]
        %v2079 = vld [vmem:[%s1436 + $0x8] sm:$0xff]
        %v2080 = vld [vmem:[%s1436 + $0x10] sm:$0xff]
        %v2081 = vld [vmem:[%s1436 + $0x18] sm:$0xff]
        %v2082 = vld [vmem:[%s1436 + $0x20] sm:$0xff]
        %v2083 = vld [vmem:[%s1436 + $0x28] sm:$0xff]
        %v2084 = vld [vmem:[%s1436 + $0x30] sm:$0xff]
        %v2085 = vld [vmem:[%s1436 + $0x38] sm:$0xff]
        %v2086 = vld [vmem:[%s1436 + $0x40] sm:$0xff]
        %v2087 = vld [vmem:[%s1436 + $0x48] sm:$0xff]
        %v2088 = vld [vmem:[%s1436 + $0x50] sm:$0xff]
        %v2089 = vld [vmem:[%s1436 + $0x58] sm:$0xff]
        %v2090 = vld [vmem:[%s1436 + $0x60] sm:$0xff]
        %v2091 = vld [vmem:[%s1436 + $0x68] sm:$0xff]
        %v2092 = vld [vmem:[%s1436 + $0x70] sm:$0xff]
        %v2093 = vld [vmem:[%s1436 + $0x78] sm:$0xff]
        %v2094 = vld [vmem:[%s1436 + $0x80] sm:$0xff]
        %v2095 = vld [vmem:[%s1436 + $0x88] sm:$0xff]
        %v2096 = vld [vmem:[%s1436 + $0x90] sm:$0xff]
        %v2097 = vld [vmem:[%s1436 + $0x98] sm:$0xff]
        %v2098 = vld [vmem:[%s1436 + $0xa0] sm:$0xff]
        %v2099 = vld [vmem:[%s1436 + $0xa8] sm:$0xff]
        %v2100 = vld [vmem:[%s1436 + $0xb0] sm:$0xff]
        %v2101 = vld [vmem:[%s1436 + $0xb8] sm:$0xff]
        %v2102 = vld [vmem:[%s1436 + $0xc0] sm:$0xff]
        %v2103 = vld [vmem:[%s1436 + $0xc8] sm:$0xff]
        %v2104 = vld [vmem:[%s1436 + $0xd0] sm:$0xff]
        %v2105 = vld [vmem:[%s1436 + $0xd8] sm:$0xff]
        %v2106 = vld [vmem:[%s1436 + $0xe0] sm:$0xff]
        %v2107 = vld [vmem:[%s1436 + $0xe8] sm:$0xff]
        %v2108 = vld [vmem:[%s1436 + $0xf0] sm:$0xff]
        %v2109 = vld [vmem:[%s1436 + $0xf8] sm:$0xff]
        %v2110 = vmax.f32 %v2046, %v2078
        %v2111 = vmax.f32 %v2047, %v2079
        %v2112 = vmax.f32 %v2048, %v2080
        %v2113 = vmax.f32 %v2049, %v2081
        %v2114 = vmax.f32 %v2050, %v2082
        %v2115 = vmax.f32 %v2051, %v2083
        %v2116 = vmax.f32 %v2052, %v2084
        %v2117 = vmax.f32 %v2053, %v2085
        %v2118 = vmax.f32 %v2054, %v2086
        %v2119 = vmax.f32 %v2055, %v2087
        %v2120 = vmax.f32 %v2056, %v2088
        %v2121 = vmax.f32 %v2057, %v2089
        %v2122 = vmax.f32 %v2058, %v2090
        %v2123 = vmax.f32 %v2059, %v2091
        %v2124 = vmax.f32 %v2060, %v2092
        %v2125 = vmax.f32 %v2061, %v2093
        %v2126 = vmax.f32 %v2062, %v2094
        %v2127 = vmax.f32 %v2063, %v2095
        %v2128 = vmax.f32 %v2064, %v2096
        %v2129 = vmax.f32 %v2065, %v2097
        %v2130 = vmax.f32 %v2066, %v2098
        %v2131 = vmax.f32 %v2067, %v2099
        %v2132 = vmax.f32 %v2068, %v2100
        %v2133 = vmax.f32 %v2069, %v2101
        %v2134 = vmax.f32 %v2070, %v2102
        %v2135 = vmax.f32 %v2071, %v2103
        %v2136 = vmax.f32 %v2072, %v2104
        %v2137 = vmax.f32 %v2073, %v2105
        %v2138 = vmax.f32 %v2074, %v2106
        %v2139 = vmax.f32 %v2075, %v2107
        %v2140 = vmax.f32 %v2076, %v2108
        %v2141 = vmax.f32 %v2077, %v2109
        %v2142 = vld [vmem:[%s1501] sm:$0xff]
        %v2143 = vld [vmem:[%s1501 + $0x8] sm:$0xff]
        %v2144 = vld [vmem:[%s1501 + $0x10] sm:$0xff]
        %v2145 = vld [vmem:[%s1501 + $0x18] sm:$0xff]
        %v2146 = vld [vmem:[%s1501 + $0x20] sm:$0xff]
        %v2147 = vld [vmem:[%s1501 + $0x28] sm:$0xff]
        %v2148 = vld [vmem:[%s1501 + $0x30] sm:$0xff]
        %v2149 = vld [vmem:[%s1501 + $0x38] sm:$0xff]
        %v2150 = vld [vmem:[%s1501 + $0x40] sm:$0xff]
        %v2151 = vld [vmem:[%s1501 + $0x48] sm:$0xff]
        %v2152 = vld [vmem:[%s1501 + $0x50] sm:$0xff]
        %v2153 = vld [vmem:[%s1501 + $0x58] sm:$0xff]
        %v2154 = vld [vmem:[%s1501 + $0x60] sm:$0xff]
        %v2155 = vld [vmem:[%s1501 + $0x68] sm:$0xff]
        %v2156 = vld [vmem:[%s1501 + $0x70] sm:$0xff]
        %v2157 = vld [vmem:[%s1501 + $0x78] sm:$0xff]
        %v2158 = vld [vmem:[%s1501 + $0x80] sm:$0xff]
        %v2159 = vld [vmem:[%s1501 + $0x88] sm:$0xff]
        %v2160 = vld [vmem:[%s1501 + $0x90] sm:$0xff]
        %v2161 = vld [vmem:[%s1501 + $0x98] sm:$0xff]
        %v2162 = vld [vmem:[%s1501 + $0xa0] sm:$0xff]
        %v2163 = vld [vmem:[%s1501 + $0xa8] sm:$0xff]
        %v2164 = vld [vmem:[%s1501 + $0xb0] sm:$0xff]
        %v2165 = vld [vmem:[%s1501 + $0xb8] sm:$0xff]
        %v2166 = vld [vmem:[%s1501 + $0xc0] sm:$0xff]
        %v2167 = vld [vmem:[%s1501 + $0xc8] sm:$0xff]
        %v2168 = vld [vmem:[%s1501 + $0xd0] sm:$0xff]
        %v2169 = vld [vmem:[%s1501 + $0xd8] sm:$0xff]
        %v2170 = vld [vmem:[%s1501 + $0xe0] sm:$0xff]
        %v2171 = vld [vmem:[%s1501 + $0xe8] sm:$0xff]
        %v2172 = vld [vmem:[%s1501 + $0xf0] sm:$0xff]
        %v2173 = vld [vmem:[%s1501 + $0xf8] sm:$0xff]
        %v2174 = vmax.f32 %v2110, %v2142
        %v2175 = vmax.f32 %v2111, %v2143
        %v2176 = vmax.f32 %v2112, %v2144
        %v2177 = vmax.f32 %v2113, %v2145
        %v2178 = vmax.f32 %v2114, %v2146
        %v2179 = vmax.f32 %v2115, %v2147
        %v2180 = vmax.f32 %v2116, %v2148
        %v2181 = vmax.f32 %v2117, %v2149
        %v2182 = vmax.f32 %v2118, %v2150
        %v2183 = vmax.f32 %v2119, %v2151
        %v2184 = vmax.f32 %v2120, %v2152
        %v2185 = vmax.f32 %v2121, %v2153
        %v2186 = vmax.f32 %v2122, %v2154
        %v2187 = vmax.f32 %v2123, %v2155
        %v2188 = vmax.f32 %v2124, %v2156
        %v2189 = vmax.f32 %v2125, %v2157
        %v2190 = vmax.f32 %v2126, %v2158
        %v2191 = vmax.f32 %v2127, %v2159
        %v2192 = vmax.f32 %v2128, %v2160
        %v2193 = vmax.f32 %v2129, %v2161
        %v2194 = vmax.f32 %v2130, %v2162
        %v2195 = vmax.f32 %v2131, %v2163
        %v2196 = vmax.f32 %v2132, %v2164
        %v2197 = vmax.f32 %v2133, %v2165
        %v2198 = vmax.f32 %v2134, %v2166
        %v2199 = vmax.f32 %v2135, %v2167
        %v2200 = vmax.f32 %v2136, %v2168
        %v2201 = vmax.f32 %v2137, %v2169
        %v2202 = vmax.f32 %v2138, %v2170
        %v2203 = vmax.f32 %v2139, %v2171
        %v2204 = vmax.f32 %v2140, %v2172
        %v2205 = vmax.f32 %v2141, %v2173
        %2206 = vst [vmem:[#allocation2 + $0x2] sm:$0xff] %v2174
        %2207 = vst [vmem:[#allocation2 + $0xa] sm:$0xff] %v2175
        %2208 = vst [vmem:[#allocation2 + $0x1a] sm:$0xff] %v2176
        %2209 = vst [vmem:[#allocation2 + $0x22] sm:$0xff] %v2177
        %2210 = vst [vmem:[#allocation2 + $0x32] sm:$0xff] %v2178
        %2211 = vst [vmem:[#allocation2 + $0x3a] sm:$0xff] %v2179
        %2212 = vst [vmem:[#allocation2 + $0x4a] sm:$0xff] %v2180
        %2213 = vst [vmem:[#allocation2 + $0x52] sm:$0xff] %v2181
        %2214 = vst [vmem:[#allocation2 + $0x62] sm:$0xff] %v2182
        %2215 = vst [vmem:[#allocation2 + $0x6a] sm:$0xff] %v2183
        %2216 = vst [vmem:[#allocation2 + $0x7a] sm:$0xff] %v2184
        %2217 = vst [vmem:[#allocation2 + $0x82] sm:$0xff] %v2185
        %2218 = vst [vmem:[#allocation2 + $0x92] sm:$0xff] %v2186
        %2219 = vst [vmem:[#allocation2 + $0x9a] sm:$0xff] %v2187
        %2220 = vst [vmem:[#allocation2 + $0xaa] sm:$0xff] %v2188
        %2221 = vst [vmem:[#allocation2 + $0xb2] sm:$0xff] %v2189
        %2222 = vst [vmem:[#allocation2 + $0xc2] sm:$0xff] %v2190
        %2223 = vst [vmem:[#allocation2 + $0xca] sm:$0xff] %v2191
        %2224 = vst [vmem:[#allocation2 + $0xda] sm:$0xff] %v2192
        %2225 = vst [vmem:[#allocation2 + $0xe2] sm:$0xff] %v2193
        %2226 = vst [vmem:[#allocation2 + $0xf2] sm:$0xff] %v2194
        %2227 = vst [vmem:[#allocation2 + $0xfa] sm:$0xff] %v2195
        %2228 = vst [vmem:[#allocation2 + $0x10a] sm:$0xff] %v2196
        %2229 = vst [vmem:[#allocation2 + $0x112] sm:$0xff] %v2197
        %2230 = vst [vmem:[#allocation2 + $0x122] sm:$0xff] %v2198
        %2231 = vst [vmem:[#allocation2 + $0x12a] sm:$0xff] %v2199
        %2232 = vst [vmem:[#allocation2 + $0x13a] sm:$0xff] %v2200
        %2233 = vst [vmem:[#allocation2 + $0x142] sm:$0xff] %v2201
        %2234 = vst [vmem:[#allocation2 + $0x152] sm:$0xff] %v2202
        %2235 = vst [vmem:[#allocation2 + $0x15a] sm:$0xff] %v2203
        %2236 = vst [vmem:[#allocation2 + $0x16a] sm:$0xff] %v2204
        %2237 = vst [vmem:[#allocation2 + $0x172] sm:$0xff] %v2205
        %v2238 = vld [vmem:[#allocation2] sm:$0xff]
        %v2239 = vld [vmem:[#allocation2 + $0x8] sm:$0xff]
        %v2240 = vld [vmem:[#allocation2 + $0x18] sm:$0xff]
        %v2241 = vld [vmem:[#allocation2 + $0x20] sm:$0xff]
        %v2242 = vld [vmem:[#allocation2 + $0x30] sm:$0xff]
        %v2243 = vld [vmem:[#allocation2 + $0x38] sm:$0xff]
        %v2244 = vld [vmem:[#allocation2 + $0x48] sm:$0xff]
        %v2245 = vld [vmem:[#allocation2 + $0x50] sm:$0xff]
        %v2246 = vld [vmem:[#allocation2 + $0x60] sm:$0xff]
        %v2247 = vld [vmem:[#allocation2 + $0x68] sm:$0xff]
        %v2248 = vld [vmem:[#allocation2 + $0x78] sm:$0xff]
        %v2249 = vld [vmem:[#allocation2 + $0x80] sm:$0xff]
        %v2250 = vld [vmem:[#allocation2 + $0x90] sm:$0xff]
        %v2251 = vld [vmem:[#allocation2 + $0x98] sm:$0xff]
        %v2252 = vld [vmem:[#allocation2 + $0xa8] sm:$0xff]
        %v2253 = vld [vmem:[#allocation2 + $0xb0] sm:$0xff]
        %v2254 = vld [vmem:[#allocation2 + $0xc0] sm:$0xff]
        %v2255 = vld [vmem:[#allocation2 + $0xc8] sm:$0xff]
        %v2256 = vld [vmem:[#allocation2 + $0xd8] sm:$0xff]
        %v2257 = vld [vmem:[#allocation2 + $0xe0] sm:$0xff]
        %v2258 = vld [vmem:[#allocation2 + $0xf0] sm:$0xff]
        %v2259 = vld [vmem:[#allocation2 + $0xf8] sm:$0xff]
        %v2260 = vld [vmem:[#allocation2 + $0x108] sm:$0xff]
        %v2261 = vld [vmem:[#allocation2 + $0x110] sm:$0xff]
        %v2262 = vld [vmem:[#allocation2 + $0x120] sm:$0xff]
        %v2263 = vld [vmem:[#allocation2 + $0x128] sm:$0xff]
        %v2264 = vld [vmem:[#allocation2 + $0x138] sm:$0xff]
        %v2265 = vld [vmem:[#allocation2 + $0x140] sm:$0xff]
        %v2266 = vld [vmem:[#allocation2 + $0x150] sm:$0xff]
        %v2267 = vld [vmem:[#allocation2 + $0x158] sm:$0xff]
        %v2268 = vld [vmem:[#allocation2 + $0x168] sm:$0xff]
        %v2269 = vld [vmem:[#allocation2 + $0x170] sm:$0xff]
        %v2270 = vld [vmem:[#allocation2 + $0x1] sm:$0xff]
        %v2271 = vld [vmem:[#allocation2 + $0x9] sm:$0xff]
        %v2272 = vld [vmem:[#allocation2 + $0x19] sm:$0xff]
        %v2273 = vld [vmem:[#allocation2 + $0x21] sm:$0xff]
        %v2274 = vld [vmem:[#allocation2 + $0x31] sm:$0xff]
        %v2275 = vld [vmem:[#allocation2 + $0x39] sm:$0xff]
        %v2276 = vld [vmem:[#allocation2 + $0x49] sm:$0xff]
        %v2277 = vld [vmem:[#allocation2 + $0x51] sm:$0xff]
        %v2278 = vld [vmem:[#allocation2 + $0x61] sm:$0xff]
        %v2279 = vld [vmem:[#allocation2 + $0x69] sm:$0xff]
        %v2280 = vld [vmem:[#allocation2 + $0x79] sm:$0xff]
        %v2281 = vld [vmem:[#allocation2 + $0x81] sm:$0xff]
        %v2282 = vld [vmem:[#allocation2 + $0x91] sm:$0xff]
        %v2283 = vld [vmem:[#allocation2 + $0x99] sm:$0xff]
        %v2284 = vld [vmem:[#allocation2 + $0xa9] sm:$0xff]
        %v2285 = vld [vmem:[#allocation2 + $0xb1] sm:$0xff]
        %v2286 = vld [vmem:[#allocation2 + $0xc1] sm:$0xff]
        %v2287 = vld [vmem:[#allocation2 + $0xc9] sm:$0xff]
        %v2288 = vld [vmem:[#allocation2 + $0xd9] sm:$0xff]
        %v2289 = vld [vmem:[#allocation2 + $0xe1] sm:$0xff]
        %v2290 = vld [vmem:[#allocation2 + $0xf1] sm:$0xff]
        %v2291 = vld [vmem:[#allocation2 + $0xf9] sm:$0xff]
        %v2292 = vld [vmem:[#allocation2 + $0x109] sm:$0xff]
        %v2293 = vld [vmem:[#allocation2 + $0x111] sm:$0xff]
        %v2294 = vld [vmem:[#allocation2 + $0x121] sm:$0xff]
        %v2295 = vld [vmem:[#allocation2 + $0x129] sm:$0xff]
        %v2296 = vld [vmem:[#allocation2 + $0x139] sm:$0xff]
        %v2297 = vld [vmem:[#allocation2 + $0x141] sm:$0xff]
        %v2298 = vld [vmem:[#allocation2 + $0x151] sm:$0xff]
        %v2299 = vld [vmem:[#allocation2 + $0x159] sm:$0xff]
        %v2300 = vld [vmem:[#allocation2 + $0x169] sm:$0xff]
        %v2301 = vld [vmem:[#allocation2 + $0x171] sm:$0xff]
        %v2302 = vmax.f32 %v2238, %v2270
        %v2303 = vmax.f32 %v2239, %v2271
        %v2304 = vmax.f32 %v2240, %v2272
        %v2305 = vmax.f32 %v2241, %v2273
        %v2306 = vmax.f32 %v2242, %v2274
        %v2307 = vmax.f32 %v2243, %v2275
        %v2308 = vmax.f32 %v2244, %v2276
        %v2309 = vmax.f32 %v2245, %v2277
        %v2310 = vmax.f32 %v2246, %v2278
        %v2311 = vmax.f32 %v2247, %v2279
        %v2312 = vmax.f32 %v2248, %v2280
        %v2313 = vmax.f32 %v2249, %v2281
        %v2314 = vmax.f32 %v2250, %v2282
        %v2315 = vmax.f32 %v2251, %v2283
        %v2316 = vmax.f32 %v2252, %v2284
        %v2317 = vmax.f32 %v2253, %v2285
        %v2318 = vmax.f32 %v2254, %v2286
        %v2319 = vmax.f32 %v2255, %v2287
        %v2320 = vmax.f32 %v2256, %v2288
        %v2321 = vmax.f32 %v2257, %v2289
        %v2322 = vmax.f32 %v2258, %v2290
        %v2323 = vmax.f32 %v2259, %v2291
        %v2324 = vmax.f32 %v2260, %v2292
        %v2325 = vmax.f32 %v2261, %v2293
        %v2326 = vmax.f32 %v2262, %v2294
        %v2327 = vmax.f32 %v2263, %v2295
        %v2328 = vmax.f32 %v2264, %v2296
        %v2329 = vmax.f32 %v2265, %v2297
        %v2330 = vmax.f32 %v2266, %v2298
        %v2331 = vmax.f32 %v2267, %v2299
        %v2332 = vmax.f32 %v2268, %v2300
        %v2333 = vmax.f32 %v2269, %v2301
        %v2334 = vld [vmem:[#allocation2 + $0x2] sm:$0xff]
        %v2335 = vld [vmem:[#allocation2 + $0xa] sm:$0xff]
        %v2336 = vld [vmem:[#allocation2 + $0x1a] sm:$0xff]
        %v2337 = vld [vmem:[#allocation2 + $0x22] sm:$0xff]
        %v2338 = vld [vmem:[#allocation2 + $0x32] sm:$0xff]
        %v2339 = vld [vmem:[#allocation2 + $0x3a] sm:$0xff]
        %v2340 = vld [vmem:[#allocation2 + $0x4a] sm:$0xff]
        %v2341 = vld [vmem:[#allocation2 + $0x52] sm:$0xff]
        %v2342 = vld [vmem:[#allocation2 + $0x62] sm:$0xff]
        %v2343 = vld [vmem:[#allocation2 + $0x6a] sm:$0xff]
        %v2344 = vld [vmem:[#allocation2 + $0x7a] sm:$0xff]
        %v2345 = vld [vmem:[#allocation2 + $0x82] sm:$0xff]
        %v2346 = vld [vmem:[#allocation2 + $0x92] sm:$0xff]
        %v2347 = vld [vmem:[#allocation2 + $0x9a] sm:$0xff]
        %v2348 = vld [vmem:[#allocation2 + $0xaa] sm:$0xff]
        %v2349 = vld [vmem:[#allocation2 + $0xb2] sm:$0xff]
        %v2350 = vld [vmem:[#allocation2 + $0xc2] sm:$0xff]
        %v2351 = vld [vmem:[#allocation2 + $0xca] sm:$0xff]
        %v2352 = vld [vmem:[#allocation2 + $0xda] sm:$0xff]
        %v2353 = vld [vmem:[#allocation2 + $0xe2] sm:$0xff]
        %v2354 = vld [vmem:[#allocation2 + $0xf2] sm:$0xff]
        %v2355 = vld [vmem:[#allocation2 + $0xfa] sm:$0xff]
        %v2356 = vld [vmem:[#allocation2 + $0x10a] sm:$0xff]
        %v2357 = vld [vmem:[#allocation2 + $0x112] sm:$0xff]
        %v2358 = vld [vmem:[#allocation2 + $0x122] sm:$0xff]
        %v2359 = vld [vmem:[#allocation2 + $0x12a] sm:$0xff]
        %v2360 = vld [vmem:[#allocation2 + $0x13a] sm:$0xff]
        %v2361 = vld [vmem:[#allocation2 + $0x142] sm:$0xff]
        %v2362 = vld [vmem:[#allocation2 + $0x152] sm:$0xff]
        %v2363 = vld [vmem:[#allocation2 + $0x15a] sm:$0xff]
        %v2364 = vld [vmem:[#allocation2 + $0x16a] sm:$0xff]
        %v2365 = vld [vmem:[#allocation2 + $0x172] sm:$0xff]
        %v2366 = vmax.f32 %v2302, %v2334
        %v2367 = vmax.f32 %v2303, %v2335
        %v2368 = vmax.f32 %v2304, %v2336
        %v2369 = vmax.f32 %v2305, %v2337
        %v2370 = vmax.f32 %v2306, %v2338
        %v2371 = vmax.f32 %v2307, %v2339
        %v2372 = vmax.f32 %v2308, %v2340
        %v2373 = vmax.f32 %v2309, %v2341
        %v2374 = vmax.f32 %v2310, %v2342
        %v2375 = vmax.f32 %v2311, %v2343
        %v2376 = vmax.f32 %v2312, %v2344
        %v2377 = vmax.f32 %v2313, %v2345
        %v2378 = vmax.f32 %v2314, %v2346
        %v2379 = vmax.f32 %v2315, %v2347
        %v2380 = vmax.f32 %v2316, %v2348
        %v2381 = vmax.f32 %v2317, %v2349
        %v2382 = vmax.f32 %v2318, %v2350
        %v2383 = vmax.f32 %v2319, %v2351
        %v2384 = vmax.f32 %v2320, %v2352
        %v2385 = vmax.f32 %v2321, %v2353
        %v2386 = vmax.f32 %v2322, %v2354
        %v2387 = vmax.f32 %v2323, %v2355
        %v2388 = vmax.f32 %v2324, %v2356
        %v2389 = vmax.f32 %v2325, %v2357
        %v2390 = vmax.f32 %v2326, %v2358
        %v2391 = vmax.f32 %v2327, %v2359
        %v2392 = vmax.f32 %v2328, %v2360
        %v2393 = vmax.f32 %v2329, %v2361
        %v2394 = vmax.f32 %v2330, %v2362
        %v2395 = vmax.f32 %v2331, %v2363
        %v2396 = vmax.f32 %v2332, %v2364
        %v2397 = vmax.f32 %v2333, %v2365
        %v2398 = vld [vmem:[#allocation2 + $0x3] sm:$0xff]
        %v2399 = vld [vmem:[#allocation2 + $0xb] sm:$0xff]
        %v2400 = vld [vmem:[#allocation2 + $0x1b] sm:$0xff]
        %v2401 = vld [vmem:[#allocation2 + $0x23] sm:$0xff]
        %v2402 = vld [vmem:[#allocation2 + $0x33] sm:$0xff]
        %v2403 = vld [vmem:[#allocation2 + $0x3b] sm:$0xff]
        %v2404 = vld [vmem:[#allocation2 + $0x4b] sm:$0xff]
        %v2405 = vld [vmem:[#allocation2 + $0x53] sm:$0xff]
        %v2406 = vld [vmem:[#allocation2 + $0x63] sm:$0xff]
        %v2407 = vld [vmem:[#allocation2 + $0x6b] sm:$0xff]
        %v2408 = vld [vmem:[#allocation2 + $0x7b] sm:$0xff]
        %v2409 = vld [vmem:[#allocation2 + $0x83] sm:$0xff]
        %v2410 = vld [vmem:[#allocation2 + $0x93] sm:$0xff]
        %v2411 = vld [vmem:[#allocation2 + $0x9b] sm:$0xff]
        %v2412 = vld [vmem:[#allocation2 + $0xab] sm:$0xff]
        %v2413 = vld [vmem:[#allocation2 + $0xb3] sm:$0xff]
        %v2414 = vld [vmem:[#allocation2 + $0xc3] sm:$0xff]
        %v2415 = vld [vmem:[#allocation2 + $0xcb] sm:$0xff]
        %v2416 = vld [vmem:[#allocation2 + $0xdb] sm:$0xff]
        %v2417 = vld [vmem:[#allocation2 + $0xe3] sm:$0xff]
        %v2418 = vld [vmem:[#allocation2 + $0xf3] sm:$0xff]
        %v2419 = vld [vmem:[#allocation2 + $0xfb] sm:$0xff]
        %v2420 = vld [vmem:[#allocation2 + $0x10b] sm:$0xff]
        %v2421 = vld [vmem:[#allocation2 + $0x113] sm:$0xff]
        %v2422 = vld [vmem:[#allocation2 + $0x123] sm:$0xff]
        %v2423 = vld [vmem:[#allocation2 + $0x12b] sm:$0xff]
        %v2424 = vld [vmem:[#allocation2 + $0x13b] sm:$0xff]
        %v2425 = vld [vmem:[#allocation2 + $0x143] sm:$0xff]
        %v2426 = vld [vmem:[#allocation2 + $0x153] sm:$0xff]
        %v2427 = vld [vmem:[#allocation2 + $0x15b] sm:$0xff]
        %v2428 = vld [vmem:[#allocation2 + $0x16b] sm:$0xff]
        %v2429 = vld [vmem:[#allocation2 + $0x173] sm:$0xff]
        %v2430 = vmax.f32 %v2366, %v2398
        %v2431 = vmax.f32 %v2367, %v2399
        %v2432 = vmax.f32 %v2368, %v2400
        %v2433 = vmax.f32 %v2369, %v2401
        %v2434 = vmax.f32 %v2370, %v2402
        %v2435 = vmax.f32 %v2371, %v2403
        %v2436 = vmax.f32 %v2372, %v2404
        %v2437 = vmax.f32 %v2373, %v2405
        %v2438 = vmax.f32 %v2374, %v2406
        %v2439 = vmax.f32 %v2375, %v2407
        %v2440 = vmax.f32 %v2376, %v2408
        %v2441 = vmax.f32 %v2377, %v2409
        %v2442 = vmax.f32 %v2378, %v2410
        %v2443 = vmax.f32 %v2379, %v2411
        %v2444 = vmax.f32 %v2380, %v2412
        %v2445 = vmax.f32 %v2381, %v2413
        %v2446 = vmax.f32 %v2382, %v2414
        %v2447 = vmax.f32 %v2383, %v2415
        %v2448 = vmax.f32 %v2384, %v2416
        %v2449 = vmax.f32 %v2385, %v2417
        %v2450 = vmax.f32 %v2386, %v2418
        %v2451 = vmax.f32 %v2387, %v2419
        %v2452 = vmax.f32 %v2388, %v2420
        %v2453 = vmax.f32 %v2389, %v2421
        %v2454 = vmax.f32 %v2390, %v2422
        %v2455 = vmax.f32 %v2391, %v2423
        %v2456 = vmax.f32 %v2392, %v2424
        %v2457 = vmax.f32 %v2393, %v2425
        %v2458 = vmax.f32 %v2394, %v2426
        %v2459 = vmax.f32 %v2395, %v2427
        %v2460 = vmax.f32 %v2396, %v2428
        %v2461 = vmax.f32 %v2397, %v2429
        %v2462 = vld [vmem:[#allocation2 + $0x4] sm:$0xff]
        %v2463 = vld [vmem:[#allocation2 + $0xc] sm:$0xff]
        %v2464 = vld [vmem:[#allocation2 + $0x1c] sm:$0xff]
        %v2465 = vld [vmem:[#allocation2 + $0x24] sm:$0xff]
        %v2466 = vld [vmem:[#allocation2 + $0x34] sm:$0xff]
        %v2467 = vld [vmem:[#allocation2 + $0x3c] sm:$0xff]
        %v2468 = vld [vmem:[#allocation2 + $0x4c] sm:$0xff]
        %v2469 = vld [vmem:[#allocation2 + $0x54] sm:$0xff]
        %v2470 = vld [vmem:[#allocation2 + $0x64] sm:$0xff]
        %v2471 = vld [vmem:[#allocation2 + $0x6c] sm:$0xff]
        %v2472 = vld [vmem:[#allocation2 + $0x7c] sm:$0xff]
        %v2473 = vld [vmem:[#allocation2 + $0x84] sm:$0xff]
        %v2474 = vld [vmem:[#allocation2 + $0x94] sm:$0xff]
        %v2475 = vld [vmem:[#allocation2 + $0x9c] sm:$0xff]
        %v2476 = vld [vmem:[#allocation2 + $0xac] sm:$0xff]
        %v2477 = vld [vmem:[#allocation2 + $0xb4] sm:$0xff]
        %v2478 = vld [vmem:[#allocation2 + $0xc4] sm:$0xff]
        %v2479 = vld [vmem:[#allocation2 + $0xcc] sm:$0xff]
        %v2480 = vld [vmem:[#allocation2 + $0xdc] sm:$0xff]
        %v2481 = vld [vmem:[#allocation2 + $0xe4] sm:$0xff]
        %v2482 = vld [vmem:[#allocation2 + $0xf4] sm:$0xff]
        %v2483 = vld [vmem:[#allocation2 + $0xfc] sm:$0xff]
        %v2484 = vld [vmem:[#allocation2 + $0x10c] sm:$0xff]
        %v2485 = vld [vmem:[#allocation2 + $0x114] sm:$0xff]
        %v2486 = vld [vmem:[#allocation2 + $0x124] sm:$0xff]
        %v2487 = vld [vmem:[#allocation2 + $0x12c] sm:$0xff]
        %v2488 = vld [vmem:[#allocation2 + $0x13c] sm:$0xff]
        %v2489 = vld [vmem:[#allocation2 + $0x144] sm:$0xff]
        %v2490 = vld [vmem:[#allocation2 + $0x154] sm:$0xff]
        %v2491 = vld [vmem:[#allocation2 + $0x15c] sm:$0xff]
        %v2492 = vld [vmem:[#allocation2 + $0x16c] sm:$0xff]
        %v2493 = vld [vmem:[#allocation2 + $0x174] sm:$0xff]
        %v2494 = vmax.f32 %v2430, %v2462
        %v2495 = vmax.f32 %v2431, %v2463
        %v2496 = vmax.f32 %v2432, %v2464
        %v2497 = vmax.f32 %v2433, %v2465
        %v2498 = vmax.f32 %v2434, %v2466
        %v2499 = vmax.f32 %v2435, %v2467
        %v2500 = vmax.f32 %v2436, %v2468
        %v2501 = vmax.f32 %v2437, %v2469
        %v2502 = vmax.f32 %v2438, %v2470
        %v2503 = vmax.f32 %v2439, %v2471
        %v2504 = vmax.f32 %v2440, %v2472
        %v2505 = vmax.f32 %v2441, %v2473
        %v2506 = vmax.f32 %v2442, %v2474
        %v2507 = vmax.f32 %v2443, %v2475
        %v2508 = vmax.f32 %v2444, %v2476
        %v2509 = vmax.f32 %v2445, %v2477
        %v2510 = vmax.f32 %v2446, %v2478
        %v2511 = vmax.f32 %v2447, %v2479
        %v2512 = vmax.f32 %v2448, %v2480
        %v2513 = vmax.f32 %v2449, %v2481
        %v2514 = vmax.f32 %v2450, %v2482
        %v2515 = vmax.f32 %v2451, %v2483
        %v2516 = vmax.f32 %v2452, %v2484
        %v2517 = vmax.f32 %v2453, %v2485
        %v2518 = vmax.f32 %v2454, %v2486
        %v2519 = vmax.f32 %v2455, %v2487
        %v2520 = vmax.f32 %v2456, %v2488
        %v2521 = vmax.f32 %v2457, %v2489
        %v2522 = vmax.f32 %v2458, %v2490
        %v2523 = vmax.f32 %v2459, %v2491
        %v2524 = vmax.f32 %v2460, %v2492
        %v2525 = vmax.f32 %v2461, %v2493
        %2526 = vst [vmem:[%s1242] sm:$0xff] %v2494
        %2527 = vst [vmem:[%s1242 + $0x8] sm:$0xff] %v2495
        %2528 = vst [vmem:[%s1242 + $0x10] sm:$0xff] %v2496
        %2529 = vst [vmem:[%s1242 + $0x18] sm:$0xff] %v2497
        %2530 = vst [vmem:[%s1242 + $0x20] sm:$0xff] %v2498
        %2531 = vst [vmem:[%s1242 + $0x28] sm:$0xff] %v2499
        %2532 = vst [vmem:[%s1242 + $0x30] sm:$0xff] %v2500
        %2533 = vst [vmem:[%s1242 + $0x38] sm:$0xff] %v2501
        %2534 = vst [vmem:[%s1242 + $0x40] sm:$0xff] %v2502
        %2535 = vst [vmem:[%s1242 + $0x48] sm:$0xff] %v2503
        %2536 = vst [vmem:[%s1242 + $0x50] sm:$0xff] %v2504
        %2537 = vst [vmem:[%s1242 + $0x58] sm:$0xff] %v2505
        %2538 = vst [vmem:[%s1242 + $0x60] sm:$0xff] %v2506
        %2539 = vst [vmem:[%s1242 + $0x68] sm:$0xff] %v2507
        %2540 = vst [vmem:[%s1242 + $0x70] sm:$0xff] %v2508
        %2541 = vst [vmem:[%s1242 + $0x78] sm:$0xff] %v2509
        %2542 = vst [vmem:[%s1242 + $0x80] sm:$0xff] %v2510
        %2543 = vst [vmem:[%s1242 + $0x88] sm:$0xff] %v2511
        %2544 = vst [vmem:[%s1242 + $0x90] sm:$0xff] %v2512
        %2545 = vst [vmem:[%s1242 + $0x98] sm:$0xff] %v2513
        %2546 = vst [vmem:[%s1242 + $0xa0] sm:$0xff] %v2514
        %2547 = vst [vmem:[%s1242 + $0xa8] sm:$0xff] %v2515
        %2548 = vst [vmem:[%s1242 + $0xb0] sm:$0xff] %v2516
        %2549 = vst [vmem:[%s1242 + $0xb8] sm:$0xff] %v2517
        %2550 = vst [vmem:[%s1242 + $0xc0] sm:$0xff] %v2518
        %2551 = vst [vmem:[%s1242 + $0xc8] sm:$0xff] %v2519
        %2552 = vst [vmem:[%s1242 + $0xd0] sm:$0xff] %v2520
        %2553 = vst [vmem:[%s1242 + $0xd8] sm:$0xff] %v2521
        %2554 = vst [vmem:[%s1242 + $0xe0] sm:$0xff] %v2522
        %2555 = vst [vmem:[%s1242 + $0xe8] sm:$0xff] %v2523
        %2556 = vst [vmem:[%s1242 + $0xf0] sm:$0xff] %v2524
        %2557 = vst [vmem:[%s1242 + $0xf8] sm:$0xff] %v2525
        %v2558 = vld [vmem:[#allocation3] sm:$0xff]
        %v2559 = vld [vmem:[#allocation3 + $0x8] sm:$0xff]
        %v2560 = vld [vmem:[#allocation3 + $0x10] sm:$0xff]
        %v2561 = vld [vmem:[#allocation3 + $0x18] sm:$0xff]
        %v2562 = vld [vmem:[#allocation3 + $0x20] sm:$0xff]
        %v2563 = vld [vmem:[#allocation3 + $0x28] sm:$0xff]
        %v2564 = vld [vmem:[#allocation3 + $0x30] sm:$0xff]
        %v2565 = vld [vmem:[#allocation3 + $0x38] sm:$0xff]
        %v2566 = vld [vmem:[#allocation3 + $0x40] sm:$0xff]
        %v2567 = vld [vmem:[#allocation3 + $0x48] sm:$0xff]
        %v2568 = vld [vmem:[#allocation3 + $0x50] sm:$0xff]
        %v2569 = vld [vmem:[#allocation3 + $0x58] sm:$0xff]
        %v2570 = vld [vmem:[#allocation3 + $0x60] sm:$0xff]
        %v2571 = vld [vmem:[#allocation3 + $0x68] sm:$0xff]
        %v2572 = vld [vmem:[#allocation3 + $0x70] sm:$0xff]
        %v2573 = vld [vmem:[#allocation3 + $0x78] sm:$0xff]
        %v2574 = vld [vmem:[#allocation3 + $0x80] sm:$0xff]
        %v2575 = vld [vmem:[#allocation3 + $0x88] sm:$0xff]
        %v2576 = vld [vmem:[#allocation3 + $0x90] sm:$0xff]
        %v2577 = vld [vmem:[#allocation3 + $0x98] sm:$0xff]
        %v2578 = vld [vmem:[#allocation3 + $0xa0] sm:$0xff]
        %v2579 = vld [vmem:[#allocation3 + $0xa8] sm:$0xff]
        %v2580 = vld [vmem:[#allocation3 + $0xb0] sm:$0xff]
        %v2581 = vld [vmem:[#allocation3 + $0xb8] sm:$0xff]
        %v2582 = vld [vmem:[#allocation3 + $0xc0] sm:$0xff]
        %v2583 = vld [vmem:[#allocation3 + $0xc8] sm:$0xff]
        %v2584 = vld [vmem:[#allocation3 + $0xd0] sm:$0xff]
        %v2585 = vld [vmem:[#allocation3 + $0xd8] sm:$0xff]
        %v2586 = vld [vmem:[#allocation3 + $0xe0] sm:$0xff]
        %v2587 = vld [vmem:[#allocation3 + $0xe8] sm:$0xff]
        %v2588 = vld [vmem:[#allocation3 + $0xf0] sm:$0xff]
        %v2589 = vld [vmem:[#allocation3 + $0xf8] sm:$0xff]
        %v2590 = vld [vmem:[%s1307] sm:$0xff]
        %v2591 = vld [vmem:[%s1307 + $0x8] sm:$0xff]
        %v2592 = vld [vmem:[%s1307 + $0x10] sm:$0xff]
        %v2593 = vld [vmem:[%s1307 + $0x18] sm:$0xff]
        %v2594 = vld [vmem:[%s1307 + $0x20] sm:$0xff]
        %v2595 = vld [vmem:[%s1307 + $0x28] sm:$0xff]
        %v2596 = vld [vmem:[%s1307 + $0x30] sm:$0xff]
        %v2597 = vld [vmem:[%s1307 + $0x38] sm:$0xff]
        %v2598 = vld [vmem:[%s1307 + $0x40] sm:$0xff]
        %v2599 = vld [vmem:[%s1307 + $0x48] sm:$0xff]
        %v2600 = vld [vmem:[%s1307 + $0x50] sm:$0xff]
        %v2601 = vld [vmem:[%s1307 + $0x58] sm:$0xff]
        %v2602 = vld [vmem:[%s1307 + $0x60] sm:$0xff]
        %v2603 = vld [vmem:[%s1307 + $0x68] sm:$0xff]
        %v2604 = vld [vmem:[%s1307 + $0x70] sm:$0xff]
        %v2605 = vld [vmem:[%s1307 + $0x78] sm:$0xff]
        %v2606 = vld [vmem:[%s1307 + $0x80] sm:$0xff]
        %v2607 = vld [vmem:[%s1307 + $0x88] sm:$0xff]
        %v2608 = vld [vmem:[%s1307 + $0x90] sm:$0xff]
        %v2609 = vld [vmem:[%s1307 + $0x98] sm:$0xff]
        %v2610 = vld [vmem:[%s1307 + $0xa0] sm:$0xff]
        %v2611 = vld [vmem:[%s1307 + $0xa8] sm:$0xff]
        %v2612 = vld [vmem:[%s1307 + $0xb0] sm:$0xff]
        %v2613 = vld [vmem:[%s1307 + $0xb8] sm:$0xff]
        %v2614 = vld [vmem:[%s1307 + $0xc0] sm:$0xff]
        %v2615 = vld [vmem:[%s1307 + $0xc8] sm:$0xff]
        %v2616 = vld [vmem:[%s1307 + $0xd0] sm:$0xff]
        %v2617 = vld [vmem:[%s1307 + $0xd8] sm:$0xff]
        %v2618 = vld [vmem:[%s1307 + $0xe0] sm:$0xff]
        %v2619 = vld [vmem:[%s1307 + $0xe8] sm:$0xff]
        %v2620 = vld [vmem:[%s1307 + $0xf0] sm:$0xff]
        %v2621 = vld [vmem:[%s1307 + $0xf8] sm:$0xff]
        %v2622 = vmax.f32 %v2558, %v2590
        %v2623 = vmax.f32 %v2559, %v2591
        %v2624 = vmax.f32 %v2560, %v2592
        %v2625 = vmax.f32 %v2561, %v2593
        %v2626 = vmax.f32 %v2562, %v2594
        %v2627 = vmax.f32 %v2563, %v2595
        %v2628 = vmax.f32 %v2564, %v2596
        %v2629 = vmax.f32 %v2565, %v2597
        %v2630 = vmax.f32 %v2566, %v2598
        %v2631 = vmax.f32 %v2567, %v2599
        %v2632 = vmax.f32 %v2568, %v2600
        %v2633 = vmax.f32 %v2569, %v2601
        %v2634 = vmax.f32 %v2570, %v2602
        %v2635 = vmax.f32 %v2571, %v2603
        %v2636 = vmax.f32 %v2572, %v2604
        %v2637 = vmax.f32 %v2573, %v2605
        %v2638 = vmax.f32 %v2574, %v2606
        %v2639 = vmax.f32 %v2575, %v2607
        %v2640 = vmax.f32 %v2576, %v2608
        %v2641 = vmax.f32 %v2577, %v2609
        %v2642 = vmax.f32 %v2578, %v2610
        %v2643 = vmax.f32 %v2579, %v2611
        %v2644 = vmax.f32 %v2580, %v2612
        %v2645 = vmax.f32 %v2581, %v2613
        %v2646 = vmax.f32 %v2582, %v2614
        %v2647 = vmax.f32 %v2583, %v2615
        %v2648 = vmax.f32 %v2584, %v2616
        %v2649 = vmax.f32 %v2585, %v2617
        %v2650 = vmax.f32 %v2586, %v2618
        %v2651 = vmax.f32 %v2587, %v2619
        %v2652 = vmax.f32 %v2588, %v2620
        %v2653 = vmax.f32 %v2589, %v2621
        %v2654 = vld [vmem:[%s1242] sm:$0xff]
        %v2655 = vld [vmem:[%s1242 + $0x8] sm:$0xff]
        %v2656 = vld [vmem:[%s1242 + $0x10] sm:$0xff]
        %v2657 = vld [vmem:[%s1242 + $0x18] sm:$0xff]
        %v2658 = vld [vmem:[%s1242 + $0x20] sm:$0xff]
        %v2659 = vld [vmem:[%s1242 + $0x28] sm:$0xff]
        %v2660 = vld [vmem:[%s1242 + $0x30] sm:$0xff]
        %v2661 = vld [vmem:[%s1242 + $0x38] sm:$0xff]
        %v2662 = vld [vmem:[%s1242 + $0x40] sm:$0xff]
        %v2663 = vld [vmem:[%s1242 + $0x48] sm:$0xff]
        %v2664 = vld [vmem:[%s1242 + $0x50] sm:$0xff]
        %v2665 = vld [vmem:[%s1242 + $0x58] sm:$0xff]
        %v2666 = vld [vmem:[%s1242 + $0x60] sm:$0xff]
        %v2667 = vld [vmem:[%s1242 + $0x68] sm:$0xff]
        %v2668 = vld [vmem:[%s1242 + $0x70] sm:$0xff]
        %v2669 = vld [vmem:[%s1242 + $0x78] sm:$0xff]
        %v2670 = vld [vmem:[%s1242 + $0x80] sm:$0xff]
        %v2671 = vld [vmem:[%s1242 + $0x88] sm:$0xff]
        %v2672 = vld [vmem:[%s1242 + $0x90] sm:$0xff]
        %v2673 = vld [vmem:[%s1242 + $0x98] sm:$0xff]
        %v2674 = vld [vmem:[%s1242 + $0xa0] sm:$0xff]
        %v2675 = vld [vmem:[%s1242 + $0xa8] sm:$0xff]
        %v2676 = vld [vmem:[%s1242 + $0xb0] sm:$0xff]
        %v2677 = vld [vmem:[%s1242 + $0xb8] sm:$0xff]
        %v2678 = vld [vmem:[%s1242 + $0xc0] sm:$0xff]
        %v2679 = vld [vmem:[%s1242 + $0xc8] sm:$0xff]
        %v2680 = vld [vmem:[%s1242 + $0xd0] sm:$0xff]
        %v2681 = vld [vmem:[%s1242 + $0xd8] sm:$0xff]
        %v2682 = vld [vmem:[%s1242 + $0xe0] sm:$0xff]
        %v2683 = vld [vmem:[%s1242 + $0xe8] sm:$0xff]
        %v2684 = vld [vmem:[%s1242 + $0xf0] sm:$0xff]
        %v2685 = vld [vmem:[%s1242 + $0xf8] sm:$0xff]
        %v2686 = vmax.f32 %v2622, %v2654
        %v2687 = vmax.f32 %v2623, %v2655
        %v2688 = vmax.f32 %v2624, %v2656
        %v2689 = vmax.f32 %v2625, %v2657
        %v2690 = vmax.f32 %v2626, %v2658
        %v2691 = vmax.f32 %v2627, %v2659
        %v2692 = vmax.f32 %v2628, %v2660
        %v2693 = vmax.f32 %v2629, %v2661
        %v2694 = vmax.f32 %v2630, %v2662
        %v2695 = vmax.f32 %v2631, %v2663
        %v2696 = vmax.f32 %v2632, %v2664
        %v2697 = vmax.f32 %v2633, %v2665
        %v2698 = vmax.f32 %v2634, %v2666
        %v2699 = vmax.f32 %v2635, %v2667
        %v2700 = vmax.f32 %v2636, %v2668
        %v2701 = vmax.f32 %v2637, %v2669
        %v2702 = vmax.f32 %v2638, %v2670
        %v2703 = vmax.f32 %v2639, %v2671
        %v2704 = vmax.f32 %v2640, %v2672
        %v2705 = vmax.f32 %v2641, %v2673
        %v2706 = vmax.f32 %v2642, %v2674
        %v2707 = vmax.f32 %v2643, %v2675
        %v2708 = vmax.f32 %v2644, %v2676
        %v2709 = vmax.f32 %v2645, %v2677
        %v2710 = vmax.f32 %v2646, %v2678
        %v2711 = vmax.f32 %v2647, %v2679
        %v2712 = vmax.f32 %v2648, %v2680
        %v2713 = vmax.f32 %v2649, %v2681
        %v2714 = vmax.f32 %v2650, %v2682
        %v2715 = vmax.f32 %v2651, %v2683
        %v2716 = vmax.f32 %v2652, %v2684
        %v2717 = vmax.f32 %v2653, %v2685
        %v2718 = vld [vmem:[%s1436] sm:$0xff]
        %v2719 = vld [vmem:[%s1436 + $0x8] sm:$0xff]
        %v2720 = vld [vmem:[%s1436 + $0x10] sm:$0xff]
        %v2721 = vld [vmem:[%s1436 + $0x18] sm:$0xff]
        %v2722 = vld [vmem:[%s1436 + $0x20] sm:$0xff]
        %v2723 = vld [vmem:[%s1436 + $0x28] sm:$0xff]
        %v2724 = vld [vmem:[%s1436 + $0x30] sm:$0xff]
        %v2725 = vld [vmem:[%s1436 + $0x38] sm:$0xff]
        %v2726 = vld [vmem:[%s1436 + $0x40] sm:$0xff]
        %v2727 = vld [vmem:[%s1436 + $0x48] sm:$0xff]
        %v2728 = vld [vmem:[%s1436 + $0x50] sm:$0xff]
        %v2729 = vld [vmem:[%s1436 + $0x58] sm:$0xff]
        %v2730 = vld [vmem:[%s1436 + $0x60] sm:$0xff]
        %v2731 = vld [vmem:[%s1436 + $0x68] sm:$0xff]
        %v2732 = vld [vmem:[%s1436 + $0x70] sm:$0xff]
        %v2733 = vld [vmem:[%s1436 + $0x78] sm:$0xff]
        %v2734 = vld [vmem:[%s1436 + $0x80] sm:$0xff]
        %v2735 = vld [vmem:[%s1436 + $0x88] sm:$0xff]
        %v2736 = vld [vmem:[%s1436 + $0x90] sm:$0xff]
        %v2737 = vld [vmem:[%s1436 + $0x98] sm:$0xff]
        %v2738 = vld [vmem:[%s1436 + $0xa0] sm:$0xff]
        %v2739 = vld [vmem:[%s1436 + $0xa8] sm:$0xff]
        %v2740 = vld [vmem:[%s1436 + $0xb0] sm:$0xff]
        %v2741 = vld [vmem:[%s1436 + $0xb8] sm:$0xff]
        %v2742 = vld [vmem:[%s1436 + $0xc0] sm:$0xff]
        %v2743 = vld [vmem:[%s1436 + $0xc8] sm:$0xff]
        %v2744 = vld [vmem:[%s1436 + $0xd0] sm:$0xff]
        %v2745 = vld [vmem:[%s1436 + $0xd8] sm:$0xff]
        %v2746 = vld [vmem:[%s1436 + $0xe0] sm:$0xff]
        %v2747 = vld [vmem:[%s1436 + $0xe8] sm:$0xff]
        %v2748 = vld [vmem:[%s1436 + $0xf0] sm:$0xff]
        %v2749 = vld [vmem:[%s1436 + $0xf8] sm:$0xff]
        %v2750 = vmax.f32 %v2686, %v2718
        %v2751 = vmax.f32 %v2687, %v2719
        %v2752 = vmax.f32 %v2688, %v2720
        %v2753 = vmax.f32 %v2689, %v2721
        %v2754 = vmax.f32 %v2690, %v2722
        %v2755 = vmax.f32 %v2691, %v2723
        %v2756 = vmax.f32 %v2692, %v2724
        %v2757 = vmax.f32 %v2693, %v2725
        %v2758 = vmax.f32 %v2694, %v2726
        %v2759 = vmax.f32 %v2695, %v2727
        %v2760 = vmax.f32 %v2696, %v2728
        %v2761 = vmax.f32 %v2697, %v2729
        %v2762 = vmax.f32 %v2698, %v2730
        %v2763 = vmax.f32 %v2699, %v2731
        %v2764 = vmax.f32 %v2700, %v2732
        %v2765 = vmax.f32 %v2701, %v2733
        %v2766 = vmax.f32 %v2702, %v2734
        %v2767 = vmax.f32 %v2703, %v2735
        %v2768 = vmax.f32 %v2704, %v2736
        %v2769 = vmax.f32 %v2705, %v2737
        %v2770 = vmax.f32 %v2706, %v2738
        %v2771 = vmax.f32 %v2707, %v2739
        %v2772 = vmax.f32 %v2708, %v2740
        %v2773 = vmax.f32 %v2709, %v2741
        %v2774 = vmax.f32 %v2710, %v2742
        %v2775 = vmax.f32 %v2711, %v2743
        %v2776 = vmax.f32 %v2712, %v2744
        %v2777 = vmax.f32 %v2713, %v2745
        %v2778 = vmax.f32 %v2714, %v2746
        %v2779 = vmax.f32 %v2715, %v2747
        %v2780 = vmax.f32 %v2716, %v2748
        %v2781 = vmax.f32 %v2717, %v2749
        %v2782 = vld [vmem:[%s1501] sm:$0xff]
        %v2783 = vld [vmem:[%s1501 + $0x8] sm:$0xff]
        %v2784 = vld [vmem:[%s1501 + $0x10] sm:$0xff]
        %v2785 = vld [vmem:[%s1501 + $0x18] sm:$0xff]
        %v2786 = vld [vmem:[%s1501 + $0x20] sm:$0xff]
        %v2787 = vld [vmem:[%s1501 + $0x28] sm:$0xff]
        %v2788 = vld [vmem:[%s1501 + $0x30] sm:$0xff]
        %v2789 = vld [vmem:[%s1501 + $0x38] sm:$0xff]
        %v2790 = vld [vmem:[%s1501 + $0x40] sm:$0xff]
        %v2791 = vld [vmem:[%s1501 + $0x48] sm:$0xff]
        %v2792 = vld [vmem:[%s1501 + $0x50] sm:$0xff]
        %v2793 = vld [vmem:[%s1501 + $0x58] sm:$0xff]
        %v2794 = vld [vmem:[%s1501 + $0x60] sm:$0xff]
        %v2795 = vld [vmem:[%s1501 + $0x68] sm:$0xff]
        %v2796 = vld [vmem:[%s1501 + $0x70] sm:$0xff]
        %v2797 = vld [vmem:[%s1501 + $0x78] sm:$0xff]
        %v2798 = vld [vmem:[%s1501 + $0x80] sm:$0xff]
        %v2799 = vld [vmem:[%s1501 + $0x88] sm:$0xff]
        %v2800 = vld [vmem:[%s1501 + $0x90] sm:$0xff]
        %v2801 = vld [vmem:[%s1501 + $0x98] sm:$0xff]
        %v2802 = vld [vmem:[%s1501 + $0xa0] sm:$0xff]
        %v2803 = vld [vmem:[%s1501 + $0xa8] sm:$0xff]
        %v2804 = vld [vmem:[%s1501 + $0xb0] sm:$0xff]
        %v2805 = vld [vmem:[%s1501 + $0xb8] sm:$0xff]
        %v2806 = vld [vmem:[%s1501 + $0xc0] sm:$0xff]
        %v2807 = vld [vmem:[%s1501 + $0xc8] sm:$0xff]
        %v2808 = vld [vmem:[%s1501 + $0xd0] sm:$0xff]
        %v2809 = vld [vmem:[%s1501 + $0xd8] sm:$0xff]
        %v2810 = vld [vmem:[%s1501 + $0xe0] sm:$0xff]
        %v2811 = vld [vmem:[%s1501 + $0xe8] sm:$0xff]
        %v2812 = vld [vmem:[%s1501 + $0xf0] sm:$0xff]
        %v2813 = vld [vmem:[%s1501 + $0xf8] sm:$0xff]
        %v2814 = vmax.f32 %v2750, %v2782
        %v2815 = vmax.f32 %v2751, %v2783
        %v2816 = vmax.f32 %v2752, %v2784
        %v2817 = vmax.f32 %v2753, %v2785
        %v2818 = vmax.f32 %v2754, %v2786
        %v2819 = vmax.f32 %v2755, %v2787
        %v2820 = vmax.f32 %v2756, %v2788
        %v2821 = vmax.f32 %v2757, %v2789
        %v2822 = vmax.f32 %v2758, %v2790
        %v2823 = vmax.f32 %v2759, %v2791
        %v2824 = vmax.f32 %v2760, %v2792
        %v2825 = vmax.f32 %v2761, %v2793
        %v2826 = vmax.f32 %v2762, %v2794
        %v2827 = vmax.f32 %v2763, %v2795
        %v2828 = vmax.f32 %v2764, %v2796
        %v2829 = vmax.f32 %v2765, %v2797
        %v2830 = vmax.f32 %v2766, %v2798
        %v2831 = vmax.f32 %v2767, %v2799
        %v2832 = vmax.f32 %v2768, %v2800
        %v2833 = vmax.f32 %v2769, %v2801
        %v2834 = vmax.f32 %v2770, %v2802
        %v2835 = vmax.f32 %v2771, %v2803
        %v2836 = vmax.f32 %v2772, %v2804
        %v2837 = vmax.f32 %v2773, %v2805
        %v2838 = vmax.f32 %v2774, %v2806
        %v2839 = vmax.f32 %v2775, %v2807
        %v2840 = vmax.f32 %v2776, %v2808
        %v2841 = vmax.f32 %v2777, %v2809
        %v2842 = vmax.f32 %v2778, %v2810
        %v2843 = vmax.f32 %v2779, %v2811
        %v2844 = vmax.f32 %v2780, %v2812
        %v2845 = vmax.f32 %v2781, %v2813
        %v2846 = vld [vmem:[%s286] sm:$0xff]
        %v2847 = vld [vmem:[%s286 + $0x8] sm:$0xff]
        %v2848 = vld [vmem:[%s286 + $0x10] sm:$0xff]
        %v2849 = vld [vmem:[%s286 + $0x18] sm:$0xff]
        %v2850 = vld [vmem:[%s286 + $0x20] sm:$0xff]
        %v2851 = vld [vmem:[%s286 + $0x28] sm:$0xff]
        %v2852 = vld [vmem:[%s286 + $0x30] sm:$0xff]
        %v2853 = vld [vmem:[%s286 + $0x38] sm:$0xff]
        %v2854 = vld [vmem:[%s286 + $0x40] sm:$0xff]
        %v2855 = vld [vmem:[%s286 + $0x48] sm:$0xff]
        %v2856 = vld [vmem:[%s286 + $0x50] sm:$0xff]
        %v2857 = vld [vmem:[%s286 + $0x58] sm:$0xff]
        %v2858 = vld [vmem:[%s286 + $0x60] sm:$0xff]
        %v2859 = vld [vmem:[%s286 + $0x68] sm:$0xff]
        %v2860 = vld [vmem:[%s286 + $0x70] sm:$0xff]
        %v2861 = vld [vmem:[%s286 + $0x78] sm:$0xff]
        %s2862 = scalar_lea.vmem %s286, 128
        %v2863 = vld [vmem:[%s2862] sm:$0xff]
        %v2864 = vld [vmem:[%s2862 + $0x8] sm:$0xff]
        %v2865 = vld [vmem:[%s2862 + $0x10] sm:$0xff]
        %v2866 = vld [vmem:[%s2862 + $0x18] sm:$0xff]
        %v2867 = vld [vmem:[%s2862 + $0x20] sm:$0xff]
        %v2868 = vld [vmem:[%s2862 + $0x28] sm:$0xff]
        %v2869 = vld [vmem:[%s2862 + $0x30] sm:$0xff]
        %v2870 = vld [vmem:[%s2862 + $0x38] sm:$0xff]
        %v2871 = vld [vmem:[%s2862 + $0x40] sm:$0xff]
        %v2872 = vld [vmem:[%s2862 + $0x48] sm:$0xff]
        %v2873 = vld [vmem:[%s2862 + $0x50] sm:$0xff]
        %v2874 = vld [vmem:[%s2862 + $0x58] sm:$0xff]
        %v2875 = vld [vmem:[%s2862 + $0x60] sm:$0xff]
        %v2876 = vld [vmem:[%s2862 + $0x68] sm:$0xff]
        %v2877 = vld [vmem:[%s2862 + $0x70] sm:$0xff]
        %v2878 = vld [vmem:[%s2862 + $0x78] sm:$0xff]
        %2879 = vmatprep.subr.mxu0 0.0
        %2880 = vmatpush1.msra.mxu0 %v2878
        %2881 = vmatprep.subr.mxu0 0.0
        %2882 = vmatpush1.msra.mxu0 %v2877
        %2883 = vmatprep.subr.mxu0 0.0
        %2884 = vmatpush1.msra.mxu0 %v2876
        %2885 = vmatprep.subr.mxu0 0.0
        %2886 = vmatpush1.msra.mxu0 %v2875
        %2887 = vmatprep.subr.mxu0 0.0
        %2888 = vmatpush1.msra.mxu0 %v2874
        %2889 = vmatprep.subr.mxu0 0.0
        %2890 = vmatpush1.msra.mxu0 %v2873
        %2891 = vmatprep.subr.mxu0 0.0
        %2892 = vmatpush1.msra.mxu0 %v2872
        %2893 = vmatprep.subr.mxu0 0.0
        %2894 = vmatpush1.msra.mxu0 %v2871
        %2895 = vmatprep.subr.mxu0 0.0
        %2896 = vmatpush1.msra.mxu0 %v2870
        %2897 = vmatprep.subr.mxu0 0.0
        %2898 = vmatpush1.msra.mxu0 %v2869
        %2899 = vmatprep.subr.mxu0 0.0
        %2900 = vmatpush1.msra.mxu0 %v2868
        %2901 = vmatprep.subr.mxu0 0.0
        %2902 = vmatpush1.msra.mxu0 %v2867
        %2903 = vmatprep.subr.mxu0 0.0
        %2904 = vmatpush1.msra.mxu0 %v2866
        %2905 = vmatprep.subr.mxu0 0.0
        %2906 = vmatpush1.msra.mxu0 %v2865
        %2907 = vmatprep.subr.mxu0 0.0
        %2908 = vmatpush1.msra.mxu0 %v2864
        %2909 = vmatprep.subr.mxu0 0.0
        %2910 = vmatpush1.msra.mxu0 %v2863
        %2911 = vmatprep.subr.mxu0 0.0
        %2912 = vmatpush2.msra.mxu0 0.0
        %2913 = vmatprep.subr.mxu0 0.0
        %2914 = vmatpush2.msra.mxu0 0.0
        %2915 = vmatprep.subr.mxu0 0.0
        %2916 = vmatpush2.msra.mxu0 0.0
        %2917 = vmatprep.subr.mxu0 0.0
        %2918 = vmatpush2.msra.mxu0 0.0
        %2919 = vmatprep.subr.mxu0 0.0
        %2920 = vmatpush2.msra.mxu0 0.0
        %2921 = vmatprep.subr.mxu0 0.0
        %2922 = vmatpush2.msra.mxu0 0.0
        %2923 = vmatprep.subr.mxu0 0.0
        %2924 = vmatpush2.msra.mxu0 0.0
        %2925 = vmatprep.subr.mxu0 0.0
        %2926 = vmatpush2.msra.mxu0 0.0
        %2927 = vmatprep.subr.mxu0 0.0
        %2928 = vmatpush2.msra.mxu0 0.0
        %2929 = vmatprep.subr.mxu0 0.0
        %2930 = vmatpush2.msra.mxu0 0.0
        %2931 = vmatprep.subr.mxu0 0.0
        %2932 = vmatpush2.msra.mxu0 0.0
        %2933 = vmatprep.subr.mxu0 0.0
        %2934 = vmatpush2.msra.mxu0 0.0
        %2935 = vmatprep.subr.mxu0 0.0
        %2936 = vmatpush2.msra.mxu0 0.0
        %2937 = vmatprep.subr.mxu0 0.0
        %2938 = vmatpush2.msra.mxu0 0.0
        %2939 = vmatprep.subr.mxu0 0.0
        %2940 = vmatpush2.msra.mxu0 0.0
        %2941 = vmatprep.subr.mxu0 0.0
        %2942 = vmatpush2.msra.mxu0 0.0
        %2943 = vmatprep.mubr.f32.mxu0 0.0
        %2944 = vmatmul.mubr.f32.gmra.mxu0 %v1534
        %v2945 = vpop.f32.mrf.mxu0
        %v2946 = vadd.f32 0.0, %v2945
        %v2947 = vpop.f32.mrf.mxu0
        %2948 = vmatprep.mubr.f32.mxu0 0.0
        %2949 = vmatmul.mubr.f32.gmra.mxu0 %v1535
        %v2950 = vpop.f32.mrf.mxu0
        %v2951 = vadd.f32 0.0, %v2950
        %v2952 = vpop.f32.mrf.mxu0
        %2953 = vmatprep.mubr.f32.mxu0 0.0
        %2954 = vmatmul.mubr.f32.gmra.mxu0 %v1536
        %v2955 = vpop.f32.mrf.mxu0
        %v2956 = vadd.f32 0.0, %v2955
        %v2957 = vpop.f32.mrf.mxu0
        %2958 = vmatprep.mubr.f32.mxu0 0.0
        %2959 = vmatmul.mubr.f32.gmra.mxu0 %v1537
        %v2960 = vpop.f32.mrf.mxu0
        %v2961 = vadd.f32 0.0, %v2960
        %v2962 = vpop.f32.mrf.mxu0
        %2963 = vmatprep.mubr.f32.mxu0 0.0
        %2964 = vmatmul.mubr.f32.gmra.mxu0 %v1538
        %v2965 = vpop.f32.mrf.mxu0
        %v2966 = vadd.f32 0.0, %v2965
        %v2967 = vpop.f32.mrf.mxu0
        %2968 = vmatprep.mubr.f32.mxu0 0.0
        %2969 = vmatmul.mubr.f32.gmra.mxu0 %v1539
        %v2970 = vpop.f32.mrf.mxu0
        %v2971 = vadd.f32 0.0, %v2970
        %v2972 = vpop.f32.mrf.mxu0
        %2973 = vmatprep.mubr.f32.mxu0 0.0
        %2974 = vmatmul.mubr.f32.gmra.mxu0 %v1540
        %v2975 = vpop.f32.mrf.mxu0
        %v2976 = vadd.f32 0.0, %v2975
        %v2977 = vpop.f32.mrf.mxu0
        %2978 = vmatprep.mubr.f32.mxu0 0.0
        %2979 = vmatmul.mubr.f32.gmra.mxu0 %v1541
        %v2980 = vpop.f32.mrf.mxu0
        %v2981 = vadd.f32 0.0, %v2980
        %v2982 = vpop.f32.mrf.mxu0
        %2983 = vmatprep.mubr.f32.mxu0 0.0
        %2984 = vmatmul.mubr.f32.gmra.mxu0 %v1542
        %v2985 = vpop.f32.mrf.mxu0
        %v2986 = vadd.f32 0.0, %v2985
        %v2987 = vpop.f32.mrf.mxu0
        %2988 = vmatprep.mubr.f32.mxu0 0.0
        %2989 = vmatmul.mubr.f32.gmra.mxu0 %v1543
        %v2990 = vpop.f32.mrf.mxu0
        %v2991 = vadd.f32 0.0, %v2990
        %v2992 = vpop.f32.mrf.mxu0
        %2993 = vmatprep.mubr.f32.mxu0 0.0
        %2994 = vmatmul.mubr.f32.gmra.mxu0 %v1544
        %v2995 = vpop.f32.mrf.mxu0
        %v2996 = vadd.f32 0.0, %v2995
        %v2997 = vpop.f32.mrf.mxu0
        %2998 = vmatprep.mubr.f32.mxu0 0.0
        %2999 = vmatmul.mubr.f32.gmra.mxu0 %v1545
        %v3000 = vpop.f32.mrf.mxu0
        %v3001 = vadd.f32 0.0, %v3000
        %v3002 = vpop.f32.mrf.mxu0
        %3003 = vmatprep.mubr.f32.mxu0 0.0
        %3004 = vmatmul.mubr.f32.gmra.mxu0 %v1546
        %v3005 = vpop.f32.mrf.mxu0
        %v3006 = vadd.f32 0.0, %v3005
        %v3007 = vpop.f32.mrf.mxu0
        %3008 = vmatprep.mubr.f32.mxu0 0.0
        %3009 = vmatmul.mubr.f32.gmra.mxu0 %v1547
        %v3010 = vpop.f32.mrf.mxu0
        %v3011 = vadd.f32 0.0, %v3010
        %v3012 = vpop.f32.mrf.mxu0
        %3013 = vmatprep.mubr.f32.mxu0 0.0
        %3014 = vmatmul.mubr.f32.gmra.mxu0 %v1548
        %v3015 = vpop.f32.mrf.mxu0
        %v3016 = vadd.f32 0.0, %v3015
        %v3017 = vpop.f32.mrf.mxu0
        %3018 = vmatprep.mubr.f32.mxu0 0.0
        %3019 = vmatmul.mubr.f32.gmra.mxu0 %v1549
        %v3020 = vpop.f32.mrf.mxu0
        %v3021 = vadd.f32 0.0, %v3020
        %v3022 = vpop.f32.mrf.mxu0
        %3023 = vmatprep.mubr.f32.mxu0 0.0
        %3024 = vmatmul.mubr.f32.gmra.mxu0 %v1550
        %v3025 = vpop.f32.mrf.mxu0
        %v3026 = vadd.f32 0.0, %v3025
        %v3027 = vpop.f32.mrf.mxu0
        %3028 = vmatprep.mubr.f32.mxu0 0.0
        %3029 = vmatmul.mubr.f32.gmra.mxu0 %v1551
        %v3030 = vpop.f32.mrf.mxu0
        %v3031 = vadd.f32 0.0, %v3030
        %v3032 = vpop.f32.mrf.mxu0
        %3033 = vmatprep.mubr.f32.mxu0 0.0
        %3034 = vmatmul.mubr.f32.gmra.mxu0 %v1552
        %v3035 = vpop.f32.mrf.mxu0
        %v3036 = vadd.f32 0.0, %v3035
        %v3037 = vpop.f32.mrf.mxu0
        %3038 = vmatprep.mubr.f32.mxu0 0.0
        %3039 = vmatmul.mubr.f32.gmra.mxu0 %v1553
        %v3040 = vpop.f32.mrf.mxu0
        %v3041 = vadd.f32 0.0, %v3040
        %v3042 = vpop.f32.mrf.mxu0
        %3043 = vmatprep.mubr.f32.mxu0 0.0
        %3044 = vmatmul.mubr.f32.gmra.mxu0 %v1554
        %v3045 = vpop.f32.mrf.mxu0
        %v3046 = vadd.f32 0.0, %v3045
        %v3047 = vpop.f32.mrf.mxu0
        %3048 = vmatprep.mubr.f32.mxu0 0.0
        %3049 = vmatmul.mubr.f32.gmra.mxu0 %v1555
        %v3050 = vpop.f32.mrf.mxu0
        %v3051 = vadd.f32 0.0, %v3050
        %v3052 = vpop.f32.mrf.mxu0
        %3053 = vmatprep.mubr.f32.mxu0 0.0
        %3054 = vmatmul.mubr.f32.gmra.mxu0 %v1556
        %v3055 = vpop.f32.mrf.mxu0
        %v3056 = vadd.f32 0.0, %v3055
        %v3057 = vpop.f32.mrf.mxu0
        %3058 = vmatprep.mubr.f32.mxu0 0.0
        %3059 = vmatmul.mubr.f32.gmra.mxu0 %v1557
        %v3060 = vpop.f32.mrf.mxu0
        %v3061 = vadd.f32 0.0, %v3060
        %v3062 = vpop.f32.mrf.mxu0
        %3063 = vmatprep.mubr.f32.mxu0 0.0
        %3064 = vmatmul.mubr.f32.gmra.mxu0 %v1558
        %v3065 = vpop.f32.mrf.mxu0
        %v3066 = vadd.f32 0.0, %v3065
        %v3067 = vpop.f32.mrf.mxu0
        %3068 = vmatprep.mubr.f32.mxu0 0.0
        %3069 = vmatmul.mubr.f32.gmra.mxu0 %v1559
        %v3070 = vpop.f32.mrf.mxu0
        %v3071 = vadd.f32 0.0, %v3070
        %v3072 = vpop.f32.mrf.mxu0
        %3073 = vmatprep.mubr.f32.mxu0 0.0
        %3074 = vmatmul.mubr.f32.gmra.mxu0 %v1560
        %v3075 = vpop.f32.mrf.mxu0
        %v3076 = vadd.f32 0.0, %v3075
        %v3077 = vpop.f32.mrf.mxu0
        %3078 = vmatprep.mubr.f32.mxu0 0.0
        %3079 = vmatmul.mubr.f32.gmra.mxu0 %v1561
        %v3080 = vpop.f32.mrf.mxu0
        %v3081 = vadd.f32 0.0, %v3080
        %v3082 = vpop.f32.mrf.mxu0
        %3083 = vmatprep.mubr.f32.mxu0 0.0
        %3084 = vmatmul.mubr.f32.gmra.mxu0 %v1562
        %v3085 = vpop.f32.mrf.mxu0
        %v3086 = vadd.f32 0.0, %v3085
        %v3087 = vpop.f32.mrf.mxu0
        %3088 = vmatprep.mubr.f32.mxu0 0.0
        %3089 = vmatmul.mubr.f32.gmra.mxu0 %v1563
        %v3090 = vpop.f32.mrf.mxu0
        %v3091 = vadd.f32 0.0, %v3090
        %v3092 = vpop.f32.mrf.mxu0
        %3093 = vmatprep.mubr.f32.mxu0 0.0
        %3094 = vmatmul.mubr.f32.gmra.mxu0 %v1564
        %v3095 = vpop.f32.mrf.mxu0
        %v3096 = vadd.f32 0.0, %v3095
        %v3097 = vpop.f32.mrf.mxu0
        %3098 = vmatprep.mubr.f32.mxu0 0.0
        %3099 = vmatmul.mubr.f32.gmra.mxu0 %v1565
        %v3100 = vpop.f32.mrf.mxu0
        %v3101 = vadd.f32 0.0, %v3100
        %v3102 = vpop.f32.mrf.mxu0
        %3103 = vdwg.mxu0
        %3104 = vmatprep.subr.mxu0 0.0
        %3105 = vmatpush1.msra.mxu0 %v2861
        %3106 = vmatprep.subr.mxu0 0.0
        %3107 = vmatpush1.msra.mxu0 %v2860
        %3108 = vmatprep.subr.mxu0 0.0
        %3109 = vmatpush1.msra.mxu0 %v2859
        %3110 = vmatprep.subr.mxu0 0.0
        %3111 = vmatpush1.msra.mxu0 %v2858
        %3112 = vmatprep.subr.mxu0 0.0
        %3113 = vmatpush1.msra.mxu0 %v2857
        %3114 = vmatprep.subr.mxu0 0.0
        %3115 = vmatpush1.msra.mxu0 %v2856
        %3116 = vmatprep.subr.mxu0 0.0
        %3117 = vmatpush1.msra.mxu0 %v2855
        %3118 = vmatprep.subr.mxu0 0.0
        %3119 = vmatpush1.msra.mxu0 %v2854
        %3120 = vmatprep.subr.mxu0 0.0
        %3121 = vmatpush1.msra.mxu0 %v2853
        %3122 = vmatprep.subr.mxu0 0.0
        %3123 = vmatpush1.msra.mxu0 %v2852
        %3124 = vmatprep.subr.mxu0 0.0
        %3125 = vmatpush1.msra.mxu0 %v2851
        %3126 = vmatprep.subr.mxu0 0.0
        %3127 = vmatpush1.msra.mxu0 %v2850
        %3128 = vmatprep.subr.mxu0 0.0
        %3129 = vmatpush1.msra.mxu0 %v2849
        %3130 = vmatprep.subr.mxu0 0.0
        %3131 = vmatpush1.msra.mxu0 %v2848
        %3132 = vmatprep.subr.mxu0 0.0
        %3133 = vmatpush1.msra.mxu0 %v2847
        %3134 = vmatprep.subr.mxu0 0.0
        %3135 = vmatpush1.msra.mxu0 %v2846
        %3136 = vmatprep.subr.mxu0 0.0
        %3137 = vmatpush2.msra.mxu0 0.0
        %3138 = vmatprep.subr.mxu0 0.0
        %3139 = vmatpush2.msra.mxu0 0.0
        %3140 = vmatprep.subr.mxu0 0.0
        %3141 = vmatpush2.msra.mxu0 0.0
        %3142 = vmatprep.subr.mxu0 0.0
        %3143 = vmatpush2.msra.mxu0 0.0
        %3144 = vmatprep.subr.mxu0 0.0
        %3145 = vmatpush2.msra.mxu0 0.0
        %3146 = vmatprep.subr.mxu0 0.0
        %3147 = vmatpush2.msra.mxu0 0.0
        %3148 = vmatprep.subr.mxu0 0.0
        %3149 = vmatpush2.msra.mxu0 0.0
        %3150 = vmatprep.subr.mxu0 0.0
        %3151 = vmatpush2.msra.mxu0 0.0
        %3152 = vmatprep.subr.mxu0 0.0
        %3153 = vmatpush2.msra.mxu0 0.0
        %3154 = vmatprep.subr.mxu0 0.0
        %3155 = vmatpush2.msra.mxu0 0.0
        %3156 = vmatprep.subr.mxu0 0.0
        %3157 = vmatpush2.msra.mxu0 0.0
        %3158 = vmatprep.subr.mxu0 0.0
        %3159 = vmatpush2.msra.mxu0 0.0
        %3160 = vmatprep.subr.mxu0 0.0
        %3161 = vmatpush2.msra.mxu0 0.0
        %3162 = vmatprep.subr.mxu0 0.0
        %3163 = vmatpush2.msra.mxu0 0.0
        %3164 = vmatprep.subr.mxu0 0.0
        %3165 = vmatpush2.msra.mxu0 0.0
        %3166 = vmatprep.subr.mxu0 0.0
        %3167 = vmatpush2.msra.mxu0 0.0
        %3168 = vmatprep.mubr.f32.mxu0 0.0
        %3169 = vmatmul.mubr.f32.gmra.mxu0 %v849
        %v3170 = vpop.f32.mrf.mxu0
        %v3171 = vadd.f32 %v2946, %v3170
        %v3172 = vpop.f32.mrf.mxu0
        %3173 = vmatprep.mubr.f32.mxu0 0.0
        %3174 = vmatmul.mubr.f32.gmra.mxu0 %v850
        %v3175 = vpop.f32.mrf.mxu0
        %v3176 = vadd.f32 %v2951, %v3175
        %v3177 = vpop.f32.mrf.mxu0
        %3178 = vmatprep.mubr.f32.mxu0 0.0
        %3179 = vmatmul.mubr.f32.gmra.mxu0 %v851
        %v3180 = vpop.f32.mrf.mxu0
        %v3181 = vadd.f32 %v2956, %v3180
        %v3182 = vpop.f32.mrf.mxu0
        %3183 = vmatprep.mubr.f32.mxu0 0.0
        %3184 = vmatmul.mubr.f32.gmra.mxu0 %v852
        %v3185 = vpop.f32.mrf.mxu0
        %v3186 = vadd.f32 %v2961, %v3185
        %v3187 = vpop.f32.mrf.mxu0
        %3188 = vmatprep.mubr.f32.mxu0 0.0
        %3189 = vmatmul.mubr.f32.gmra.mxu0 %v853
        %v3190 = vpop.f32.mrf.mxu0
        %v3191 = vadd.f32 %v2966, %v3190
        %v3192 = vpop.f32.mrf.mxu0
        %3193 = vmatprep.mubr.f32.mxu0 0.0
        %3194 = vmatmul.mubr.f32.gmra.mxu0 %v854
        %v3195 = vpop.f32.mrf.mxu0
        %v3196 = vadd.f32 %v2971, %v3195
        %v3197 = vpop.f32.mrf.mxu0
        %3198 = vmatprep.mubr.f32.mxu0 0.0
        %3199 = vmatmul.mubr.f32.gmra.mxu0 %v855
        %v3200 = vpop.f32.mrf.mxu0
        %v3201 = vadd.f32 %v2976, %v3200
        %v3202 = vpop.f32.mrf.mxu0
        %3203 = vmatprep.mubr.f32.mxu0 0.0
        %3204 = vmatmul.mubr.f32.gmra.mxu0 %v856
        %v3205 = vpop.f32.mrf.mxu0
        %v3206 = vadd.f32 %v2981, %v3205
        %v3207 = vpop.f32.mrf.mxu0
        %3208 = vmatprep.mubr.f32.mxu0 0.0
        %3209 = vmatmul.mubr.f32.gmra.mxu0 %v857
        %v3210 = vpop.f32.mrf.mxu0
        %v3211 = vadd.f32 %v2986, %v3210
        %v3212 = vpop.f32.mrf.mxu0
        %3213 = vmatprep.mubr.f32.mxu0 0.0
        %3214 = vmatmul.mubr.f32.gmra.mxu0 %v858
        %v3215 = vpop.f32.mrf.mxu0
        %v3216 = vadd.f32 %v2991, %v3215
        %v3217 = vpop.f32.mrf.mxu0
        %3218 = vmatprep.mubr.f32.mxu0 0.0
        %3219 = vmatmul.mubr.f32.gmra.mxu0 %v859
        %v3220 = vpop.f32.mrf.mxu0
        %v3221 = vadd.f32 %v2996, %v3220
        %v3222 = vpop.f32.mrf.mxu0
        %3223 = vmatprep.mubr.f32.mxu0 0.0
        %3224 = vmatmul.mubr.f32.gmra.mxu0 %v860
        %v3225 = vpop.f32.mrf.mxu0
        %v3226 = vadd.f32 %v3001, %v3225
        %v3227 = vpop.f32.mrf.mxu0
        %3228 = vmatprep.mubr.f32.mxu0 0.0
        %3229 = vmatmul.mubr.f32.gmra.mxu0 %v861
        %v3230 = vpop.f32.mrf.mxu0
        %v3231 = vadd.f32 %v3006, %v3230
        %v3232 = vpop.f32.mrf.mxu0
        %3233 = vmatprep.mubr.f32.mxu0 0.0
        %3234 = vmatmul.mubr.f32.gmra.mxu0 %v862
        %v3235 = vpop.f32.mrf.mxu0
        %v3236 = vadd.f32 %v3011, %v3235
        %v3237 = vpop.f32.mrf.mxu0
        %3238 = vmatprep.mubr.f32.mxu0 0.0
        %3239 = vmatmul.mubr.f32.gmra.mxu0 %v863
        %v3240 = vpop.f32.mrf.mxu0
        %v3241 = vadd.f32 %v3016, %v3240
        %v3242 = vpop.f32.mrf.mxu0
        %3243 = vmatprep.mubr.f32.mxu0 0.0
        %3244 = vmatmul.mubr.f32.gmra.mxu0 %v864
        %v3245 = vpop.f32.mrf.mxu0
        %v3246 = vadd.f32 %v3021, %v3245
        %v3247 = vpop.f32.mrf.mxu0
        %3248 = vmatprep.mubr.f32.mxu0 0.0
        %3249 = vmatmul.mubr.f32.gmra.mxu0 %v865
        %v3250 = vpop.f32.mrf.mxu0
        %v3251 = vadd.f32 %v3026, %v3250
        %v3252 = vpop.f32.mrf.mxu0
        %3253 = vmatprep.mubr.f32.mxu0 0.0
        %3254 = vmatmul.mubr.f32.gmra.mxu0 %v866
        %v3255 = vpop.f32.mrf.mxu0
        %v3256 = vadd.f32 %v3031, %v3255
        %v3257 = vpop.f32.mrf.mxu0
        %3258 = vmatprep.mubr.f32.mxu0 0.0
        %3259 = vmatmul.mubr.f32.gmra.mxu0 %v867
        %v3260 = vpop.f32.mrf.mxu0
        %v3261 = vadd.f32 %v3036, %v3260
        %v3262 = vpop.f32.mrf.mxu0
        %3263 = vmatprep.mubr.f32.mxu0 0.0
        %3264 = vmatmul.mubr.f32.gmra.mxu0 %v868
        %v3265 = vpop.f32.mrf.mxu0
        %v3266 = vadd.f32 %v3041, %v3265
        %v3267 = vpop.f32.mrf.mxu0
        %3268 = vmatprep.mubr.f32.mxu0 0.0
        %3269 = vmatmul.mubr.f32.gmra.mxu0 %v869
        %v3270 = vpop.f32.mrf.mxu0
        %v3271 = vadd.f32 %v3046, %v3270
        %v3272 = vpop.f32.mrf.mxu0
        %3273 = vmatprep.mubr.f32.mxu0 0.0
        %3274 = vmatmul.mubr.f32.gmra.mxu0 %v870
        %v3275 = vpop.f32.mrf.mxu0
        %v3276 = vadd.f32 %v3051, %v3275
        %v3277 = vpop.f32.mrf.mxu0
        %3278 = vmatprep.mubr.f32.mxu0 0.0
        %3279 = vmatmul.mubr.f32.gmra.mxu0 %v871
        %v3280 = vpop.f32.mrf.mxu0
        %v3281 = vadd.f32 %v3056, %v3280
        %v3282 = vpop.f32.mrf.mxu0
        %3283 = vmatprep.mubr.f32.mxu0 0.0
        %3284 = vmatmul.mubr.f32.gmra.mxu0 %v872
        %v3285 = vpop.f32.mrf.mxu0
        %v3286 = vadd.f32 %v3061, %v3285
        %v3287 = vpop.f32.mrf.mxu0
        %3288 = vmatprep.mubr.f32.mxu0 0.0
        %3289 = vmatmul.mubr.f32.gmra.mxu0 %v873
        %v3290 = vpop.f32.mrf.mxu0
        %v3291 = vadd.f32 %v3066, %v3290
        %v3292 = vpop.f32.mrf.mxu0
        %3293 = vmatprep.mubr.f32.mxu0 0.0
        %3294 = vmatmul.mubr.f32.gmra.mxu0 %v874
        %v3295 = vpop.f32.mrf.mxu0
        %v3296 = vadd.f32 %v3071, %v3295
        %v3297 = vpop.f32.mrf.mxu0
        %3298 = vmatprep.mubr.f32.mxu0 0.0
        %3299 = vmatmul.mubr.f32.gmra.mxu0 %v875
        %v3300 = vpop.f32.mrf.mxu0
        %v3301 = vadd.f32 %v3076, %v3300
        %v3302 = vpop.f32.mrf.mxu0
        %3303 = vmatprep.mubr.f32.mxu0 0.0
        %3304 = vmatmul.mubr.f32.gmra.mxu0 %v876
        %v3305 = vpop.f32.mrf.mxu0
        %v3306 = vadd.f32 %v3081, %v3305
        %v3307 = vpop.f32.mrf.mxu0
        %3308 = vmatprep.mubr.f32.mxu0 0.0
        %3309 = vmatmul.mubr.f32.gmra.mxu0 %v877
        %v3310 = vpop.f32.mrf.mxu0
        %v3311 = vadd.f32 %v3086, %v3310
        %v3312 = vpop.f32.mrf.mxu0
        %3313 = vmatprep.mubr.f32.mxu0 0.0
        %3314 = vmatmul.mubr.f32.gmra.mxu0 %v878
        %v3315 = vpop.f32.mrf.mxu0
        %v3316 = vadd.f32 %v3091, %v3315
        %v3317 = vpop.f32.mrf.mxu0
        %3318 = vmatprep.mubr.f32.mxu0 0.0
        %3319 = vmatmul.mubr.f32.gmra.mxu0 %v879
        %v3320 = vpop.f32.mrf.mxu0
        %v3321 = vadd.f32 %v3096, %v3320
        %v3322 = vpop.f32.mrf.mxu0
        %3323 = vmatprep.mubr.f32.mxu0 0.0
        %3324 = vmatmul.mubr.f32.gmra.mxu0 %v880
        %v3325 = vpop.f32.mrf.mxu0
        %v3326 = vadd.f32 %v3101, %v3325
        %v3327 = vpop.f32.mrf.mxu0
        %3328 = vdwg.mxu0
        %s3329 = scalar_lea.vmem %s286, 256
        %v3330 = vld [vmem:[%s3329] sm:$0xff]
        %v3331 = vld [vmem:[%s3329 + $0x8] sm:$0xff]
        %v3332 = vld [vmem:[%s3329 + $0x10] sm:$0xff]
        %v3333 = vld [vmem:[%s3329 + $0x18] sm:$0xff]
        %v3334 = vld [vmem:[%s3329 + $0x20] sm:$0xff]
        %v3335 = vld [vmem:[%s3329 + $0x28] sm:$0xff]
        %v3336 = vld [vmem:[%s3329 + $0x30] sm:$0xff]
        %v3337 = vld [vmem:[%s3329 + $0x38] sm:$0xff]
        %v3338 = vld [vmem:[%s3329 + $0x40] sm:$0xff]
        %v3339 = vld [vmem:[%s3329 + $0x48] sm:$0xff]
        %v3340 = vld [vmem:[%s3329 + $0x50] sm:$0xff]
        %v3341 = vld [vmem:[%s3329 + $0x58] sm:$0xff]
        %v3342 = vld [vmem:[%s3329 + $0x60] sm:$0xff]
        %v3343 = vld [vmem:[%s3329 + $0x68] sm:$0xff]
        %v3344 = vld [vmem:[%s3329 + $0x70] sm:$0xff]
        %v3345 = vld [vmem:[%s3329 + $0x78] sm:$0xff]
        %3346 = vmatprep.subr.mxu0 0.0
        %3347 = vmatpush1.msra.mxu0 %v3345
        %3348 = vmatprep.subr.mxu0 0.0
        %3349 = vmatpush1.msra.mxu0 %v3344
        %3350 = vmatprep.subr.mxu0 0.0
        %3351 = vmatpush1.msra.mxu0 %v3343
        %3352 = vmatprep.subr.mxu0 0.0
        %3353 = vmatpush1.msra.mxu0 %v3342
        %3354 = vmatprep.subr.mxu0 0.0
        %3355 = vmatpush1.msra.mxu0 %v3341
        %3356 = vmatprep.subr.mxu0 0.0
        %3357 = vmatpush1.msra.mxu0 %v3340
        %3358 = vmatprep.subr.mxu0 0.0
        %3359 = vmatpush1.msra.mxu0 %v3339
        %3360 = vmatprep.subr.mxu0 0.0
        %3361 = vmatpush1.msra.mxu0 %v3338
        %3362 = vmatprep.subr.mxu0 0.0
        %3363 = vmatpush1.msra.mxu0 %v3337
        %3364 = vmatprep.subr.mxu0 0.0
        %3365 = vmatpush1.msra.mxu0 %v3336
        %3366 = vmatprep.subr.mxu0 0.0
        %3367 = vmatpush1.msra.mxu0 %v3335
        %3368 = vmatprep.subr.mxu0 0.0
        %3369 = vmatpush1.msra.mxu0 %v3334
        %3370 = vmatprep.subr.mxu0 0.0
        %3371 = vmatpush1.msra.mxu0 %v3333
        %3372 = vmatprep.subr.mxu0 0.0
        %3373 = vmatpush1.msra.mxu0 %v3332
        %3374 = vmatprep.subr.mxu0 0.0
        %3375 = vmatpush1.msra.mxu0 %v3331
        %3376 = vmatprep.subr.mxu0 0.0
        %3377 = vmatpush1.msra.mxu0 %v3330
        %3378 = vmatprep.subr.mxu0 0.0
        %3379 = vmatpush2.msra.mxu0 0.0
        %3380 = vmatprep.subr.mxu0 0.0
        %3381 = vmatpush2.msra.mxu0 0.0
        %3382 = vmatprep.subr.mxu0 0.0
        %3383 = vmatpush2.msra.mxu0 0.0
        %3384 = vmatprep.subr.mxu0 0.0
        %3385 = vmatpush2.msra.mxu0 0.0
        %3386 = vmatprep.subr.mxu0 0.0
        %3387 = vmatpush2.msra.mxu0 0.0
        %3388 = vmatprep.subr.mxu0 0.0
        %3389 = vmatpush2.msra.mxu0 0.0
        %3390 = vmatprep.subr.mxu0 0.0
        %3391 = vmatpush2.msra.mxu0 0.0
        %3392 = vmatprep.subr.mxu0 0.0
        %3393 = vmatpush2.msra.mxu0 0.0
        %3394 = vmatprep.subr.mxu0 0.0
        %3395 = vmatpush2.msra.mxu0 0.0
        %3396 = vmatprep.subr.mxu0 0.0
        %3397 = vmatpush2.msra.mxu0 0.0
        %3398 = vmatprep.subr.mxu0 0.0
        %3399 = vmatpush2.msra.mxu0 0.0
        %3400 = vmatprep.subr.mxu0 0.0
        %3401 = vmatpush2.msra.mxu0 0.0
        %3402 = vmatprep.subr.mxu0 0.0
        %3403 = vmatpush2.msra.mxu0 0.0
        %3404 = vmatprep.subr.mxu0 0.0
        %3405 = vmatpush2.msra.mxu0 0.0
        %3406 = vmatprep.subr.mxu0 0.0
        %3407 = vmatpush2.msra.mxu0 0.0
        %3408 = vmatprep.subr.mxu0 0.0
        %3409 = vmatpush2.msra.mxu0 0.0
        %3410 = vmatprep.mubr.f32.mxu0 0.0
        %3411 = vmatmul.mubr.f32.gmra.mxu0 %v2174
        %v3412 = vpop.f32.mrf.mxu0
        %v3413 = vadd.f32 0.0, %v3412
        %v3414 = vpop.f32.mrf.mxu0
        %3415 = vmatprep.mubr.f32.mxu0 0.0
        %3416 = vmatmul.mubr.f32.gmra.mxu0 %v2175
        %v3417 = vpop.f32.mrf.mxu0
        %v3418 = vadd.f32 0.0, %v3417
        %v3419 = vpop.f32.mrf.mxu0
        %3420 = vmatprep.mubr.f32.mxu0 0.0
        %3421 = vmatmul.mubr.f32.gmra.mxu0 %v2176
        %v3422 = vpop.f32.mrf.mxu0
        %v3423 = vadd.f32 0.0, %v3422
        %v3424 = vpop.f32.mrf.mxu0
        %3425 = vmatprep.mubr.f32.mxu0 0.0
        %3426 = vmatmul.mubr.f32.gmra.mxu0 %v2177
        %v3427 = vpop.f32.mrf.mxu0
        %v3428 = vadd.f32 0.0, %v3427
        %v3429 = vpop.f32.mrf.mxu0
        %3430 = vmatprep.mubr.f32.mxu0 0.0
        %3431 = vmatmul.mubr.f32.gmra.mxu0 %v2178
        %v3432 = vpop.f32.mrf.mxu0
        %v3433 = vadd.f32 0.0, %v3432
        %v3434 = vpop.f32.mrf.mxu0
        %3435 = vmatprep.mubr.f32.mxu0 0.0
        %3436 = vmatmul.mubr.f32.gmra.mxu0 %v2179
        %v3437 = vpop.f32.mrf.mxu0
        %v3438 = vadd.f32 0.0, %v3437
        %v3439 = vpop.f32.mrf.mxu0
        %3440 = vmatprep.mubr.f32.mxu0 0.0
        %3441 = vmatmul.mubr.f32.gmra.mxu0 %v2180
        %v3442 = vpop.f32.mrf.mxu0
        %v3443 = vadd.f32 0.0, %v3442
        %v3444 = vpop.f32.mrf.mxu0
        %3445 = vmatprep.mubr.f32.mxu0 0.0
        %3446 = vmatmul.mubr.f32.gmra.mxu0 %v2181
        %v3447 = vpop.f32.mrf.mxu0
        %v3448 = vadd.f32 0.0, %v3447
        %v3449 = vpop.f32.mrf.mxu0
        %3450 = vmatprep.mubr.f32.mxu0 0.0
        %3451 = vmatmul.mubr.f32.gmra.mxu0 %v2182
        %v3452 = vpop.f32.mrf.mxu0
        %v3453 = vadd.f32 0.0, %v3452
        %v3454 = vpop.f32.mrf.mxu0
        %3455 = vmatprep.mubr.f32.mxu0 0.0
        %3456 = vmatmul.mubr.f32.gmra.mxu0 %v2183
        %v3457 = vpop.f32.mrf.mxu0
        %v3458 = vadd.f32 0.0, %v3457
        %v3459 = vpop.f32.mrf.mxu0
        %3460 = vmatprep.mubr.f32.mxu0 0.0
        %3461 = vmatmul.mubr.f32.gmra.mxu0 %v2184
        %v3462 = vpop.f32.mrf.mxu0
        %v3463 = vadd.f32 0.0, %v3462
        %v3464 = vpop.f32.mrf.mxu0
        %3465 = vmatprep.mubr.f32.mxu0 0.0
        %3466 = vmatmul.mubr.f32.gmra.mxu0 %v2185
        %v3467 = vpop.f32.mrf.mxu0
        %v3468 = vadd.f32 0.0, %v3467
        %v3469 = vpop.f32.mrf.mxu0
        %3470 = vmatprep.mubr.f32.mxu0 0.0
        %3471 = vmatmul.mubr.f32.gmra.mxu0 %v2186
        %v3472 = vpop.f32.mrf.mxu0
        %v3473 = vadd.f32 0.0, %v3472
        %v3474 = vpop.f32.mrf.mxu0
        %3475 = vmatprep.mubr.f32.mxu0 0.0
        %3476 = vmatmul.mubr.f32.gmra.mxu0 %v2187
        %v3477 = vpop.f32.mrf.mxu0
        %v3478 = vadd.f32 0.0, %v3477
        %v3479 = vpop.f32.mrf.mxu0
        %3480 = vmatprep.mubr.f32.mxu0 0.0
        %3481 = vmatmul.mubr.f32.gmra.mxu0 %v2188
        %v3482 = vpop.f32.mrf.mxu0
        %v3483 = vadd.f32 0.0, %v3482
        %v3484 = vpop.f32.mrf.mxu0
        %3485 = vmatprep.mubr.f32.mxu0 0.0
        %3486 = vmatmul.mubr.f32.gmra.mxu0 %v2189
        %v3487 = vpop.f32.mrf.mxu0
        %v3488 = vadd.f32 0.0, %v3487
        %v3489 = vpop.f32.mrf.mxu0
        %3490 = vmatprep.mubr.f32.mxu0 0.0
        %3491 = vmatmul.mubr.f32.gmra.mxu0 %v2190
        %v3492 = vpop.f32.mrf.mxu0
        %v3493 = vadd.f32 0.0, %v3492
        %v3494 = vpop.f32.mrf.mxu0
        %3495 = vmatprep.mubr.f32.mxu0 0.0
        %3496 = vmatmul.mubr.f32.gmra.mxu0 %v2191
        %v3497 = vpop.f32.mrf.mxu0
        %v3498 = vadd.f32 0.0, %v3497
        %v3499 = vpop.f32.mrf.mxu0
        %3500 = vmatprep.mubr.f32.mxu0 0.0
        %3501 = vmatmul.mubr.f32.gmra.mxu0 %v2192
        %v3502 = vpop.f32.mrf.mxu0
        %v3503 = vadd.f32 0.0, %v3502
        %v3504 = vpop.f32.mrf.mxu0
        %3505 = vmatprep.mubr.f32.mxu0 0.0
        %3506 = vmatmul.mubr.f32.gmra.mxu0 %v2193
        %v3507 = vpop.f32.mrf.mxu0
        %v3508 = vadd.f32 0.0, %v3507
        %v3509 = vpop.f32.mrf.mxu0
        %3510 = vmatprep.mubr.f32.mxu0 0.0
        %3511 = vmatmul.mubr.f32.gmra.mxu0 %v2194
        %v3512 = vpop.f32.mrf.mxu0
        %v3513 = vadd.f32 0.0, %v3512
        %v3514 = vpop.f32.mrf.mxu0
        %3515 = vmatprep.mubr.f32.mxu0 0.0
        %3516 = vmatmul.mubr.f32.gmra.mxu0 %v2195
        %v3517 = vpop.f32.mrf.mxu0
        %v3518 = vadd.f32 0.0, %v3517
        %v3519 = vpop.f32.mrf.mxu0
        %3520 = vmatprep.mubr.f32.mxu0 0.0
        %3521 = vmatmul.mubr.f32.gmra.mxu0 %v2196
        %v3522 = vpop.f32.mrf.mxu0
        %v3523 = vadd.f32 0.0, %v3522
        %v3524 = vpop.f32.mrf.mxu0
        %3525 = vmatprep.mubr.f32.mxu0 0.0
        %3526 = vmatmul.mubr.f32.gmra.mxu0 %v2197
        %v3527 = vpop.f32.mrf.mxu0
        %v3528 = vadd.f32 0.0, %v3527
        %v3529 = vpop.f32.mrf.mxu0
        %3530 = vmatprep.mubr.f32.mxu0 0.0
        %3531 = vmatmul.mubr.f32.gmra.mxu0 %v2198
        %v3532 = vpop.f32.mrf.mxu0
        %v3533 = vadd.f32 0.0, %v3532
        %v3534 = vpop.f32.mrf.mxu0
        %3535 = vmatprep.mubr.f32.mxu0 0.0
        %3536 = vmatmul.mubr.f32.gmra.mxu0 %v2199
        %v3537 = vpop.f32.mrf.mxu0
        %v3538 = vadd.f32 0.0, %v3537
        %v3539 = vpop.f32.mrf.mxu0
        %3540 = vmatprep.mubr.f32.mxu0 0.0
        %3541 = vmatmul.mubr.f32.gmra.mxu0 %v2200
        %v3542 = vpop.f32.mrf.mxu0
        %v3543 = vadd.f32 0.0, %v3542
        %v3544 = vpop.f32.mrf.mxu0
        %3545 = vmatprep.mubr.f32.mxu0 0.0
        %3546 = vmatmul.mubr.f32.gmra.mxu0 %v2201
        %v3547 = vpop.f32.mrf.mxu0
        %v3548 = vadd.f32 0.0, %v3547
        %v3549 = vpop.f32.mrf.mxu0
        %3550 = vmatprep.mubr.f32.mxu0 0.0
        %3551 = vmatmul.mubr.f32.gmra.mxu0 %v2202
        %v3552 = vpop.f32.mrf.mxu0
        %v3553 = vadd.f32 0.0, %v3552
        %v3554 = vpop.f32.mrf.mxu0
        %3555 = vmatprep.mubr.f32.mxu0 0.0
        %3556 = vmatmul.mubr.f32.gmra.mxu0 %v2203
        %v3557 = vpop.f32.mrf.mxu0
        %v3558 = vadd.f32 0.0, %v3557
        %v3559 = vpop.f32.mrf.mxu0
        %3560 = vmatprep.mubr.f32.mxu0 0.0
        %3561 = vmatmul.mubr.f32.gmra.mxu0 %v2204
        %v3562 = vpop.f32.mrf.mxu0
        %v3563 = vadd.f32 0.0, %v3562
        %v3564 = vpop.f32.mrf.mxu0
        %3565 = vmatprep.mubr.f32.mxu0 0.0
        %3566 = vmatmul.mubr.f32.gmra.mxu0 %v2205
        %v3567 = vpop.f32.mrf.mxu0
        %v3568 = vadd.f32 0.0, %v3567
        %v3569 = vpop.f32.mrf.mxu0
        %3570 = vdwg.mxu0
        %v3571 = vadd.f32 %v3171, %v3413
        %v3572 = vadd.f32 %v3176, %v3418
        %v3573 = vadd.f32 %v3181, %v3423
        %v3574 = vadd.f32 %v3186, %v3428
        %v3575 = vadd.f32 %v3191, %v3433
        %v3576 = vadd.f32 %v3196, %v3438
        %v3577 = vadd.f32 %v3201, %v3443
        %v3578 = vadd.f32 %v3206, %v3448
        %v3579 = vadd.f32 %v3211, %v3453
        %v3580 = vadd.f32 %v3216, %v3458
        %v3581 = vadd.f32 %v3221, %v3463
        %v3582 = vadd.f32 %v3226, %v3468
        %v3583 = vadd.f32 %v3231, %v3473
        %v3584 = vadd.f32 %v3236, %v3478
        %v3585 = vadd.f32 %v3241, %v3483
        %v3586 = vadd.f32 %v3246, %v3488
        %v3587 = vadd.f32 %v3251, %v3493
        %v3588 = vadd.f32 %v3256, %v3498
        %v3589 = vadd.f32 %v3261, %v3503
        %v3590 = vadd.f32 %v3266, %v3508
        %v3591 = vadd.f32 %v3271, %v3513
        %v3592 = vadd.f32 %v3276, %v3518
        %v3593 = vadd.f32 %v3281, %v3523
        %v3594 = vadd.f32 %v3286, %v3528
        %v3595 = vadd.f32 %v3291, %v3533
        %v3596 = vadd.f32 %v3296, %v3538
        %v3597 = vadd.f32 %v3301, %v3543
        %v3598 = vadd.f32 %v3306, %v3548
        %v3599 = vadd.f32 %v3311, %v3553
        %v3600 = vadd.f32 %v3316, %v3558
        %v3601 = vadd.f32 %v3321, %v3563
        %v3602 = vadd.f32 %v3326, %v3568
        %s3603 = scalar_lea.vmem %s286, 384
        %v3604 = vld [vmem:[%s3603] sm:$0xff]
        %v3605 = vld [vmem:[%s3603 + $0x8] sm:$0xff]
        %v3606 = vld [vmem:[%s3603 + $0x10] sm:$0xff]
        %v3607 = vld [vmem:[%s3603 + $0x18] sm:$0xff]
        %v3608 = vld [vmem:[%s3603 + $0x20] sm:$0xff]
        %v3609 = vld [vmem:[%s3603 + $0x28] sm:$0xff]
        %v3610 = vld [vmem:[%s3603 + $0x30] sm:$0xff]
        %v3611 = vld [vmem:[%s3603 + $0x38] sm:$0xff]
        %v3612 = vld [vmem:[%s3603 + $0x40] sm:$0xff]
        %v3613 = vld [vmem:[%s3603 + $0x48] sm:$0xff]
        %v3614 = vld [vmem:[%s3603 + $0x50] sm:$0xff]
        %v3615 = vld [vmem:[%s3603 + $0x58] sm:$0xff]
        %v3616 = vld [vmem:[%s3603 + $0x60] sm:$0xff]
        %v3617 = vld [vmem:[%s3603 + $0x68] sm:$0xff]
        %v3618 = vld [vmem:[%s3603 + $0x70] sm:$0xff]
        %v3619 = vld [vmem:[%s3603 + $0x78] sm:$0xff]
        %3620 = vmatprep.subr.mxu0 0.0
        %3621 = vmatpush1.msra.mxu0 %v3619
        %3622 = vmatprep.subr.mxu0 0.0
        %3623 = vmatpush1.msra.mxu0 %v3618
        %3624 = vmatprep.subr.mxu0 0.0
        %3625 = vmatpush1.msra.mxu0 %v3617
        %3626 = vmatprep.subr.mxu0 0.0
        %3627 = vmatpush1.msra.mxu0 %v3616
        %3628 = vmatprep.subr.mxu0 0.0
        %3629 = vmatpush1.msra.mxu0 %v3615
        %3630 = vmatprep.subr.mxu0 0.0
        %3631 = vmatpush1.msra.mxu0 %v3614
        %3632 = vmatprep.subr.mxu0 0.0
        %3633 = vmatpush1.msra.mxu0 %v3613
        %3634 = vmatprep.subr.mxu0 0.0
        %3635 = vmatpush1.msra.mxu0 %v3612
        %3636 = vmatprep.subr.mxu0 0.0
        %3637 = vmatpush1.msra.mxu0 %v3611
        %3638 = vmatprep.subr.mxu0 0.0
        %3639 = vmatpush1.msra.mxu0 %v3610
        %3640 = vmatprep.subr.mxu0 0.0
        %3641 = vmatpush1.msra.mxu0 %v3609
        %3642 = vmatprep.subr.mxu0 0.0
        %3643 = vmatpush1.msra.mxu0 %v3608
        %3644 = vmatprep.subr.mxu0 0.0
        %3645 = vmatpush1.msra.mxu0 %v3607
        %3646 = vmatprep.subr.mxu0 0.0
        %3647 = vmatpush1.msra.mxu0 %v3606
        %3648 = vmatprep.subr.mxu0 0.0
        %3649 = vmatpush1.msra.mxu0 %v3605
        %3650 = vmatprep.subr.mxu0 0.0
        %3651 = vmatpush1.msra.mxu0 %v3604
        %3652 = vmatprep.subr.mxu0 0.0
        %3653 = vmatpush2.msra.mxu0 0.0
        %3654 = vmatprep.subr.mxu0 0.0
        %3655 = vmatpush2.msra.mxu0 0.0
        %3656 = vmatprep.subr.mxu0 0.0
        %3657 = vmatpush2.msra.mxu0 0.0
        %3658 = vmatprep.subr.mxu0 0.0
        %3659 = vmatpush2.msra.mxu0 0.0
        %3660 = vmatprep.subr.mxu0 0.0
        %3661 = vmatpush2.msra.mxu0 0.0
        %3662 = vmatprep.subr.mxu0 0.0
        %3663 = vmatpush2.msra.mxu0 0.0
        %3664 = vmatprep.subr.mxu0 0.0
        %3665 = vmatpush2.msra.mxu0 0.0
        %3666 = vmatprep.subr.mxu0 0.0
        %3667 = vmatpush2.msra.mxu0 0.0
        %3668 = vmatprep.subr.mxu0 0.0
        %3669 = vmatpush2.msra.mxu0 0.0
        %3670 = vmatprep.subr.mxu0 0.0
        %3671 = vmatpush2.msra.mxu0 0.0
        %3672 = vmatprep.subr.mxu0 0.0
        %3673 = vmatpush2.msra.mxu0 0.0
        %3674 = vmatprep.subr.mxu0 0.0
        %3675 = vmatpush2.msra.mxu0 0.0
        %3676 = vmatprep.subr.mxu0 0.0
        %3677 = vmatpush2.msra.mxu0 0.0
        %3678 = vmatprep.subr.mxu0 0.0
        %3679 = vmatpush2.msra.mxu0 0.0
        %3680 = vmatprep.subr.mxu0 0.0
        %3681 = vmatpush2.msra.mxu0 0.0
        %3682 = vmatprep.subr.mxu0 0.0
        %3683 = vmatpush2.msra.mxu0 0.0
        %3684 = vmatprep.mubr.f32.mxu0 0.0
        %3685 = vmatmul.mubr.f32.gmra.mxu0 %v2814
        %v3686 = vpop.f32.mrf.mxu0
        %v3687 = vadd.f32 0.0, %v3686
        %v3688 = vpop.f32.mrf.mxu0
        %3689 = vmatprep.mubr.f32.mxu0 0.0
        %3690 = vmatmul.mubr.f32.gmra.mxu0 %v2815
        %v3691 = vpop.f32.mrf.mxu0
        %v3692 = vadd.f32 0.0, %v3691
        %v3693 = vpop.f32.mrf.mxu0
        %3694 = vmatprep.mubr.f32.mxu0 0.0
        %3695 = vmatmul.mubr.f32.gmra.mxu0 %v2816
        %v3696 = vpop.f32.mrf.mxu0
        %v3697 = vadd.f32 0.0, %v3696
        %v3698 = vpop.f32.mrf.mxu0
        %3699 = vmatprep.mubr.f32.mxu0 0.0
        %3700 = vmatmul.mubr.f32.gmra.mxu0 %v2817
        %v3701 = vpop.f32.mrf.mxu0
        %v3702 = vadd.f32 0.0, %v3701
        %v3703 = vpop.f32.mrf.mxu0
        %3704 = vmatprep.mubr.f32.mxu0 0.0
        %3705 = vmatmul.mubr.f32.gmra.mxu0 %v2818
        %v3706 = vpop.f32.mrf.mxu0
        %v3707 = vadd.f32 0.0, %v3706
        %v3708 = vpop.f32.mrf.mxu0
        %3709 = vmatprep.mubr.f32.mxu0 0.0
        %3710 = vmatmul.mubr.f32.gmra.mxu0 %v2819
        %v3711 = vpop.f32.mrf.mxu0
        %v3712 = vadd.f32 0.0, %v3711
        %v3713 = vpop.f32.mrf.mxu0
        %3714 = vmatprep.mubr.f32.mxu0 0.0
        %3715 = vmatmul.mubr.f32.gmra.mxu0 %v2820
        %v3716 = vpop.f32.mrf.mxu0
        %v3717 = vadd.f32 0.0, %v3716
        %v3718 = vpop.f32.mrf.mxu0
        %3719 = vmatprep.mubr.f32.mxu0 0.0
        %3720 = vmatmul.mubr.f32.gmra.mxu0 %v2821
        %v3721 = vpop.f32.mrf.mxu0
        %v3722 = vadd.f32 0.0, %v3721
        %v3723 = vpop.f32.mrf.mxu0
        %3724 = vmatprep.mubr.f32.mxu0 0.0
        %3725 = vmatmul.mubr.f32.gmra.mxu0 %v2822
        %v3726 = vpop.f32.mrf.mxu0
        %v3727 = vadd.f32 0.0, %v3726
        %v3728 = vpop.f32.mrf.mxu0
        %3729 = vmatprep.mubr.f32.mxu0 0.0
        %3730 = vmatmul.mubr.f32.gmra.mxu0 %v2823
        %v3731 = vpop.f32.mrf.mxu0
        %v3732 = vadd.f32 0.0, %v3731
        %v3733 = vpop.f32.mrf.mxu0
        %3734 = vmatprep.mubr.f32.mxu0 0.0
        %3735 = vmatmul.mubr.f32.gmra.mxu0 %v2824
        %v3736 = vpop.f32.mrf.mxu0
        %v3737 = vadd.f32 0.0, %v3736
        %v3738 = vpop.f32.mrf.mxu0
        %3739 = vmatprep.mubr.f32.mxu0 0.0
        %3740 = vmatmul.mubr.f32.gmra.mxu0 %v2825
        %v3741 = vpop.f32.mrf.mxu0
        %v3742 = vadd.f32 0.0, %v3741
        %v3743 = vpop.f32.mrf.mxu0
        %3744 = vmatprep.mubr.f32.mxu0 0.0
        %3745 = vmatmul.mubr.f32.gmra.mxu0 %v2826
        %v3746 = vpop.f32.mrf.mxu0
        %v3747 = vadd.f32 0.0, %v3746
        %v3748 = vpop.f32.mrf.mxu0
        %3749 = vmatprep.mubr.f32.mxu0 0.0
        %3750 = vmatmul.mubr.f32.gmra.mxu0 %v2827
        %v3751 = vpop.f32.mrf.mxu0
        %v3752 = vadd.f32 0.0, %v3751
        %v3753 = vpop.f32.mrf.mxu0
        %3754 = vmatprep.mubr.f32.mxu0 0.0
        %3755 = vmatmul.mubr.f32.gmra.mxu0 %v2828
        %v3756 = vpop.f32.mrf.mxu0
        %v3757 = vadd.f32 0.0, %v3756
        %v3758 = vpop.f32.mrf.mxu0
        %3759 = vmatprep.mubr.f32.mxu0 0.0
        %3760 = vmatmul.mubr.f32.gmra.mxu0 %v2829
        %v3761 = vpop.f32.mrf.mxu0
        %v3762 = vadd.f32 0.0, %v3761
        %v3763 = vpop.f32.mrf.mxu0
        %3764 = vmatprep.mubr.f32.mxu0 0.0
        %3765 = vmatmul.mubr.f32.gmra.mxu0 %v2830
        %v3766 = vpop.f32.mrf.mxu0
        %v3767 = vadd.f32 0.0, %v3766
        %v3768 = vpop.f32.mrf.mxu0
        %3769 = vmatprep.mubr.f32.mxu0 0.0
        %3770 = vmatmul.mubr.f32.gmra.mxu0 %v2831
        %v3771 = vpop.f32.mrf.mxu0
        %v3772 = vadd.f32 0.0, %v3771
        %v3773 = vpop.f32.mrf.mxu0
        %3774 = vmatprep.mubr.f32.mxu0 0.0
        %3775 = vmatmul.mubr.f32.gmra.mxu0 %v2832
        %v3776 = vpop.f32.mrf.mxu0
        %v3777 = vadd.f32 0.0, %v3776
        %v3778 = vpop.f32.mrf.mxu0
        %3779 = vmatprep.mubr.f32.mxu0 0.0
        %3780 = vmatmul.mubr.f32.gmra.mxu0 %v2833
        %v3781 = vpop.f32.mrf.mxu0
        %v3782 = vadd.f32 0.0, %v3781
        %v3783 = vpop.f32.mrf.mxu0
        %3784 = vmatprep.mubr.f32.mxu0 0.0
        %3785 = vmatmul.mubr.f32.gmra.mxu0 %v2834
        %v3786 = vpop.f32.mrf.mxu0
        %v3787 = vadd.f32 0.0, %v3786
        %v3788 = vpop.f32.mrf.mxu0
        %3789 = vmatprep.mubr.f32.mxu0 0.0
        %3790 = vmatmul.mubr.f32.gmra.mxu0 %v2835
        %v3791 = vpop.f32.mrf.mxu0
        %v3792 = vadd.f32 0.0, %v3791
        %v3793 = vpop.f32.mrf.mxu0
        %3794 = vmatprep.mubr.f32.mxu0 0.0
        %3795 = vmatmul.mubr.f32.gmra.mxu0 %v2836
        %v3796 = vpop.f32.mrf.mxu0
        %v3797 = vadd.f32 0.0, %v3796
        %v3798 = vpop.f32.mrf.mxu0
        %3799 = vmatprep.mubr.f32.mxu0 0.0
        %3800 = vmatmul.mubr.f32.gmra.mxu0 %v2837
        %v3801 = vpop.f32.mrf.mxu0
        %v3802 = vadd.f32 0.0, %v3801
        %v3803 = vpop.f32.mrf.mxu0
        %3804 = vmatprep.mubr.f32.mxu0 0.0
        %3805 = vmatmul.mubr.f32.gmra.mxu0 %v2838
        %v3806 = vpop.f32.mrf.mxu0
        %v3807 = vadd.f32 0.0, %v3806
        %v3808 = vpop.f32.mrf.mxu0
        %3809 = vmatprep.mubr.f32.mxu0 0.0
        %3810 = vmatmul.mubr.f32.gmra.mxu0 %v2839
        %v3811 = vpop.f32.mrf.mxu0
        %v3812 = vadd.f32 0.0, %v3811
        %v3813 = vpop.f32.mrf.mxu0
        %3814 = vmatprep.mubr.f32.mxu0 0.0
        %3815 = vmatmul.mubr.f32.gmra.mxu0 %v2840
        %v3816 = vpop.f32.mrf.mxu0
        %v3817 = vadd.f32 0.0, %v3816
        %v3818 = vpop.f32.mrf.mxu0
        %3819 = vmatprep.mubr.f32.mxu0 0.0
        %3820 = vmatmul.mubr.f32.gmra.mxu0 %v2841
        %v3821 = vpop.f32.mrf.mxu0
        %v3822 = vadd.f32 0.0, %v3821
        %v3823 = vpop.f32.mrf.mxu0
        %3824 = vmatprep.mubr.f32.mxu0 0.0
        %3825 = vmatmul.mubr.f32.gmra.mxu0 %v2842
        %v3826 = vpop.f32.mrf.mxu0
        %v3827 = vadd.f32 0.0, %v3826
        %v3828 = vpop.f32.mrf.mxu0
        %3829 = vmatprep.mubr.f32.mxu0 0.0
        %3830 = vmatmul.mubr.f32.gmra.mxu0 %v2843
        %v3831 = vpop.f32.mrf.mxu0
        %v3832 = vadd.f32 0.0, %v3831
        %v3833 = vpop.f32.mrf.mxu0
        %3834 = vmatprep.mubr.f32.mxu0 0.0
        %3835 = vmatmul.mubr.f32.gmra.mxu0 %v2844
        %v3836 = vpop.f32.mrf.mxu0
        %v3837 = vadd.f32 0.0, %v3836
        %v3838 = vpop.f32.mrf.mxu0
        %3839 = vmatprep.mubr.f32.mxu0 0.0
        %3840 = vmatmul.mubr.f32.gmra.mxu0 %v2845
        %v3841 = vpop.f32.mrf.mxu0
        %v3842 = vadd.f32 0.0, %v3841
        %v3843 = vpop.f32.mrf.mxu0
        %3844 = vdwg.mxu0
        %v3845 = vadd.f32 %v3571, %v3687
        %v3846 = vadd.f32 %v3572, %v3692
        %v3847 = vadd.f32 %v3573, %v3697
        %v3848 = vadd.f32 %v3574, %v3702
        %v3849 = vadd.f32 %v3575, %v3707
        %v3850 = vadd.f32 %v3576, %v3712
        %v3851 = vadd.f32 %v3577, %v3717
        %v3852 = vadd.f32 %v3578, %v3722
        %v3853 = vadd.f32 %v3579, %v3727
        %v3854 = vadd.f32 %v3580, %v3732
        %v3855 = vadd.f32 %v3581, %v3737
        %v3856 = vadd.f32 %v3582, %v3742
        %v3857 = vadd.f32 %v3583, %v3747
        %v3858 = vadd.f32 %v3584, %v3752
        %v3859 = vadd.f32 %v3585, %v3757
        %v3860 = vadd.f32 %v3586, %v3762
        %v3861 = vadd.f32 %v3587, %v3767
        %v3862 = vadd.f32 %v3588, %v3772
        %v3863 = vadd.f32 %v3589, %v3777
        %v3864 = vadd.f32 %v3590, %v3782
        %v3865 = vadd.f32 %v3591, %v3787
        %v3866 = vadd.f32 %v3592, %v3792
        %v3867 = vadd.f32 %v3593, %v3797
        %v3868 = vadd.f32 %v3594, %v3802
        %v3869 = vadd.f32 %v3595, %v3807
        %v3870 = vadd.f32 %v3596, %v3812
        %v3871 = vadd.f32 %v3597, %v3817
        %v3872 = vadd.f32 %v3598, %v3822
        %v3873 = vadd.f32 %v3599, %v3827
        %v3874 = vadd.f32 %v3600, %v3832
        %v3875 = vadd.f32 %v3601, %v3837
        %v3876 = vadd.f32 %v3602, %v3842
        %v3877 = vld [vmem:[%s4] sm:$0x1]
        %v3879 = vlaneseq
        %v3880 = vshrl.u32 %v3879, 7
        %v3881 = vsub.s32 0, %v3880
        %v3882 = vrot.slane %v3877, %v3881
        %v3884 = vadd.f32 %v3845, %v3882
        %v3885 = vadd.f32 %v3846, %v3882
        %v3886 = vadd.f32 %v3847, %v3882
        %v3887 = vadd.f32 %v3848, %v3882
        %v3888 = vadd.f32 %v3849, %v3882
        %v3889 = vadd.f32 %v3850, %v3882
        %v3890 = vadd.f32 %v3851, %v3882
        %v3891 = vadd.f32 %v3852, %v3882
        %v3892 = vadd.f32 %v3853, %v3882
        %v3893 = vadd.f32 %v3854, %v3882
        %v3894 = vadd.f32 %v3855, %v3882
        %v3895 = vadd.f32 %v3856, %v3882
        %v3896 = vadd.f32 %v3857, %v3882
        %v3897 = vadd.f32 %v3858, %v3882
        %v3898 = vadd.f32 %v3859, %v3882
        %v3899 = vadd.f32 %v3860, %v3882
        %v3900 = vadd.f32 %v3861, %v3882
        %v3901 = vadd.f32 %v3862, %v3882
        %v3902 = vadd.f32 %v3863, %v3882
        %v3903 = vadd.f32 %v3864, %v3882
        %v3904 = vadd.f32 %v3865, %v3882
        %v3905 = vadd.f32 %v3866, %v3882
        %v3906 = vadd.f32 %v3867, %v3882
        %v3907 = vadd.f32 %v3868, %v3882
        %v3908 = vadd.f32 %v3869, %v3882
        %v3909 = vadd.f32 %v3870, %v3882
        %v3910 = vadd.f32 %v3871, %v3882
        %v3911 = vadd.f32 %v3872, %v3882
        %v3912 = vadd.f32 %v3873, %v3882
        %v3913 = vadd.f32 %v3874, %v3882
        %v3914 = vadd.f32 %v3875, %v3882
        %v3915 = vadd.f32 %v3876, %v3882
        %v3916 = vxor.u32 %v3884, 2147483648
        %v3917 = vxor.u32 %v3885, 2147483648
        %v3918 = vxor.u32 %v3886, 2147483648
        %v3919 = vxor.u32 %v3887, 2147483648
        %v3920 = vxor.u32 %v3888, 2147483648
        %v3921 = vxor.u32 %v3889, 2147483648
        %v3922 = vxor.u32 %v3890, 2147483648
        %v3923 = vxor.u32 %v3891, 2147483648
        %v3924 = vxor.u32 %v3892, 2147483648
        %v3925 = vxor.u32 %v3893, 2147483648
        %v3926 = vxor.u32 %v3894, 2147483648
        %v3927 = vxor.u32 %v3895, 2147483648
        %v3928 = vxor.u32 %v3896, 2147483648
        %v3929 = vxor.u32 %v3897, 2147483648
        %v3930 = vxor.u32 %v3898, 2147483648
        %v3931 = vxor.u32 %v3899, 2147483648
        %v3932 = vxor.u32 %v3900, 2147483648
        %v3933 = vxor.u32 %v3901, 2147483648
        %v3934 = vxor.u32 %v3902, 2147483648
        %v3935 = vxor.u32 %v3903, 2147483648
        %v3936 = vxor.u32 %v3904, 2147483648
        %v3937 = vxor.u32 %v3905, 2147483648
        %v3938 = vxor.u32 %v3906, 2147483648
        %v3939 = vxor.u32 %v3907, 2147483648
        %v3940 = vxor.u32 %v3908, 2147483648
        %v3941 = vxor.u32 %v3909, 2147483648
        %v3942 = vxor.u32 %v3910, 2147483648
        %v3943 = vxor.u32 %v3911, 2147483648
        %v3944 = vxor.u32 %v3912, 2147483648
        %v3945 = vxor.u32 %v3913, 2147483648
        %v3946 = vxor.u32 %v3914, 2147483648
        %v3947 = vxor.u32 %v3915, 2147483648
        %v3948 = vmul.f32 %v3916, 1.442695
        %v3949 = vpow.pop %v3948
        %v3950 = vmul.f32 %v3917, 1.442695
        %v3951 = vpow.pop %v3950
        %v3952 = vmul.f32 %v3918, 1.442695
        %v3953 = vpow.pop %v3952
        %v3954 = vmul.f32 %v3919, 1.442695
        %v3955 = vpow.pop %v3954
        %v3956 = vmul.f32 %v3920, 1.442695
        %v3957 = vpow.pop %v3956
        %v3958 = vmul.f32 %v3921, 1.442695
        %v3959 = vpow.pop %v3958
        %v3960 = vmul.f32 %v3922, 1.442695
        %v3961 = vpow.pop %v3960
        %v3962 = vmul.f32 %v3923, 1.442695
        %v3963 = vpow.pop %v3962
        %v3964 = vmul.f32 %v3924, 1.442695
        %v3965 = vpow.pop %v3964
        %v3966 = vmul.f32 %v3925, 1.442695
        %v3967 = vpow.pop %v3966
        %v3968 = vmul.f32 %v3926, 1.442695
        %v3969 = vpow.pop %v3968
        %v3970 = vmul.f32 %v3927, 1.442695
        %v3971 = vpow.pop %v3970
        %v3972 = vmul.f32 %v3928, 1.442695
        %v3973 = vpow.pop %v3972
        %v3974 = vmul.f32 %v3929, 1.442695
        %v3975 = vpow.pop %v3974
        %v3976 = vmul.f32 %v3930, 1.442695
        %v3977 = vpow.pop %v3976
        %v3978 = vmul.f32 %v3931, 1.442695
        %v3979 = vpow.pop %v3978
        %v3980 = vmul.f32 %v3932, 1.442695
        %v3981 = vpow.pop %v3980
        %v3982 = vmul.f32 %v3933, 1.442695
        %v3983 = vpow.pop %v3982
        %v3984 = vmul.f32 %v3934, 1.442695
        %v3985 = vpow.pop %v3984
        %v3986 = vmul.f32 %v3935, 1.442695
        %v3987 = vpow.pop %v3986
        %v3988 = vmul.f32 %v3936, 1.442695
        %v3989 = vpow.pop %v3988
        %v3990 = vmul.f32 %v3937, 1.442695
        %v3991 = vpow.pop %v3990
        %v3992 = vmul.f32 %v3938, 1.442695
        %v3993 = vpow.pop %v3992
        %v3994 = vmul.f32 %v3939, 1.442695
        %v3995 = vpow.pop %v3994
        %v3996 = vmul.f32 %v3940, 1.442695
        %v3997 = vpow.pop %v3996
        %v3998 = vmul.f32 %v3941, 1.442695
        %v3999 = vpow.pop %v3998
        %v4000 = vmul.f32 %v3942, 1.442695
        %v4001 = vpow.pop %v4000
        %v4002 = vmul.f32 %v3943, 1.442695
        %v4003 = vpow.pop %v4002
        %v4004 = vmul.f32 %v3944, 1.442695
        %v4005 = vpow.pop %v4004
        %v4006 = vmul.f32 %v3945, 1.442695
        %v4007 = vpow.pop %v4006
        %v4008 = vmul.f32 %v3946, 1.442695
        %v4009 = vpow.pop %v4008
        %v4010 = vmul.f32 %v3947, 1.442695
        %v4011 = vpow.pop %v4010
        %v4012 = vadd.f32 %v3949, 1.0
        %v4013 = vadd.f32 %v3951, 1.0
        %v4014 = vadd.f32 %v3953, 1.0
        %v4015 = vadd.f32 %v3955, 1.0
        %v4016 = vadd.f32 %v3957, 1.0
        %v4017 = vadd.f32 %v3959, 1.0
        %v4018 = vadd.f32 %v3961, 1.0
        %v4019 = vadd.f32 %v3963, 1.0
        %v4020 = vadd.f32 %v3965, 1.0
        %v4021 = vadd.f32 %v3967, 1.0
        %v4022 = vadd.f32 %v3969, 1.0
        %v4023 = vadd.f32 %v3971, 1.0
        %v4024 = vadd.f32 %v3973, 1.0
        %v4025 = vadd.f32 %v3975, 1.0
        %v4026 = vadd.f32 %v3977, 1.0
        %v4027 = vadd.f32 %v3979, 1.0
        %v4028 = vadd.f32 %v3981, 1.0
        %v4029 = vadd.f32 %v3983, 1.0
        %v4030 = vadd.f32 %v3985, 1.0
        %v4031 = vadd.f32 %v3987, 1.0
        %v4032 = vadd.f32 %v3989, 1.0
        %v4033 = vadd.f32 %v3991, 1.0
        %v4034 = vadd.f32 %v3993, 1.0
        %v4035 = vadd.f32 %v3995, 1.0
        %v4036 = vadd.f32 %v3997, 1.0
        %v4037 = vadd.f32 %v3999, 1.0
        %v4038 = vadd.f32 %v4001, 1.0
        %v4039 = vadd.f32 %v4003, 1.0
        %v4040 = vadd.f32 %v4005, 1.0
        %v4041 = vadd.f32 %v4007, 1.0
        %v4042 = vadd.f32 %v4009, 1.0
        %v4043 = vadd.f32 %v4011, 1.0
        %v4044 = vrcp.pop %v4012
        %v4045 = vmul.f32 1.0, %v4044
        %v4046 = vrcp.pop %v4013
        %v4047 = vmul.f32 1.0, %v4046
        %v4048 = vrcp.pop %v4014
        %v4049 = vmul.f32 1.0, %v4048
        %v4050 = vrcp.pop %v4015
        %v4051 = vmul.f32 1.0, %v4050
        %v4052 = vrcp.pop %v4016
        %v4053 = vmul.f32 1.0, %v4052
        %v4054 = vrcp.pop %v4017
        %v4055 = vmul.f32 1.0, %v4054
        %v4056 = vrcp.pop %v4018
        %v4057 = vmul.f32 1.0, %v4056
        %v4058 = vrcp.pop %v4019
        %v4059 = vmul.f32 1.0, %v4058
        %v4060 = vrcp.pop %v4020
        %v4061 = vmul.f32 1.0, %v4060
        %v4062 = vrcp.pop %v4021
        %v4063 = vmul.f32 1.0, %v4062
        %v4064 = vrcp.pop %v4022
        %v4065 = vmul.f32 1.0, %v4064
        %v4066 = vrcp.pop %v4023
        %v4067 = vmul.f32 1.0, %v4066
        %v4068 = vrcp.pop %v4024
        %v4069 = vmul.f32 1.0, %v4068
        %v4070 = vrcp.pop %v4025
        %v4071 = vmul.f32 1.0, %v4070
        %v4072 = vrcp.pop %v4026
        %v4073 = vmul.f32 1.0, %v4072
        %v4074 = vrcp.pop %v4027
        %v4075 = vmul.f32 1.0, %v4074
        %v4076 = vrcp.pop %v4028
        %v4077 = vmul.f32 1.0, %v4076
        %v4078 = vrcp.pop %v4029
        %v4079 = vmul.f32 1.0, %v4078
        %v4080 = vrcp.pop %v4030
        %v4081 = vmul.f32 1.0, %v4080
        %v4082 = vrcp.pop %v4031
        %v4083 = vmul.f32 1.0, %v4082
        %v4084 = vrcp.pop %v4032
        %v4085 = vmul.f32 1.0, %v4084
        %v4086 = vrcp.pop %v4033
        %v4087 = vmul.f32 1.0, %v4086
        %v4088 = vrcp.pop %v4034
        %v4089 = vmul.f32 1.0, %v4088
        %v4090 = vrcp.pop %v4035
        %v4091 = vmul.f32 1.0, %v4090
        %v4092 = vrcp.pop %v4036
        %v4093 = vmul.f32 1.0, %v4092
        %v4094 = vrcp.pop %v4037
        %v4095 = vmul.f32 1.0, %v4094
        %v4096 = vrcp.pop %v4038
        %v4097 = vmul.f32 1.0, %v4096
        %v4098 = vrcp.pop %v4039
        %v4099 = vmul.f32 1.0, %v4098
        %v4100 = vrcp.pop %v4040
        %v4101 = vmul.f32 1.0, %v4100
        %v4102 = vrcp.pop %v4041
        %v4103 = vmul.f32 1.0, %v4102
        %v4104 = vrcp.pop %v4042
        %v4105 = vmul.f32 1.0, %v4104
        %v4106 = vrcp.pop %v4043
        %v4107 = vmul.f32 1.0, %v4106
        %v4108 = vmul.f32 %v3884, %v4045
        %v4109 = vmul.f32 %v3885, %v4047
        %v4110 = vmul.f32 %v3886, %v4049
        %v4111 = vmul.f32 %v3887, %v4051
        %v4112 = vmul.f32 %v3888, %v4053
        %v4113 = vmul.f32 %v3889, %v4055
        %v4114 = vmul.f32 %v3890, %v4057
        %v4115 = vmul.f32 %v3891, %v4059
        %v4116 = vmul.f32 %v3892, %v4061
        %v4117 = vmul.f32 %v3893, %v4063
        %v4118 = vmul.f32 %v3894, %v4065
        %v4119 = vmul.f32 %v3895, %v4067
        %v4120 = vmul.f32 %v3896, %v4069
        %v4121 = vmul.f32 %v3897, %v4071
        %v4122 = vmul.f32 %v3898, %v4073
        %v4123 = vmul.f32 %v3899, %v4075
        %v4124 = vmul.f32 %v3900, %v4077
        %v4125 = vmul.f32 %v3901, %v4079
        %v4126 = vmul.f32 %v3902, %v4081
        %v4127 = vmul.f32 %v3903, %v4083
        %v4128 = vmul.f32 %v3904, %v4085
        %v4129 = vmul.f32 %v3905, %v4087
        %v4130 = vmul.f32 %v3906, %v4089
        %v4131 = vmul.f32 %v3907, %v4091
        %v4132 = vmul.f32 %v3908, %v4093
        %v4133 = vmul.f32 %v3909, %v4095
        %v4134 = vmul.f32 %v3910, %v4097
        %v4135 = vmul.f32 %v3911, %v4099
        %v4136 = vmul.f32 %v3912, %v4101
        %v4137 = vmul.f32 %v3913, %v4103
        %v4138 = vmul.f32 %v3914, %v4105
        %v4139 = vmul.f32 %v3915, %v4107
        %4140 = vst [vmem:[%s269] sm:$0xff] %v4108
        %4141 = vst [vmem:[%s269 + $0x8] sm:$0xff] %v4109
        %4142 = vst [vmem:[%s269 + $0x10] sm:$0xff] %v4110
        %4143 = vst [vmem:[%s269 + $0x18] sm:$0xff] %v4111
        %4144 = vst [vmem:[%s269 + $0x20] sm:$0xff] %v4112
        %4145 = vst [vmem:[%s269 + $0x28] sm:$0xff] %v4113
        %4146 = vst [vmem:[%s269 + $0x30] sm:$0xff] %v4114
        %4147 = vst [vmem:[%s269 + $0x38] sm:$0xff] %v4115
        %4148 = vst [vmem:[%s269 + $0x40] sm:$0xff] %v4116
        %4149 = vst [vmem:[%s269 + $0x48] sm:$0xff] %v4117
        %4150 = vst [vmem:[%s269 + $0x50] sm:$0xff] %v4118
        %4151 = vst [vmem:[%s269 + $0x58] sm:$0xff] %v4119
        %4152 = vst [vmem:[%s269 + $0x60] sm:$0xff] %v4120
        %4153 = vst [vmem:[%s269 + $0x68] sm:$0xff] %v4121
        %4154 = vst [vmem:[%s269 + $0x70] sm:$0xff] %v4122
        %4155 = vst [vmem:[%s269 + $0x78] sm:$0xff] %v4123
        %4156 = vst [vmem:[%s269 + $0x80] sm:$0xff] %v4124
        %4157 = vst [vmem:[%s269 + $0x88] sm:$0xff] %v4125
        %4158 = vst [vmem:[%s269 + $0x90] sm:$0xff] %v4126
        %4159 = vst [vmem:[%s269 + $0x98] sm:$0xff] %v4127
        %4160 = vst [vmem:[%s269 + $0xa0] sm:$0xff] %v4128
        %4161 = vst [vmem:[%s269 + $0xa8] sm:$0xff] %v4129
        %4162 = vst [vmem:[%s269 + $0xb0] sm:$0xff] %v4130
        %4163 = vst [vmem:[%s269 + $0xb8] sm:$0xff] %v4131
        %4164 = vst [vmem:[%s269 + $0xc0] sm:$0xff] %v4132
        %4165 = vst [vmem:[%s269 + $0xc8] sm:$0xff] %v4133
        %4166 = vst [vmem:[%s269 + $0xd0] sm:$0xff] %v4134
        %4167 = vst [vmem:[%s269 + $0xd8] sm:$0xff] %v4135
        %4168 = vst [vmem:[%s269 + $0xe0] sm:$0xff] %v4136
        %4169 = vst [vmem:[%s269 + $0xe8] sm:$0xff] %v4137
        %4170 = vst [vmem:[%s269 + $0xf0] sm:$0xff] %v4138
        %4171 = vst [vmem:[%s269 + $0xf8] sm:$0xff] %v4139
        %s4172 = sand.u32 %s164, 1
        %s4173 = scalar_lea.sflag [#allocation5], %s4172
        %s4174 = sand.u32 %s164, 1
        %s4175 = smul.addr %s4174, 256
        %s4176 = scalar_lea.vmem [#allocation4], %s4175
        // Predicated region
        $region41: #{tpu_custom_call.1} parent=39 // pred_check
          %p4177 = pneg %p174
        $region42: #{tpu_custom_call.1} parent=39 // pred_check_branch
          %4179 = sbr.rel (%p4177) target = $region44
        $region43: #{tpu_custom_call.1} parent=39 // pred_region
          %s4181 = ssub.s32 4096, 4096
          %4182 = vsyncadd %s4173, %s4181
          %s4183 = smul.addr %s23, 32
          %s4184 = smul.addr %s4183, 128
          %s4185 = scalar_lea.hbm %s5, %s4184
          %s4186 = sshll.u32 %s4176, 4
          %s4187 = int_to_ptr.vmem [resolvable:$true] %s4186
          %4192 = dma.vmem_to_hbm [thread:$0]  %s4187, 4096, %s4185, %s4173, 128, 128, 8
        $region44: #{tpu_custom_call.1} parent=39 // pred_fallthru
          _
      $region40: #{tpu_custom_call.1} parent=5 // pred_fallthru
        _
      %p4193 = scmp.le.s32.totalorder 2, %s14
      // Predicated region
      $region45: #{tpu_custom_call.1} parent=5 // pred_check
        %p4194 = pneg %p4193
      $region46: #{tpu_custom_call.1} parent=5 // pred_check_branch
        %4196 = sbr.rel (%p4194) target = $region48
      $region47: #{tpu_custom_call.1} parent=5 // pred_region
        %s4197 = ssub.s32 %s14, 2
        // Predicated region
        $region49: #{tpu_custom_call.1} parent=47 // pred_check
          %p4198 = pneg %p180
        $region50: #{tpu_custom_call.1} parent=47 // pred_check_branch
          %4200 = sbr.rel (%p4198) target = $region52
        $region51: #{tpu_custom_call.1} parent=47 // pred_region
          %s4201 = sand.u32 %s165, 1
          %s4202 = scalar_lea.sflag [#allocation5], %s4201
          %s4203 = sand.u32 %s165, 1
          %s4204 = smul.addr %s4203, 256
          %s4205 = scalar_lea.vmem [#allocation4], %s4204
          %4206 = dma.done %s4202, 4096
        $region52: #{tpu_custom_call.1} parent=47 // pred_fallthru
          _
      $region48: #{tpu_custom_call.1} parent=5 // pred_fallthru
        _
    $region6: #{tpu_custom_call.1} parent=1 // loop_footer
      %s18 = sadd.s32 1, %s14
    $region7: #{tpu_custom_call.1} parent=1 // loop_footer_branch
      %13 = sbr.rel target = $region3
    $region8: #{tpu_custom_call.1} parent=1 // loop_exit
      _
    %4207 = vsyncpa [#allocation5], 1
    %s4208 = scalar_lea.sflag [#allocation5], 1
    %4209 = vsyncpa %s4208, 1

</llo_original>
